<compile_context>
chip_gen: v7x
topology: tpu7x:2x2x1
jax: 0.10.0
libtpu: 0.0.40
codegen_flags: <defaults>
</compile_context>

<pallas_src>
import functools

import numpy as np

import jax
import jax.numpy as jnp
from jax.experimental import pallas as pl
from jax.experimental.pallas import tpu as pltpu  # noqa: F401

# Layer configs implied by the PyTorch module: (kernel, stride, pad).
RAW_CFG = [(8, 2, 3), (8, 4, 2), (8, 4, 2), (8, 4, 2)]
FFT_CFG = [(8, 2, 4), (8, 2, 4), (8, 4, 4), (8, 4, 4), (8, 2, 3)]
RAW_CH = [32, 64, 128, 256]
FFT_CH = [32, 64, 128, 128, 256]


# ---------------------------------------------------------------------------
# Static geometry + per-layer select/place matrices (trace-time constants).
# ---------------------------------------------------------------------------
def _branch_geometry(cfg, l_in):
    geos, l = [], l_in
    for i, (k, s, p) in enumerate(cfg):
        lp = l + 2 * p                       # padded input length (== slab length)
        lo = (lp - k) // s + 1               # conv output length
        assert lo >= 1
        off = cfg[i + 1][2] if i + 1 < len(cfg) else 0   # next layer's padding
        geos.append(dict(k=k, s=s, pad=p, ls_in=lp, l_out=lo,
                         ls_out=lo + 2 * off, off=off))
        l = lo
    return geos


def _selection_matrices(geos, n):
    """0/1 matrices that (a) pick the stride-s output rows out of the stride-1
    depthwise accumulator and (b) place them into the next layer's zero-padded
    slab (all-zero rows produce the exact zero padding)."""
    mats = []
    for g in geos:
        r_acc = n * g["ls_in"] - g["k"] + 1
        sel = np.zeros((n * g["ls_out"], r_acc), np.float32)
        for b in range(n):
            rows = b * g["ls_out"] + g["off"] + np.arange(g["l_out"])
            cols = b * g["ls_in"] + g["s"] * np.arange(g["l_out"])
            sel[rows, cols] = 1.0
        mats.append(jnp.asarray(sel))
    return mats


def _prep_input(x, pad, ls):
    """(N, C, L) -> channels-last, zero-padded, batch-flattened (N*ls, C)."""
    n, c, l = x.shape
    xt = jnp.transpose(x, (0, 2, 1))
    xp = jnp.pad(xt, ((0, 0), (pad, ls - l - pad), (0, 0)))
    return xp.reshape(n * ls, c)


# ---------------------------------------------------------------------------
# Single fused kernel for the whole forward pass.
# ---------------------------------------------------------------------------
def _classifier_kernel(*refs, n_raw, n_fft, raw_ks, fft_ks):
    it = iter(refs)
    xr_ref, xf_ref = next(it), next(it)
    raw_layers = [(next(it), next(it), next(it)) for _ in range(n_raw)]
    fft_layers = [(next(it), next(it), next(it)) for _ in range(n_fft)]
    rh_w1, rh_w2 = next(it), next(it)
    fh_w1, fh_w2 = next(it), next(it)
    out_w1, out_w2 = next(it), next(it)
    o_ref = next(it)

    def conv_branch(x, layers, ks):
        # x: (N * L_slab, C_in) channels-last, zero-padded slabs per sample.
        for (dwp_ref, pwp_ref, sel_ref), k in zip(layers, ks):
            dwp = dwp_ref[...]                       # (k+1, C_in): k taps + bias
            c_in = dwp.shape[1]
            r_acc = x.shape[0] - k + 1
            # Depthwise conv at stride 1 over all slab rows (contiguous slices).
            acc = jnp.zeros((r_acc, c_in), jnp.float32)
            for j in range(k):
                acc = acc + dwp[j:j + 1, :] * x[j:j + r_acc, :]
            acc = acc + dwp[k:k + 1, :]              # depthwise bias
            # Pointwise 1x1 conv + bias + ReLU: lane-dense MXU matmul with the
            # whole batch folded into the M dimension.
            pwp = pwp_ref[...]                       # (C_in+1, C_out)
            y = jnp.dot(acc, pwp[:c_in, :], preferred_element_type=jnp.float32)
            y = jnp.maximum(y + pwp[c_in:c_in + 1, :], 0.0)
            # Stride-s selection + placement into next layer's padded slab.
            x = jnp.dot(sel_ref[...], y, preferred_element_type=jnp.float32)
        return x                                      # (N, C_last): last L_out == 1

    def mlp_head(x, w1_ref, w2_ref):
        w1 = w1_ref[...]
        d1 = w1.shape[0] - 1
        h = jnp.dot(x, w1[:d1, :], preferred_element_type=jnp.float32)
        h = jnp.maximum(h + w1[d1:, :], 0.0)
        w2 = w2_ref[...]
        d2 = w2.shape[0] - 1
        h = jnp.dot(h, w2[:d2, :], preferred_element_type=jnp.float32)
        return jnp.maximum(h + w2[d2:, :], 0.0)

    raw_feat = mlp_head(conv_branch(xr_ref[...].astype(jnp.float32),
                                    raw_layers, raw_ks), rh_w1, rh_w2)
    fft_feat = mlp_head(conv_branch(xf_ref[...].astype(jnp.float32),
                                    fft_layers, fft_ks), fh_w1, fh_w2)

    # Output head: concat -> Linear(128,64)+ReLU -> Linear(64,no); the concat
    # is realised as a split matmul (no in-kernel relayout).
    w1 = out_w1[...]                                  # (2*F + 1, 64)
    f = raw_feat.shape[1]
    h = jnp.dot(raw_feat, w1[:f, :], preferred_element_type=jnp.float32)
    h = h + jnp.dot(fft_feat, w1[f:2 * f, :], preferred_element_type=jnp.float32)
    h = jnp.maximum(h + w1[2 * f:2 * f + 1, :], 0.0)
    w2 = out_w2[...]                                  # (65, no)
    d2 = w2.shape[0] - 1
    o = jnp.dot(h, w2[:d2, :], preferred_element_type=jnp.float32) + w2[d2:, :]
    o_ref[...] = o.astype(o_ref.dtype)


# ---------------------------------------------------------------------------
# Wrapper: one pallas_call for the whole model.
# ---------------------------------------------------------------------------
@jax.jit
def classifier_forward(params, t_raw, t_fft):
    n, _, l0 = t_raw.shape
    no = params["out"]["w2p"].shape[1]

    raw_geo = _branch_geometry(RAW_CFG, l0)
    fft_geo = _branch_geometry(FFT_CFG, l0)
    # Flatten() == identity on (N, 256, 1); needs the conv stacks to end at
    # spatial length 1 (true for seq_len == 128, matching Linear(256, 64)).
    assert raw_geo[-1]["l_out"] == 1 and fft_geo[-1]["l_out"] == 1

    raw_sel = _selection_matrices(raw_geo, n)
    fft_sel = _selection_matrices(fft_geo, n)

    xr = _prep_input(t_raw, RAW_CFG[0][2], raw_geo[0]["ls_in"])
    xf = _prep_input(t_fft, FFT_CFG[0][2], fft_geo[0]["ls_in"])

    args = [xr, xf]
    for cp, sel in zip(params["raw"]["convs"], raw_sel):
        args += [cp["dwp"], cp["pwp"], sel]
    for cp, sel in zip(params["fft"]["convs"], fft_sel):
        args += [cp["dwp"], cp["pwp"], sel]
    args += [params["raw"]["head"]["w1p"], params["raw"]["head"]["w2p"],
             params["fft"]["head"]["w1p"], params["fft"]["head"]["w2p"],
             params["out"]["w1p"], params["out"]["w2p"]]

    kernel = functools.partial(
        _classifier_kernel,
        n_raw=len(RAW_CFG), n_fft=len(FFT_CFG),
        raw_ks=tuple(c[0] for c in RAW_CFG),
        fft_ks=tuple(c[0] for c in FFT_CFG))

    return pl.pallas_call(
        kernel,
        out_shape=jax.ShapeDtypeStruct((n, no), t_raw.dtype),
    )(*args)


# ---------------------------------------------------------------------------
# Parameters (stored pre-packed for the kernel).
# ---------------------------------------------------------------------------
def init_params(key, raw_ni, fft_ni, no, dtype=jnp.float32):
    keys = iter(jax.random.split(key, 64))

    def conv_p(ci, co, k):
        dw = jax.random.normal(next(keys), (k, ci), dtype) / (k ** 0.5)
        dwb = jax.random.normal(next(keys), (1, ci), dtype) * 0.05
        pwT = jax.random.normal(next(keys), (ci, co), dtype) / (ci ** 0.5)
        pwb = jax.random.normal(next(keys), (1, co), dtype) * 0.05
        return dict(dwp=jnp.concatenate([dw, dwb], 0),       # (k+1, ci)
                    pwp=jnp.concatenate([pwT, pwb], 0))       # (ci+1, co)

    def head_p(fi, fh, fo):
        w1 = jax.random.normal(next(keys), (fi, fh), dtype) / (fi ** 0.5)
        b1 = jax.random.normal(next(keys), (1, fh), dtype) * 0.05
        w2 = jax.random.normal(next(keys), (fh, fo), dtype) / (fh ** 0.5)
        b2 = jax.random.normal(next(keys), (1, fo), dtype) * 0.05
        return dict(w1p=jnp.concatenate([w1, b1], 0),
                    w2p=jnp.concatenate([w2, b2], 0))

    raw_ch = [raw_ni] + RAW_CH
    fft_ch = [fft_ni] + FFT_CH
    out_w1 = jax.random.normal(next(keys), (128, 64), dtype) / (128 ** 0.5)
    out_b1 = jax.random.normal(next(keys), (1, 64), dtype) * 0.05
    out_w2 = jax.random.normal(next(keys), (64, no), dtype) / (64 ** 0.5)
    out_b2 = jax.random.normal(next(keys), (1, no), dtype) * 0.05
    return dict(
        raw=dict(convs=[conv_p(raw_ch[i], raw_ch[i + 1], RAW_CFG[i][0])
                        for i in range(len(RAW_CFG))],
                 head=head_p(256, 64, 64)),
        fft=dict(convs=[conv_p(fft_ch[i], fft_ch[i + 1], FFT_CFG[i][0])
                        for i in range(len(FFT_CFG))],
                 head=head_p(256, 64, 64)),
        out=dict(w1p=jnp.concatenate([out_w1, out_b1], 0),    # (129, 64)
                 w2p=jnp.concatenate([out_w2, out_b2], 0)),   # (65, no)
    )


# ---------------------------------------------------------------------------
# Pure-JAX reference (mirrors the PyTorch module, eval mode).
# ---------------------------------------------------------------------------
def _ref_sepconv(x, cp, k, stride, pad):
    c_in = x.shape[1]
    dw = cp["dwp"][:k].T[:, None, :]                  # (C_in, 1, K)
    dwb = cp["dwp"][k]                                # (C_in,)
    pwT = cp["pwp"][:c_in]                            # (C_in, C_out)
    pwb = cp["pwp"][c_in]                             # (C_out,)
    y = jax.lax.conv_general_dilated(
        x, dw, window_strides=(stride,), padding=[(pad, pad)],
        dimension_numbers=("NCH", "OIH", "NCH"), feature_group_count=c_in)
    y = y + dwb[None, :, None]
    y = jnp.einsum("ncl,co->nol", y, pwT) + pwb[None, :, None]
    return jnp.maximum(y, 0.0)


def _ref_head(x, hp):
    w1 = hp["w1p"]; d1 = w1.shape[0] - 1
    h = jnp.maximum(x @ w1[:d1] + w1[d1], 0.0)
    w2 = hp["w2p"]; d2 = w2.shape[0] - 1
    return jnp.maximum(h @ w2[:d2] + w2[d2], 0.0)


def reference_forward(params, t_raw, t_fft):
    x = t_raw
    for cp, (k, s, p) in zip(params["raw"]["convs"], RAW_CFG):
        x = _ref_sepconv(x, cp, k, s, p)
    raw_feat = _ref_head(x.reshape(x.shape[0], -1), params["raw"]["head"])
    y = t_fft
    for cp, (k, s, p) in zip(params["fft"]["convs"], FFT_CFG):
        y = _ref_sepconv(y, cp, k, s, p)
    fft_feat = _ref_head(y.reshape(y.shape[0], -1), params["fft"]["head"])
    t_in = jnp.concatenate([raw_feat, fft_feat], axis=1)
    w1 = params["out"]["w1p"]; d1 = w1.shape[0] - 1
    h = jnp.maximum(t_in @ w1[:d1] + w1[d1], 0.0)
    w2 = params["out"]["w2p"]; d2 = w2.shape[0] - 1
    return h @ w2[:d2] + w2[d2]


if __name__ == "__main__":
    key = jax.random.PRNGKey(0)
    k_p, k_raw, k_fft = jax.random.split(key, 3)

    batch, raw_ni, fft_ni, n_classes, seq = 2, 4, 4, 10, 128
    params = init_params(k_p, raw_ni, fft_ni, n_classes)
    t_raw = jax.random.normal(k_raw, (batch, raw_ni, seq), jnp.float32)
    t_fft = jax.random.normal(k_fft, (batch, fft_ni, seq), jnp.float32)

    out = jax.block_until_ready(classifier_forward(params, t_raw, t_fft))
    assert out.shape == (batch, n_classes), out.shape
    assert out.dtype == jnp.float32

    ref = reference_forward(params, t_raw, t_fft)
    max_err = float(jnp.max(jnp.abs(out - ref)))
    assert max_err < 5e-3, f"mismatch vs reference: max_err={max_err}"

    print("KERNEL_OK")
</pallas_src>

<mosaic_0001>
module attributes {stable_mosaic.version = 11 : i64} {
  func.func @_classifier_kernel(%arg0: memref<268x4xf32, #tpu.memory_space<vmem>>, %arg1: memref<272x4xf32, #tpu.memory_space<vmem>>, %arg2: memref<9x4xf32, #tpu.memory_space<vmem>>, %arg3: memref<5x32xf32, #tpu.memory_space<vmem>>, %arg4: memref<136x261xf32, #tpu.memory_space<vmem>>, %arg5: memref<9x32xf32, #tpu.memory_space<vmem>>, %arg6: memref<33x64xf32, #tpu.memory_space<vmem>>, %arg7: memref<40x129xf32, #tpu.memory_space<vmem>>, %arg8: memref<9x64xf32, #tpu.memory_space<vmem>>, %arg9: memref<65x128xf32, #tpu.memory_space<vmem>>, %arg10: memref<16x33xf32, #tpu.memory_space<vmem>>, %arg11: memref<9x128xf32, #tpu.memory_space<vmem>>, %arg12: memref<129x256xf32, #tpu.memory_space<vmem>>, %arg13: memref<2x9xf32, #tpu.memory_space<vmem>>, %arg14: memref<9x4xf32, #tpu.memory_space<vmem>>, %arg15: memref<5x32xf32, #tpu.memory_space<vmem>>, %arg16: memref<146x265xf32, #tpu.memory_space<vmem>>, %arg17: memref<9x32xf32, #tpu.memory_space<vmem>>, %arg18: memref<33x64xf32, #tpu.memory_space<vmem>>, %arg19: memref<82x139xf32, #tpu.memory_space<vmem>>, %arg20: memref<9x64xf32, #tpu.memory_space<vmem>>, %arg21: memref<65x128xf32, #tpu.memory_space<vmem>>, %arg22: memref<34x75xf32, #tpu.memory_space<vmem>>, %arg23: memref<9x128xf32, #tpu.memory_space<vmem>>, %arg24: memref<129x128xf32, #tpu.memory_space<vmem>>, %arg25: memref<18x27xf32, #tpu.memory_space<vmem>>, %arg26: memref<9x128xf32, #tpu.memory_space<vmem>>, %arg27: memref<129x256xf32, #tpu.memory_space<vmem>>, %arg28: memref<2x11xf32, #tpu.memory_space<vmem>>, %arg29: memref<257x64xf32, #tpu.memory_space<vmem>>, %arg30: memref<65x64xf32, #tpu.memory_space<vmem>>, %arg31: memref<257x64xf32, #tpu.memory_space<vmem>>, %arg32: memref<65x64xf32, #tpu.memory_space<vmem>>, %arg33: memref<129x64xf32, #tpu.memory_space<vmem>>, %arg34: memref<65x10xf32, #tpu.memory_space<vmem>>, %arg35: memref<2x10xf32, #tpu.memory_space<vmem>>) attributes {dimension_semantics = [], scalar_prefetch = 0 : i64, scratch_operands = 0 : i64, tpu.core_type = #tpu.core_type<tc>} {
    %c0 = arith.constant 0 : index
    %c0_0 = arith.constant 0 : index
    %0 = vector.load %arg0[%c0, %c0_0] : memref<268x4xf32, #tpu.memory_space<vmem>>, vector<268x4xf32>
    %c0_1 = arith.constant 0 : index
    %c0_2 = arith.constant 0 : index
    %1 = vector.load %arg2[%c0_1, %c0_2] : memref<9x4xf32, #tpu.memory_space<vmem>>, vector<9x4xf32>
    %cst = arith.constant 0.000000e+00 : f32
    %2 = vector.broadcast %cst : f32 to vector<261x4xf32>
    %3 = vector.extract_strided_slice %1 {offsets = [0, 0], sizes = [1, 4], strides = [1, 1]} : vector<9x4xf32> to vector<1x4xf32>
    %4 = vector.extract_strided_slice %0 {offsets = [0, 0], sizes = [261, 4], strides = [1, 1]} : vector<268x4xf32> to vector<261x4xf32>
    %5 = vector.broadcast %3 : vector<1x4xf32> to vector<261x4xf32>
    %6 = arith.mulf %5, %4 : vector<261x4xf32>
    %7 = arith.addf %2, %6 : vector<261x4xf32>
    %8 = vector.extract_strided_slice %1 {offsets = [1, 0], sizes = [1, 4], strides = [1, 1]} : vector<9x4xf32> to vector<1x4xf32>
    %9 = vector.extract_strided_slice %0 {offsets = [1, 0], sizes = [261, 4], strides = [1, 1]} : vector<268x4xf32> to vector<261x4xf32>
    %10 = vector.broadcast %8 : vector<1x4xf32> to vector<261x4xf32>
    %11 = arith.mulf %10, %9 : vector<261x4xf32>
    %12 = arith.addf %7, %11 : vector<261x4xf32>
    %13 = vector.extract_strided_slice %1 {offsets = [2, 0], sizes = [1, 4], strides = [1, 1]} : vector<9x4xf32> to vector<1x4xf32>
    %14 = vector.extract_strided_slice %0 {offsets = [2, 0], sizes = [261, 4], strides = [1, 1]} : vector<268x4xf32> to vector<261x4xf32>
    %15 = vector.broadcast %13 : vector<1x4xf32> to vector<261x4xf32>
    %16 = arith.mulf %15, %14 : vector<261x4xf32>
    %17 = arith.addf %12, %16 : vector<261x4xf32>
    %18 = vector.extract_strided_slice %1 {offsets = [3, 0], sizes = [1, 4], strides = [1, 1]} : vector<9x4xf32> to vector<1x4xf32>
    %19 = vector.extract_strided_slice %0 {offsets = [3, 0], sizes = [261, 4], strides = [1, 1]} : vector<268x4xf32> to vector<261x4xf32>
    %20 = vector.broadcast %18 : vector<1x4xf32> to vector<261x4xf32>
    %21 = arith.mulf %20, %19 : vector<261x4xf32>
    %22 = arith.addf %17, %21 : vector<261x4xf32>
    %23 = vector.extract_strided_slice %1 {offsets = [4, 0], sizes = [1, 4], strides = [1, 1]} : vector<9x4xf32> to vector<1x4xf32>
    %24 = vector.extract_strided_slice %0 {offsets = [4, 0], sizes = [261, 4], strides = [1, 1]} : vector<268x4xf32> to vector<261x4xf32>
    %25 = vector.broadcast %23 : vector<1x4xf32> to vector<261x4xf32>
    %26 = arith.mulf %25, %24 : vector<261x4xf32>
    %27 = arith.addf %22, %26 : vector<261x4xf32>
    %28 = vector.extract_strided_slice %1 {offsets = [5, 0], sizes = [1, 4], strides = [1, 1]} : vector<9x4xf32> to vector<1x4xf32>
    %29 = vector.extract_strided_slice %0 {offsets = [5, 0], sizes = [261, 4], strides = [1, 1]} : vector<268x4xf32> to vector<261x4xf32>
    %30 = vector.broadcast %28 : vector<1x4xf32> to vector<261x4xf32>
    %31 = arith.mulf %30, %29 : vector<261x4xf32>
    %32 = arith.addf %27, %31 : vector<261x4xf32>
    %33 = vector.extract_strided_slice %1 {offsets = [6, 0], sizes = [1, 4], strides = [1, 1]} : vector<9x4xf32> to vector<1x4xf32>
    %34 = vector.extract_strided_slice %0 {offsets = [6, 0], sizes = [261, 4], strides = [1, 1]} : vector<268x4xf32> to vector<261x4xf32>
    %35 = vector.broadcast %33 : vector<1x4xf32> to vector<261x4xf32>
    %36 = arith.mulf %35, %34 : vector<261x4xf32>
    %37 = arith.addf %32, %36 : vector<261x4xf32>
    %38 = vector.extract_strided_slice %1 {offsets = [7, 0], sizes = [1, 4], strides = [1, 1]} : vector<9x4xf32> to vector<1x4xf32>
    %39 = vector.extract_strided_slice %0 {offsets = [7, 0], sizes = [261, 4], strides = [1, 1]} : vector<268x4xf32> to vector<261x4xf32>
    %40 = vector.broadcast %38 : vector<1x4xf32> to vector<261x4xf32>
    %41 = arith.mulf %40, %39 : vector<261x4xf32>
    %42 = arith.addf %37, %41 : vector<261x4xf32>
    %43 = vector.extract_strided_slice %1 {offsets = [8, 0], sizes = [1, 4], strides = [1, 1]} : vector<9x4xf32> to vector<1x4xf32>
    %44 = vector.broadcast %43 : vector<1x4xf32> to vector<261x4xf32>
    %45 = arith.addf %42, %44 : vector<261x4xf32>
    %c0_3 = arith.constant 0 : index
    %c0_4 = arith.constant 0 : index
    %46 = vector.load %arg3[%c0_3, %c0_4] : memref<5x32xf32, #tpu.memory_space<vmem>>, vector<5x32xf32>
    %47 = vector.extract_strided_slice %46 {offsets = [0, 0], sizes = [4, 32], strides = [1, 1]} : vector<5x32xf32> to vector<4x32xf32>
    %cst_5 = arith.constant dense<0.000000e+00> : vector<261x32xf32>
    %48 = tpu.matmul %45, %47, %cst_5 {dimension_numbers = #tpu.dot_dimension_numbers<[1], [0], [0], [1], [0, 0, 1, 1], [], []>} : vector<261x4xf32>, vector<4x32xf32>, vector<261x32xf32> -> vector<261x32xf32>
    %49 = vector.extract_strided_slice %46 {offsets = [4, 0], sizes = [1, 32], strides = [1, 1]} : vector<5x32xf32> to vector<1x32xf32>
    %50 = vector.broadcast %49 : vector<1x32xf32> to vector<261x32xf32>
    %51 = arith.addf %48, %50 : vector<261x32xf32>
    %cst_6 = arith.constant 0.000000e+00 : f32
    %52 = vector.broadcast %cst_6 : f32 to vector<261x32xf32>
    %53 = arith.maximumf %51, %52 : vector<261x32xf32>
    %c0_7 = arith.constant 0 : index
    %c0_8 = arith.constant 0 : index
    %54 = vector.load %arg4[%c0_7, %c0_8] : memref<136x261xf32, #tpu.memory_space<vmem>>, vector<136x261xf32>
    %cst_9 = arith.constant dense<0.000000e+00> : vector<136x32xf32>
    %55 = tpu.matmul %54, %53, %cst_9 {dimension_numbers = #tpu.dot_dimension_numbers<[1], [0], [0], [1], [0, 0, 1, 1], [], []>} : vector<136x261xf32>, vector<261x32xf32>, vector<136x32xf32> -> vector<136x32xf32>
    %c0_10 = arith.constant 0 : index
    %c0_11 = arith.constant 0 : index
    %56 = vector.load %arg5[%c0_10, %c0_11] : memref<9x32xf32, #tpu.memory_space<vmem>>, vector<9x32xf32>
    %cst_12 = arith.constant 0.000000e+00 : f32
    %57 = vector.broadcast %cst_12 : f32 to vector<129x32xf32>
    %58 = vector.extract_strided_slice %56 {offsets = [0, 0], sizes = [1, 32], strides = [1, 1]} : vector<9x32xf32> to vector<1x32xf32>
    %59 = vector.extract_strided_slice %55 {offsets = [0, 0], sizes = [129, 32], strides = [1, 1]} : vector<136x32xf32> to vector<129x32xf32>
    %60 = vector.broadcast %58 : vector<1x32xf32> to vector<129x32xf32>
    %61 = arith.mulf %60, %59 : vector<129x32xf32>
    %62 = arith.addf %57, %61 : vector<129x32xf32>
    %63 = vector.extract_strided_slice %56 {offsets = [1, 0], sizes = [1, 32], strides = [1, 1]} : vector<9x32xf32> to vector<1x32xf32>
    %64 = vector.extract_strided_slice %55 {offsets = [1, 0], sizes = [129, 32], strides = [1, 1]} : vector<136x32xf32> to vector<129x32xf32>
    %65 = vector.broadcast %63 : vector<1x32xf32> to vector<129x32xf32>
    %66 = arith.mulf %65, %64 : vector<129x32xf32>
    %67 = arith.addf %62, %66 : vector<129x32xf32>
    %68 = vector.extract_strided_slice %56 {offsets = [2, 0], sizes = [1, 32], strides = [1, 1]} : vector<9x32xf32> to vector<1x32xf32>
    %69 = vector.extract_strided_slice %55 {offsets = [2, 0], sizes = [129, 32], strides = [1, 1]} : vector<136x32xf32> to vector<129x32xf32>
    %70 = vector.broadcast %68 : vector<1x32xf32> to vector<129x32xf32>
    %71 = arith.mulf %70, %69 : vector<129x32xf32>
    %72 = arith.addf %67, %71 : vector<129x32xf32>
    %73 = vector.extract_strided_slice %56 {offsets = [3, 0], sizes = [1, 32], strides = [1, 1]} : vector<9x32xf32> to vector<1x32xf32>
    %74 = vector.extract_strided_slice %55 {offsets = [3, 0], sizes = [129, 32], strides = [1, 1]} : vector<136x32xf32> to vector<129x32xf32>
    %75 = vector.broadcast %73 : vector<1x32xf32> to vector<129x32xf32>
    %76 = arith.mulf %75, %74 : vector<129x32xf32>
    %77 = arith.addf %72, %76 : vector<129x32xf32>
    %78 = vector.extract_strided_slice %56 {offsets = [4, 0], sizes = [1, 32], strides = [1, 1]} : vector<9x32xf32> to vector<1x32xf32>
    %79 = vector.extract_strided_slice %55 {offsets = [4, 0], sizes = [129, 32], strides = [1, 1]} : vector<136x32xf32> to vector<129x32xf32>
    %80 = vector.broadcast %78 : vector<1x32xf32> to vector<129x32xf32>
    %81 = arith.mulf %80, %79 : vector<129x32xf32>
    %82 = arith.addf %77, %81 : vector<129x32xf32>
    %83 = vector.extract_strided_slice %56 {offsets = [5, 0], sizes = [1, 32], strides = [1, 1]} : vector<9x32xf32> to vector<1x32xf32>
    %84 = vector.extract_strided_slice %55 {offsets = [5, 0], sizes = [129, 32], strides = [1, 1]} : vector<136x32xf32> to vector<129x32xf32>
    %85 = vector.broadcast %83 : vector<1x32xf32> to vector<129x32xf32>
    %86 = arith.mulf %85, %84 : vector<129x32xf32>
    %87 = arith.addf %82, %86 : vector<129x32xf32>
    %88 = vector.extract_strided_slice %56 {offsets = [6, 0], sizes = [1, 32], strides = [1, 1]} : vector<9x32xf32> to vector<1x32xf32>
    %89 = vector.extract_strided_slice %55 {offsets = [6, 0], sizes = [129, 32], strides = [1, 1]} : vector<136x32xf32> to vector<129x32xf32>
    %90 = vector.broadcast %88 : vector<1x32xf32> to vector<129x32xf32>
    %91 = arith.mulf %90, %89 : vector<129x32xf32>
    %92 = arith.addf %87, %91 : vector<129x32xf32>
    %93 = vector.extract_strided_slice %56 {offsets = [7, 0], sizes = [1, 32], strides = [1, 1]} : vector<9x32xf32> to vector<1x32xf32>
    %94 = vector.extract_strided_slice %55 {offsets = [7, 0], sizes = [129, 32], strides = [1, 1]} : vector<136x32xf32> to vector<129x32xf32>
    %95 = vector.broadcast %93 : vector<1x32xf32> to vector<129x32xf32>
    %96 = arith.mulf %95, %94 : vector<129x32xf32>
    %97 = arith.addf %92, %96 : vector<129x32xf32>
    %98 = vector.extract_strided_slice %56 {offsets = [8, 0], sizes = [1, 32], strides = [1, 1]} : vector<9x32xf32> to vector<1x32xf32>
    %99 = vector.broadcast %98 : vector<1x32xf32> to vector<129x32xf32>
    %100 = arith.addf %97, %99 : vector<129x32xf32>
    %c0_13 = arith.constant 0 : index
    %c0_14 = arith.constant 0 : index
    %101 = vector.load %arg6[%c0_13, %c0_14] : memref<33x64xf32, #tpu.memory_space<vmem>>, vector<33x64xf32>
    %102 = vector.extract_strided_slice %101 {offsets = [0, 0], sizes = [32, 64], strides = [1, 1]} : vector<33x64xf32> to vector<32x64xf32>
    %cst_15 = arith.constant dense<0.000000e+00> : vector<129x64xf32>
    %103 = tpu.matmul %100, %102, %cst_15 {dimension_numbers = #tpu.dot_dimension_numbers<[1], [0], [0], [1], [0, 0, 1, 1], [], []>} : vector<129x32xf32>, vector<32x64xf32>, vector<129x64xf32> -> vector<129x64xf32>
    %104 = vector.extract_strided_slice %101 {offsets = [32, 0], sizes = [1, 64], strides = [1, 1]} : vector<33x64xf32> to vector<1x64xf32>
    %105 = vector.broadcast %104 : vector<1x64xf32> to vector<129x64xf32>
    %106 = arith.addf %103, %105 : vector<129x64xf32>
    %cst_16 = arith.constant 0.000000e+00 : f32
    %107 = vector.broadcast %cst_16 : f32 to vector<129x64xf32>
    %108 = arith.maximumf %106, %107 : vector<129x64xf32>
    %c0_17 = arith.constant 0 : index
    %c0_18 = arith.constant 0 : index
    %109 = vector.load %arg7[%c0_17, %c0_18] : memref<40x129xf32, #tpu.memory_space<vmem>>, vector<40x129xf32>
    %cst_19 = arith.constant dense<0.000000e+00> : vector<40x64xf32>
    %110 = tpu.matmul %109, %108, %cst_19 {dimension_numbers = #tpu.dot_dimension_numbers<[1], [0], [0], [1], [0, 0, 1, 1], [], []>} : vector<40x129xf32>, vector<129x64xf32>, vector<40x64xf32> -> vector<40x64xf32>
    %c0_20 = arith.constant 0 : index
    %c0_21 = arith.constant 0 : index
    %111 = vector.load %arg8[%c0_20, %c0_21] : memref<9x64xf32, #tpu.memory_space<vmem>>, vector<9x64xf32>
    %cst_22 = arith.constant 0.000000e+00 : f32
    %112 = vector.broadcast %cst_22 : f32 to vector<33x64xf32>
    %113 = vector.extract_strided_slice %111 {offsets = [0, 0], sizes = [1, 64], strides = [1, 1]} : vector<9x64xf32> to vector<1x64xf32>
    %114 = vector.extract_strided_slice %110 {offsets = [0, 0], sizes = [33, 64], strides = [1, 1]} : vector<40x64xf32> to vector<33x64xf32>
    %115 = vector.broadcast %113 : vector<1x64xf32> to vector<33x64xf32>
    %116 = arith.mulf %115, %114 : vector<33x64xf32>
    %117 = arith.addf %112, %116 : vector<33x64xf32>
    %118 = vector.extract_strided_slice %111 {offsets = [1, 0], sizes = [1, 64], strides = [1, 1]} : vector<9x64xf32> to vector<1x64xf32>
    %119 = vector.extract_strided_slice %110 {offsets = [1, 0], sizes = [33, 64], strides = [1, 1]} : vector<40x64xf32> to vector<33x64xf32>
    %120 = vector.broadcast %118 : vector<1x64xf32> to vector<33x64xf32>
    %121 = arith.mulf %120, %119 : vector<33x64xf32>
    %122 = arith.addf %117, %121 : vector<33x64xf32>
    %123 = vector.extract_strided_slice %111 {offsets = [2, 0], sizes = [1, 64], strides = [1, 1]} : vector<9x64xf32> to vector<1x64xf32>
    %124 = vector.extract_strided_slice %110 {offsets = [2, 0], sizes = [33, 64], strides = [1, 1]} : vector<40x64xf32> to vector<33x64xf32>
    %125 = vector.broadcast %123 : vector<1x64xf32> to vector<33x64xf32>
    %126 = arith.mulf %125, %124 : vector<33x64xf32>
    %127 = arith.addf %122, %126 : vector<33x64xf32>
    %128 = vector.extract_strided_slice %111 {offsets = [3, 0], sizes = [1, 64], strides = [1, 1]} : vector<9x64xf32> to vector<1x64xf32>
    %129 = vector.extract_strided_slice %110 {offsets = [3, 0], sizes = [33, 64], strides = [1, 1]} : vector<40x64xf32> to vector<33x64xf32>
    %130 = vector.broadcast %128 : vector<1x64xf32> to vector<33x64xf32>
    %131 = arith.mulf %130, %129 : vector<33x64xf32>
    %132 = arith.addf %127, %131 : vector<33x64xf32>
    %133 = vector.extract_strided_slice %111 {offsets = [4, 0], sizes = [1, 64], strides = [1, 1]} : vector<9x64xf32> to vector<1x64xf32>
    %134 = vector.extract_strided_slice %110 {offsets = [4, 0], sizes = [33, 64], strides = [1, 1]} : vector<40x64xf32> to vector<33x64xf32>
    %135 = vector.broadcast %133 : vector<1x64xf32> to vector<33x64xf32>
    %136 = arith.mulf %135, %134 : vector<33x64xf32>
    %137 = arith.addf %132, %136 : vector<33x64xf32>
    %138 = vector.extract_strided_slice %111 {offsets = [5, 0], sizes = [1, 64], strides = [1, 1]} : vector<9x64xf32> to vector<1x64xf32>
    %139 = vector.extract_strided_slice %110 {offsets = [5, 0], sizes = [33, 64], strides = [1, 1]} : vector<40x64xf32> to vector<33x64xf32>
    %140 = vector.broadcast %138 : vector<1x64xf32> to vector<33x64xf32>
    %141 = arith.mulf %140, %139 : vector<33x64xf32>
    %142 = arith.addf %137, %141 : vector<33x64xf32>
    %143 = vector.extract_strided_slice %111 {offsets = [6, 0], sizes = [1, 64], strides = [1, 1]} : vector<9x64xf32> to vector<1x64xf32>
    %144 = vector.extract_strided_slice %110 {offsets = [6, 0], sizes = [33, 64], strides = [1, 1]} : vector<40x64xf32> to vector<33x64xf32>
    %145 = vector.broadcast %143 : vector<1x64xf32> to vector<33x64xf32>
    %146 = arith.mulf %145, %144 : vector<33x64xf32>
    %147 = arith.addf %142, %146 : vector<33x64xf32>
    %148 = vector.extract_strided_slice %111 {offsets = [7, 0], sizes = [1, 64], strides = [1, 1]} : vector<9x64xf32> to vector<1x64xf32>
    %149 = vector.extract_strided_slice %110 {offsets = [7, 0], sizes = [33, 64], strides = [1, 1]} : vector<40x64xf32> to vector<33x64xf32>
    %150 = vector.broadcast %148 : vector<1x64xf32> to vector<33x64xf32>
    %151 = arith.mulf %150, %149 : vector<33x64xf32>
    %152 = arith.addf %147, %151 : vector<33x64xf32>
    %153 = vector.extract_strided_slice %111 {offsets = [8, 0], sizes = [1, 64], strides = [1, 1]} : vector<9x64xf32> to vector<1x64xf32>
    %154 = vector.broadcast %153 : vector<1x64xf32> to vector<33x64xf32>
    %155 = arith.addf %152, %154 : vector<33x64xf32>
    %c0_23 = arith.constant 0 : index
    %c0_24 = arith.constant 0 : index
    %156 = vector.load %arg9[%c0_23, %c0_24] : memref<65x128xf32, #tpu.memory_space<vmem>>, vector<65x128xf32>
    %157 = vector.extract_strided_slice %156 {offsets = [0, 0], sizes = [64, 128], strides = [1, 1]} : vector<65x128xf32> to vector<64x128xf32>
    %cst_25 = arith.constant dense<0.000000e+00> : vector<33x128xf32>
    %158 = tpu.matmul %155, %157, %cst_25 {dimension_numbers = #tpu.dot_dimension_numbers<[1], [0], [0], [1], [0, 0, 1, 1], [], []>} : vector<33x64xf32>, vector<64x128xf32>, vector<33x128xf32> -> vector<33x128xf32>
    %159 = vector.extract_strided_slice %156 {offsets = [64, 0], sizes = [1, 128], strides = [1, 1]} : vector<65x128xf32> to vector<1x128xf32>
    %160 = vector.broadcast %159 : vector<1x128xf32> to vector<33x128xf32>
    %161 = arith.addf %158, %160 : vector<33x128xf32>
    %cst_26 = arith.constant 0.000000e+00 : f32
    %162 = vector.broadcast %cst_26 : f32 to vector<33x128xf32>
    %163 = arith.maximumf %161, %162 : vector<33x128xf32>
    %c0_27 = arith.constant 0 : index
    %c0_28 = arith.constant 0 : index
    %164 = vector.load %arg10[%c0_27, %c0_28] : memref<16x33xf32, #tpu.memory_space<vmem>>, vector<16x33xf32>
    %cst_29 = arith.constant dense<0.000000e+00> : vector<16x128xf32>
    %165 = tpu.matmul %164, %163, %cst_29 {dimension_numbers = #tpu.dot_dimension_numbers<[1], [0], [0], [1], [0, 0, 1, 1], [], []>} : vector<16x33xf32>, vector<33x128xf32>, vector<16x128xf32> -> vector<16x128xf32>
    %c0_30 = arith.constant 0 : index
    %c0_31 = arith.constant 0 : index
    %166 = vector.load %arg11[%c0_30, %c0_31] : memref<9x128xf32, #tpu.memory_space<vmem>>, vector<9x128xf32>
    %cst_32 = arith.constant 0.000000e+00 : f32
    %167 = vector.broadcast %cst_32 : f32 to vector<9x128xf32>
    %168 = vector.extract_strided_slice %166 {offsets = [0, 0], sizes = [1, 128], strides = [1, 1]} : vector<9x128xf32> to vector<1x128xf32>
    %169 = vector.extract_strided_slice %165 {offsets = [0, 0], sizes = [9, 128], strides = [1, 1]} : vector<16x128xf32> to vector<9x128xf32>
    %170 = vector.broadcast %168 : vector<1x128xf32> to vector<9x128xf32>
    %171 = arith.mulf %170, %169 : vector<9x128xf32>
    %172 = arith.addf %167, %171 : vector<9x128xf32>
    %173 = vector.extract_strided_slice %166 {offsets = [1, 0], sizes = [1, 128], strides = [1, 1]} : vector<9x128xf32> to vector<1x128xf32>
    %174 = vector.extract_strided_slice %165 {offsets = [1, 0], sizes = [9, 128], strides = [1, 1]} : vector<16x128xf32> to vector<9x128xf32>
    %175 = vector.broadcast %173 : vector<1x128xf32> to vector<9x128xf32>
    %176 = arith.mulf %175, %174 : vector<9x128xf32>
    %177 = arith.addf %172, %176 : vector<9x128xf32>
    %178 = vector.extract_strided_slice %166 {offsets = [2, 0], sizes = [1, 128], strides = [1, 1]} : vector<9x128xf32> to vector<1x128xf32>
    %179 = vector.extract_strided_slice %165 {offsets = [2, 0], sizes = [9, 128], strides = [1, 1]} : vector<16x128xf32> to vector<9x128xf32>
    %180 = vector.broadcast %178 : vector<1x128xf32> to vector<9x128xf32>
    %181 = arith.mulf %180, %179 : vector<9x128xf32>
    %182 = arith.addf %177, %181 : vector<9x128xf32>
    %183 = vector.extract_strided_slice %166 {offsets = [3, 0], sizes = [1, 128], strides = [1, 1]} : vector<9x128xf32> to vector<1x128xf32>
    %184 = vector.extract_strided_slice %165 {offsets = [3, 0], sizes = [9, 128], strides = [1, 1]} : vector<16x128xf32> to vector<9x128xf32>
    %185 = vector.broadcast %183 : vector<1x128xf32> to vector<9x128xf32>
    %186 = arith.mulf %185, %184 : vector<9x128xf32>
    %187 = arith.addf %182, %186 : vector<9x128xf32>
    %188 = vector.extract_strided_slice %166 {offsets = [4, 0], sizes = [1, 128], strides = [1, 1]} : vector<9x128xf32> to vector<1x128xf32>
    %189 = vector.extract_strided_slice %165 {offsets = [4, 0], sizes = [9, 128], strides = [1, 1]} : vector<16x128xf32> to vector<9x128xf32>
    %190 = vector.broadcast %188 : vector<1x128xf32> to vector<9x128xf32>
    %191 = arith.mulf %190, %189 : vector<9x128xf32>
    %192 = arith.addf %187, %191 : vector<9x128xf32>
    %193 = vector.extract_strided_slice %166 {offsets = [5, 0], sizes = [1, 128], strides = [1, 1]} : vector<9x128xf32> to vector<1x128xf32>
    %194 = vector.extract_strided_slice %165 {offsets = [5, 0], sizes = [9, 128], strides = [1, 1]} : vector<16x128xf32> to vector<9x128xf32>
    %195 = vector.broadcast %193 : vector<1x128xf32> to vector<9x128xf32>
    %196 = arith.mulf %195, %194 : vector<9x128xf32>
    %197 = arith.addf %192, %196 : vector<9x128xf32>
    %198 = vector.extract_strided_slice %166 {offsets = [6, 0], sizes = [1, 128], strides = [1, 1]} : vector<9x128xf32> to vector<1x128xf32>
    %199 = vector.extract_strided_slice %165 {offsets = [6, 0], sizes = [9, 128], strides = [1, 1]} : vector<16x128xf32> to vector<9x128xf32>
    %200 = vector.broadcast %198 : vector<1x128xf32> to vector<9x128xf32>
    %201 = arith.mulf %200, %199 : vector<9x128xf32>
    %202 = arith.addf %197, %201 : vector<9x128xf32>
    %203 = vector.extract_strided_slice %166 {offsets = [7, 0], sizes = [1, 128], strides = [1, 1]} : vector<9x128xf32> to vector<1x128xf32>
    %204 = vector.extract_strided_slice %165 {offsets = [7, 0], sizes = [9, 128], strides = [1, 1]} : vector<16x128xf32> to vector<9x128xf32>
    %205 = vector.broadcast %203 : vector<1x128xf32> to vector<9x128xf32>
    %206 = arith.mulf %205, %204 : vector<9x128xf32>
    %207 = arith.addf %202, %206 : vector<9x128xf32>
    %208 = vector.extract_strided_slice %166 {offsets = [8, 0], sizes = [1, 128], strides = [1, 1]} : vector<9x128xf32> to vector<1x128xf32>
    %209 = vector.broadcast %208 : vector<1x128xf32> to vector<9x128xf32>
    %210 = arith.addf %207, %209 : vector<9x128xf32>
    %c0_33 = arith.constant 0 : index
    %c0_34 = arith.constant 0 : index
    %211 = vector.load %arg12[%c0_33, %c0_34] : memref<129x256xf32, #tpu.memory_space<vmem>>, vector<129x256xf32>
    %212 = vector.extract_strided_slice %211 {offsets = [0, 0], sizes = [128, 256], strides = [1, 1]} : vector<129x256xf32> to vector<128x256xf32>
    %cst_35 = arith.constant dense<0.000000e+00> : vector<9x256xf32>
    %213 = tpu.matmul %210, %212, %cst_35 {dimension_numbers = #tpu.dot_dimension_numbers<[1], [0], [0], [1], [0, 0, 1, 1], [], []>} : vector<9x128xf32>, vector<128x256xf32>, vector<9x256xf32> -> vector<9x256xf32>
    %214 = vector.extract_strided_slice %211 {offsets = [128, 0], sizes = [1, 256], strides = [1, 1]} : vector<129x256xf32> to vector<1x256xf32>
    %215 = vector.broadcast %214 : vector<1x256xf32> to vector<9x256xf32>
    %216 = arith.addf %213, %215 : vector<9x256xf32>
    %cst_36 = arith.constant 0.000000e+00 : f32
    %217 = vector.broadcast %cst_36 : f32 to vector<9x256xf32>
    %218 = arith.maximumf %216, %217 : vector<9x256xf32>
    %c0_37 = arith.constant 0 : index
    %c0_38 = arith.constant 0 : index
    %219 = vector.load %arg13[%c0_37, %c0_38] : memref<2x9xf32, #tpu.memory_space<vmem>>, vector<2x9xf32>
    %cst_39 = arith.constant dense<0.000000e+00> : vector<2x256xf32>
    %220 = tpu.matmul %219, %218, %cst_39 {dimension_numbers = #tpu.dot_dimension_numbers<[1], [0], [0], [1], [0, 0, 1, 1], [], []>} : vector<2x9xf32>, vector<9x256xf32>, vector<2x256xf32> -> vector<2x256xf32>
    %c0_40 = arith.constant 0 : index
    %c0_41 = arith.constant 0 : index
    %221 = vector.load %arg29[%c0_40, %c0_41] : memref<257x64xf32, #tpu.memory_space<vmem>>, vector<257x64xf32>
    %222 = vector.extract_strided_slice %221 {offsets = [0, 0], sizes = [256, 64], strides = [1, 1]} : vector<257x64xf32> to vector<256x64xf32>
    %cst_42 = arith.constant dense<0.000000e+00> : vector<2x64xf32>
    %223 = tpu.matmul %220, %222, %cst_42 {dimension_numbers = #tpu.dot_dimension_numbers<[1], [0], [0], [1], [0, 0, 1, 1], [], []>} : vector<2x256xf32>, vector<256x64xf32>, vector<2x64xf32> -> vector<2x64xf32>
    %224 = vector.extract_strided_slice %221 {offsets = [256, 0], sizes = [1, 64], strides = [1, 1]} : vector<257x64xf32> to vector<1x64xf32>
    %225 = vector.broadcast %224 : vector<1x64xf32> to vector<2x64xf32>
    %226 = arith.addf %223, %225 : vector<2x64xf32>
    %cst_43 = arith.constant 0.000000e+00 : f32
    %227 = vector.broadcast %cst_43 : f32 to vector<2x64xf32>
    %228 = arith.maximumf %226, %227 : vector<2x64xf32>
    %c0_44 = arith.constant 0 : index
    %c0_45 = arith.constant 0 : index
    %229 = vector.load %arg30[%c0_44, %c0_45] : memref<65x64xf32, #tpu.memory_space<vmem>>, vector<65x64xf32>
    %230 = vector.extract_strided_slice %229 {offsets = [0, 0], sizes = [64, 64], strides = [1, 1]} : vector<65x64xf32> to vector<64x64xf32>
    %cst_46 = arith.constant dense<0.000000e+00> : vector<2x64xf32>
    %231 = tpu.matmul %228, %230, %cst_46 {dimension_numbers = #tpu.dot_dimension_numbers<[1], [0], [0], [1], [0, 0, 1, 1], [], []>} : vector<2x64xf32>, vector<64x64xf32>, vector<2x64xf32> -> vector<2x64xf32>
    %232 = vector.extract_strided_slice %229 {offsets = [64, 0], sizes = [1, 64], strides = [1, 1]} : vector<65x64xf32> to vector<1x64xf32>
    %233 = vector.broadcast %232 : vector<1x64xf32> to vector<2x64xf32>
    %234 = arith.addf %231, %233 : vector<2x64xf32>
    %cst_47 = arith.constant 0.000000e+00 : f32
    %235 = vector.broadcast %cst_47 : f32 to vector<2x64xf32>
    %236 = arith.maximumf %234, %235 : vector<2x64xf32>
    %c0_48 = arith.constant 0 : index
    %c0_49 = arith.constant 0 : index
    %237 = vector.load %arg1[%c0_48, %c0_49] : memref<272x4xf32, #tpu.memory_space<vmem>>, vector<272x4xf32>
    %c0_50 = arith.constant 0 : index
    %c0_51 = arith.constant 0 : index
    %238 = vector.load %arg14[%c0_50, %c0_51] : memref<9x4xf32, #tpu.memory_space<vmem>>, vector<9x4xf32>
    %cst_52 = arith.constant 0.000000e+00 : f32
    %239 = vector.broadcast %cst_52 : f32 to vector<265x4xf32>
    %240 = vector.extract_strided_slice %238 {offsets = [0, 0], sizes = [1, 4], strides = [1, 1]} : vector<9x4xf32> to vector<1x4xf32>
    %241 = vector.extract_strided_slice %237 {offsets = [0, 0], sizes = [265, 4], strides = [1, 1]} : vector<272x4xf32> to vector<265x4xf32>
    %242 = vector.broadcast %240 : vector<1x4xf32> to vector<265x4xf32>
    %243 = arith.mulf %242, %241 : vector<265x4xf32>
    %244 = arith.addf %239, %243 : vector<265x4xf32>
    %245 = vector.extract_strided_slice %238 {offsets = [1, 0], sizes = [1, 4], strides = [1, 1]} : vector<9x4xf32> to vector<1x4xf32>
    %246 = vector.extract_strided_slice %237 {offsets = [1, 0], sizes = [265, 4], strides = [1, 1]} : vector<272x4xf32> to vector<265x4xf32>
    %247 = vector.broadcast %245 : vector<1x4xf32> to vector<265x4xf32>
    %248 = arith.mulf %247, %246 : vector<265x4xf32>
    %249 = arith.addf %244, %248 : vector<265x4xf32>
    %250 = vector.extract_strided_slice %238 {offsets = [2, 0], sizes = [1, 4], strides = [1, 1]} : vector<9x4xf32> to vector<1x4xf32>
    %251 = vector.extract_strided_slice %237 {offsets = [2, 0], sizes = [265, 4], strides = [1, 1]} : vector<272x4xf32> to vector<265x4xf32>
    %252 = vector.broadcast %250 : vector<1x4xf32> to vector<265x4xf32>
    %253 = arith.mulf %252, %251 : vector<265x4xf32>
    %254 = arith.addf %249, %253 : vector<265x4xf32>
    %255 = vector.extract_strided_slice %238 {offsets = [3, 0], sizes = [1, 4], strides = [1, 1]} : vector<9x4xf32> to vector<1x4xf32>
    %256 = vector.extract_strided_slice %237 {offsets = [3, 0], sizes = [265, 4], strides = [1, 1]} : vector<272x4xf32> to vector<265x4xf32>
    %257 = vector.broadcast %255 : vector<1x4xf32> to vector<265x4xf32>
    %258 = arith.mulf %257, %256 : vector<265x4xf32>
    %259 = arith.addf %254, %258 : vector<265x4xf32>
    %260 = vector.extract_strided_slice %238 {offsets = [4, 0], sizes = [1, 4], strides = [1, 1]} : vector<9x4xf32> to vector<1x4xf32>
    %261 = vector.extract_strided_slice %237 {offsets = [4, 0], sizes = [265, 4], strides = [1, 1]} : vector<272x4xf32> to vector<265x4xf32>
    %262 = vector.broadcast %260 : vector<1x4xf32> to vector<265x4xf32>
    %263 = arith.mulf %262, %261 : vector<265x4xf32>
    %264 = arith.addf %259, %263 : vector<265x4xf32>
    %265 = vector.extract_strided_slice %238 {offsets = [5, 0], sizes = [1, 4], strides = [1, 1]} : vector<9x4xf32> to vector<1x4xf32>
    %266 = vector.extract_strided_slice %237 {offsets = [5, 0], sizes = [265, 4], strides = [1, 1]} : vector<272x4xf32> to vector<265x4xf32>
    %267 = vector.broadcast %265 : vector<1x4xf32> to vector<265x4xf32>
    %268 = arith.mulf %267, %266 : vector<265x4xf32>
    %269 = arith.addf %264, %268 : vector<265x4xf32>
    %270 = vector.extract_strided_slice %238 {offsets = [6, 0], sizes = [1, 4], strides = [1, 1]} : vector<9x4xf32> to vector<1x4xf32>
    %271 = vector.extract_strided_slice %237 {offsets = [6, 0], sizes = [265, 4], strides = [1, 1]} : vector<272x4xf32> to vector<265x4xf32>
    %272 = vector.broadcast %270 : vector<1x4xf32> to vector<265x4xf32>
    %273 = arith.mulf %272, %271 : vector<265x4xf32>
    %274 = arith.addf %269, %273 : vector<265x4xf32>
    %275 = vector.extract_strided_slice %238 {offsets = [7, 0], sizes = [1, 4], strides = [1, 1]} : vector<9x4xf32> to vector<1x4xf32>
    %276 = vector.extract_strided_slice %237 {offsets = [7, 0], sizes = [265, 4], strides = [1, 1]} : vector<272x4xf32> to vector<265x4xf32>
    %277 = vector.broadcast %275 : vector<1x4xf32> to vector<265x4xf32>
    %278 = arith.mulf %277, %276 : vector<265x4xf32>
    %279 = arith.addf %274, %278 : vector<265x4xf32>
    %280 = vector.extract_strided_slice %238 {offsets = [8, 0], sizes = [1, 4], strides = [1, 1]} : vector<9x4xf32> to vector<1x4xf32>
    %281 = vector.broadcast %280 : vector<1x4xf32> to vector<265x4xf32>
    %282 = arith.addf %279, %281 : vector<265x4xf32>
    %c0_53 = arith.constant 0 : index
    %c0_54 = arith.constant 0 : index
    %283 = vector.load %arg15[%c0_53, %c0_54] : memref<5x32xf32, #tpu.memory_space<vmem>>, vector<5x32xf32>
    %284 = vector.extract_strided_slice %283 {offsets = [0, 0], sizes = [4, 32], strides = [1, 1]} : vector<5x32xf32> to vector<4x32xf32>
    %cst_55 = arith.constant dense<0.000000e+00> : vector<265x32xf32>
    %285 = tpu.matmul %282, %284, %cst_55 {dimension_numbers = #tpu.dot_dimension_numbers<[1], [0], [0], [1], [0, 0, 1, 1], [], []>} : vector<265x4xf32>, vector<4x32xf32>, vector<265x32xf32> -> vector<265x32xf32>
    %286 = vector.extract_strided_slice %283 {offsets = [4, 0], sizes = [1, 32], strides = [1, 1]} : vector<5x32xf32> to vector<1x32xf32>
    %287 = vector.broadcast %286 : vector<1x32xf32> to vector<265x32xf32>
    %288 = arith.addf %285, %287 : vector<265x32xf32>
    %cst_56 = arith.constant 0.000000e+00 : f32
    %289 = vector.broadcast %cst_56 : f32 to vector<265x32xf32>
    %290 = arith.maximumf %288, %289 : vector<265x32xf32>
    %c0_57 = arith.constant 0 : index
    %c0_58 = arith.constant 0 : index
    %291 = vector.load %arg16[%c0_57, %c0_58] : memref<146x265xf32, #tpu.memory_space<vmem>>, vector<146x265xf32>
    %cst_59 = arith.constant dense<0.000000e+00> : vector<146x32xf32>
    %292 = tpu.matmul %291, %290, %cst_59 {dimension_numbers = #tpu.dot_dimension_numbers<[1], [0], [0], [1], [0, 0, 1, 1], [], []>} : vector<146x265xf32>, vector<265x32xf32>, vector<146x32xf32> -> vector<146x32xf32>
    %c0_60 = arith.constant 0 : index
    %c0_61 = arith.constant 0 : index
    %293 = vector.load %arg17[%c0_60, %c0_61] : memref<9x32xf32, #tpu.memory_space<vmem>>, vector<9x32xf32>
    %cst_62 = arith.constant 0.000000e+00 : f32
    %294 = vector.broadcast %cst_62 : f32 to vector<139x32xf32>
    %295 = vector.extract_strided_slice %293 {offsets = [0, 0], sizes = [1, 32], strides = [1, 1]} : vector<9x32xf32> to vector<1x32xf32>
    %296 = vector.extract_strided_slice %292 {offsets = [0, 0], sizes = [139, 32], strides = [1, 1]} : vector<146x32xf32> to vector<139x32xf32>
    %297 = vector.broadcast %295 : vector<1x32xf32> to vector<139x32xf32>
    %298 = arith.mulf %297, %296 : vector<139x32xf32>
    %299 = arith.addf %294, %298 : vector<139x32xf32>
    %300 = vector.extract_strided_slice %293 {offsets = [1, 0], sizes = [1, 32], strides = [1, 1]} : vector<9x32xf32> to vector<1x32xf32>
    %301 = vector.extract_strided_slice %292 {offsets = [1, 0], sizes = [139, 32], strides = [1, 1]} : vector<146x32xf32> to vector<139x32xf32>
    %302 = vector.broadcast %300 : vector<1x32xf32> to vector<139x32xf32>
    %303 = arith.mulf %302, %301 : vector<139x32xf32>
    %304 = arith.addf %299, %303 : vector<139x32xf32>
    %305 = vector.extract_strided_slice %293 {offsets = [2, 0], sizes = [1, 32], strides = [1, 1]} : vector<9x32xf32> to vector<1x32xf32>
    %306 = vector.extract_strided_slice %292 {offsets = [2, 0], sizes = [139, 32], strides = [1, 1]} : vector<146x32xf32> to vector<139x32xf32>
    %307 = vector.broadcast %305 : vector<1x32xf32> to vector<139x32xf32>
    %308 = arith.mulf %307, %306 : vector<139x32xf32>
    %309 = arith.addf %304, %308 : vector<139x32xf32>
    %310 = vector.extract_strided_slice %293 {offsets = [3, 0], sizes = [1, 32], strides = [1, 1]} : vector<9x32xf32> to vector<1x32xf32>
    %311 = vector.extract_strided_slice %292 {offsets = [3, 0], sizes = [139, 32], strides = [1, 1]} : vector<146x32xf32> to vector<139x32xf32>
    %312 = vector.broadcast %310 : vector<1x32xf32> to vector<139x32xf32>
    %313 = arith.mulf %312, %311 : vector<139x32xf32>
    %314 = arith.addf %309, %313 : vector<139x32xf32>
    %315 = vector.extract_strided_slice %293 {offsets = [4, 0], sizes = [1, 32], strides = [1, 1]} : vector<9x32xf32> to vector<1x32xf32>
    %316 = vector.extract_strided_slice %292 {offsets = [4, 0], sizes = [139, 32], strides = [1, 1]} : vector<146x32xf32> to vector<139x32xf32>
    %317 = vector.broadcast %315 : vector<1x32xf32> to vector<139x32xf32>
    %318 = arith.mulf %317, %316 : vector<139x32xf32>
    %319 = arith.addf %314, %318 : vector<139x32xf32>
    %320 = vector.extract_strided_slice %293 {offsets = [5, 0], sizes = [1, 32], strides = [1, 1]} : vector<9x32xf32> to vector<1x32xf32>
    %321 = vector.extract_strided_slice %292 {offsets = [5, 0], sizes = [139, 32], strides = [1, 1]} : vector<146x32xf32> to vector<139x32xf32>
    %322 = vector.broadcast %320 : vector<1x32xf32> to vector<139x32xf32>
    %323 = arith.mulf %322, %321 : vector<139x32xf32>
    %324 = arith.addf %319, %323 : vector<139x32xf32>
    %325 = vector.extract_strided_slice %293 {offsets = [6, 0], sizes = [1, 32], strides = [1, 1]} : vector<9x32xf32> to vector<1x32xf32>
    %326 = vector.extract_strided_slice %292 {offsets = [6, 0], sizes = [139, 32], strides = [1, 1]} : vector<146x32xf32> to vector<139x32xf32>
    %327 = vector.broadcast %325 : vector<1x32xf32> to vector<139x32xf32>
    %328 = arith.mulf %327, %326 : vector<139x32xf32>
    %329 = arith.addf %324, %328 : vector<139x32xf32>
    %330 = vector.extract_strided_slice %293 {offsets = [7, 0], sizes = [1, 32], strides = [1, 1]} : vector<9x32xf32> to vector<1x32xf32>
    %331 = vector.extract_strided_slice %292 {offsets = [7, 0], sizes = [139, 32], strides = [1, 1]} : vector<146x32xf32> to vector<139x32xf32>
    %332 = vector.broadcast %330 : vector<1x32xf32> to vector<139x32xf32>
    %333 = arith.mulf %332, %331 : vector<139x32xf32>
    %334 = arith.addf %329, %333 : vector<139x32xf32>
    %335 = vector.extract_strided_slice %293 {offsets = [8, 0], sizes = [1, 32], strides = [1, 1]} : vector<9x32xf32> to vector<1x32xf32>
    %336 = vector.broadcast %335 : vector<1x32xf32> to vector<139x32xf32>
    %337 = arith.addf %334, %336 : vector<139x32xf32>
    %c0_63 = arith.constant 0 : index
    %c0_64 = arith.constant 0 : index
    %338 = vector.load %arg18[%c0_63, %c0_64] : memref<33x64xf32, #tpu.memory_space<vmem>>, vector<33x64xf32>
    %339 = vector.extract_strided_slice %338 {offsets = [0, 0], sizes = [32, 64], strides = [1, 1]} : vector<33x64xf32> to vector<32x64xf32>
    %cst_65 = arith.constant dense<0.000000e+00> : vector<139x64xf32>
    %340 = tpu.matmul %337, %339, %cst_65 {dimension_numbers = #tpu.dot_dimension_numbers<[1], [0], [0], [1], [0, 0, 1, 1], [], []>} : vector<139x32xf32>, vector<32x64xf32>, vector<139x64xf32> -> vector<139x64xf32>
    %341 = vector.extract_strided_slice %338 {offsets = [32, 0], sizes = [1, 64], strides = [1, 1]} : vector<33x64xf32> to vector<1x64xf32>
    %342 = vector.broadcast %341 : vector<1x64xf32> to vector<139x64xf32>
    %343 = arith.addf %340, %342 : vector<139x64xf32>
    %cst_66 = arith.constant 0.000000e+00 : f32
    %344 = vector.broadcast %cst_66 : f32 to vector<139x64xf32>
    %345 = arith.maximumf %343, %344 : vector<139x64xf32>
    %c0_67 = arith.constant 0 : index
    %c0_68 = arith.constant 0 : index
    %346 = vector.load %arg19[%c0_67, %c0_68] : memref<82x139xf32, #tpu.memory_space<vmem>>, vector<82x139xf32>
    %cst_69 = arith.constant dense<0.000000e+00> : vector<82x64xf32>
    %347 = tpu.matmul %346, %345, %cst_69 {dimension_numbers = #tpu.dot_dimension_numbers<[1], [0], [0], [1], [0, 0, 1, 1], [], []>} : vector<82x139xf32>, vector<139x64xf32>, vector<82x64xf32> -> vector<82x64xf32>
    %c0_70 = arith.constant 0 : index
    %c0_71 = arith.constant 0 : index
    %348 = vector.load %arg20[%c0_70, %c0_71] : memref<9x64xf32, #tpu.memory_space<vmem>>, vector<9x64xf32>
    %cst_72 = arith.constant 0.000000e+00 : f32
    %349 = vector.broadcast %cst_72 : f32 to vector<75x64xf32>
    %350 = vector.extract_strided_slice %348 {offsets = [0, 0], sizes = [1, 64], strides = [1, 1]} : vector<9x64xf32> to vector<1x64xf32>
    %351 = vector.extract_strided_slice %347 {offsets = [0, 0], sizes = [75, 64], strides = [1, 1]} : vector<82x64xf32> to vector<75x64xf32>
    %352 = vector.broadcast %350 : vector<1x64xf32> to vector<75x64xf32>
    %353 = arith.mulf %352, %351 : vector<75x64xf32>
    %354 = arith.addf %349, %353 : vector<75x64xf32>
    %355 = vector.extract_strided_slice %348 {offsets = [1, 0], sizes = [1, 64], strides = [1, 1]} : vector<9x64xf32> to vector<1x64xf32>
    %356 = vector.extract_strided_slice %347 {offsets = [1, 0], sizes = [75, 64], strides = [1, 1]} : vector<82x64xf32> to vector<75x64xf32>
    %357 = vector.broadcast %355 : vector<1x64xf32> to vector<75x64xf32>
    %358 = arith.mulf %357, %356 : vector<75x64xf32>
    %359 = arith.addf %354, %358 : vector<75x64xf32>
    %360 = vector.extract_strided_slice %348 {offsets = [2, 0], sizes = [1, 64], strides = [1, 1]} : vector<9x64xf32> to vector<1x64xf32>
    %361 = vector.extract_strided_slice %347 {offsets = [2, 0], sizes = [75, 64], strides = [1, 1]} : vector<82x64xf32> to vector<75x64xf32>
    %362 = vector.broadcast %360 : vector<1x64xf32> to vector<75x64xf32>
    %363 = arith.mulf %362, %361 : vector<75x64xf32>
    %364 = arith.addf %359, %363 : vector<75x64xf32>
    %365 = vector.extract_strided_slice %348 {offsets = [3, 0], sizes = [1, 64], strides = [1, 1]} : vector<9x64xf32> to vector<1x64xf32>
    %366 = vector.extract_strided_slice %347 {offsets = [3, 0], sizes = [75, 64], strides = [1, 1]} : vector<82x64xf32> to vector<75x64xf32>
    %367 = vector.broadcast %365 : vector<1x64xf32> to vector<75x64xf32>
    %368 = arith.mulf %367, %366 : vector<75x64xf32>
    %369 = arith.addf %364, %368 : vector<75x64xf32>
    %370 = vector.extract_strided_slice %348 {offsets = [4, 0], sizes = [1, 64], strides = [1, 1]} : vector<9x64xf32> to vector<1x64xf32>
    %371 = vector.extract_strided_slice %347 {offsets = [4, 0], sizes = [75, 64], strides = [1, 1]} : vector<82x64xf32> to vector<75x64xf32>
    %372 = vector.broadcast %370 : vector<1x64xf32> to vector<75x64xf32>
    %373 = arith.mulf %372, %371 : vector<75x64xf32>
    %374 = arith.addf %369, %373 : vector<75x64xf32>
    %375 = vector.extract_strided_slice %348 {offsets = [5, 0], sizes = [1, 64], strides = [1, 1]} : vector<9x64xf32> to vector<1x64xf32>
    %376 = vector.extract_strided_slice %347 {offsets = [5, 0], sizes = [75, 64], strides = [1, 1]} : vector<82x64xf32> to vector<75x64xf32>
    %377 = vector.broadcast %375 : vector<1x64xf32> to vector<75x64xf32>
    %378 = arith.mulf %377, %376 : vector<75x64xf32>
    %379 = arith.addf %374, %378 : vector<75x64xf32>
    %380 = vector.extract_strided_slice %348 {offsets = [6, 0], sizes = [1, 64], strides = [1, 1]} : vector<9x64xf32> to vector<1x64xf32>
    %381 = vector.extract_strided_slice %347 {offsets = [6, 0], sizes = [75, 64], strides = [1, 1]} : vector<82x64xf32> to vector<75x64xf32>
    %382 = vector.broadcast %380 : vector<1x64xf32> to vector<75x64xf32>
    %383 = arith.mulf %382, %381 : vector<75x64xf32>
    %384 = arith.addf %379, %383 : vector<75x64xf32>
    %385 = vector.extract_strided_slice %348 {offsets = [7, 0], sizes = [1, 64], strides = [1, 1]} : vector<9x64xf32> to vector<1x64xf32>
    %386 = vector.extract_strided_slice %347 {offsets = [7, 0], sizes = [75, 64], strides = [1, 1]} : vector<82x64xf32> to vector<75x64xf32>
    %387 = vector.broadcast %385 : vector<1x64xf32> to vector<75x64xf32>
    %388 = arith.mulf %387, %386 : vector<75x64xf32>
    %389 = arith.addf %384, %388 : vector<75x64xf32>
    %390 = vector.extract_strided_slice %348 {offsets = [8, 0], sizes = [1, 64], strides = [1, 1]} : vector<9x64xf32> to vector<1x64xf32>
    %391 = vector.broadcast %390 : vector<1x64xf32> to vector<75x64xf32>
    %392 = arith.addf %389, %391 : vector<75x64xf32>
    %c0_73 = arith.constant 0 : index
    %c0_74 = arith.constant 0 : index
    %393 = vector.load %arg21[%c0_73, %c0_74] : memref<65x128xf32, #tpu.memory_space<vmem>>, vector<65x128xf32>
    %394 = vector.extract_strided_slice %393 {offsets = [0, 0], sizes = [64, 128], strides = [1, 1]} : vector<65x128xf32> to vector<64x128xf32>
    %cst_75 = arith.constant dense<0.000000e+00> : vector<75x128xf32>
    %395 = tpu.matmul %392, %394, %cst_75 {dimension_numbers = #tpu.dot_dimension_numbers<[1], [0], [0], [1], [0, 0, 1, 1], [], []>} : vector<75x64xf32>, vector<64x128xf32>, vector<75x128xf32> -> vector<75x128xf32>
    %396 = vector.extract_strided_slice %393 {offsets = [64, 0], sizes = [1, 128], strides = [1, 1]} : vector<65x128xf32> to vector<1x128xf32>
    %397 = vector.broadcast %396 : vector<1x128xf32> to vector<75x128xf32>
    %398 = arith.addf %395, %397 : vector<75x128xf32>
    %cst_76 = arith.constant 0.000000e+00 : f32
    %399 = vector.broadcast %cst_76 : f32 to vector<75x128xf32>
    %400 = arith.maximumf %398, %399 : vector<75x128xf32>
    %c0_77 = arith.constant 0 : index
    %c0_78 = arith.constant 0 : index
    %401 = vector.load %arg22[%c0_77, %c0_78] : memref<34x75xf32, #tpu.memory_space<vmem>>, vector<34x75xf32>
    %cst_79 = arith.constant dense<0.000000e+00> : vector<34x128xf32>
    %402 = tpu.matmul %401, %400, %cst_79 {dimension_numbers = #tpu.dot_dimension_numbers<[1], [0], [0], [1], [0, 0, 1, 1], [], []>} : vector<34x75xf32>, vector<75x128xf32>, vector<34x128xf32> -> vector<34x128xf32>
    %c0_80 = arith.constant 0 : index
    %c0_81 = arith.constant 0 : index
    %403 = vector.load %arg23[%c0_80, %c0_81] : memref<9x128xf32, #tpu.memory_space<vmem>>, vector<9x128xf32>
    %cst_82 = arith.constant 0.000000e+00 : f32
    %404 = vector.broadcast %cst_82 : f32 to vector<27x128xf32>
    %405 = vector.extract_strided_slice %403 {offsets = [0, 0], sizes = [1, 128], strides = [1, 1]} : vector<9x128xf32> to vector<1x128xf32>
    %406 = vector.extract_strided_slice %402 {offsets = [0, 0], sizes = [27, 128], strides = [1, 1]} : vector<34x128xf32> to vector<27x128xf32>
    %407 = vector.broadcast %405 : vector<1x128xf32> to vector<27x128xf32>
    %408 = arith.mulf %407, %406 : vector<27x128xf32>
    %409 = arith.addf %404, %408 : vector<27x128xf32>
    %410 = vector.extract_strided_slice %403 {offsets = [1, 0], sizes = [1, 128], strides = [1, 1]} : vector<9x128xf32> to vector<1x128xf32>
    %411 = vector.extract_strided_slice %402 {offsets = [1, 0], sizes = [27, 128], strides = [1, 1]} : vector<34x128xf32> to vector<27x128xf32>
    %412 = vector.broadcast %410 : vector<1x128xf32> to vector<27x128xf32>
    %413 = arith.mulf %412, %411 : vector<27x128xf32>
    %414 = arith.addf %409, %413 : vector<27x128xf32>
    %415 = vector.extract_strided_slice %403 {offsets = [2, 0], sizes = [1, 128], strides = [1, 1]} : vector<9x128xf32> to vector<1x128xf32>
    %416 = vector.extract_strided_slice %402 {offsets = [2, 0], sizes = [27, 128], strides = [1, 1]} : vector<34x128xf32> to vector<27x128xf32>
    %417 = vector.broadcast %415 : vector<1x128xf32> to vector<27x128xf32>
    %418 = arith.mulf %417, %416 : vector<27x128xf32>
    %419 = arith.addf %414, %418 : vector<27x128xf32>
    %420 = vector.extract_strided_slice %403 {offsets = [3, 0], sizes = [1, 128], strides = [1, 1]} : vector<9x128xf32> to vector<1x128xf32>
    %421 = vector.extract_strided_slice %402 {offsets = [3, 0], sizes = [27, 128], strides = [1, 1]} : vector<34x128xf32> to vector<27x128xf32>
    %422 = vector.broadcast %420 : vector<1x128xf32> to vector<27x128xf32>
    %423 = arith.mulf %422, %421 : vector<27x128xf32>
    %424 = arith.addf %419, %423 : vector<27x128xf32>
    %425 = vector.extract_strided_slice %403 {offsets = [4, 0], sizes = [1, 128], strides = [1, 1]} : vector<9x128xf32> to vector<1x128xf32>
    %426 = vector.extract_strided_slice %402 {offsets = [4, 0], sizes = [27, 128], strides = [1, 1]} : vector<34x128xf32> to vector<27x128xf32>
    %427 = vector.broadcast %425 : vector<1x128xf32> to vector<27x128xf32>
    %428 = arith.mulf %427, %426 : vector<27x128xf32>
    %429 = arith.addf %424, %428 : vector<27x128xf32>
    %430 = vector.extract_strided_slice %403 {offsets = [5, 0], sizes = [1, 128], strides = [1, 1]} : vector<9x128xf32> to vector<1x128xf32>
    %431 = vector.extract_strided_slice %402 {offsets = [5, 0], sizes = [27, 128], strides = [1, 1]} : vector<34x128xf32> to vector<27x128xf32>
    %432 = vector.broadcast %430 : vector<1x128xf32> to vector<27x128xf32>
    %433 = arith.mulf %432, %431 : vector<27x128xf32>
    %434 = arith.addf %429, %433 : vector<27x128xf32>
    %435 = vector.extract_strided_slice %403 {offsets = [6, 0], sizes = [1, 128], strides = [1, 1]} : vector<9x128xf32> to vector<1x128xf32>
    %436 = vector.extract_strided_slice %402 {offsets = [6, 0], sizes = [27, 128], strides = [1, 1]} : vector<34x128xf32> to vector<27x128xf32>
    %437 = vector.broadcast %435 : vector<1x128xf32> to vector<27x128xf32>
    %438 = arith.mulf %437, %436 : vector<27x128xf32>
    %439 = arith.addf %434, %438 : vector<27x128xf32>
    %440 = vector.extract_strided_slice %403 {offsets = [7, 0], sizes = [1, 128], strides = [1, 1]} : vector<9x128xf32> to vector<1x128xf32>
    %441 = vector.extract_strided_slice %402 {offsets = [7, 0], sizes = [27, 128], strides = [1, 1]} : vector<34x128xf32> to vector<27x128xf32>
    %442 = vector.broadcast %440 : vector<1x128xf32> to vector<27x128xf32>
    %443 = arith.mulf %442, %441 : vector<27x128xf32>
    %444 = arith.addf %439, %443 : vector<27x128xf32>
    %445 = vector.extract_strided_slice %403 {offsets = [8, 0], sizes = [1, 128], strides = [1, 1]} : vector<9x128xf32> to vector<1x128xf32>
    %446 = vector.broadcast %445 : vector<1x128xf32> to vector<27x128xf32>
    %447 = arith.addf %444, %446 : vector<27x128xf32>
    %c0_83 = arith.constant 0 : index
    %c0_84 = arith.constant 0 : index
    %448 = vector.load %arg24[%c0_83, %c0_84] : memref<129x128xf32, #tpu.memory_space<vmem>>, vector<129x128xf32>
    %449 = vector.extract_strided_slice %448 {offsets = [0, 0], sizes = [128, 128], strides = [1, 1]} : vector<129x128xf32> to vector<128x128xf32>
    %cst_85 = arith.constant dense<0.000000e+00> : vector<27x128xf32>
    %450 = tpu.matmul %447, %449, %cst_85 {dimension_numbers = #tpu.dot_dimension_numbers<[1], [0], [0], [1], [0, 0, 1, 1], [], []>} : vector<27x128xf32>, vector<128x128xf32>, vector<27x128xf32> -> vector<27x128xf32>
    %451 = vector.extract_strided_slice %448 {offsets = [128, 0], sizes = [1, 128], strides = [1, 1]} : vector<129x128xf32> to vector<1x128xf32>
    %452 = vector.broadcast %451 : vector<1x128xf32> to vector<27x128xf32>
    %453 = arith.addf %450, %452 : vector<27x128xf32>
    %cst_86 = arith.constant 0.000000e+00 : f32
    %454 = vector.broadcast %cst_86 : f32 to vector<27x128xf32>
    %455 = arith.maximumf %453, %454 : vector<27x128xf32>
    %c0_87 = arith.constant 0 : index
    %c0_88 = arith.constant 0 : index
    %456 = vector.load %arg25[%c0_87, %c0_88] : memref<18x27xf32, #tpu.memory_space<vmem>>, vector<18x27xf32>
    %cst_89 = arith.constant dense<0.000000e+00> : vector<18x128xf32>
    %457 = tpu.matmul %456, %455, %cst_89 {dimension_numbers = #tpu.dot_dimension_numbers<[1], [0], [0], [1], [0, 0, 1, 1], [], []>} : vector<18x27xf32>, vector<27x128xf32>, vector<18x128xf32> -> vector<18x128xf32>
    %c0_90 = arith.constant 0 : index
    %c0_91 = arith.constant 0 : index
    %458 = vector.load %arg26[%c0_90, %c0_91] : memref<9x128xf32, #tpu.memory_space<vmem>>, vector<9x128xf32>
    %cst_92 = arith.constant 0.000000e+00 : f32
    %459 = vector.broadcast %cst_92 : f32 to vector<11x128xf32>
    %460 = vector.extract_strided_slice %458 {offsets = [0, 0], sizes = [1, 128], strides = [1, 1]} : vector<9x128xf32> to vector<1x128xf32>
    %461 = vector.extract_strided_slice %457 {offsets = [0, 0], sizes = [11, 128], strides = [1, 1]} : vector<18x128xf32> to vector<11x128xf32>
    %462 = vector.broadcast %460 : vector<1x128xf32> to vector<11x128xf32>
    %463 = arith.mulf %462, %461 : vector<11x128xf32>
    %464 = arith.addf %459, %463 : vector<11x128xf32>
    %465 = vector.extract_strided_slice %458 {offsets = [1, 0], sizes = [1, 128], strides = [1, 1]} : vector<9x128xf32> to vector<1x128xf32>
    %466 = vector.extract_strided_slice %457 {offsets = [1, 0], sizes = [11, 128], strides = [1, 1]} : vector<18x128xf32> to vector<11x128xf32>
    %467 = vector.broadcast %465 : vector<1x128xf32> to vector<11x128xf32>
    %468 = arith.mulf %467, %466 : vector<11x128xf32>
    %469 = arith.addf %464, %468 : vector<11x128xf32>
    %470 = vector.extract_strided_slice %458 {offsets = [2, 0], sizes = [1, 128], strides = [1, 1]} : vector<9x128xf32> to vector<1x128xf32>
    %471 = vector.extract_strided_slice %457 {offsets = [2, 0], sizes = [11, 128], strides = [1, 1]} : vector<18x128xf32> to vector<11x128xf32>
    %472 = vector.broadcast %470 : vector<1x128xf32> to vector<11x128xf32>
    %473 = arith.mulf %472, %471 : vector<11x128xf32>
    %474 = arith.addf %469, %473 : vector<11x128xf32>
    %475 = vector.extract_strided_slice %458 {offsets = [3, 0], sizes = [1, 128], strides = [1, 1]} : vector<9x128xf32> to vector<1x128xf32>
    %476 = vector.extract_strided_slice %457 {offsets = [3, 0], sizes = [11, 128], strides = [1, 1]} : vector<18x128xf32> to vector<11x128xf32>
    %477 = vector.broadcast %475 : vector<1x128xf32> to vector<11x128xf32>
    %478 = arith.mulf %477, %476 : vector<11x128xf32>
    %479 = arith.addf %474, %478 : vector<11x128xf32>
    %480 = vector.extract_strided_slice %458 {offsets = [4, 0], sizes = [1, 128], strides = [1, 1]} : vector<9x128xf32> to vector<1x128xf32>
    %481 = vector.extract_strided_slice %457 {offsets = [4, 0], sizes = [11, 128], strides = [1, 1]} : vector<18x128xf32> to vector<11x128xf32>
    %482 = vector.broadcast %480 : vector<1x128xf32> to vector<11x128xf32>
    %483 = arith.mulf %482, %481 : vector<11x128xf32>
    %484 = arith.addf %479, %483 : vector<11x128xf32>
    %485 = vector.extract_strided_slice %458 {offsets = [5, 0], sizes = [1, 128], strides = [1, 1]} : vector<9x128xf32> to vector<1x128xf32>
    %486 = vector.extract_strided_slice %457 {offsets = [5, 0], sizes = [11, 128], strides = [1, 1]} : vector<18x128xf32> to vector<11x128xf32>
    %487 = vector.broadcast %485 : vector<1x128xf32> to vector<11x128xf32>
    %488 = arith.mulf %487, %486 : vector<11x128xf32>
    %489 = arith.addf %484, %488 : vector<11x128xf32>
    %490 = vector.extract_strided_slice %458 {offsets = [6, 0], sizes = [1, 128], strides = [1, 1]} : vector<9x128xf32> to vector<1x128xf32>
    %491 = vector.extract_strided_slice %457 {offsets = [6, 0], sizes = [11, 128], strides = [1, 1]} : vector<18x128xf32> to vector<11x128xf32>
    %492 = vector.broadcast %490 : vector<1x128xf32> to vector<11x128xf32>
    %493 = arith.mulf %492, %491 : vector<11x128xf32>
    %494 = arith.addf %489, %493 : vector<11x128xf32>
    %495 = vector.extract_strided_slice %458 {offsets = [7, 0], sizes = [1, 128], strides = [1, 1]} : vector<9x128xf32> to vector<1x128xf32>
    %496 = vector.extract_strided_slice %457 {offsets = [7, 0], sizes = [11, 128], strides = [1, 1]} : vector<18x128xf32> to vector<11x128xf32>
    %497 = vector.broadcast %495 : vector<1x128xf32> to vector<11x128xf32>
    %498 = arith.mulf %497, %496 : vector<11x128xf32>
    %499 = arith.addf %494, %498 : vector<11x128xf32>
    %500 = vector.extract_strided_slice %458 {offsets = [8, 0], sizes = [1, 128], strides = [1, 1]} : vector<9x128xf32> to vector<1x128xf32>
    %501 = vector.broadcast %500 : vector<1x128xf32> to vector<11x128xf32>
    %502 = arith.addf %499, %501 : vector<11x128xf32>
    %c0_93 = arith.constant 0 : index
    %c0_94 = arith.constant 0 : index
    %503 = vector.load %arg27[%c0_93, %c0_94] : memref<129x256xf32, #tpu.memory_space<vmem>>, vector<129x256xf32>
    %504 = vector.extract_strided_slice %503 {offsets = [0, 0], sizes = [128, 256], strides = [1, 1]} : vector<129x256xf32> to vector<128x256xf32>
    %cst_95 = arith.constant dense<0.000000e+00> : vector<11x256xf32>
    %505 = tpu.matmul %502, %504, %cst_95 {dimension_numbers = #tpu.dot_dimension_numbers<[1], [0], [0], [1], [0, 0, 1, 1], [], []>} : vector<11x128xf32>, vector<128x256xf32>, vector<11x256xf32> -> vector<11x256xf32>
    %506 = vector.extract_strided_slice %503 {offsets = [128, 0], sizes = [1, 256], strides = [1, 1]} : vector<129x256xf32> to vector<1x256xf32>
    %507 = vector.broadcast %506 : vector<1x256xf32> to vector<11x256xf32>
    %508 = arith.addf %505, %507 : vector<11x256xf32>
    %cst_96 = arith.constant 0.000000e+00 : f32
    %509 = vector.broadcast %cst_96 : f32 to vector<11x256xf32>
    %510 = arith.maximumf %508, %509 : vector<11x256xf32>
    %c0_97 = arith.constant 0 : index
    %c0_98 = arith.constant 0 : index
    %511 = vector.load %arg28[%c0_97, %c0_98] : memref<2x11xf32, #tpu.memory_space<vmem>>, vector<2x11xf32>
    %cst_99 = arith.constant dense<0.000000e+00> : vector<2x256xf32>
    %512 = tpu.matmul %511, %510, %cst_99 {dimension_numbers = #tpu.dot_dimension_numbers<[1], [0], [0], [1], [0, 0, 1, 1], [], []>} : vector<2x11xf32>, vector<11x256xf32>, vector<2x256xf32> -> vector<2x256xf32>
    %c0_100 = arith.constant 0 : index
    %c0_101 = arith.constant 0 : index
    %513 = vector.load %arg31[%c0_100, %c0_101] : memref<257x64xf32, #tpu.memory_space<vmem>>, vector<257x64xf32>
    %514 = vector.extract_strided_slice %513 {offsets = [0, 0], sizes = [256, 64], strides = [1, 1]} : vector<257x64xf32> to vector<256x64xf32>
    %cst_102 = arith.constant dense<0.000000e+00> : vector<2x64xf32>
    %515 = tpu.matmul %512, %514, %cst_102 {dimension_numbers = #tpu.dot_dimension_numbers<[1], [0], [0], [1], [0, 0, 1, 1], [], []>} : vector<2x256xf32>, vector<256x64xf32>, vector<2x64xf32> -> vector<2x64xf32>
    %516 = vector.extract_strided_slice %513 {offsets = [256, 0], sizes = [1, 64], strides = [1, 1]} : vector<257x64xf32> to vector<1x64xf32>
    %517 = vector.broadcast %516 : vector<1x64xf32> to vector<2x64xf32>
    %518 = arith.addf %515, %517 : vector<2x64xf32>
    %cst_103 = arith.constant 0.000000e+00 : f32
    %519 = vector.broadcast %cst_103 : f32 to vector<2x64xf32>
    %520 = arith.maximumf %518, %519 : vector<2x64xf32>
    %c0_104 = arith.constant 0 : index
    %c0_105 = arith.constant 0 : index
    %521 = vector.load %arg32[%c0_104, %c0_105] : memref<65x64xf32, #tpu.memory_space<vmem>>, vector<65x64xf32>
    %522 = vector.extract_strided_slice %521 {offsets = [0, 0], sizes = [64, 64], strides = [1, 1]} : vector<65x64xf32> to vector<64x64xf32>
    %cst_106 = arith.constant dense<0.000000e+00> : vector<2x64xf32>
    %523 = tpu.matmul %520, %522, %cst_106 {dimension_numbers = #tpu.dot_dimension_numbers<[1], [0], [0], [1], [0, 0, 1, 1], [], []>} : vector<2x64xf32>, vector<64x64xf32>, vector<2x64xf32> -> vector<2x64xf32>
    %524 = vector.extract_strided_slice %521 {offsets = [64, 0], sizes = [1, 64], strides = [1, 1]} : vector<65x64xf32> to vector<1x64xf32>
    %525 = vector.broadcast %524 : vector<1x64xf32> to vector<2x64xf32>
    %526 = arith.addf %523, %525 : vector<2x64xf32>
    %cst_107 = arith.constant 0.000000e+00 : f32
    %527 = vector.broadcast %cst_107 : f32 to vector<2x64xf32>
    %528 = arith.maximumf %526, %527 : vector<2x64xf32>
    %c0_108 = arith.constant 0 : index
    %c0_109 = arith.constant 0 : index
    %529 = vector.load %arg33[%c0_108, %c0_109] : memref<129x64xf32, #tpu.memory_space<vmem>>, vector<129x64xf32>
    %530 = vector.extract_strided_slice %529 {offsets = [0, 0], sizes = [64, 64], strides = [1, 1]} : vector<129x64xf32> to vector<64x64xf32>
    %cst_110 = arith.constant dense<0.000000e+00> : vector<2x64xf32>
    %531 = tpu.matmul %236, %530, %cst_110 {dimension_numbers = #tpu.dot_dimension_numbers<[1], [0], [0], [1], [0, 0, 1, 1], [], []>} : vector<2x64xf32>, vector<64x64xf32>, vector<2x64xf32> -> vector<2x64xf32>
    %532 = vector.extract_strided_slice %529 {offsets = [64, 0], sizes = [64, 64], strides = [1, 1]} : vector<129x64xf32> to vector<64x64xf32>
    %cst_111 = arith.constant dense<0.000000e+00> : vector<2x64xf32>
    %533 = tpu.matmul %528, %532, %cst_111 {dimension_numbers = #tpu.dot_dimension_numbers<[1], [0], [0], [1], [0, 0, 1, 1], [], []>} : vector<2x64xf32>, vector<64x64xf32>, vector<2x64xf32> -> vector<2x64xf32>
    %534 = arith.addf %531, %533 : vector<2x64xf32>
    %535 = vector.extract_strided_slice %529 {offsets = [128, 0], sizes = [1, 64], strides = [1, 1]} : vector<129x64xf32> to vector<1x64xf32>
    %536 = vector.broadcast %535 : vector<1x64xf32> to vector<2x64xf32>
    %537 = arith.addf %534, %536 : vector<2x64xf32>
    %cst_112 = arith.constant 0.000000e+00 : f32
    %538 = vector.broadcast %cst_112 : f32 to vector<2x64xf32>
    %539 = arith.maximumf %537, %538 : vector<2x64xf32>
    %c0_113 = arith.constant 0 : index
    %c0_114 = arith.constant 0 : index
    %540 = vector.load %arg34[%c0_113, %c0_114] : memref<65x10xf32, #tpu.memory_space<vmem>>, vector<65x10xf32>
    %541 = vector.extract_strided_slice %540 {offsets = [0, 0], sizes = [64, 10], strides = [1, 1]} : vector<65x10xf32> to vector<64x10xf32>
    %cst_115 = arith.constant dense<0.000000e+00> : vector<2x10xf32>
    %542 = tpu.matmul %539, %541, %cst_115 {dimension_numbers = #tpu.dot_dimension_numbers<[1], [0], [0], [1], [0, 0, 1, 1], [], []>} : vector<2x64xf32>, vector<64x10xf32>, vector<2x10xf32> -> vector<2x10xf32>
    %543 = vector.extract_strided_slice %540 {offsets = [64, 0], sizes = [1, 10], strides = [1, 1]} : vector<65x10xf32> to vector<1x10xf32>
    %544 = vector.broadcast %543 : vector<1x10xf32> to vector<2x10xf32>
    %545 = arith.addf %542, %544 : vector<2x10xf32>
    %c0_116 = arith.constant 0 : index
    %c0_117 = arith.constant 0 : index
    %546 = vector.load %arg35[%c0_116, %c0_117] : memref<2x10xf32, #tpu.memory_space<vmem>>, vector<2x10xf32>
    tpu.vector_store %arg35[%c0_116, %c0_117], %545 {strides = array<i32>} : memref<2x10xf32, #tpu.memory_space<vmem>>, vector<2x10xf32>,
    return
  }
}

</mosaic_0001>

<llo_original>
// kernel: classifier_forward.1
$region0: #{classifier_forward.1}
  #allocation0 [shape = 'u32[]', space=smem, size = 0x4, offset = 0x4, fixed_abs, tag = 'smem constant byte address 0x4 - core index']
  #allocation1 [shape = 'u32[144,128]{1,0:T(1,128)}', space=vmem, size = 0x12000, scoped, tag = 'internal scratch']
  %s0 = inlined_call_operand.smem [shape: u32[36], index: -1, kind: input, shape index: {}]
  %s1 = sld [smem:[%s0]]
  %s2 = scalar_lea.smem %s0, 1
  %s3 = sld [smem:[%s2]]
  %s4 = scalar_lea.smem %s0, 2
  %s5 = sld [smem:[%s4]]
  %s6 = scalar_lea.smem %s0, 3
  %s7 = sld [smem:[%s6]]
  %s8 = scalar_lea.smem %s0, 4
  %s9 = sld [smem:[%s8]]
  %s10 = scalar_lea.smem %s0, 5
  %s11 = sld [smem:[%s10]]
  %s12 = scalar_lea.smem %s0, 6
  %s13 = sld [smem:[%s12]]
  %s14 = scalar_lea.smem %s0, 7
  %s15 = sld [smem:[%s14]]
  %s16 = scalar_lea.smem %s0, 8
  %s17 = sld [smem:[%s16]]
  %s18 = scalar_lea.smem %s0, 9
  %s19 = sld [smem:[%s18]]
  %s20 = scalar_lea.smem %s0, 10
  %s21 = sld [smem:[%s20]]
  %s22 = scalar_lea.smem %s0, 11
  %s23 = sld [smem:[%s22]]
  %s24 = scalar_lea.smem %s0, 12
  %s25 = sld [smem:[%s24]]
  %s26 = scalar_lea.smem %s0, 13
  %s27 = sld [smem:[%s26]]
  %s28 = scalar_lea.smem %s0, 14
  %s29 = sld [smem:[%s28]]
  %s30 = scalar_lea.smem %s0, 15
  %s31 = sld [smem:[%s30]]
  %s32 = scalar_lea.smem %s0, 16
  %s33 = sld [smem:[%s32]]
  %s34 = scalar_lea.smem %s0, 17
  %s35 = sld [smem:[%s34]]
  %s36 = scalar_lea.smem %s0, 18
  %s37 = sld [smem:[%s36]]
  %s38 = scalar_lea.smem %s0, 19
  %s39 = sld [smem:[%s38]]
  %s40 = scalar_lea.smem %s0, 20
  %s41 = sld [smem:[%s40]]
  %s42 = scalar_lea.smem %s0, 21
  %s43 = sld [smem:[%s42]]
  %s44 = scalar_lea.smem %s0, 22
  %s45 = sld [smem:[%s44]]
  %s46 = scalar_lea.smem %s0, 23
  %s47 = sld [smem:[%s46]]
  %s48 = scalar_lea.smem %s0, 24
  %s49 = sld [smem:[%s48]]
  %s50 = scalar_lea.smem %s0, 25
  %s51 = sld [smem:[%s50]]
  %s52 = scalar_lea.smem %s0, 26
  %s53 = sld [smem:[%s52]]
  %s54 = scalar_lea.smem %s0, 27
  %s55 = sld [smem:[%s54]]
  %s56 = scalar_lea.smem %s0, 28
  %s57 = sld [smem:[%s56]]
  %s58 = scalar_lea.smem %s0, 29
  %s59 = sld [smem:[%s58]]
  %s60 = scalar_lea.smem %s0, 30
  %s61 = sld [smem:[%s60]]
  %s62 = scalar_lea.smem %s0, 31
  %s63 = sld [smem:[%s62]]
  %s64 = scalar_lea.smem %s0, 32
  %s65 = sld [smem:[%s64]]
  %s66 = scalar_lea.smem %s0, 33
  %s67 = sld [smem:[%s66]]
  %s68 = scalar_lea.smem %s0, 34
  %s69 = sld [smem:[%s68]]
  %s70 = scalar_lea.smem %s0, 35
  %s71 = sld [smem:[%s70]]
  %s72 = sld [smem:[#allocation0]]
  $region170: #{classifier_forward.1} parent=0
    _
  %s74 = ssub.s32 1, %s72
  %s75 = scalar_select 0, %s74, %s72
  $region1: #{classifier_forward.1} parent=0
    #allocation2 [shape = 'u8[4096]{0}', space=vmem, size = 0x1000, scoped, tag = 'input window, operand 15, single buffered']
    #allocation3 [shape = 's32[1]{0}', space=sflag, size = 0x4, scoped, tag = 'scoped memory for classifier_forward.1']
    #allocation4 [shape = 's32[1]{0}', space=sflag, size = 0x4, scoped, tag = 'scoped memory for classifier_forward.1']
    #allocation5 [shape = 'u8[8192]{0}', space=vmem, size = 0x2000, scoped, tag = 'input window, operand 17, single buffered']
    #allocation6 [shape = 's32[1]{0}', space=sflag, size = 0x4, scoped, tag = 'scoped memory for classifier_forward.1']
    #allocation7 [shape = 'u8[8192]{0}', space=vmem, size = 0x2000, scoped, tag = 'input window, operand 20, single buffered']
    #allocation8 [shape = 'u8[8192]{0}', space=vmem, size = 0x2000, scoped, tag = 'input window, operand 23, single buffered']
    #allocation9 [shape = 's32[1]{0}', space=sflag, size = 0x4, scoped, tag = 'scoped memory for classifier_forward.1']
    #allocation10 [shape = 'u8[8192]{0}', space=vmem, size = 0x2000, scoped, tag = 'input window, operand 26, single buffered']
    #allocation11 [shape = 'u8[1024]{0}', space=vmem, size = 0x400, scoped, tag = 'output window, operand 0, single buffered']
    %76 = vsyncpa [#allocation3], 0
    %77 = vsyncpa [#allocation6], 0
    %78 = vsyncpa [#allocation9], 0
    %79 = vsyncpa [#allocation4], 0
    // Predicated region
    $region2: #{classifier_forward.1} parent=1 // pred_check
      _
    $region3: #{classifier_forward.1} parent=1 // pred_check_branch
      %81 = sbr.rel (0) target = $region5
    $region4: #{classifier_forward.1} parent=1 // pred_region
      _
    $region5: #{classifier_forward.1} parent=1 // pred_fallthru
      _
    // Predicated region
    $region6: #{classifier_forward.1} parent=1 // pred_check
      _
    $region7: #{classifier_forward.1} parent=1 // pred_check_branch
      %83 = sbr.rel (0) target = $region9
    $region8: #{classifier_forward.1} parent=1 // pred_region
      _
    $region9: #{classifier_forward.1} parent=1 // pred_fallthru
      _
    // Predicated region
    $region10: #{classifier_forward.1} parent=1 // pred_check
      _
    $region11: #{classifier_forward.1} parent=1 // pred_check_branch
      %85 = sbr.rel (0) target = $region13
    $region12: #{classifier_forward.1} parent=1 // pred_region
      _
    $region13: #{classifier_forward.1} parent=1 // pred_fallthru
      _
    // Predicated region
    $region14: #{classifier_forward.1} parent=1 // pred_check
      _
    $region15: #{classifier_forward.1} parent=1 // pred_check_branch
      %87 = sbr.rel (0) target = $region17
    $region16: #{classifier_forward.1} parent=1 // pred_region
      _
    $region17: #{classifier_forward.1} parent=1 // pred_fallthru
      _
    // Predicated region
    $region18: #{classifier_forward.1} parent=1 // pred_check
      _
    $region19: #{classifier_forward.1} parent=1 // pred_check_branch
      %89 = sbr.rel (0) target = $region21
    $region20: #{classifier_forward.1} parent=1 // pred_region
      _
    $region21: #{classifier_forward.1} parent=1 // pred_fallthru
      _
    // Predicated region
    $region22: #{classifier_forward.1} parent=1 // pred_check
      _
    $region23: #{classifier_forward.1} parent=1 // pred_check_branch
      %91 = sbr.rel (0) target = $region25
    $region24: #{classifier_forward.1} parent=1 // pred_region
      _
    $region25: #{classifier_forward.1} parent=1 // pred_fallthru
      _
    // Predicated region
    $region26: #{classifier_forward.1} parent=1 // pred_check
      _
    $region27: #{classifier_forward.1} parent=1 // pred_check_branch
      %93 = sbr.rel (0) target = $region29
    $region28: #{classifier_forward.1} parent=1 // pred_region
      _
    $region29: #{classifier_forward.1} parent=1 // pred_fallthru
      _
    // Predicated region
    $region30: #{classifier_forward.1} parent=1 // pred_check
      _
    $region31: #{classifier_forward.1} parent=1 // pred_check_branch
      %95 = sbr.rel (0) target = $region33
    $region32: #{classifier_forward.1} parent=1 // pred_region
      _
    $region33: #{classifier_forward.1} parent=1 // pred_fallthru
      _
    // Predicated region
    $region34: #{classifier_forward.1} parent=1 // pred_check
      _
    $region35: #{classifier_forward.1} parent=1 // pred_check_branch
      %97 = sbr.rel (0) target = $region37
    $region36: #{classifier_forward.1} parent=1 // pred_region
      _
    $region37: #{classifier_forward.1} parent=1 // pred_fallthru
      _
    // Predicated region
    $region38: #{classifier_forward.1} parent=1 // pred_check
      _
    $region39: #{classifier_forward.1} parent=1 // pred_check_branch
      %99 = sbr.rel (0) target = $region41
    $region40: #{classifier_forward.1} parent=1 // pred_region
      _
    $region41: #{classifier_forward.1} parent=1 // pred_fallthru
      _
    // Predicated region
    $region42: #{classifier_forward.1} parent=1 // pred_check
      _
    $region43: #{classifier_forward.1} parent=1 // pred_check_branch
      %101 = sbr.rel (0) target = $region45
    $region44: #{classifier_forward.1} parent=1 // pred_region
      _
    $region45: #{classifier_forward.1} parent=1 // pred_fallthru
      _
    // Predicated region
    $region46: #{classifier_forward.1} parent=1 // pred_check
      _
    $region47: #{classifier_forward.1} parent=1 // pred_check_branch
      %103 = sbr.rel (0) target = $region49
    $region48: #{classifier_forward.1} parent=1 // pred_region
      _
    $region49: #{classifier_forward.1} parent=1 // pred_fallthru
      _
    // Predicated region
    $region50: #{classifier_forward.1} parent=1 // pred_check
      _
    $region51: #{classifier_forward.1} parent=1 // pred_check_branch
      %105 = sbr.rel (0) target = $region53
    $region52: #{classifier_forward.1} parent=1 // pred_region
      _
    $region53: #{classifier_forward.1} parent=1 // pred_fallthru
      _
    // Predicated region
    $region54: #{classifier_forward.1} parent=1 // pred_check
      _
    $region55: #{classifier_forward.1} parent=1 // pred_check_branch
      %107 = sbr.rel (0) target = $region57
    $region56: #{classifier_forward.1} parent=1 // pred_region
      _
    $region57: #{classifier_forward.1} parent=1 // pred_fallthru
      _
    // Predicated region
    $region58: #{classifier_forward.1} parent=1 // pred_check
      _
    $region59: #{classifier_forward.1} parent=1 // pred_check_branch
      %109 = sbr.rel (0) target = $region61
    $region60: #{classifier_forward.1} parent=1 // pred_region
      _
    $region61: #{classifier_forward.1} parent=1 // pred_fallthru
      _
    // Predicated region
    $region62: #{classifier_forward.1} parent=1 // pred_check
      _
    $region63: #{classifier_forward.1} parent=1 // pred_check_branch
      %111 = sbr.rel (0) target = $region65
    $region64: #{classifier_forward.1} parent=1 // pred_region
      %s113 = ssub.s32 128, 128
      %114 = vsyncadd [#allocation3], %s113
      %s116 = sshll.u32 [#allocation2], 4
      %s117 = int_to_ptr.vmem [resolvable:$true] %s116
      %119 = dma.hbm_to_vmem [thread:$0]  %s31, 128, %s117, [#allocation3]
    $region65: #{classifier_forward.1} parent=1 // pred_fallthru
      _
    // Predicated region
    $region66: #{classifier_forward.1} parent=1 // pred_check
      _
    $region67: #{classifier_forward.1} parent=1 // pred_check_branch
      %121 = sbr.rel (0) target = $region69
    $region68: #{classifier_forward.1} parent=1 // pred_region
      _
    $region69: #{classifier_forward.1} parent=1 // pred_fallthru
      _
    // Predicated region
    $region70: #{classifier_forward.1} parent=1 // pred_check
      _
    $region71: #{classifier_forward.1} parent=1 // pred_check_branch
      %123 = sbr.rel (0) target = $region73
    $region72: #{classifier_forward.1} parent=1 // pred_region
      %s125 = ssub.s32 256, 256
      %126 = vsyncadd [#allocation6], %s125
      %s127 = sshll.u32 [#allocation5], 4
      %s128 = int_to_ptr.vmem [resolvable:$true] %s127
      %133 = dma.hbm_to_vmem [thread:$0]  %s35, 256, %s128, [#allocation6], 128, 128, 8
    $region73: #{classifier_forward.1} parent=1 // pred_fallthru
      _
    // Predicated region
    $region74: #{classifier_forward.1} parent=1 // pred_check
      _
    $region75: #{classifier_forward.1} parent=1 // pred_check_branch
      %135 = sbr.rel (0) target = $region77
    $region76: #{classifier_forward.1} parent=1 // pred_region
      _
    $region77: #{classifier_forward.1} parent=1 // pred_fallthru
      _
    // Predicated region
    $region78: #{classifier_forward.1} parent=1 // pred_check
      _
    $region79: #{classifier_forward.1} parent=1 // pred_check_branch
      %137 = sbr.rel (0) target = $region81
    $region80: #{classifier_forward.1} parent=1 // pred_region
      _
    $region81: #{classifier_forward.1} parent=1 // pred_fallthru
      _
    // Predicated region
    $region82: #{classifier_forward.1} parent=1 // pred_check
      _
    $region83: #{classifier_forward.1} parent=1 // pred_check_branch
      %139 = sbr.rel (0) target = $region85
    $region84: #{classifier_forward.1} parent=1 // pred_region
      %s141 = ssub.s32 256, 256
      %142 = vsyncadd [#allocation6], %s141
      %s143 = sshll.u32 [#allocation7], 4
      %s144 = int_to_ptr.vmem [resolvable:$true] %s143
      %149 = dma.hbm_to_vmem [thread:$0]  %s41, 256, %s144, [#allocation6], 128, 128, 8
    $region85: #{classifier_forward.1} parent=1 // pred_fallthru
      _
    // Predicated region
    $region86: #{classifier_forward.1} parent=1 // pred_check
      _
    $region87: #{classifier_forward.1} parent=1 // pred_check_branch
      %151 = sbr.rel (0) target = $region89
    $region88: #{classifier_forward.1} parent=1 // pred_region
      _
    $region89: #{classifier_forward.1} parent=1 // pred_fallthru
      _
    // Predicated region
    $region90: #{classifier_forward.1} parent=1 // pred_check
      _
    $region91: #{classifier_forward.1} parent=1 // pred_check_branch
      %153 = sbr.rel (0) target = $region93
    $region92: #{classifier_forward.1} parent=1 // pred_region
      _
    $region93: #{classifier_forward.1} parent=1 // pred_fallthru
      _
    // Predicated region
    $region94: #{classifier_forward.1} parent=1 // pred_check
      _
    $region95: #{classifier_forward.1} parent=1 // pred_check_branch
      %155 = sbr.rel (0) target = $region97
    $region96: #{classifier_forward.1} parent=1 // pred_region
      %s157 = ssub.s32 256, 256
      %158 = vsyncadd [#allocation9], %s157
      %s159 = sshll.u32 [#allocation8], 4
      %s160 = int_to_ptr.vmem [resolvable:$true] %s159
      %165 = dma.hbm_to_vmem [thread:$0]  %s47, 256, %s160, [#allocation9], 128, 128, 8
    $region97: #{classifier_forward.1} parent=1 // pred_fallthru
      _
    // Predicated region
    $region98: #{classifier_forward.1} parent=1 // pred_check
      _
    $region99: #{classifier_forward.1} parent=1 // pred_check_branch
      %167 = sbr.rel (0) target = $region101
    $region100: #{classifier_forward.1} parent=1 // pred_region
      _
    $region101: #{classifier_forward.1} parent=1 // pred_fallthru
      _
    // Predicated region
    $region102: #{classifier_forward.1} parent=1 // pred_check
      _
    $region103: #{classifier_forward.1} parent=1 // pred_check_branch
      %169 = sbr.rel (0) target = $region105
    $region104: #{classifier_forward.1} parent=1 // pred_region
      _
    $region105: #{classifier_forward.1} parent=1 // pred_fallthru
      _
    // Predicated region
    $region106: #{classifier_forward.1} parent=1 // pred_check
      _
    $region107: #{classifier_forward.1} parent=1 // pred_check_branch
      %171 = sbr.rel (0) target = $region109
    $region108: #{classifier_forward.1} parent=1 // pred_region
      %s173 = ssub.s32 256, 256
      %174 = vsyncadd [#allocation9], %s173
      %s175 = sshll.u32 [#allocation10], 4
      %s176 = int_to_ptr.vmem [resolvable:$true] %s175
      %181 = dma.hbm_to_vmem [thread:$0]  %s53, 256, %s176, [#allocation9], 128, 128, 8
    $region109: #{classifier_forward.1} parent=1 // pred_fallthru
      _
    // Predicated region
    $region110: #{classifier_forward.1} parent=1 // pred_check
      _
    $region111: #{classifier_forward.1} parent=1 // pred_check_branch
      %183 = sbr.rel (0) target = $region113
    $region112: #{classifier_forward.1} parent=1 // pred_region
      _
    $region113: #{classifier_forward.1} parent=1 // pred_fallthru
      _
    // Predicated region
    $region114: #{classifier_forward.1} parent=1 // pred_check
      _
    $region115: #{classifier_forward.1} parent=1 // pred_check_branch
      %185 = sbr.rel (0) target = $region117
    $region116: #{classifier_forward.1} parent=1 // pred_region
      _
    $region117: #{classifier_forward.1} parent=1 // pred_fallthru
      _
    // Predicated region
    $region118: #{classifier_forward.1} parent=1 // pred_check
      _
    $region119: #{classifier_forward.1} parent=1 // pred_check_branch
      %187 = sbr.rel (0) target = $region121
    $region120: #{classifier_forward.1} parent=1 // pred_region
      _
    $region121: #{classifier_forward.1} parent=1 // pred_fallthru
      _
    // Predicated region
    $region122: #{classifier_forward.1} parent=1 // pred_check
      _
    $region123: #{classifier_forward.1} parent=1 // pred_check_branch
      %189 = sbr.rel (0) target = $region125
    $region124: #{classifier_forward.1} parent=1 // pred_region
      _
    $region125: #{classifier_forward.1} parent=1 // pred_fallthru
      _
    // Predicated region
    $region126: #{classifier_forward.1} parent=1 // pred_check
      _
    $region127: #{classifier_forward.1} parent=1 // pred_check_branch
      %191 = sbr.rel (0) target = $region129
    $region128: #{classifier_forward.1} parent=1 // pred_region
      _
    $region129: #{classifier_forward.1} parent=1 // pred_fallthru
      _
    // Predicated region
    $region130: #{classifier_forward.1} parent=1 // pred_check
      _
    $region131: #{classifier_forward.1} parent=1 // pred_check_branch
      %193 = sbr.rel (0) target = $region133
    $region132: #{classifier_forward.1} parent=1 // pred_region
      _
    $region133: #{classifier_forward.1} parent=1 // pred_fallthru
      _
    // Predicated region
    $region134: #{classifier_forward.1} parent=1 // pred_check
      _
    $region135: #{classifier_forward.1} parent=1 // pred_check_branch
      %195 = sbr.rel (0) target = $region137
    $region136: #{classifier_forward.1} parent=1 // pred_region
      _
    $region137: #{classifier_forward.1} parent=1 // pred_fallthru
      _
    // Predicated region
    $region138: #{classifier_forward.1} parent=1 // pred_check
      _
    $region139: #{classifier_forward.1} parent=1 // pred_check_branch
      %197 = sbr.rel (0) target = $region141
    $region140: #{classifier_forward.1} parent=1 // pred_region
      _
    $region141: #{classifier_forward.1} parent=1 // pred_fallthru
      _
    // Predicated region
    $region142: #{classifier_forward.1} parent=1 // pred_check
      _
    $region143: #{classifier_forward.1} parent=1 // pred_check_branch
      %199 = sbr.rel (0) target = $region145
    $region144: #{classifier_forward.1} parent=1 // pred_region
      %200 = dma.done [#allocation3], 128
    $region145: #{classifier_forward.1} parent=1 // pred_fallthru
      _
    // Predicated region
    $region146: #{classifier_forward.1} parent=1 // pred_check
      _
    $region147: #{classifier_forward.1} parent=1 // pred_check_branch
      %202 = sbr.rel (0) target = $region149
    $region148: #{classifier_forward.1} parent=1 // pred_region
      %203 = dma.done [#allocation6], 256
    $region149: #{classifier_forward.1} parent=1 // pred_fallthru
      _
    // Predicated region
    $region150: #{classifier_forward.1} parent=1 // pred_check
      _
    $region151: #{classifier_forward.1} parent=1 // pred_check_branch
      %205 = sbr.rel (0) target = $region153
    $region152: #{classifier_forward.1} parent=1 // pred_region
      %206 = dma.done [#allocation6], 256
    $region153: #{classifier_forward.1} parent=1 // pred_fallthru
      _
    // Predicated region
    $region154: #{classifier_forward.1} parent=1 // pred_check
      _
    $region155: #{classifier_forward.1} parent=1 // pred_check_branch
      %208 = sbr.rel (0) target = $region157
    $region156: #{classifier_forward.1} parent=1 // pred_region
      %209 = dma.done [#allocation9], 256
    $region157: #{classifier_forward.1} parent=1 // pred_fallthru
      _
    // Predicated region
    $region158: #{classifier_forward.1} parent=1 // pred_check
      _
    $region159: #{classifier_forward.1} parent=1 // pred_check_branch
      %211 = sbr.rel (0) target = $region161
    $region160: #{classifier_forward.1} parent=1 // pred_region
      %212 = dma.done [#allocation9], 256
    $region161: #{classifier_forward.1} parent=1 // pred_fallthru
      _
    %v213 = vld [vmem:[%s1] sm:$0xff]
    %v214 = vld [vmem:[%s1 + $0x8] sm:$0xff]
    %v215 = vld [vmem:[%s1 + $0x10] sm:$0xff]
    %v216 = vld [vmem:[%s1 + $0x18] sm:$0xff]
    %v217 = vld [vmem:[%s1 + $0x20] sm:$0xff]
    %v218 = vld [vmem:[%s1 + $0x28] sm:$0xff]
    %v219 = vld [vmem:[%s1 + $0x30] sm:$0xff]
    %v220 = vld [vmem:[%s1 + $0x38] sm:$0xff]
    %v221 = vld [vmem:[%s1 + $0x40] sm:$0xff]
    %v222 = vld [vmem:[%s1 + $0x48] sm:$0xff]
    %v223 = vld [vmem:[%s1 + $0x50] sm:$0xff]
    %v224 = vld [vmem:[%s1 + $0x58] sm:$0xff]
    %v225 = vld [vmem:[%s1 + $0x60] sm:$0xff]
    %v226 = vld [vmem:[%s1 + $0x68] sm:$0xff]
    %v227 = vld [vmem:[%s1 + $0x70] sm:$0xff]
    %v228 = vld [vmem:[%s1 + $0x78] sm:$0xff]
    %v229 = vld [vmem:[%s1 + $0x80] sm:$0xff]
    %v230 = vld [vmem:[%s1 + $0x88] sm:$0xff]
    %v231 = vld [vmem:[%s1 + $0x90] sm:$0xff]
    %v232 = vld [vmem:[%s1 + $0x98] sm:$0xff]
    %v233 = vld [vmem:[%s1 + $0xa0] sm:$0xff]
    %v234 = vld [vmem:[%s1 + $0xa8] sm:$0xff]
    %v235 = vld [vmem:[%s1 + $0xb0] sm:$0xff]
    %v236 = vld [vmem:[%s1 + $0xb8] sm:$0xff]
    %v237 = vld [vmem:[%s1 + $0xc0] sm:$0xff]
    %v238 = vld [vmem:[%s1 + $0xc8] sm:$0xff]
    %v239 = vld [vmem:[%s1 + $0xd0] sm:$0xff]
    %v240 = vld [vmem:[%s1 + $0xd8] sm:$0xff]
    %v241 = vld [vmem:[%s1 + $0xe0] sm:$0xff]
    %v242 = vld [vmem:[%s1 + $0xe8] sm:$0xff]
    %v243 = vld [vmem:[%s1 + $0xf0] sm:$0xff]
    %v244 = vld [vmem:[%s1 + $0xf8] sm:$0xff]
    %v245 = vld [vmem:[%s1 + $0x100] sm:$0xff]
    %v246 = vld [vmem:[%s1 + $0x108] sm:$0xf]
    %v247 = vld [vmem:[%s5] sm:$0xff]
    %v248 = vld [vmem:[%s5 + $0x8] sm:$0x1]
    %v249 = vlaneseq
    %v250 = vshrl.u32 %v249, 7
    %v251 = vsub.s32 0, %v250
    %v252 = vrot.slane %v247, %v251
    %v253 = vmul.f32 %v252, %v213
    %v254 = vmul.f32 %v252, %v214
    %v255 = vmul.f32 %v252, %v215
    %v256 = vmul.f32 %v252, %v216
    %v257 = vmul.f32 %v252, %v217
    %v258 = vmul.f32 %v252, %v218
    %v259 = vmul.f32 %v252, %v219
    %v260 = vmul.f32 %v252, %v220
    %v261 = vmul.f32 %v252, %v221
    %v262 = vmul.f32 %v252, %v222
    %v263 = vmul.f32 %v252, %v223
    %v264 = vmul.f32 %v252, %v224
    %v265 = vmul.f32 %v252, %v225
    %v266 = vmul.f32 %v252, %v226
    %v267 = vmul.f32 %v252, %v227
    %v268 = vmul.f32 %v252, %v228
    %v269 = vmul.f32 %v252, %v229
    %v270 = vmul.f32 %v252, %v230
    %v271 = vmul.f32 %v252, %v231
    %v272 = vmul.f32 %v252, %v232
    %v273 = vmul.f32 %v252, %v233
    %v274 = vmul.f32 %v252, %v234
    %v275 = vmul.f32 %v252, %v235
    %v276 = vmul.f32 %v252, %v236
    %v277 = vmul.f32 %v252, %v237
    %v278 = vmul.f32 %v252, %v238
    %v279 = vmul.f32 %v252, %v239
    %v280 = vmul.f32 %v252, %v240
    %v281 = vmul.f32 %v252, %v241
    %v282 = vmul.f32 %v252, %v242
    %v283 = vmul.f32 %v252, %v243
    %v284 = vmul.f32 %v252, %v244
    %v285 = vmul.f32 %v252, %v245
    %v286 = vadd.f32 %v253, 0.0
    %v287 = vadd.f32 %v254, 0.0
    %v288 = vadd.f32 %v255, 0.0
    %v289 = vadd.f32 %v256, 0.0
    %v290 = vadd.f32 %v257, 0.0
    %v291 = vadd.f32 %v258, 0.0
    %v292 = vadd.f32 %v259, 0.0
    %v293 = vadd.f32 %v260, 0.0
    %v294 = vadd.f32 %v261, 0.0
    %v295 = vadd.f32 %v262, 0.0
    %v296 = vadd.f32 %v263, 0.0
    %v297 = vadd.f32 %v264, 0.0
    %v298 = vadd.f32 %v265, 0.0
    %v299 = vadd.f32 %v266, 0.0
    %v300 = vadd.f32 %v267, 0.0
    %v301 = vadd.f32 %v268, 0.0
    %v302 = vadd.f32 %v269, 0.0
    %v303 = vadd.f32 %v270, 0.0
    %v304 = vadd.f32 %v271, 0.0
    %v305 = vadd.f32 %v272, 0.0
    %v306 = vadd.f32 %v273, 0.0
    %v307 = vadd.f32 %v274, 0.0
    %v308 = vadd.f32 %v275, 0.0
    %v309 = vadd.f32 %v276, 0.0
    %v310 = vadd.f32 %v277, 0.0
    %v311 = vadd.f32 %v278, 0.0
    %v312 = vadd.f32 %v279, 0.0
    %v313 = vadd.f32 %v280, 0.0
    %v314 = vadd.f32 %v281, 0.0
    %v315 = vadd.f32 %v282, 0.0
    %v316 = vadd.f32 %v283, 0.0
    %v317 = vadd.f32 %v284, 0.0
    %v318 = vadd.f32 %v285, 0.0
    %v319 = vlaneseq
    %v320 = vshrl.u32 %v319, 7
    %v321 = vsub.s32 1, %v320
    %v322 = vrot.slane %v247, %v321
    %v323 = vmul.f32 %v322, %v213
    %v324 = vmul.f32 %v322, %v214
    %v325 = vmul.f32 %v322, %v215
    %v326 = vmul.f32 %v322, %v216
    %v327 = vmul.f32 %v322, %v217
    %v328 = vmul.f32 %v322, %v218
    %v329 = vmul.f32 %v322, %v219
    %v330 = vmul.f32 %v322, %v220
    %v331 = vmul.f32 %v322, %v221
    %v332 = vmul.f32 %v322, %v222
    %v333 = vmul.f32 %v322, %v223
    %v334 = vmul.f32 %v322, %v224
    %v335 = vmul.f32 %v322, %v225
    %v336 = vmul.f32 %v322, %v226
    %v337 = vmul.f32 %v322, %v227
    %v338 = vmul.f32 %v322, %v228
    %v339 = vmul.f32 %v322, %v229
    %v340 = vmul.f32 %v322, %v230
    %v341 = vmul.f32 %v322, %v231
    %v342 = vmul.f32 %v322, %v232
    %v343 = vmul.f32 %v322, %v233
    %v344 = vmul.f32 %v322, %v234
    %v345 = vmul.f32 %v322, %v235
    %v346 = vmul.f32 %v322, %v236
    %v347 = vmul.f32 %v322, %v237
    %v348 = vmul.f32 %v322, %v238
    %v349 = vmul.f32 %v322, %v239
    %v350 = vmul.f32 %v322, %v240
    %v351 = vmul.f32 %v322, %v241
    %v352 = vmul.f32 %v322, %v242
    %v353 = vmul.f32 %v322, %v243
    %v354 = vmul.f32 %v322, %v244
    %v355 = vmul.f32 %v322, %v245
    %vm389 = vcmask 1046528
    %v390 = vrot.slane %v323, 1
    %v391 = vrot.slane %v324, 1
    %v392 = vsel %vm389, %v390, %v391
    %v393 = vrot.slane %v325, 1
    %v394 = vsel %vm389, %v391, %v393
    %v395 = vrot.slane %v326, 1
    %v396 = vsel %vm389, %v393, %v395
    %v397 = vrot.slane %v327, 1
    %v398 = vsel %vm389, %v395, %v397
    %v399 = vrot.slane %v328, 1
    %v400 = vsel %vm389, %v397, %v399
    %v401 = vrot.slane %v329, 1
    %v402 = vsel %vm389, %v399, %v401
    %v403 = vrot.slane %v330, 1
    %v404 = vsel %vm389, %v401, %v403
    %v405 = vrot.slane %v331, 1
    %v406 = vsel %vm389, %v403, %v405
    %v407 = vrot.slane %v332, 1
    %v408 = vsel %vm389, %v405, %v407
    %v409 = vrot.slane %v333, 1
    %v410 = vsel %vm389, %v407, %v409
    %v411 = vrot.slane %v334, 1
    %v412 = vsel %vm389, %v409, %v411
    %v413 = vrot.slane %v335, 1
    %v414 = vsel %vm389, %v411, %v413
    %v415 = vrot.slane %v336, 1
    %v416 = vsel %vm389, %v413, %v415
    %v417 = vrot.slane %v337, 1
    %v418 = vsel %vm389, %v415, %v417
    %v419 = vrot.slane %v338, 1
    %v420 = vsel %vm389, %v417, %v419
    %v421 = vrot.slane %v339, 1
    %v422 = vsel %vm389, %v419, %v421
    %v423 = vrot.slane %v340, 1
    %v424 = vsel %vm389, %v421, %v423
    %v425 = vrot.slane %v341, 1
    %v426 = vsel %vm389, %v423, %v425
    %v427 = vrot.slane %v342, 1
    %v428 = vsel %vm389, %v425, %v427
    %v429 = vrot.slane %v343, 1
    %v430 = vsel %vm389, %v427, %v429
    %v431 = vrot.slane %v344, 1
    %v432 = vsel %vm389, %v429, %v431
    %v433 = vrot.slane %v345, 1
    %v434 = vsel %vm389, %v431, %v433
    %v435 = vrot.slane %v346, 1
    %v436 = vsel %vm389, %v433, %v435
    %v437 = vrot.slane %v347, 1
    %v438 = vsel %vm389, %v435, %v437
    %v439 = vrot.slane %v348, 1
    %v440 = vsel %vm389, %v437, %v439
    %v441 = vrot.slane %v349, 1
    %v442 = vsel %vm389, %v439, %v441
    %v443 = vrot.slane %v350, 1
    %v444 = vsel %vm389, %v441, %v443
    %v445 = vrot.slane %v351, 1
    %v446 = vsel %vm389, %v443, %v445
    %v447 = vrot.slane %v352, 1
    %v448 = vsel %vm389, %v445, %v447
    %v449 = vrot.slane %v353, 1
    %v450 = vsel %vm389, %v447, %v449
    %v451 = vrot.slane %v354, 1
    %v452 = vsel %vm389, %v449, %v451
    %v453 = vrot.slane %v355, 1
    %v454 = vsel %vm389, %v451, %v453
    %v488 = vadd.f32 %v286, %v392
    %v489 = vadd.f32 %v287, %v394
    %v490 = vadd.f32 %v288, %v396
    %v491 = vadd.f32 %v289, %v398
    %v492 = vadd.f32 %v290, %v400
    %v493 = vadd.f32 %v291, %v402
    %v494 = vadd.f32 %v292, %v404
    %v495 = vadd.f32 %v293, %v406
    %v496 = vadd.f32 %v294, %v408
    %v497 = vadd.f32 %v295, %v410
    %v498 = vadd.f32 %v296, %v412
    %v499 = vadd.f32 %v297, %v414
    %v500 = vadd.f32 %v298, %v416
    %v501 = vadd.f32 %v299, %v418
    %v502 = vadd.f32 %v300, %v420
    %v503 = vadd.f32 %v301, %v422
    %v504 = vadd.f32 %v302, %v424
    %v505 = vadd.f32 %v303, %v426
    %v506 = vadd.f32 %v304, %v428
    %v507 = vadd.f32 %v305, %v430
    %v508 = vadd.f32 %v306, %v432
    %v509 = vadd.f32 %v307, %v434
    %v510 = vadd.f32 %v308, %v436
    %v511 = vadd.f32 %v309, %v438
    %v512 = vadd.f32 %v310, %v440
    %v513 = vadd.f32 %v311, %v442
    %v514 = vadd.f32 %v312, %v444
    %v515 = vadd.f32 %v313, %v446
    %v516 = vadd.f32 %v314, %v448
    %v517 = vadd.f32 %v315, %v450
    %v518 = vadd.f32 %v316, %v452
    %v519 = vadd.f32 %v317, %v454
    %v520 = vadd.f32 %v318, %v453
    %v521 = vlaneseq
    %v522 = vshrl.u32 %v521, 7
    %v523 = vsub.s32 2, %v522
    %v524 = vrot.slane %v247, %v523
    %v525 = vmul.f32 %v524, %v213
    %v526 = vmul.f32 %v524, %v214
    %v527 = vmul.f32 %v524, %v215
    %v528 = vmul.f32 %v524, %v216
    %v529 = vmul.f32 %v524, %v217
    %v530 = vmul.f32 %v524, %v218
    %v531 = vmul.f32 %v524, %v219
    %v532 = vmul.f32 %v524, %v220
    %v533 = vmul.f32 %v524, %v221
    %v534 = vmul.f32 %v524, %v222
    %v535 = vmul.f32 %v524, %v223
    %v536 = vmul.f32 %v524, %v224
    %v537 = vmul.f32 %v524, %v225
    %v538 = vmul.f32 %v524, %v226
    %v539 = vmul.f32 %v524, %v227
    %v540 = vmul.f32 %v524, %v228
    %v541 = vmul.f32 %v524, %v229
    %v542 = vmul.f32 %v524, %v230
    %v543 = vmul.f32 %v524, %v231
    %v544 = vmul.f32 %v524, %v232
    %v545 = vmul.f32 %v524, %v233
    %v546 = vmul.f32 %v524, %v234
    %v547 = vmul.f32 %v524, %v235
    %v548 = vmul.f32 %v524, %v236
    %v549 = vmul.f32 %v524, %v237
    %v550 = vmul.f32 %v524, %v238
    %v551 = vmul.f32 %v524, %v239
    %v552 = vmul.f32 %v524, %v240
    %v553 = vmul.f32 %v524, %v241
    %v554 = vmul.f32 %v524, %v242
    %v555 = vmul.f32 %v524, %v243
    %v556 = vmul.f32 %v524, %v244
    %v557 = vmul.f32 %v524, %v245
    %vm591 = vcmask 1045504
    %v592 = vrot.slane %v525, 2
    %v593 = vrot.slane %v526, 2
    %v594 = vsel %vm591, %v592, %v593
    %v595 = vrot.slane %v527, 2
    %v596 = vsel %vm591, %v593, %v595
    %v597 = vrot.slane %v528, 2
    %v598 = vsel %vm591, %v595, %v597
    %v599 = vrot.slane %v529, 2
    %v600 = vsel %vm591, %v597, %v599
    %v601 = vrot.slane %v530, 2
    %v602 = vsel %vm591, %v599, %v601
    %v603 = vrot.slane %v531, 2
    %v604 = vsel %vm591, %v601, %v603
    %v605 = vrot.slane %v532, 2
    %v606 = vsel %vm591, %v603, %v605
    %v607 = vrot.slane %v533, 2
    %v608 = vsel %vm591, %v605, %v607
    %v609 = vrot.slane %v534, 2
    %v610 = vsel %vm591, %v607, %v609
    %v611 = vrot.slane %v535, 2
    %v612 = vsel %vm591, %v609, %v611
    %v613 = vrot.slane %v536, 2
    %v614 = vsel %vm591, %v611, %v613
    %v615 = vrot.slane %v537, 2
    %v616 = vsel %vm591, %v613, %v615
    %v617 = vrot.slane %v538, 2
    %v618 = vsel %vm591, %v615, %v617
    %v619 = vrot.slane %v539, 2
    %v620 = vsel %vm591, %v617, %v619
    %v621 = vrot.slane %v540, 2
    %v622 = vsel %vm591, %v619, %v621
    %v623 = vrot.slane %v541, 2
    %v624 = vsel %vm591, %v621, %v623
    %v625 = vrot.slane %v542, 2
    %v626 = vsel %vm591, %v623, %v625
    %v627 = vrot.slane %v543, 2
    %v628 = vsel %vm591, %v625, %v627
    %v629 = vrot.slane %v544, 2
    %v630 = vsel %vm591, %v627, %v629
    %v631 = vrot.slane %v545, 2
    %v632 = vsel %vm591, %v629, %v631
    %v633 = vrot.slane %v546, 2
    %v634 = vsel %vm591, %v631, %v633
    %v635 = vrot.slane %v547, 2
    %v636 = vsel %vm591, %v633, %v635
    %v637 = vrot.slane %v548, 2
    %v638 = vsel %vm591, %v635, %v637
    %v639 = vrot.slane %v549, 2
    %v640 = vsel %vm591, %v637, %v639
    %v641 = vrot.slane %v550, 2
    %v642 = vsel %vm591, %v639, %v641
    %v643 = vrot.slane %v551, 2
    %v644 = vsel %vm591, %v641, %v643
    %v645 = vrot.slane %v552, 2
    %v646 = vsel %vm591, %v643, %v645
    %v647 = vrot.slane %v553, 2
    %v648 = vsel %vm591, %v645, %v647
    %v649 = vrot.slane %v554, 2
    %v650 = vsel %vm591, %v647, %v649
    %v651 = vrot.slane %v555, 2
    %v652 = vsel %vm591, %v649, %v651
    %v653 = vrot.slane %v556, 2
    %v654 = vsel %vm591, %v651, %v653
    %v655 = vrot.slane %v557, 2
    %v656 = vsel %vm591, %v653, %v655
    %v690 = vadd.f32 %v488, %v594
    %v691 = vadd.f32 %v489, %v596
    %v692 = vadd.f32 %v490, %v598
    %v693 = vadd.f32 %v491, %v600
    %v694 = vadd.f32 %v492, %v602
    %v695 = vadd.f32 %v493, %v604
    %v696 = vadd.f32 %v494, %v606
    %v697 = vadd.f32 %v495, %v608
    %v698 = vadd.f32 %v496, %v610
    %v699 = vadd.f32 %v497, %v612
    %v700 = vadd.f32 %v498, %v614
    %v701 = vadd.f32 %v499, %v616
    %v702 = vadd.f32 %v500, %v618
    %v703 = vadd.f32 %v501, %v620
    %v704 = vadd.f32 %v502, %v622
    %v705 = vadd.f32 %v503, %v624
    %v706 = vadd.f32 %v504, %v626
    %v707 = vadd.f32 %v505, %v628
    %v708 = vadd.f32 %v506, %v630
    %v709 = vadd.f32 %v507, %v632
    %v710 = vadd.f32 %v508, %v634
    %v711 = vadd.f32 %v509, %v636
    %v712 = vadd.f32 %v510, %v638
    %v713 = vadd.f32 %v511, %v640
    %v714 = vadd.f32 %v512, %v642
    %v715 = vadd.f32 %v513, %v644
    %v716 = vadd.f32 %v514, %v646
    %v717 = vadd.f32 %v515, %v648
    %v718 = vadd.f32 %v516, %v650
    %v719 = vadd.f32 %v517, %v652
    %v720 = vadd.f32 %v518, %v654
    %v721 = vadd.f32 %v519, %v656
    %v722 = vadd.f32 %v520, %v655
    %v723 = vlaneseq
    %v724 = vshrl.u32 %v723, 7
    %v725 = vsub.s32 3, %v724
    %v726 = vrot.slane %v247, %v725
    %v727 = vmul.f32 %v726, %v213
    %v728 = vmul.f32 %v726, %v214
    %v729 = vmul.f32 %v726, %v215
    %v730 = vmul.f32 %v726, %v216
    %v731 = vmul.f32 %v726, %v217
    %v732 = vmul.f32 %v726, %v218
    %v733 = vmul.f32 %v726, %v219
    %v734 = vmul.f32 %v726, %v220
    %v735 = vmul.f32 %v726, %v221
    %v736 = vmul.f32 %v726, %v222
    %v737 = vmul.f32 %v726, %v223
    %v738 = vmul.f32 %v726, %v224
    %v739 = vmul.f32 %v726, %v225
    %v740 = vmul.f32 %v726, %v226
    %v741 = vmul.f32 %v726, %v227
    %v742 = vmul.f32 %v726, %v228
    %v743 = vmul.f32 %v726, %v229
    %v744 = vmul.f32 %v726, %v230
    %v745 = vmul.f32 %v726, %v231
    %v746 = vmul.f32 %v726, %v232
    %v747 = vmul.f32 %v726, %v233
    %v748 = vmul.f32 %v726, %v234
    %v749 = vmul.f32 %v726, %v235
    %v750 = vmul.f32 %v726, %v236
    %v751 = vmul.f32 %v726, %v237
    %v752 = vmul.f32 %v726, %v238
    %v753 = vmul.f32 %v726, %v239
    %v754 = vmul.f32 %v726, %v240
    %v755 = vmul.f32 %v726, %v241
    %v756 = vmul.f32 %v726, %v242
    %v757 = vmul.f32 %v726, %v243
    %v758 = vmul.f32 %v726, %v244
    %v759 = vmul.f32 %v726, %v245
    %vm793 = vcmask 1044480
    %v794 = vrot.slane %v727, 3
    %v795 = vrot.slane %v728, 3
    %v796 = vsel %vm793, %v794, %v795
    %v797 = vrot.slane %v729, 3
    %v798 = vsel %vm793, %v795, %v797
    %v799 = vrot.slane %v730, 3
    %v800 = vsel %vm793, %v797, %v799
    %v801 = vrot.slane %v731, 3
    %v802 = vsel %vm793, %v799, %v801
    %v803 = vrot.slane %v732, 3
    %v804 = vsel %vm793, %v801, %v803
    %v805 = vrot.slane %v733, 3
    %v806 = vsel %vm793, %v803, %v805
    %v807 = vrot.slane %v734, 3
    %v808 = vsel %vm793, %v805, %v807
    %v809 = vrot.slane %v735, 3
    %v810 = vsel %vm793, %v807, %v809
    %v811 = vrot.slane %v736, 3
    %v812 = vsel %vm793, %v809, %v811
    %v813 = vrot.slane %v737, 3
    %v814 = vsel %vm793, %v811, %v813
    %v815 = vrot.slane %v738, 3
    %v816 = vsel %vm793, %v813, %v815
    %v817 = vrot.slane %v739, 3
    %v818 = vsel %vm793, %v815, %v817
    %v819 = vrot.slane %v740, 3
    %v820 = vsel %vm793, %v817, %v819
    %v821 = vrot.slane %v741, 3
    %v822 = vsel %vm793, %v819, %v821
    %v823 = vrot.slane %v742, 3
    %v824 = vsel %vm793, %v821, %v823
    %v825 = vrot.slane %v743, 3
    %v826 = vsel %vm793, %v823, %v825
    %v827 = vrot.slane %v744, 3
    %v828 = vsel %vm793, %v825, %v827
    %v829 = vrot.slane %v745, 3
    %v830 = vsel %vm793, %v827, %v829
    %v831 = vrot.slane %v746, 3
    %v832 = vsel %vm793, %v829, %v831
    %v833 = vrot.slane %v747, 3
    %v834 = vsel %vm793, %v831, %v833
    %v835 = vrot.slane %v748, 3
    %v836 = vsel %vm793, %v833, %v835
    %v837 = vrot.slane %v749, 3
    %v838 = vsel %vm793, %v835, %v837
    %v839 = vrot.slane %v750, 3
    %v840 = vsel %vm793, %v837, %v839
    %v841 = vrot.slane %v751, 3
    %v842 = vsel %vm793, %v839, %v841
    %v843 = vrot.slane %v752, 3
    %v844 = vsel %vm793, %v841, %v843
    %v845 = vrot.slane %v753, 3
    %v846 = vsel %vm793, %v843, %v845
    %v847 = vrot.slane %v754, 3
    %v848 = vsel %vm793, %v845, %v847
    %v849 = vrot.slane %v755, 3
    %v850 = vsel %vm793, %v847, %v849
    %v851 = vrot.slane %v756, 3
    %v852 = vsel %vm793, %v849, %v851
    %v853 = vrot.slane %v757, 3
    %v854 = vsel %vm793, %v851, %v853
    %v855 = vrot.slane %v758, 3
    %v856 = vsel %vm793, %v853, %v855
    %v857 = vrot.slane %v759, 3
    %v858 = vsel %vm793, %v855, %v857
    %v892 = vadd.f32 %v690, %v796
    %v893 = vadd.f32 %v691, %v798
    %v894 = vadd.f32 %v692, %v800
    %v895 = vadd.f32 %v693, %v802
    %v896 = vadd.f32 %v694, %v804
    %v897 = vadd.f32 %v695, %v806
    %v898 = vadd.f32 %v696, %v808
    %v899 = vadd.f32 %v697, %v810
    %v900 = vadd.f32 %v698, %v812
    %v901 = vadd.f32 %v699, %v814
    %v902 = vadd.f32 %v700, %v816
    %v903 = vadd.f32 %v701, %v818
    %v904 = vadd.f32 %v702, %v820
    %v905 = vadd.f32 %v703, %v822
    %v906 = vadd.f32 %v704, %v824
    %v907 = vadd.f32 %v705, %v826
    %v908 = vadd.f32 %v706, %v828
    %v909 = vadd.f32 %v707, %v830
    %v910 = vadd.f32 %v708, %v832
    %v911 = vadd.f32 %v709, %v834
    %v912 = vadd.f32 %v710, %v836
    %v913 = vadd.f32 %v711, %v838
    %v914 = vadd.f32 %v712, %v840
    %v915 = vadd.f32 %v713, %v842
    %v916 = vadd.f32 %v714, %v844
    %v917 = vadd.f32 %v715, %v846
    %v918 = vadd.f32 %v716, %v848
    %v919 = vadd.f32 %v717, %v850
    %v920 = vadd.f32 %v718, %v852
    %v921 = vadd.f32 %v719, %v854
    %v922 = vadd.f32 %v720, %v856
    %v923 = vadd.f32 %v721, %v858
    %v924 = vadd.f32 %v722, %v857
    %v925 = vlaneseq
    %v926 = vshrl.u32 %v925, 7
    %v927 = vsub.s32 4, %v926
    %v928 = vrot.slane %v247, %v927
    %v929 = vmul.f32 %v928, %v213
    %v930 = vmul.f32 %v928, %v214
    %v931 = vmul.f32 %v928, %v215
    %v932 = vmul.f32 %v928, %v216
    %v933 = vmul.f32 %v928, %v217
    %v934 = vmul.f32 %v928, %v218
    %v935 = vmul.f32 %v928, %v219
    %v936 = vmul.f32 %v928, %v220
    %v937 = vmul.f32 %v928, %v221
    %v938 = vmul.f32 %v928, %v222
    %v939 = vmul.f32 %v928, %v223
    %v940 = vmul.f32 %v928, %v224
    %v941 = vmul.f32 %v928, %v225
    %v942 = vmul.f32 %v928, %v226
    %v943 = vmul.f32 %v928, %v227
    %v944 = vmul.f32 %v928, %v228
    %v945 = vmul.f32 %v928, %v229
    %v946 = vmul.f32 %v928, %v230
    %v947 = vmul.f32 %v928, %v231
    %v948 = vmul.f32 %v928, %v232
    %v949 = vmul.f32 %v928, %v233
    %v950 = vmul.f32 %v928, %v234
    %v951 = vmul.f32 %v928, %v235
    %v952 = vmul.f32 %v928, %v236
    %v953 = vmul.f32 %v928, %v237
    %v954 = vmul.f32 %v928, %v238
    %v955 = vmul.f32 %v928, %v239
    %v956 = vmul.f32 %v928, %v240
    %v957 = vmul.f32 %v928, %v241
    %v958 = vmul.f32 %v928, %v242
    %v959 = vmul.f32 %v928, %v243
    %v960 = vmul.f32 %v928, %v244
    %v961 = vmul.f32 %v928, %v245
    %v962 = vmul.f32 %v928, %v246
    %vm997 = vcmask 1043456
    %v998 = vrot.slane %v929, 4
    %v999 = vrot.slane %v930, 4
    %v1000 = vsel %vm997, %v998, %v999
    %v1001 = vrot.slane %v931, 4
    %v1002 = vsel %vm997, %v999, %v1001
    %v1003 = vrot.slane %v932, 4
    %v1004 = vsel %vm997, %v1001, %v1003
    %v1005 = vrot.slane %v933, 4
    %v1006 = vsel %vm997, %v1003, %v1005
    %v1007 = vrot.slane %v934, 4
    %v1008 = vsel %vm997, %v1005, %v1007
    %v1009 = vrot.slane %v935, 4
    %v1010 = vsel %vm997, %v1007, %v1009
    %v1011 = vrot.slane %v936, 4
    %v1012 = vsel %vm997, %v1009, %v1011
    %v1013 = vrot.slane %v937, 4
    %v1014 = vsel %vm997, %v1011, %v1013
    %v1015 = vrot.slane %v938, 4
    %v1016 = vsel %vm997, %v1013, %v1015
    %v1017 = vrot.slane %v939, 4
    %v1018 = vsel %vm997, %v1015, %v1017
    %v1019 = vrot.slane %v940, 4
    %v1020 = vsel %vm997, %v1017, %v1019
    %v1021 = vrot.slane %v941, 4
    %v1022 = vsel %vm997, %v1019, %v1021
    %v1023 = vrot.slane %v942, 4
    %v1024 = vsel %vm997, %v1021, %v1023
    %v1025 = vrot.slane %v943, 4
    %v1026 = vsel %vm997, %v1023, %v1025
    %v1027 = vrot.slane %v944, 4
    %v1028 = vsel %vm997, %v1025, %v1027
    %v1029 = vrot.slane %v945, 4
    %v1030 = vsel %vm997, %v1027, %v1029
    %v1031 = vrot.slane %v946, 4
    %v1032 = vsel %vm997, %v1029, %v1031
    %v1033 = vrot.slane %v947, 4
    %v1034 = vsel %vm997, %v1031, %v1033
    %v1035 = vrot.slane %v948, 4
    %v1036 = vsel %vm997, %v1033, %v1035
    %v1037 = vrot.slane %v949, 4
    %v1038 = vsel %vm997, %v1035, %v1037
    %v1039 = vrot.slane %v950, 4
    %v1040 = vsel %vm997, %v1037, %v1039
    %v1041 = vrot.slane %v951, 4
    %v1042 = vsel %vm997, %v1039, %v1041
    %v1043 = vrot.slane %v952, 4
    %v1044 = vsel %vm997, %v1041, %v1043
    %v1045 = vrot.slane %v953, 4
    %v1046 = vsel %vm997, %v1043, %v1045
    %v1047 = vrot.slane %v954, 4
    %v1048 = vsel %vm997, %v1045, %v1047
    %v1049 = vrot.slane %v955, 4
    %v1050 = vsel %vm997, %v1047, %v1049
    %v1051 = vrot.slane %v956, 4
    %v1052 = vsel %vm997, %v1049, %v1051
    %v1053 = vrot.slane %v957, 4
    %v1054 = vsel %vm997, %v1051, %v1053
    %v1055 = vrot.slane %v958, 4
    %v1056 = vsel %vm997, %v1053, %v1055
    %v1057 = vrot.slane %v959, 4
    %v1058 = vsel %vm997, %v1055, %v1057
    %v1059 = vrot.slane %v960, 4
    %v1060 = vsel %vm997, %v1057, %v1059
    %v1061 = vrot.slane %v961, 4
    %v1062 = vsel %vm997, %v1059, %v1061
    %v1063 = vrot.slane %v962, 4
    %v1064 = vsel %vm997, %v1061, %v1063
    %v1098 = vadd.f32 %v892, %v1000
    %v1099 = vadd.f32 %v893, %v1002
    %v1100 = vadd.f32 %v894, %v1004
    %v1101 = vadd.f32 %v895, %v1006
    %v1102 = vadd.f32 %v896, %v1008
    %v1103 = vadd.f32 %v897, %v1010
    %v1104 = vadd.f32 %v898, %v1012
    %v1105 = vadd.f32 %v899, %v1014
    %v1106 = vadd.f32 %v900, %v1016
    %v1107 = vadd.f32 %v901, %v1018
    %v1108 = vadd.f32 %v902, %v1020
    %v1109 = vadd.f32 %v903, %v1022
    %v1110 = vadd.f32 %v904, %v1024
    %v1111 = vadd.f32 %v905, %v1026
    %v1112 = vadd.f32 %v906, %v1028
    %v1113 = vadd.f32 %v907, %v1030
    %v1114 = vadd.f32 %v908, %v1032
    %v1115 = vadd.f32 %v909, %v1034
    %v1116 = vadd.f32 %v910, %v1036
    %v1117 = vadd.f32 %v911, %v1038
    %v1118 = vadd.f32 %v912, %v1040
    %v1119 = vadd.f32 %v913, %v1042
    %v1120 = vadd.f32 %v914, %v1044
    %v1121 = vadd.f32 %v915, %v1046
    %v1122 = vadd.f32 %v916, %v1048
    %v1123 = vadd.f32 %v917, %v1050
    %v1124 = vadd.f32 %v918, %v1052
    %v1125 = vadd.f32 %v919, %v1054
    %v1126 = vadd.f32 %v920, %v1056
    %v1127 = vadd.f32 %v921, %v1058
    %v1128 = vadd.f32 %v922, %v1060
    %v1129 = vadd.f32 %v923, %v1062
    %v1130 = vadd.f32 %v924, %v1064
    %v1131 = vlaneseq
    %v1132 = vshrl.u32 %v1131, 7
    %v1133 = vsub.s32 5, %v1132
    %v1134 = vrot.slane %v247, %v1133
    %v1135 = vmul.f32 %v1134, %v213
    %v1136 = vmul.f32 %v1134, %v214
    %v1137 = vmul.f32 %v1134, %v215
    %v1138 = vmul.f32 %v1134, %v216
    %v1139 = vmul.f32 %v1134, %v217
    %v1140 = vmul.f32 %v1134, %v218
    %v1141 = vmul.f32 %v1134, %v219
    %v1142 = vmul.f32 %v1134, %v220
    %v1143 = vmul.f32 %v1134, %v221
    %v1144 = vmul.f32 %v1134, %v222
    %v1145 = vmul.f32 %v1134, %v223
    %v1146 = vmul.f32 %v1134, %v224
    %v1147 = vmul.f32 %v1134, %v225
    %v1148 = vmul.f32 %v1134, %v226
    %v1149 = vmul.f32 %v1134, %v227
    %v1150 = vmul.f32 %v1134, %v228
    %v1151 = vmul.f32 %v1134, %v229
    %v1152 = vmul.f32 %v1134, %v230
    %v1153 = vmul.f32 %v1134, %v231
    %v1154 = vmul.f32 %v1134, %v232
    %v1155 = vmul.f32 %v1134, %v233
    %v1156 = vmul.f32 %v1134, %v234
    %v1157 = vmul.f32 %v1134, %v235
    %v1158 = vmul.f32 %v1134, %v236
    %v1159 = vmul.f32 %v1134, %v237
    %v1160 = vmul.f32 %v1134, %v238
    %v1161 = vmul.f32 %v1134, %v239
    %v1162 = vmul.f32 %v1134, %v240
    %v1163 = vmul.f32 %v1134, %v241
    %v1164 = vmul.f32 %v1134, %v242
    %v1165 = vmul.f32 %v1134, %v243
    %v1166 = vmul.f32 %v1134, %v244
    %v1167 = vmul.f32 %v1134, %v245
    %v1168 = vmul.f32 %v1134, %v246
    %vm1203 = vcmask 1042432
    %v1204 = vrot.slane %v1135, 5
    %v1205 = vrot.slane %v1136, 5
    %v1206 = vsel %vm1203, %v1204, %v1205
    %v1207 = vrot.slane %v1137, 5
    %v1208 = vsel %vm1203, %v1205, %v1207
    %v1209 = vrot.slane %v1138, 5
    %v1210 = vsel %vm1203, %v1207, %v1209
    %v1211 = vrot.slane %v1139, 5
    %v1212 = vsel %vm1203, %v1209, %v1211
    %v1213 = vrot.slane %v1140, 5
    %v1214 = vsel %vm1203, %v1211, %v1213
    %v1215 = vrot.slane %v1141, 5
    %v1216 = vsel %vm1203, %v1213, %v1215
    %v1217 = vrot.slane %v1142, 5
    %v1218 = vsel %vm1203, %v1215, %v1217
    %v1219 = vrot.slane %v1143, 5
    %v1220 = vsel %vm1203, %v1217, %v1219
    %v1221 = vrot.slane %v1144, 5
    %v1222 = vsel %vm1203, %v1219, %v1221
    %v1223 = vrot.slane %v1145, 5
    %v1224 = vsel %vm1203, %v1221, %v1223
    %v1225 = vrot.slane %v1146, 5
    %v1226 = vsel %vm1203, %v1223, %v1225
    %v1227 = vrot.slane %v1147, 5
    %v1228 = vsel %vm1203, %v1225, %v1227
    %v1229 = vrot.slane %v1148, 5
    %v1230 = vsel %vm1203, %v1227, %v1229
    %v1231 = vrot.slane %v1149, 5
    %v1232 = vsel %vm1203, %v1229, %v1231
    %v1233 = vrot.slane %v1150, 5
    %v1234 = vsel %vm1203, %v1231, %v1233
    %v1235 = vrot.slane %v1151, 5
    %v1236 = vsel %vm1203, %v1233, %v1235
    %v1237 = vrot.slane %v1152, 5
    %v1238 = vsel %vm1203, %v1235, %v1237
    %v1239 = vrot.slane %v1153, 5
    %v1240 = vsel %vm1203, %v1237, %v1239
    %v1241 = vrot.slane %v1154, 5
    %v1242 = vsel %vm1203, %v1239, %v1241
    %v1243 = vrot.slane %v1155, 5
    %v1244 = vsel %vm1203, %v1241, %v1243
    %v1245 = vrot.slane %v1156, 5
    %v1246 = vsel %vm1203, %v1243, %v1245
    %v1247 = vrot.slane %v1157, 5
    %v1248 = vsel %vm1203, %v1245, %v1247
    %v1249 = vrot.slane %v1158, 5
    %v1250 = vsel %vm1203, %v1247, %v1249
    %v1251 = vrot.slane %v1159, 5
    %v1252 = vsel %vm1203, %v1249, %v1251
    %v1253 = vrot.slane %v1160, 5
    %v1254 = vsel %vm1203, %v1251, %v1253
    %v1255 = vrot.slane %v1161, 5
    %v1256 = vsel %vm1203, %v1253, %v1255
    %v1257 = vrot.slane %v1162, 5
    %v1258 = vsel %vm1203, %v1255, %v1257
    %v1259 = vrot.slane %v1163, 5
    %v1260 = vsel %vm1203, %v1257, %v1259
    %v1261 = vrot.slane %v1164, 5
    %v1262 = vsel %vm1203, %v1259, %v1261
    %v1263 = vrot.slane %v1165, 5
    %v1264 = vsel %vm1203, %v1261, %v1263
    %v1265 = vrot.slane %v1166, 5
    %v1266 = vsel %vm1203, %v1263, %v1265
    %v1267 = vrot.slane %v1167, 5
    %v1268 = vsel %vm1203, %v1265, %v1267
    %v1269 = vrot.slane %v1168, 5
    %v1270 = vsel %vm1203, %v1267, %v1269
    %v1304 = vadd.f32 %v1098, %v1206
    %v1305 = vadd.f32 %v1099, %v1208
    %v1306 = vadd.f32 %v1100, %v1210
    %v1307 = vadd.f32 %v1101, %v1212
    %v1308 = vadd.f32 %v1102, %v1214
    %v1309 = vadd.f32 %v1103, %v1216
    %v1310 = vadd.f32 %v1104, %v1218
    %v1311 = vadd.f32 %v1105, %v1220
    %v1312 = vadd.f32 %v1106, %v1222
    %v1313 = vadd.f32 %v1107, %v1224
    %v1314 = vadd.f32 %v1108, %v1226
    %v1315 = vadd.f32 %v1109, %v1228
    %v1316 = vadd.f32 %v1110, %v1230
    %v1317 = vadd.f32 %v1111, %v1232
    %v1318 = vadd.f32 %v1112, %v1234
    %v1319 = vadd.f32 %v1113, %v1236
    %v1320 = vadd.f32 %v1114, %v1238
    %v1321 = vadd.f32 %v1115, %v1240
    %v1322 = vadd.f32 %v1116, %v1242
    %v1323 = vadd.f32 %v1117, %v1244
    %v1324 = vadd.f32 %v1118, %v1246
    %v1325 = vadd.f32 %v1119, %v1248
    %v1326 = vadd.f32 %v1120, %v1250
    %v1327 = vadd.f32 %v1121, %v1252
    %v1328 = vadd.f32 %v1122, %v1254
    %v1329 = vadd.f32 %v1123, %v1256
    %v1330 = vadd.f32 %v1124, %v1258
    %v1331 = vadd.f32 %v1125, %v1260
    %v1332 = vadd.f32 %v1126, %v1262
    %v1333 = vadd.f32 %v1127, %v1264
    %v1334 = vadd.f32 %v1128, %v1266
    %v1335 = vadd.f32 %v1129, %v1268
    %v1336 = vadd.f32 %v1130, %v1270
    %v1337 = vlaneseq
    %v1338 = vshrl.u32 %v1337, 7
    %v1339 = vsub.s32 6, %v1338
    %v1340 = vrot.slane %v247, %v1339
    %v1341 = vmul.f32 %v1340, %v213
    %v1342 = vmul.f32 %v1340, %v214
    %v1343 = vmul.f32 %v1340, %v215
    %v1344 = vmul.f32 %v1340, %v216
    %v1345 = vmul.f32 %v1340, %v217
    %v1346 = vmul.f32 %v1340, %v218
    %v1347 = vmul.f32 %v1340, %v219
    %v1348 = vmul.f32 %v1340, %v220
    %v1349 = vmul.f32 %v1340, %v221
    %v1350 = vmul.f32 %v1340, %v222
    %v1351 = vmul.f32 %v1340, %v223
    %v1352 = vmul.f32 %v1340, %v224
    %v1353 = vmul.f32 %v1340, %v225
    %v1354 = vmul.f32 %v1340, %v226
    %v1355 = vmul.f32 %v1340, %v227
    %v1356 = vmul.f32 %v1340, %v228
    %v1357 = vmul.f32 %v1340, %v229
    %v1358 = vmul.f32 %v1340, %v230
    %v1359 = vmul.f32 %v1340, %v231
    %v1360 = vmul.f32 %v1340, %v232
    %v1361 = vmul.f32 %v1340, %v233
    %v1362 = vmul.f32 %v1340, %v234
    %v1363 = vmul.f32 %v1340, %v235
    %v1364 = vmul.f32 %v1340, %v236
    %v1365 = vmul.f32 %v1340, %v237
    %v1366 = vmul.f32 %v1340, %v238
    %v1367 = vmul.f32 %v1340, %v239
    %v1368 = vmul.f32 %v1340, %v240
    %v1369 = vmul.f32 %v1340, %v241
    %v1370 = vmul.f32 %v1340, %v242
    %v1371 = vmul.f32 %v1340, %v243
    %v1372 = vmul.f32 %v1340, %v244
    %v1373 = vmul.f32 %v1340, %v245
    %v1374 = vmul.f32 %v1340, %v246
    %vm1409 = vcmask 1041408
    %v1410 = vrot.slane %v1341, 6
    %v1411 = vrot.slane %v1342, 6
    %v1412 = vsel %vm1409, %v1410, %v1411
    %v1413 = vrot.slane %v1343, 6
    %v1414 = vsel %vm1409, %v1411, %v1413
    %v1415 = vrot.slane %v1344, 6
    %v1416 = vsel %vm1409, %v1413, %v1415
    %v1417 = vrot.slane %v1345, 6
    %v1418 = vsel %vm1409, %v1415, %v1417
    %v1419 = vrot.slane %v1346, 6
    %v1420 = vsel %vm1409, %v1417, %v1419
    %v1421 = vrot.slane %v1347, 6
    %v1422 = vsel %vm1409, %v1419, %v1421
    %v1423 = vrot.slane %v1348, 6
    %v1424 = vsel %vm1409, %v1421, %v1423
    %v1425 = vrot.slane %v1349, 6
    %v1426 = vsel %vm1409, %v1423, %v1425
    %v1427 = vrot.slane %v1350, 6
    %v1428 = vsel %vm1409, %v1425, %v1427
    %v1429 = vrot.slane %v1351, 6
    %v1430 = vsel %vm1409, %v1427, %v1429
    %v1431 = vrot.slane %v1352, 6
    %v1432 = vsel %vm1409, %v1429, %v1431
    %v1433 = vrot.slane %v1353, 6
    %v1434 = vsel %vm1409, %v1431, %v1433
    %v1435 = vrot.slane %v1354, 6
    %v1436 = vsel %vm1409, %v1433, %v1435
    %v1437 = vrot.slane %v1355, 6
    %v1438 = vsel %vm1409, %v1435, %v1437
    %v1439 = vrot.slane %v1356, 6
    %v1440 = vsel %vm1409, %v1437, %v1439
    %v1441 = vrot.slane %v1357, 6
    %v1442 = vsel %vm1409, %v1439, %v1441
    %v1443 = vrot.slane %v1358, 6
    %v1444 = vsel %vm1409, %v1441, %v1443
    %v1445 = vrot.slane %v1359, 6
    %v1446 = vsel %vm1409, %v1443, %v1445
    %v1447 = vrot.slane %v1360, 6
    %v1448 = vsel %vm1409, %v1445, %v1447
    %v1449 = vrot.slane %v1361, 6
    %v1450 = vsel %vm1409, %v1447, %v1449
    %v1451 = vrot.slane %v1362, 6
    %v1452 = vsel %vm1409, %v1449, %v1451
    %v1453 = vrot.slane %v1363, 6
    %v1454 = vsel %vm1409, %v1451, %v1453
    %v1455 = vrot.slane %v1364, 6
    %v1456 = vsel %vm1409, %v1453, %v1455
    %v1457 = vrot.slane %v1365, 6
    %v1458 = vsel %vm1409, %v1455, %v1457
    %v1459 = vrot.slane %v1366, 6
    %v1460 = vsel %vm1409, %v1457, %v1459
    %v1461 = vrot.slane %v1367, 6
    %v1462 = vsel %vm1409, %v1459, %v1461
    %v1463 = vrot.slane %v1368, 6
    %v1464 = vsel %vm1409, %v1461, %v1463
    %v1465 = vrot.slane %v1369, 6
    %v1466 = vsel %vm1409, %v1463, %v1465
    %v1467 = vrot.slane %v1370, 6
    %v1468 = vsel %vm1409, %v1465, %v1467
    %v1469 = vrot.slane %v1371, 6
    %v1470 = vsel %vm1409, %v1467, %v1469
    %v1471 = vrot.slane %v1372, 6
    %v1472 = vsel %vm1409, %v1469, %v1471
    %v1473 = vrot.slane %v1373, 6
    %v1474 = vsel %vm1409, %v1471, %v1473
    %v1475 = vrot.slane %v1374, 6
    %v1476 = vsel %vm1409, %v1473, %v1475
    %v1510 = vadd.f32 %v1304, %v1412
    %v1511 = vadd.f32 %v1305, %v1414
    %v1512 = vadd.f32 %v1306, %v1416
    %v1513 = vadd.f32 %v1307, %v1418
    %v1514 = vadd.f32 %v1308, %v1420
    %v1515 = vadd.f32 %v1309, %v1422
    %v1516 = vadd.f32 %v1310, %v1424
    %v1517 = vadd.f32 %v1311, %v1426
    %v1518 = vadd.f32 %v1312, %v1428
    %v1519 = vadd.f32 %v1313, %v1430
    %v1520 = vadd.f32 %v1314, %v1432
    %v1521 = vadd.f32 %v1315, %v1434
    %v1522 = vadd.f32 %v1316, %v1436
    %v1523 = vadd.f32 %v1317, %v1438
    %v1524 = vadd.f32 %v1318, %v1440
    %v1525 = vadd.f32 %v1319, %v1442
    %v1526 = vadd.f32 %v1320, %v1444
    %v1527 = vadd.f32 %v1321, %v1446
    %v1528 = vadd.f32 %v1322, %v1448
    %v1529 = vadd.f32 %v1323, %v1450
    %v1530 = vadd.f32 %v1324, %v1452
    %v1531 = vadd.f32 %v1325, %v1454
    %v1532 = vadd.f32 %v1326, %v1456
    %v1533 = vadd.f32 %v1327, %v1458
    %v1534 = vadd.f32 %v1328, %v1460
    %v1535 = vadd.f32 %v1329, %v1462
    %v1536 = vadd.f32 %v1330, %v1464
    %v1537 = vadd.f32 %v1331, %v1466
    %v1538 = vadd.f32 %v1332, %v1468
    %v1539 = vadd.f32 %v1333, %v1470
    %v1540 = vadd.f32 %v1334, %v1472
    %v1541 = vadd.f32 %v1335, %v1474
    %v1542 = vadd.f32 %v1336, %v1476
    %v1543 = vlaneseq
    %v1544 = vshrl.u32 %v1543, 7
    %v1545 = vsub.s32 7, %v1544
    %v1546 = vrot.slane %v247, %v1545
    %v1547 = vmul.f32 %v1546, %v213
    %v1548 = vmul.f32 %v1546, %v214
    %v1549 = vmul.f32 %v1546, %v215
    %v1550 = vmul.f32 %v1546, %v216
    %v1551 = vmul.f32 %v1546, %v217
    %v1552 = vmul.f32 %v1546, %v218
    %v1553 = vmul.f32 %v1546, %v219
    %v1554 = vmul.f32 %v1546, %v220
    %v1555 = vmul.f32 %v1546, %v221
    %v1556 = vmul.f32 %v1546, %v222
    %v1557 = vmul.f32 %v1546, %v223
    %v1558 = vmul.f32 %v1546, %v224
    %v1559 = vmul.f32 %v1546, %v225
    %v1560 = vmul.f32 %v1546, %v226
    %v1561 = vmul.f32 %v1546, %v227
    %v1562 = vmul.f32 %v1546, %v228
    %v1563 = vmul.f32 %v1546, %v229
    %v1564 = vmul.f32 %v1546, %v230
    %v1565 = vmul.f32 %v1546, %v231
    %v1566 = vmul.f32 %v1546, %v232
    %v1567 = vmul.f32 %v1546, %v233
    %v1568 = vmul.f32 %v1546, %v234
    %v1569 = vmul.f32 %v1546, %v235
    %v1570 = vmul.f32 %v1546, %v236
    %v1571 = vmul.f32 %v1546, %v237
    %v1572 = vmul.f32 %v1546, %v238
    %v1573 = vmul.f32 %v1546, %v239
    %v1574 = vmul.f32 %v1546, %v240
    %v1575 = vmul.f32 %v1546, %v241
    %v1576 = vmul.f32 %v1546, %v242
    %v1577 = vmul.f32 %v1546, %v243
    %v1578 = vmul.f32 %v1546, %v244
    %v1579 = vmul.f32 %v1546, %v245
    %v1580 = vmul.f32 %v1546, %v246
    %vm1615 = vcmask 1040384
    %v1616 = vrot.slane %v1547, 7
    %v1617 = vrot.slane %v1548, 7
    %v1618 = vsel %vm1615, %v1616, %v1617
    %v1619 = vrot.slane %v1549, 7
    %v1620 = vsel %vm1615, %v1617, %v1619
    %v1621 = vrot.slane %v1550, 7
    %v1622 = vsel %vm1615, %v1619, %v1621
    %v1623 = vrot.slane %v1551, 7
    %v1624 = vsel %vm1615, %v1621, %v1623
    %v1625 = vrot.slane %v1552, 7
    %v1626 = vsel %vm1615, %v1623, %v1625
    %v1627 = vrot.slane %v1553, 7
    %v1628 = vsel %vm1615, %v1625, %v1627
    %v1629 = vrot.slane %v1554, 7
    %v1630 = vsel %vm1615, %v1627, %v1629
    %v1631 = vrot.slane %v1555, 7
    %v1632 = vsel %vm1615, %v1629, %v1631
    %v1633 = vrot.slane %v1556, 7
    %v1634 = vsel %vm1615, %v1631, %v1633
    %v1635 = vrot.slane %v1557, 7
    %v1636 = vsel %vm1615, %v1633, %v1635
    %v1637 = vrot.slane %v1558, 7
    %v1638 = vsel %vm1615, %v1635, %v1637
    %v1639 = vrot.slane %v1559, 7
    %v1640 = vsel %vm1615, %v1637, %v1639
    %v1641 = vrot.slane %v1560, 7
    %v1642 = vsel %vm1615, %v1639, %v1641
    %v1643 = vrot.slane %v1561, 7
    %v1644 = vsel %vm1615, %v1641, %v1643
    %v1645 = vrot.slane %v1562, 7
    %v1646 = vsel %vm1615, %v1643, %v1645
    %v1647 = vrot.slane %v1563, 7
    %v1648 = vsel %vm1615, %v1645, %v1647
    %v1649 = vrot.slane %v1564, 7
    %v1650 = vsel %vm1615, %v1647, %v1649
    %v1651 = vrot.slane %v1565, 7
    %v1652 = vsel %vm1615, %v1649, %v1651
    %v1653 = vrot.slane %v1566, 7
    %v1654 = vsel %vm1615, %v1651, %v1653
    %v1655 = vrot.slane %v1567, 7
    %v1656 = vsel %vm1615, %v1653, %v1655
    %v1657 = vrot.slane %v1568, 7
    %v1658 = vsel %vm1615, %v1655, %v1657
    %v1659 = vrot.slane %v1569, 7
    %v1660 = vsel %vm1615, %v1657, %v1659
    %v1661 = vrot.slane %v1570, 7
    %v1662 = vsel %vm1615, %v1659, %v1661
    %v1663 = vrot.slane %v1571, 7
    %v1664 = vsel %vm1615, %v1661, %v1663
    %v1665 = vrot.slane %v1572, 7
    %v1666 = vsel %vm1615, %v1663, %v1665
    %v1667 = vrot.slane %v1573, 7
    %v1668 = vsel %vm1615, %v1665, %v1667
    %v1669 = vrot.slane %v1574, 7
    %v1670 = vsel %vm1615, %v1667, %v1669
    %v1671 = vrot.slane %v1575, 7
    %v1672 = vsel %vm1615, %v1669, %v1671
    %v1673 = vrot.slane %v1576, 7
    %v1674 = vsel %vm1615, %v1671, %v1673
    %v1675 = vrot.slane %v1577, 7
    %v1676 = vsel %vm1615, %v1673, %v1675
    %v1677 = vrot.slane %v1578, 7
    %v1678 = vsel %vm1615, %v1675, %v1677
    %v1679 = vrot.slane %v1579, 7
    %v1680 = vsel %vm1615, %v1677, %v1679
    %v1681 = vrot.slane %v1580, 7
    %v1682 = vsel %vm1615, %v1679, %v1681
    %v1716 = vadd.f32 %v1510, %v1618
    %v1717 = vadd.f32 %v1511, %v1620
    %v1718 = vadd.f32 %v1512, %v1622
    %v1719 = vadd.f32 %v1513, %v1624
    %v1720 = vadd.f32 %v1514, %v1626
    %v1721 = vadd.f32 %v1515, %v1628
    %v1722 = vadd.f32 %v1516, %v1630
    %v1723 = vadd.f32 %v1517, %v1632
    %v1724 = vadd.f32 %v1518, %v1634
    %v1725 = vadd.f32 %v1519, %v1636
    %v1726 = vadd.f32 %v1520, %v1638
    %v1727 = vadd.f32 %v1521, %v1640
    %v1728 = vadd.f32 %v1522, %v1642
    %v1729 = vadd.f32 %v1523, %v1644
    %v1730 = vadd.f32 %v1524, %v1646
    %v1731 = vadd.f32 %v1525, %v1648
    %v1732 = vadd.f32 %v1526, %v1650
    %v1733 = vadd.f32 %v1527, %v1652
    %v1734 = vadd.f32 %v1528, %v1654
    %v1735 = vadd.f32 %v1529, %v1656
    %v1736 = vadd.f32 %v1530, %v1658
    %v1737 = vadd.f32 %v1531, %v1660
    %v1738 = vadd.f32 %v1532, %v1662
    %v1739 = vadd.f32 %v1533, %v1664
    %v1740 = vadd.f32 %v1534, %v1666
    %v1741 = vadd.f32 %v1535, %v1668
    %v1742 = vadd.f32 %v1536, %v1670
    %v1743 = vadd.f32 %v1537, %v1672
    %v1744 = vadd.f32 %v1538, %v1674
    %v1745 = vadd.f32 %v1539, %v1676
    %v1746 = vadd.f32 %v1540, %v1678
    %v1747 = vadd.f32 %v1541, %v1680
    %v1748 = vadd.f32 %v1542, %v1682
    %v1749 = vlaneseq
    %v1750 = vshrl.u32 %v1749, 7
    %v1751 = vsub.s32 0, %v1750
    %v1752 = vrot.slane %v248, %v1751
    %v1753 = vadd.f32 %v1716, %v1752
    %v1754 = vadd.f32 %v1717, %v1752
    %v1755 = vadd.f32 %v1718, %v1752
    %v1756 = vadd.f32 %v1719, %v1752
    %v1757 = vadd.f32 %v1720, %v1752
    %v1758 = vadd.f32 %v1721, %v1752
    %v1759 = vadd.f32 %v1722, %v1752
    %v1760 = vadd.f32 %v1723, %v1752
    %v1761 = vadd.f32 %v1724, %v1752
    %v1762 = vadd.f32 %v1725, %v1752
    %v1763 = vadd.f32 %v1726, %v1752
    %v1764 = vadd.f32 %v1727, %v1752
    %v1765 = vadd.f32 %v1728, %v1752
    %v1766 = vadd.f32 %v1729, %v1752
    %v1767 = vadd.f32 %v1730, %v1752
    %v1768 = vadd.f32 %v1731, %v1752
    %v1769 = vadd.f32 %v1732, %v1752
    %v1770 = vadd.f32 %v1733, %v1752
    %v1771 = vadd.f32 %v1734, %v1752
    %v1772 = vadd.f32 %v1735, %v1752
    %v1773 = vadd.f32 %v1736, %v1752
    %v1774 = vadd.f32 %v1737, %v1752
    %v1775 = vadd.f32 %v1738, %v1752
    %v1776 = vadd.f32 %v1739, %v1752
    %v1777 = vadd.f32 %v1740, %v1752
    %v1778 = vadd.f32 %v1741, %v1752
    %v1779 = vadd.f32 %v1742, %v1752
    %v1780 = vadd.f32 %v1743, %v1752
    %v1781 = vadd.f32 %v1744, %v1752
    %v1782 = vadd.f32 %v1745, %v1752
    %v1783 = vadd.f32 %v1746, %v1752
    %v1784 = vadd.f32 %v1747, %v1752
    %v1785 = vadd.f32 %v1748, %v1752
    %v1786 = vld [vmem:[%s7] sm:$0x1f]
    %v1787 = vlaneseq
    %v1788 = vshrl.u32 %v1787, 7
    %v1789 = vsub.s32 4, %v1788
    %v1790 = vrot.slane %v1786, %v1789
    %vm1791 = vcmask 31744
    %v1793 = vsel %vm1791, %v1753, 0
    %v1796 = vsel %vm1791, %v1754, 0
    %v1799 = vsel %vm1791, %v1755, 0
    %v1802 = vsel %vm1791, %v1756, 0
    %v1805 = vsel %vm1791, %v1757, 0
    %v1808 = vsel %vm1791, %v1758, 0
    %v1811 = vsel %vm1791, %v1759, 0
    %v1814 = vsel %vm1791, %v1760, 0
    %v1817 = vsel %vm1791, %v1761, 0
    %v1820 = vsel %vm1791, %v1762, 0
    %v1823 = vsel %vm1791, %v1763, 0
    %v1826 = vsel %vm1791, %v1764, 0
    %v1829 = vsel %vm1791, %v1765, 0
    %v1832 = vsel %vm1791, %v1766, 0
    %v1835 = vsel %vm1791, %v1767, 0
    %v1838 = vsel %vm1791, %v1768, 0
    %v1841 = vsel %vm1791, %v1769, 0
    %v1844 = vsel %vm1791, %v1770, 0
    %v1847 = vsel %vm1791, %v1771, 0
    %v1850 = vsel %vm1791, %v1772, 0
    %v1853 = vsel %vm1791, %v1773, 0
    %v1856 = vsel %vm1791, %v1774, 0
    %v1859 = vsel %vm1791, %v1775, 0
    %v1862 = vsel %vm1791, %v1776, 0
    %v1865 = vsel %vm1791, %v1777, 0
    %v1868 = vsel %vm1791, %v1778, 0
    %v1871 = vsel %vm1791, %v1779, 0
    %v1874 = vsel %vm1791, %v1780, 0
    %v1877 = vsel %vm1791, %v1781, 0
    %v1880 = vsel %vm1791, %v1782, 0
    %v1883 = vsel %vm1791, %v1783, 0
    %v1886 = vsel %vm1791, %v1784, 0
    %v1889 = vsel %vm1791, %v1785, 0
    %v1892 = vsel %vm997, %v1786, 0
    %1894 = vmatprep.subr.mxu0 0.0
    %1895 = vmatpush1.msra.mxu0 %v1892
    %1896 = vmatprep.subr.mxu0 0.0
    %1897 = vmatpush1.msra.mxu0 0.0
    %1898 = vmatprep.subr.mxu0 0.0
    %1899 = vmatpush1.msra.mxu0 0.0
    %1900 = vmatprep.subr.mxu0 0.0
    %1901 = vmatpush1.msra.mxu0 0.0
    %1902 = vmatprep.subr.mxu0 0.0
    %1903 = vmatpush1.msra.mxu0 0.0
    %1904 = vmatprep.subr.mxu0 0.0
    %1905 = vmatpush1.msra.mxu0 0.0
    %1906 = vmatprep.subr.mxu0 0.0
    %1907 = vmatpush1.msra.mxu0 0.0
    %1908 = vmatprep.subr.mxu0 0.0
    %1909 = vmatpush1.msra.mxu0 0.0
    %1910 = vmatprep.subr.mxu0 0.0
    %1911 = vmatpush1.msra.mxu0 0.0
    %1912 = vmatprep.subr.mxu0 0.0
    %1913 = vmatpush1.msra.mxu0 0.0
    %1914 = vmatprep.subr.mxu0 0.0
    %1915 = vmatpush1.msra.mxu0 0.0
    %1916 = vmatprep.subr.mxu0 0.0
    %1917 = vmatpush1.msra.mxu0 0.0
    %1918 = vmatprep.subr.mxu0 0.0
    %1919 = vmatpush1.msra.mxu0 0.0
    %1920 = vmatprep.subr.mxu0 0.0
    %1921 = vmatpush1.msra.mxu0 0.0
    %1922 = vmatprep.subr.mxu0 0.0
    %1923 = vmatpush1.msra.mxu0 0.0
    %1924 = vmatprep.subr.mxu0 0.0
    %1925 = vmatpush1.msra.mxu0 0.0
    %1926 = vmatprep.subr.mxu0 0.0
    %1927 = vmatpush1.msra.mxu0 0.0
    %1928 = vmatprep.subr.mxu0 0.0
    %1929 = vmatpush1.msra.mxu0 0.0
    %1930 = vmatprep.subr.mxu0 0.0
    %1931 = vmatpush1.msra.mxu0 0.0
    %1932 = vmatprep.subr.mxu0 0.0
    %1933 = vmatpush1.msra.mxu0 0.0
    %1934 = vmatprep.subr.mxu0 0.0
    %1935 = vmatpush1.msra.mxu0 0.0
    %1936 = vmatprep.subr.mxu0 0.0
    %1937 = vmatpush1.msra.mxu0 0.0
    %1938 = vmatprep.subr.mxu0 0.0
    %1939 = vmatpush1.msra.mxu0 0.0
    %1940 = vmatprep.subr.mxu0 0.0
    %1941 = vmatpush1.msra.mxu0 0.0
    %1942 = vmatprep.subr.mxu0 0.0
    %1943 = vmatpush1.msra.mxu0 0.0
    %1944 = vmatprep.subr.mxu0 0.0
    %1945 = vmatpush1.msra.mxu0 0.0
    %1946 = vmatprep.subr.mxu0 0.0
    %1947 = vmatpush1.msra.mxu0 0.0
    %1948 = vmatprep.subr.mxu0 0.0
    %1949 = vmatpush1.msra.mxu0 0.0
    %1950 = vmatprep.subr.mxu0 0.0
    %1951 = vmatpush1.msra.mxu0 0.0
    %1952 = vmatprep.subr.mxu0 0.0
    %1953 = vmatpush1.msra.mxu0 0.0
    %1954 = vmatprep.subr.mxu0 0.0
    %1955 = vmatpush1.msra.mxu0 0.0
    %1956 = vmatprep.subr.mxu0 0.0
    %1957 = vmatpush1.msra.mxu0 0.0
    %1958 = vmatprep.mubr.f32.mxu0 0.0
    %1959 = vmatmul.mubr.f32.gmra.mrb[0].mxu0 %v1793
    %v1960 = vpop.f32.mrb[0].mxu0
    %v1961 = vadd.f32 %v1790, %v1960
    %v1962 = vpop.f32.mrb[0].mxu0
    %1963 = vmatprep.mubr.f32.mxu0 0.0
    %1964 = vmatmul.mubr.f32.gmra.mrb[0].mxu0 %v1796
    %v1965 = vpop.f32.mrb[0].mxu0
    %v1966 = vadd.f32 %v1790, %v1965
    %v1967 = vpop.f32.mrb[0].mxu0
    %1968 = vmatprep.mubr.f32.mxu0 0.0
    %1969 = vmatmul.mubr.f32.gmra.mrb[0].mxu0 %v1799
    %v1970 = vpop.f32.mrb[0].mxu0
    %v1971 = vadd.f32 %v1790, %v1970
    %v1972 = vpop.f32.mrb[0].mxu0
    %1973 = vmatprep.mubr.f32.mxu0 0.0
    %1974 = vmatmul.mubr.f32.gmra.mrb[0].mxu0 %v1802
    %v1975 = vpop.f32.mrb[0].mxu0
    %v1976 = vadd.f32 %v1790, %v1975
    %v1977 = vpop.f32.mrb[0].mxu0
    %1978 = vmatprep.mubr.f32.mxu0 0.0
    %1979 = vmatmul.mubr.f32.gmra.mrb[0].mxu0 %v1805
    %v1980 = vpop.f32.mrb[0].mxu0
    %v1981 = vadd.f32 %v1790, %v1980
    %v1982 = vpop.f32.mrb[0].mxu0
    %1983 = vmatprep.mubr.f32.mxu0 0.0
    %1984 = vmatmul.mubr.f32.gmra.mrb[0].mxu0 %v1808
    %v1985 = vpop.f32.mrb[0].mxu0
    %v1986 = vadd.f32 %v1790, %v1985
    %v1987 = vpop.f32.mrb[0].mxu0
    %1988 = vmatprep.mubr.f32.mxu0 0.0
    %1989 = vmatmul.mubr.f32.gmra.mrb[0].mxu0 %v1811
    %v1990 = vpop.f32.mrb[0].mxu0
    %v1991 = vadd.f32 %v1790, %v1990
    %v1992 = vpop.f32.mrb[0].mxu0
    %1993 = vmatprep.mubr.f32.mxu0 0.0
    %1994 = vmatmul.mubr.f32.gmra.mrb[0].mxu0 %v1814
    %v1995 = vpop.f32.mrb[0].mxu0
    %v1996 = vadd.f32 %v1790, %v1995
    %v1997 = vpop.f32.mrb[0].mxu0
    %1998 = vmatprep.mubr.f32.mxu0 0.0
    %1999 = vmatmul.mubr.f32.gmra.mrb[0].mxu0 %v1817
    %v2000 = vpop.f32.mrb[0].mxu0
    %v2001 = vadd.f32 %v1790, %v2000
    %v2002 = vpop.f32.mrb[0].mxu0
    %2003 = vmatprep.mubr.f32.mxu0 0.0
    %2004 = vmatmul.mubr.f32.gmra.mrb[0].mxu0 %v1820
    %v2005 = vpop.f32.mrb[0].mxu0
    %v2006 = vadd.f32 %v1790, %v2005
    %v2007 = vpop.f32.mrb[0].mxu0
    %2008 = vmatprep.mubr.f32.mxu0 0.0
    %2009 = vmatmul.mubr.f32.gmra.mrb[0].mxu0 %v1823
    %v2010 = vpop.f32.mrb[0].mxu0
    %v2011 = vadd.f32 %v1790, %v2010
    %v2012 = vpop.f32.mrb[0].mxu0
    %2013 = vmatprep.mubr.f32.mxu0 0.0
    %2014 = vmatmul.mubr.f32.gmra.mrb[0].mxu0 %v1826
    %v2015 = vpop.f32.mrb[0].mxu0
    %v2016 = vadd.f32 %v1790, %v2015
    %v2017 = vpop.f32.mrb[0].mxu0
    %2018 = vmatprep.mubr.f32.mxu0 0.0
    %2019 = vmatmul.mubr.f32.gmra.mrb[0].mxu0 %v1829
    %v2020 = vpop.f32.mrb[0].mxu0
    %v2021 = vadd.f32 %v1790, %v2020
    %v2022 = vpop.f32.mrb[0].mxu0
    %2023 = vmatprep.mubr.f32.mxu0 0.0
    %2024 = vmatmul.mubr.f32.gmra.mrb[0].mxu0 %v1832
    %v2025 = vpop.f32.mrb[0].mxu0
    %v2026 = vadd.f32 %v1790, %v2025
    %v2027 = vpop.f32.mrb[0].mxu0
    %2028 = vmatprep.mubr.f32.mxu0 0.0
    %2029 = vmatmul.mubr.f32.gmra.mrb[0].mxu0 %v1835
    %v2030 = vpop.f32.mrb[0].mxu0
    %v2031 = vadd.f32 %v1790, %v2030
    %v2032 = vpop.f32.mrb[0].mxu0
    %2033 = vmatprep.mubr.f32.mxu0 0.0
    %2034 = vmatmul.mubr.f32.gmra.mrb[0].mxu0 %v1838
    %v2035 = vpop.f32.mrb[0].mxu0
    %v2036 = vadd.f32 %v1790, %v2035
    %v2037 = vpop.f32.mrb[0].mxu0
    %2038 = vmatprep.mubr.f32.mxu0 0.0
    %2039 = vmatmul.mubr.f32.gmra.mrb[0].mxu0 %v1841
    %v2040 = vpop.f32.mrb[0].mxu0
    %v2041 = vadd.f32 %v1790, %v2040
    %v2042 = vpop.f32.mrb[0].mxu0
    %2043 = vmatprep.mubr.f32.mxu0 0.0
    %2044 = vmatmul.mubr.f32.gmra.mrb[0].mxu0 %v1844
    %v2045 = vpop.f32.mrb[0].mxu0
    %v2046 = vadd.f32 %v1790, %v2045
    %v2047 = vpop.f32.mrb[0].mxu0
    %2048 = vmatprep.mubr.f32.mxu0 0.0
    %2049 = vmatmul.mubr.f32.gmra.mrb[0].mxu0 %v1847
    %v2050 = vpop.f32.mrb[0].mxu0
    %v2051 = vadd.f32 %v1790, %v2050
    %v2052 = vpop.f32.mrb[0].mxu0
    %2053 = vmatprep.mubr.f32.mxu0 0.0
    %2054 = vmatmul.mubr.f32.gmra.mrb[0].mxu0 %v1850
    %v2055 = vpop.f32.mrb[0].mxu0
    %v2056 = vadd.f32 %v1790, %v2055
    %v2057 = vpop.f32.mrb[0].mxu0
    %2058 = vmatprep.mubr.f32.mxu0 0.0
    %2059 = vmatmul.mubr.f32.gmra.mrb[0].mxu0 %v1853
    %v2060 = vpop.f32.mrb[0].mxu0
    %v2061 = vadd.f32 %v1790, %v2060
    %v2062 = vpop.f32.mrb[0].mxu0
    %2063 = vmatprep.mubr.f32.mxu0 0.0
    %2064 = vmatmul.mubr.f32.gmra.mrb[0].mxu0 %v1856
    %v2065 = vpop.f32.mrb[0].mxu0
    %v2066 = vadd.f32 %v1790, %v2065
    %v2067 = vpop.f32.mrb[0].mxu0
    %2068 = vmatprep.mubr.f32.mxu0 0.0
    %2069 = vmatmul.mubr.f32.gmra.mrb[0].mxu0 %v1859
    %v2070 = vpop.f32.mrb[0].mxu0
    %v2071 = vadd.f32 %v1790, %v2070
    %v2072 = vpop.f32.mrb[0].mxu0
    %2073 = vmatprep.mubr.f32.mxu0 0.0
    %2074 = vmatmul.mubr.f32.gmra.mrb[0].mxu0 %v1862
    %v2075 = vpop.f32.mrb[0].mxu0
    %v2076 = vadd.f32 %v1790, %v2075
    %v2077 = vpop.f32.mrb[0].mxu0
    %2078 = vmatprep.mubr.f32.mxu0 0.0
    %2079 = vmatmul.mubr.f32.gmra.mrb[0].mxu0 %v1865
    %v2080 = vpop.f32.mrb[0].mxu0
    %v2081 = vadd.f32 %v1790, %v2080
    %v2082 = vpop.f32.mrb[0].mxu0
    %2083 = vmatprep.mubr.f32.mxu0 0.0
    %2084 = vmatmul.mubr.f32.gmra.mrb[0].mxu0 %v1868
    %v2085 = vpop.f32.mrb[0].mxu0
    %v2086 = vadd.f32 %v1790, %v2085
    %v2087 = vpop.f32.mrb[0].mxu0
    %2088 = vmatprep.mubr.f32.mxu0 0.0
    %2089 = vmatmul.mubr.f32.gmra.mrb[0].mxu0 %v1871
    %v2090 = vpop.f32.mrb[0].mxu0
    %v2091 = vadd.f32 %v1790, %v2090
    %v2092 = vpop.f32.mrb[0].mxu0
    %2093 = vmatprep.mubr.f32.mxu0 0.0
    %2094 = vmatmul.mubr.f32.gmra.mrb[0].mxu0 %v1874
    %v2095 = vpop.f32.mrb[0].mxu0
    %v2096 = vadd.f32 %v1790, %v2095
    %v2097 = vpop.f32.mrb[0].mxu0
    %2098 = vmatprep.mubr.f32.mxu0 0.0
    %2099 = vmatmul.mubr.f32.gmra.mrb[0].mxu0 %v1877
    %v2100 = vpop.f32.mrb[0].mxu0
    %v2101 = vadd.f32 %v1790, %v2100
    %v2102 = vpop.f32.mrb[0].mxu0
    %2103 = vmatprep.mubr.f32.mxu0 0.0
    %2104 = vmatmul.mubr.f32.gmra.mrb[0].mxu0 %v1880
    %v2105 = vpop.f32.mrb[0].mxu0
    %v2106 = vadd.f32 %v1790, %v2105
    %v2107 = vpop.f32.mrb[0].mxu0
    %2108 = vmatprep.mubr.f32.mxu0 0.0
    %2109 = vmatmul.mubr.f32.gmra.mrb[0].mxu0 %v1883
    %v2110 = vpop.f32.mrb[0].mxu0
    %v2111 = vadd.f32 %v1790, %v2110
    %v2112 = vpop.f32.mrb[0].mxu0
    %2113 = vmatprep.mubr.f32.mxu0 0.0
    %2114 = vmatmul.mubr.f32.gmra.mrb[0].mxu0 %v1886
    %v2115 = vpop.f32.mrb[0].mxu0
    %v2116 = vadd.f32 %v1790, %v2115
    %v2117 = vpop.f32.mrb[0].mxu0
    %2118 = vmatprep.mubr.f32.mxu0 0.0
    %2119 = vmatmul.mubr.f32.gmra.mrb[0].mxu0 %v1889
    %v2120 = vpop.f32.mrb[0].mxu0
    %v2121 = vadd.f32 %v1790, %v2120
    %v2122 = vpop.f32.mrb[0].mxu0
    %2123 = vdwg.mxu0
    %v2124 = vmax.f32 %v1961, 0.0
    %v2125 = vmax.f32 %v1966, 0.0
    %v2126 = vmax.f32 %v1971, 0.0
    %v2127 = vmax.f32 %v1976, 0.0
    %v2128 = vmax.f32 %v1981, 0.0
    %v2129 = vmax.f32 %v1986, 0.0
    %v2130 = vmax.f32 %v1991, 0.0
    %v2131 = vmax.f32 %v1996, 0.0
    %v2132 = vmax.f32 %v2001, 0.0
    %v2133 = vmax.f32 %v2006, 0.0
    %v2134 = vmax.f32 %v2011, 0.0
    %v2135 = vmax.f32 %v2016, 0.0
    %v2136 = vmax.f32 %v2021, 0.0
    %v2137 = vmax.f32 %v2026, 0.0
    %v2138 = vmax.f32 %v2031, 0.0
    %v2139 = vmax.f32 %v2036, 0.0
    %v2140 = vmax.f32 %v2041, 0.0
    %v2141 = vmax.f32 %v2046, 0.0
    %v2142 = vmax.f32 %v2051, 0.0
    %v2143 = vmax.f32 %v2056, 0.0
    %v2144 = vmax.f32 %v2061, 0.0
    %v2145 = vmax.f32 %v2066, 0.0
    %v2146 = vmax.f32 %v2071, 0.0
    %v2147 = vmax.f32 %v2076, 0.0
    %v2148 = vmax.f32 %v2081, 0.0
    %v2149 = vmax.f32 %v2086, 0.0
    %v2150 = vmax.f32 %v2091, 0.0
    %v2151 = vmax.f32 %v2096, 0.0
    %v2152 = vmax.f32 %v2101, 0.0
    %v2153 = vmax.f32 %v2106, 0.0
    %v2154 = vmax.f32 %v2111, 0.0
    %v2155 = vmax.f32 %v2116, 0.0
    %v2156 = vmax.f32 %v2121, 0.0
    %v2157 = vld [vmem:[%s9] sm:$0xff]
    %v2158 = vld [vmem:[%s9 + $0x8] sm:$0xff]
    %v2159 = vld [vmem:[%s9 + $0x10] sm:$0xff]
    %v2160 = vld [vmem:[%s9 + $0x18] sm:$0xff]
    %v2161 = vld [vmem:[%s9 + $0x20] sm:$0xff]
    %v2162 = vld [vmem:[%s9 + $0x28] sm:$0xff]
    %v2163 = vld [vmem:[%s9 + $0x30] sm:$0xff]
    %v2164 = vld [vmem:[%s9 + $0x38] sm:$0xff]
    %v2165 = vld [vmem:[%s9 + $0x40] sm:$0xff]
    %v2166 = vld [vmem:[%s9 + $0x48] sm:$0xff]
    %v2167 = vld [vmem:[%s9 + $0x50] sm:$0xff]
    %v2168 = vld [vmem:[%s9 + $0x58] sm:$0xff]
    %v2169 = vld [vmem:[%s9 + $0x60] sm:$0xff]
    %v2170 = vld [vmem:[%s9 + $0x68] sm:$0xff]
    %v2171 = vld [vmem:[%s9 + $0x70] sm:$0xff]
    %v2172 = vld [vmem:[%s9 + $0x78] sm:$0xff]
    %v2173 = vld [vmem:[%s9 + $0x80] sm:$0xff]
    %v2174 = vld [vmem:[%s9 + $0x88] sm:$0xff]
    %v2175 = vld [vmem:[%s9 + $0x90] sm:$0xff]
    %v2176 = vld [vmem:[%s9 + $0x98] sm:$0xff]
    %v2177 = vld [vmem:[%s9 + $0xa0] sm:$0xff]
    %v2178 = vld [vmem:[%s9 + $0xa8] sm:$0xff]
    %v2179 = vld [vmem:[%s9 + $0xb0] sm:$0xff]
    %v2180 = vld [vmem:[%s9 + $0xb8] sm:$0xff]
    %v2181 = vld [vmem:[%s9 + $0xc0] sm:$0xff]
    %v2182 = vld [vmem:[%s9 + $0xc8] sm:$0xff]
    %v2183 = vld [vmem:[%s9 + $0xd0] sm:$0xff]
    %v2184 = vld [vmem:[%s9 + $0xd8] sm:$0xff]
    %v2185 = vld [vmem:[%s9 + $0xe0] sm:$0xff]
    %v2186 = vld [vmem:[%s9 + $0xe8] sm:$0xff]
    %v2187 = vld [vmem:[%s9 + $0xf0] sm:$0xff]
    %v2188 = vld [vmem:[%s9 + $0xf8] sm:$0xff]
    %v2189 = vld [vmem:[%s9 + $0x100] sm:$0xff]
    %v2190 = vld [vmem:[%s9 + $0x108] sm:$0xff]
    %v2191 = vld [vmem:[%s9 + $0x110] sm:$0xff]
    %v2192 = vld [vmem:[%s9 + $0x118] sm:$0xff]
    %v2193 = vld [vmem:[%s9 + $0x120] sm:$0xff]
    %v2194 = vld [vmem:[%s9 + $0x128] sm:$0xff]
    %v2195 = vld [vmem:[%s9 + $0x130] sm:$0xff]
    %v2196 = vld [vmem:[%s9 + $0x138] sm:$0xff]
    %v2197 = vld [vmem:[%s9 + $0x140] sm:$0xff]
    %v2198 = vld [vmem:[%s9 + $0x148] sm:$0xff]
    %v2199 = vld [vmem:[%s9 + $0x150] sm:$0xff]
    %v2200 = vld [vmem:[%s9 + $0x158] sm:$0xff]
    %v2201 = vld [vmem:[%s9 + $0x160] sm:$0xff]
    %v2202 = vld [vmem:[%s9 + $0x168] sm:$0xff]
    %v2203 = vld [vmem:[%s9 + $0x170] sm:$0xff]
    %v2204 = vld [vmem:[%s9 + $0x178] sm:$0xff]
    %v2205 = vld [vmem:[%s9 + $0x180] sm:$0xff]
    %v2206 = vld [vmem:[%s9 + $0x188] sm:$0xff]
    %v2207 = vld [vmem:[%s9 + $0x190] sm:$0xff]
    %vm2208 = vcmask 39936
    %v2210 = vsel %vm2208, %v2159, 0
    %v2213 = vsel %vm2208, %v2162, 0
    %v2216 = vsel %vm2208, %v2165, 0
    %v2219 = vsel %vm2208, %v2168, 0
    %v2222 = vsel %vm2208, %v2171, 0
    %v2225 = vsel %vm2208, %v2174, 0
    %v2228 = vsel %vm2208, %v2177, 0
    %v2231 = vsel %vm2208, %v2180, 0
    %v2234 = vsel %vm2208, %v2183, 0
    %v2237 = vsel %vm2208, %v2186, 0
    %v2240 = vsel %vm2208, %v2189, 0
    %v2243 = vsel %vm2208, %v2192, 0
    %v2246 = vsel %vm2208, %v2195, 0
    %v2249 = vsel %vm2208, %v2198, 0
    %v2252 = vsel %vm2208, %v2201, 0
    %v2255 = vsel %vm2208, %v2204, 0
    %v2258 = vsel %vm2208, %v2207, 0
    %v2261 = vsel %vm793, %v2156, 0
    %2263 = vmatprep.subr.mxu0 0.0
    %2264 = vmatpush1.msra.mxu0 %v2124
    %2265 = vmatprep.subr.mxu0 0.0
    %2266 = vmatpush1.msra.mxu0 %v2125
    %2267 = vmatprep.subr.mxu0 0.0
    %2268 = vmatpush1.msra.mxu0 %v2126
    %2269 = vmatprep.subr.mxu0 0.0
    %2270 = vmatpush1.msra.mxu0 %v2127
    %2271 = vmatprep.subr.mxu0 0.0
    %2272 = vmatpush1.msra.mxu0 %v2128
    %2273 = vmatprep.subr.mxu0 0.0
    %2274 = vmatpush1.msra.mxu0 %v2129
    %2275 = vmatprep.subr.mxu0 0.0
    %2276 = vmatpush1.msra.mxu0 %v2130
    %2277 = vmatprep.subr.mxu0 0.0
    %2278 = vmatpush1.msra.mxu0 %v2131
    %2279 = vmatprep.subr.mxu0 0.0
    %2280 = vmatpush1.msra.mxu0 %v2132
    %2281 = vmatprep.subr.mxu0 0.0
    %2282 = vmatpush1.msra.mxu0 %v2133
    %2283 = vmatprep.subr.mxu0 0.0
    %2284 = vmatpush1.msra.mxu0 %v2134
    %2285 = vmatprep.subr.mxu0 0.0
    %2286 = vmatpush1.msra.mxu0 %v2135
    %2287 = vmatprep.subr.mxu0 0.0
    %2288 = vmatpush1.msra.mxu0 %v2136
    %2289 = vmatprep.subr.mxu0 0.0
    %2290 = vmatpush1.msra.mxu0 %v2137
    %2291 = vmatprep.subr.mxu0 0.0
    %2292 = vmatpush1.msra.mxu0 %v2138
    %2293 = vmatprep.subr.mxu0 0.0
    %2294 = vmatpush1.msra.mxu0 %v2139
    %2295 = vmatprep.subr.mxu0 0.0
    %2296 = vmatpush1.msra.mxu0 %v2140
    %2297 = vmatprep.subr.mxu0 0.0
    %2298 = vmatpush1.msra.mxu0 %v2141
    %2299 = vmatprep.subr.mxu0 0.0
    %2300 = vmatpush1.msra.mxu0 %v2142
    %2301 = vmatprep.subr.mxu0 0.0
    %2302 = vmatpush1.msra.mxu0 %v2143
    %2303 = vmatprep.subr.mxu0 0.0
    %2304 = vmatpush1.msra.mxu0 %v2144
    %2305 = vmatprep.subr.mxu0 0.0
    %2306 = vmatpush1.msra.mxu0 %v2145
    %2307 = vmatprep.subr.mxu0 0.0
    %2308 = vmatpush1.msra.mxu0 %v2146
    %2309 = vmatprep.subr.mxu0 0.0
    %2310 = vmatpush1.msra.mxu0 %v2147
    %2311 = vmatprep.subr.mxu0 0.0
    %2312 = vmatpush1.msra.mxu0 %v2148
    %2313 = vmatprep.subr.mxu0 0.0
    %2314 = vmatpush1.msra.mxu0 %v2149
    %2315 = vmatprep.subr.mxu0 0.0
    %2316 = vmatpush1.msra.mxu0 %v2150
    %2317 = vmatprep.subr.mxu0 0.0
    %2318 = vmatpush1.msra.mxu0 %v2151
    %2319 = vmatprep.subr.mxu0 0.0
    %2320 = vmatpush1.msra.mxu0 %v2152
    %2321 = vmatprep.subr.mxu0 0.0
    %2322 = vmatpush1.msra.mxu0 %v2153
    %2323 = vmatprep.subr.mxu0 0.0
    %2324 = vmatpush1.msra.mxu0 %v2154
    %2325 = vmatprep.subr.mxu0 0.0
    %2326 = vmatpush1.msra.mxu0 %v2155
    %2327 = vmatprep.mubr.f32.mxu0 %v2158
    %2328 = vmatmul.mubr.f32.gmra.mrb[0].mxu0 %v2157
    %v2329 = vpop.f32.mrb[0].mxu0
    %v2330 = vadd.f32 0.0, %v2329
    %v2331 = vpop.f32.mrb[0].mxu0
    %2332 = vmatprep.mubr.f32.mxu0 %v2161
    %2333 = vmatmul.mubr.f32.gmra.mrb[0].mxu0 %v2160
    %v2334 = vpop.f32.mrb[0].mxu0
    %v2335 = vadd.f32 0.0, %v2334
    %v2336 = vpop.f32.mrb[0].mxu0
    %2337 = vmatprep.mubr.f32.mxu0 %v2164
    %2338 = vmatmul.mubr.f32.gmra.mrb[0].mxu0 %v2163
    %v2339 = vpop.f32.mrb[0].mxu0
    %v2340 = vadd.f32 0.0, %v2339
    %v2341 = vpop.f32.mrb[0].mxu0
    %2342 = vmatprep.mubr.f32.mxu0 %v2167
    %2343 = vmatmul.mubr.f32.gmra.mrb[0].mxu0 %v2166
    %v2344 = vpop.f32.mrb[0].mxu0
    %v2345 = vadd.f32 0.0, %v2344
    %v2346 = vpop.f32.mrb[0].mxu0
    %2347 = vmatprep.mubr.f32.mxu0 %v2170
    %2348 = vmatmul.mubr.f32.gmra.mrb[0].mxu0 %v2169
    %v2349 = vpop.f32.mrb[0].mxu0
    %v2350 = vadd.f32 0.0, %v2349
    %v2351 = vpop.f32.mrb[0].mxu0
    %2352 = vmatprep.mubr.f32.mxu0 %v2173
    %2353 = vmatmul.mubr.f32.gmra.mrb[0].mxu0 %v2172
    %v2354 = vpop.f32.mrb[0].mxu0
    %v2355 = vadd.f32 0.0, %v2354
    %v2356 = vpop.f32.mrb[0].mxu0
    %2357 = vmatprep.mubr.f32.mxu0 %v2176
    %2358 = vmatmul.mubr.f32.gmra.mrb[0].mxu0 %v2175
    %v2359 = vpop.f32.mrb[0].mxu0
    %v2360 = vadd.f32 0.0, %v2359
    %v2361 = vpop.f32.mrb[0].mxu0
    %2362 = vmatprep.mubr.f32.mxu0 %v2179
    %2363 = vmatmul.mubr.f32.gmra.mrb[0].mxu0 %v2178
    %v2364 = vpop.f32.mrb[0].mxu0
    %v2365 = vadd.f32 0.0, %v2364
    %v2366 = vpop.f32.mrb[0].mxu0
    %2367 = vmatprep.mubr.f32.mxu0 %v2182
    %2368 = vmatmul.mubr.f32.gmra.mrb[0].mxu0 %v2181
    %v2369 = vpop.f32.mrb[0].mxu0
    %v2370 = vadd.f32 0.0, %v2369
    %v2371 = vpop.f32.mrb[0].mxu0
    %2372 = vmatprep.mubr.f32.mxu0 %v2185
    %2373 = vmatmul.mubr.f32.gmra.mrb[0].mxu0 %v2184
    %v2374 = vpop.f32.mrb[0].mxu0
    %v2375 = vadd.f32 0.0, %v2374
    %v2376 = vpop.f32.mrb[0].mxu0
    %2377 = vmatprep.mubr.f32.mxu0 %v2188
    %2378 = vmatmul.mubr.f32.gmra.mrb[0].mxu0 %v2187
    %v2379 = vpop.f32.mrb[0].mxu0
    %v2380 = vadd.f32 0.0, %v2379
    %v2381 = vpop.f32.mrb[0].mxu0
    %2382 = vmatprep.mubr.f32.mxu0 %v2191
    %2383 = vmatmul.mubr.f32.gmra.mrb[0].mxu0 %v2190
    %v2384 = vpop.f32.mrb[0].mxu0
    %v2385 = vadd.f32 0.0, %v2384
    %v2386 = vpop.f32.mrb[0].mxu0
    %2387 = vmatprep.mubr.f32.mxu0 %v2194
    %2388 = vmatmul.mubr.f32.gmra.mrb[0].mxu0 %v2193
    %v2389 = vpop.f32.mrb[0].mxu0
    %v2390 = vadd.f32 0.0, %v2389
    %v2391 = vpop.f32.mrb[0].mxu0
    %2392 = vmatprep.mubr.f32.mxu0 %v2197
    %2393 = vmatmul.mubr.f32.gmra.mrb[0].mxu0 %v2196
    %v2394 = vpop.f32.mrb[0].mxu0
    %v2395 = vadd.f32 0.0, %v2394
    %v2396 = vpop.f32.mrb[0].mxu0
    %2397 = vmatprep.mubr.f32.mxu0 %v2200
    %2398 = vmatmul.mubr.f32.gmra.mrb[0].mxu0 %v2199
    %v2399 = vpop.f32.mrb[0].mxu0
    %v2400 = vadd.f32 0.0, %v2399
    %v2401 = vpop.f32.mrb[0].mxu0
    %2402 = vmatprep.mubr.f32.mxu0 %v2203
    %2403 = vmatmul.mubr.f32.gmra.mrb[0].mxu0 %v2202
    %v2404 = vpop.f32.mrb[0].mxu0
    %v2405 = vadd.f32 0.0, %v2404
    %v2406 = vpop.f32.mrb[0].mxu0
    %2407 = vmatprep.mubr.f32.mxu0 %v2206
    %2408 = vmatmul.mubr.f32.gmra.mrb[0].mxu0 %v2205
    %v2409 = vpop.f32.mrb[0].mxu0
    %v2410 = vadd.f32 0.0, %v2409
    %v2411 = vpop.f32.mrb[0].mxu0
    %2412 = vdwg.mxu0
    %2413 = vmatprep.subr.mxu0 0.0
    %2414 = vmatpush1.msra.mxu0 %v2261
    %2415 = vmatprep.subr.mxu0 0.0
    %2416 = vmatpush1.msra.mxu0 0.0
    %2417 = vmatprep.subr.mxu0 0.0
    %2418 = vmatpush1.msra.mxu0 0.0
    %2419 = vmatprep.subr.mxu0 0.0
    %2420 = vmatpush1.msra.mxu0 0.0
    %2421 = vmatprep.subr.mxu0 0.0
    %2422 = vmatpush1.msra.mxu0 0.0
    %2423 = vmatprep.subr.mxu0 0.0
    %2424 = vmatpush1.msra.mxu0 0.0
    %2425 = vmatprep.subr.mxu0 0.0
    %2426 = vmatpush1.msra.mxu0 0.0
    %2427 = vmatprep.subr.mxu0 0.0
    %2428 = vmatpush1.msra.mxu0 0.0
    %2429 = vmatprep.subr.mxu0 0.0
    %2430 = vmatpush1.msra.mxu0 0.0
    %2431 = vmatprep.subr.mxu0 0.0
    %2432 = vmatpush1.msra.mxu0 0.0
    %2433 = vmatprep.subr.mxu0 0.0
    %2434 = vmatpush1.msra.mxu0 0.0
    %2435 = vmatprep.subr.mxu0 0.0
    %2436 = vmatpush1.msra.mxu0 0.0
    %2437 = vmatprep.subr.mxu0 0.0
    %2438 = vmatpush1.msra.mxu0 0.0
    %2439 = vmatprep.subr.mxu0 0.0
    %2440 = vmatpush1.msra.mxu0 0.0
    %2441 = vmatprep.subr.mxu0 0.0
    %2442 = vmatpush1.msra.mxu0 0.0
    %2443 = vmatprep.subr.mxu0 0.0
    %2444 = vmatpush1.msra.mxu0 0.0
    %2445 = vmatprep.subr.mxu0 0.0
    %2446 = vmatpush1.msra.mxu0 0.0
    %2447 = vmatprep.subr.mxu0 0.0
    %2448 = vmatpush1.msra.mxu0 0.0
    %2449 = vmatprep.subr.mxu0 0.0
    %2450 = vmatpush1.msra.mxu0 0.0
    %2451 = vmatprep.subr.mxu0 0.0
    %2452 = vmatpush1.msra.mxu0 0.0
    %2453 = vmatprep.subr.mxu0 0.0
    %2454 = vmatpush1.msra.mxu0 0.0
    %2455 = vmatprep.subr.mxu0 0.0
    %2456 = vmatpush1.msra.mxu0 0.0
    %2457 = vmatprep.subr.mxu0 0.0
    %2458 = vmatpush1.msra.mxu0 0.0
    %2459 = vmatprep.subr.mxu0 0.0
    %2460 = vmatpush1.msra.mxu0 0.0
    %2461 = vmatprep.subr.mxu0 0.0
    %2462 = vmatpush1.msra.mxu0 0.0
    %2463 = vmatprep.subr.mxu0 0.0
    %2464 = vmatpush1.msra.mxu0 0.0
    %2465 = vmatprep.subr.mxu0 0.0
    %2466 = vmatpush1.msra.mxu0 0.0
    %2467 = vmatprep.subr.mxu0 0.0
    %2468 = vmatpush1.msra.mxu0 0.0
    %2469 = vmatprep.subr.mxu0 0.0
    %2470 = vmatpush1.msra.mxu0 0.0
    %2471 = vmatprep.subr.mxu0 0.0
    %2472 = vmatpush1.msra.mxu0 0.0
    %2473 = vmatprep.subr.mxu0 0.0
    %2474 = vmatpush1.msra.mxu0 0.0
    %2475 = vmatprep.subr.mxu0 0.0
    %2476 = vmatpush1.msra.mxu0 0.0
    %2477 = vmatprep.mubr.f32.mxu0 0.0
    %2478 = vmatmul.mubr.f32.gmra.mrb[0].mxu0 %v2210
    %v2479 = vpop.f32.mrb[0].mxu0
    %v2480 = vadd.f32 %v2330, %v2479
    %v2481 = vpop.f32.mrb[0].mxu0
    %2482 = vmatprep.mubr.f32.mxu0 0.0
    %2483 = vmatmul.mubr.f32.gmra.mrb[0].mxu0 %v2213
    %v2484 = vpop.f32.mrb[0].mxu0
    %v2485 = vadd.f32 %v2335, %v2484
    %v2486 = vpop.f32.mrb[0].mxu0
    %2487 = vmatprep.mubr.f32.mxu0 0.0
    %2488 = vmatmul.mubr.f32.gmra.mrb[0].mxu0 %v2216
    %v2489 = vpop.f32.mrb[0].mxu0
    %v2490 = vadd.f32 %v2340, %v2489
    %v2491 = vpop.f32.mrb[0].mxu0
    %2492 = vmatprep.mubr.f32.mxu0 0.0
    %2493 = vmatmul.mubr.f32.gmra.mrb[0].mxu0 %v2219
    %v2494 = vpop.f32.mrb[0].mxu0
    %v2495 = vadd.f32 %v2345, %v2494
    %v2496 = vpop.f32.mrb[0].mxu0
    %2497 = vmatprep.mubr.f32.mxu0 0.0
    %2498 = vmatmul.mubr.f32.gmra.mrb[0].mxu0 %v2222
    %v2499 = vpop.f32.mrb[0].mxu0
    %v2500 = vadd.f32 %v2350, %v2499
    %v2501 = vpop.f32.mrb[0].mxu0
    %2502 = vmatprep.mubr.f32.mxu0 0.0
    %2503 = vmatmul.mubr.f32.gmra.mrb[0].mxu0 %v2225
    %v2504 = vpop.f32.mrb[0].mxu0
    %v2505 = vadd.f32 %v2355, %v2504
    %v2506 = vpop.f32.mrb[0].mxu0
    %2507 = vmatprep.mubr.f32.mxu0 0.0
    %2508 = vmatmul.mubr.f32.gmra.mrb[0].mxu0 %v2228
    %v2509 = vpop.f32.mrb[0].mxu0
    %v2510 = vadd.f32 %v2360, %v2509
    %v2511 = vpop.f32.mrb[0].mxu0
    %2512 = vmatprep.mubr.f32.mxu0 0.0
    %2513 = vmatmul.mubr.f32.gmra.mrb[0].mxu0 %v2231
    %v2514 = vpop.f32.mrb[0].mxu0
    %v2515 = vadd.f32 %v2365, %v2514
    %v2516 = vpop.f32.mrb[0].mxu0
    %2517 = vmatprep.mubr.f32.mxu0 0.0
    %2518 = vmatmul.mubr.f32.gmra.mrb[0].mxu0 %v2234
    %v2519 = vpop.f32.mrb[0].mxu0
    %v2520 = vadd.f32 %v2370, %v2519
    %v2521 = vpop.f32.mrb[0].mxu0
    %2522 = vmatprep.mubr.f32.mxu0 0.0
    %2523 = vmatmul.mubr.f32.gmra.mrb[0].mxu0 %v2237
    %v2524 = vpop.f32.mrb[0].mxu0
    %v2525 = vadd.f32 %v2375, %v2524
    %v2526 = vpop.f32.mrb[0].mxu0
    %2527 = vmatprep.mubr.f32.mxu0 0.0
    %2528 = vmatmul.mubr.f32.gmra.mrb[0].mxu0 %v2240
    %v2529 = vpop.f32.mrb[0].mxu0
    %v2530 = vadd.f32 %v2380, %v2529
    %v2531 = vpop.f32.mrb[0].mxu0
    %2532 = vmatprep.mubr.f32.mxu0 0.0
    %2533 = vmatmul.mubr.f32.gmra.mrb[0].mxu0 %v2243
    %v2534 = vpop.f32.mrb[0].mxu0
    %v2535 = vadd.f32 %v2385, %v2534
    %v2536 = vpop.f32.mrb[0].mxu0
    %2537 = vmatprep.mubr.f32.mxu0 0.0
    %2538 = vmatmul.mubr.f32.gmra.mrb[0].mxu0 %v2246
    %v2539 = vpop.f32.mrb[0].mxu0
    %v2540 = vadd.f32 %v2390, %v2539
    %v2541 = vpop.f32.mrb[0].mxu0
    %2542 = vmatprep.mubr.f32.mxu0 0.0
    %2543 = vmatmul.mubr.f32.gmra.mrb[0].mxu0 %v2249
    %v2544 = vpop.f32.mrb[0].mxu0
    %v2545 = vadd.f32 %v2395, %v2544
    %v2546 = vpop.f32.mrb[0].mxu0
    %2547 = vmatprep.mubr.f32.mxu0 0.0
    %2548 = vmatmul.mubr.f32.gmra.mrb[0].mxu0 %v2252
    %v2549 = vpop.f32.mrb[0].mxu0
    %v2550 = vadd.f32 %v2400, %v2549
    %v2551 = vpop.f32.mrb[0].mxu0
    %2552 = vmatprep.mubr.f32.mxu0 0.0
    %2553 = vmatmul.mubr.f32.gmra.mrb[0].mxu0 %v2255
    %v2554 = vpop.f32.mrb[0].mxu0
    %v2555 = vadd.f32 %v2405, %v2554
    %v2556 = vpop.f32.mrb[0].mxu0
    %2557 = vmatprep.mubr.f32.mxu0 0.0
    %2558 = vmatmul.mubr.f32.gmra.mrb[0].mxu0 %v2258
    %v2559 = vpop.f32.mrb[0].mxu0
    %v2560 = vadd.f32 %v2410, %v2559
    %v2561 = vpop.f32.mrb[0].mxu0
    %2562 = vdwg.mxu0
    %v2563 = vld [vmem:[%s11] sm:$0xff]
    %v2564 = vld [vmem:[%s11 + $0x8] sm:$0x1]
    %v2565 = vlaneseq
    %v2566 = vshrl.u32 %v2565, 7
    %v2567 = vsub.s32 0, %v2566
    %v2568 = vrot.slane %v2563, %v2567
    %v2569 = vmul.f32 %v2568, %v2480
    %v2570 = vmul.f32 %v2568, %v2485
    %v2571 = vmul.f32 %v2568, %v2490
    %v2572 = vmul.f32 %v2568, %v2495
    %v2573 = vmul.f32 %v2568, %v2500
    %v2574 = vmul.f32 %v2568, %v2505
    %v2575 = vmul.f32 %v2568, %v2510
    %v2576 = vmul.f32 %v2568, %v2515
    %v2577 = vmul.f32 %v2568, %v2520
    %v2578 = vmul.f32 %v2568, %v2525
    %v2579 = vmul.f32 %v2568, %v2530
    %v2580 = vmul.f32 %v2568, %v2535
    %v2581 = vmul.f32 %v2568, %v2540
    %v2582 = vmul.f32 %v2568, %v2545
    %v2583 = vmul.f32 %v2568, %v2550
    %v2584 = vmul.f32 %v2568, %v2555
    %v2585 = vmul.f32 %v2568, %v2560
    %v2586 = vadd.f32 %v2569, 0.0
    %v2587 = vadd.f32 %v2570, 0.0
    %v2588 = vadd.f32 %v2571, 0.0
    %v2589 = vadd.f32 %v2572, 0.0
    %v2590 = vadd.f32 %v2573, 0.0
    %v2591 = vadd.f32 %v2574, 0.0
    %v2592 = vadd.f32 %v2575, 0.0
    %v2593 = vadd.f32 %v2576, 0.0
    %v2594 = vadd.f32 %v2577, 0.0
    %v2595 = vadd.f32 %v2578, 0.0
    %v2596 = vadd.f32 %v2579, 0.0
    %v2597 = vadd.f32 %v2580, 0.0
    %v2598 = vadd.f32 %v2581, 0.0
    %v2599 = vadd.f32 %v2582, 0.0
    %v2600 = vadd.f32 %v2583, 0.0
    %v2601 = vadd.f32 %v2584, 0.0
    %v2602 = vadd.f32 %v2585, 0.0
    %v2603 = vlaneseq
    %v2604 = vshrl.u32 %v2603, 7
    %v2605 = vsub.s32 1, %v2604
    %v2606 = vrot.slane %v2563, %v2605
    %v2607 = vmul.f32 %v2606, %v2480
    %v2608 = vmul.f32 %v2606, %v2485
    %v2609 = vmul.f32 %v2606, %v2490
    %v2610 = vmul.f32 %v2606, %v2495
    %v2611 = vmul.f32 %v2606, %v2500
    %v2612 = vmul.f32 %v2606, %v2505
    %v2613 = vmul.f32 %v2606, %v2510
    %v2614 = vmul.f32 %v2606, %v2515
    %v2615 = vmul.f32 %v2606, %v2520
    %v2616 = vmul.f32 %v2606, %v2525
    %v2617 = vmul.f32 %v2606, %v2530
    %v2618 = vmul.f32 %v2606, %v2535
    %v2619 = vmul.f32 %v2606, %v2540
    %v2620 = vmul.f32 %v2606, %v2545
    %v2621 = vmul.f32 %v2606, %v2550
    %v2622 = vmul.f32 %v2606, %v2555
    %v2623 = vmul.f32 %v2606, %v2560
    %v2641 = vrot.slane %v2607, 1
    %v2642 = vrot.slane %v2608, 1
    %v2643 = vsel %vm389, %v2641, %v2642
    %v2644 = vrot.slane %v2609, 1
    %v2645 = vsel %vm389, %v2642, %v2644
    %v2646 = vrot.slane %v2610, 1
    %v2647 = vsel %vm389, %v2644, %v2646
    %v2648 = vrot.slane %v2611, 1
    %v2649 = vsel %vm389, %v2646, %v2648
    %v2650 = vrot.slane %v2612, 1
    %v2651 = vsel %vm389, %v2648, %v2650
    %v2652 = vrot.slane %v2613, 1
    %v2653 = vsel %vm389, %v2650, %v2652
    %v2654 = vrot.slane %v2614, 1
    %v2655 = vsel %vm389, %v2652, %v2654
    %v2656 = vrot.slane %v2615, 1
    %v2657 = vsel %vm389, %v2654, %v2656
    %v2658 = vrot.slane %v2616, 1
    %v2659 = vsel %vm389, %v2656, %v2658
    %v2660 = vrot.slane %v2617, 1
    %v2661 = vsel %vm389, %v2658, %v2660
    %v2662 = vrot.slane %v2618, 1
    %v2663 = vsel %vm389, %v2660, %v2662
    %v2664 = vrot.slane %v2619, 1
    %v2665 = vsel %vm389, %v2662, %v2664
    %v2666 = vrot.slane %v2620, 1
    %v2667 = vsel %vm389, %v2664, %v2666
    %v2668 = vrot.slane %v2621, 1
    %v2669 = vsel %vm389, %v2666, %v2668
    %v2670 = vrot.slane %v2622, 1
    %v2671 = vsel %vm389, %v2668, %v2670
    %v2672 = vrot.slane %v2623, 1
    %v2673 = vsel %vm389, %v2670, %v2672
    %v2691 = vadd.f32 %v2586, %v2643
    %v2692 = vadd.f32 %v2587, %v2645
    %v2693 = vadd.f32 %v2588, %v2647
    %v2694 = vadd.f32 %v2589, %v2649
    %v2695 = vadd.f32 %v2590, %v2651
    %v2696 = vadd.f32 %v2591, %v2653
    %v2697 = vadd.f32 %v2592, %v2655
    %v2698 = vadd.f32 %v2593, %v2657
    %v2699 = vadd.f32 %v2594, %v2659
    %v2700 = vadd.f32 %v2595, %v2661
    %v2701 = vadd.f32 %v2596, %v2663
    %v2702 = vadd.f32 %v2597, %v2665
    %v2703 = vadd.f32 %v2598, %v2667
    %v2704 = vadd.f32 %v2599, %v2669
    %v2705 = vadd.f32 %v2600, %v2671
    %v2706 = vadd.f32 %v2601, %v2673
    %v2707 = vadd.f32 %v2602, %v2672
    %v2708 = vlaneseq
    %v2709 = vshrl.u32 %v2708, 7
    %v2710 = vsub.s32 2, %v2709
    %v2711 = vrot.slane %v2563, %v2710
    %v2712 = vmul.f32 %v2711, %v2480
    %v2713 = vmul.f32 %v2711, %v2485
    %v2714 = vmul.f32 %v2711, %v2490
    %v2715 = vmul.f32 %v2711, %v2495
    %v2716 = vmul.f32 %v2711, %v2500
    %v2717 = vmul.f32 %v2711, %v2505
    %v2718 = vmul.f32 %v2711, %v2510
    %v2719 = vmul.f32 %v2711, %v2515
    %v2720 = vmul.f32 %v2711, %v2520
    %v2721 = vmul.f32 %v2711, %v2525
    %v2722 = vmul.f32 %v2711, %v2530
    %v2723 = vmul.f32 %v2711, %v2535
    %v2724 = vmul.f32 %v2711, %v2540
    %v2725 = vmul.f32 %v2711, %v2545
    %v2726 = vmul.f32 %v2711, %v2550
    %v2727 = vmul.f32 %v2711, %v2555
    %v2728 = vmul.f32 %v2711, %v2560
    %v2746 = vrot.slane %v2712, 2
    %v2747 = vrot.slane %v2713, 2
    %v2748 = vsel %vm591, %v2746, %v2747
    %v2749 = vrot.slane %v2714, 2
    %v2750 = vsel %vm591, %v2747, %v2749
    %v2751 = vrot.slane %v2715, 2
    %v2752 = vsel %vm591, %v2749, %v2751
    %v2753 = vrot.slane %v2716, 2
    %v2754 = vsel %vm591, %v2751, %v2753
    %v2755 = vrot.slane %v2717, 2
    %v2756 = vsel %vm591, %v2753, %v2755
    %v2757 = vrot.slane %v2718, 2
    %v2758 = vsel %vm591, %v2755, %v2757
    %v2759 = vrot.slane %v2719, 2
    %v2760 = vsel %vm591, %v2757, %v2759
    %v2761 = vrot.slane %v2720, 2
    %v2762 = vsel %vm591, %v2759, %v2761
    %v2763 = vrot.slane %v2721, 2
    %v2764 = vsel %vm591, %v2761, %v2763
    %v2765 = vrot.slane %v2722, 2
    %v2766 = vsel %vm591, %v2763, %v2765
    %v2767 = vrot.slane %v2723, 2
    %v2768 = vsel %vm591, %v2765, %v2767
    %v2769 = vrot.slane %v2724, 2
    %v2770 = vsel %vm591, %v2767, %v2769
    %v2771 = vrot.slane %v2725, 2
    %v2772 = vsel %vm591, %v2769, %v2771
    %v2773 = vrot.slane %v2726, 2
    %v2774 = vsel %vm591, %v2771, %v2773
    %v2775 = vrot.slane %v2727, 2
    %v2776 = vsel %vm591, %v2773, %v2775
    %v2777 = vrot.slane %v2728, 2
    %v2778 = vsel %vm591, %v2775, %v2777
    %v2796 = vadd.f32 %v2691, %v2748
    %v2797 = vadd.f32 %v2692, %v2750
    %v2798 = vadd.f32 %v2693, %v2752
    %v2799 = vadd.f32 %v2694, %v2754
    %v2800 = vadd.f32 %v2695, %v2756
    %v2801 = vadd.f32 %v2696, %v2758
    %v2802 = vadd.f32 %v2697, %v2760
    %v2803 = vadd.f32 %v2698, %v2762
    %v2804 = vadd.f32 %v2699, %v2764
    %v2805 = vadd.f32 %v2700, %v2766
    %v2806 = vadd.f32 %v2701, %v2768
    %v2807 = vadd.f32 %v2702, %v2770
    %v2808 = vadd.f32 %v2703, %v2772
    %v2809 = vadd.f32 %v2704, %v2774
    %v2810 = vadd.f32 %v2705, %v2776
    %v2811 = vadd.f32 %v2706, %v2778
    %v2812 = vadd.f32 %v2707, %v2777
    %v2813 = vlaneseq
    %v2814 = vshrl.u32 %v2813, 7
    %v2815 = vsub.s32 3, %v2814
    %v2816 = vrot.slane %v2563, %v2815
    %v2817 = vmul.f32 %v2816, %v2480
    %v2818 = vmul.f32 %v2816, %v2485
    %v2819 = vmul.f32 %v2816, %v2490
    %v2820 = vmul.f32 %v2816, %v2495
    %v2821 = vmul.f32 %v2816, %v2500
    %v2822 = vmul.f32 %v2816, %v2505
    %v2823 = vmul.f32 %v2816, %v2510
    %v2824 = vmul.f32 %v2816, %v2515
    %v2825 = vmul.f32 %v2816, %v2520
    %v2826 = vmul.f32 %v2816, %v2525
    %v2827 = vmul.f32 %v2816, %v2530
    %v2828 = vmul.f32 %v2816, %v2535
    %v2829 = vmul.f32 %v2816, %v2540
    %v2830 = vmul.f32 %v2816, %v2545
    %v2831 = vmul.f32 %v2816, %v2550
    %v2832 = vmul.f32 %v2816, %v2555
    %v2833 = vmul.f32 %v2816, %v2560
    %v2851 = vrot.slane %v2817, 3
    %v2852 = vrot.slane %v2818, 3
    %v2853 = vsel %vm793, %v2851, %v2852
    %v2854 = vrot.slane %v2819, 3
    %v2855 = vsel %vm793, %v2852, %v2854
    %v2856 = vrot.slane %v2820, 3
    %v2857 = vsel %vm793, %v2854, %v2856
    %v2858 = vrot.slane %v2821, 3
    %v2859 = vsel %vm793, %v2856, %v2858
    %v2860 = vrot.slane %v2822, 3
    %v2861 = vsel %vm793, %v2858, %v2860
    %v2862 = vrot.slane %v2823, 3
    %v2863 = vsel %vm793, %v2860, %v2862
    %v2864 = vrot.slane %v2824, 3
    %v2865 = vsel %vm793, %v2862, %v2864
    %v2866 = vrot.slane %v2825, 3
    %v2867 = vsel %vm793, %v2864, %v2866
    %v2868 = vrot.slane %v2826, 3
    %v2869 = vsel %vm793, %v2866, %v2868
    %v2870 = vrot.slane %v2827, 3
    %v2871 = vsel %vm793, %v2868, %v2870
    %v2872 = vrot.slane %v2828, 3
    %v2873 = vsel %vm793, %v2870, %v2872
    %v2874 = vrot.slane %v2829, 3
    %v2875 = vsel %vm793, %v2872, %v2874
    %v2876 = vrot.slane %v2830, 3
    %v2877 = vsel %vm793, %v2874, %v2876
    %v2878 = vrot.slane %v2831, 3
    %v2879 = vsel %vm793, %v2876, %v2878
    %v2880 = vrot.slane %v2832, 3
    %v2881 = vsel %vm793, %v2878, %v2880
    %v2882 = vrot.slane %v2833, 3
    %v2883 = vsel %vm793, %v2880, %v2882
    %v2901 = vadd.f32 %v2796, %v2853
    %v2902 = vadd.f32 %v2797, %v2855
    %v2903 = vadd.f32 %v2798, %v2857
    %v2904 = vadd.f32 %v2799, %v2859
    %v2905 = vadd.f32 %v2800, %v2861
    %v2906 = vadd.f32 %v2801, %v2863
    %v2907 = vadd.f32 %v2802, %v2865
    %v2908 = vadd.f32 %v2803, %v2867
    %v2909 = vadd.f32 %v2804, %v2869
    %v2910 = vadd.f32 %v2805, %v2871
    %v2911 = vadd.f32 %v2806, %v2873
    %v2912 = vadd.f32 %v2807, %v2875
    %v2913 = vadd.f32 %v2808, %v2877
    %v2914 = vadd.f32 %v2809, %v2879
    %v2915 = vadd.f32 %v2810, %v2881
    %v2916 = vadd.f32 %v2811, %v2883
    %v2917 = vadd.f32 %v2812, %v2882
    %v2918 = vlaneseq
    %v2919 = vshrl.u32 %v2918, 7
    %v2920 = vsub.s32 4, %v2919
    %v2921 = vrot.slane %v2563, %v2920
    %v2922 = vmul.f32 %v2921, %v2480
    %v2923 = vmul.f32 %v2921, %v2485
    %v2924 = vmul.f32 %v2921, %v2490
    %v2925 = vmul.f32 %v2921, %v2495
    %v2926 = vmul.f32 %v2921, %v2500
    %v2927 = vmul.f32 %v2921, %v2505
    %v2928 = vmul.f32 %v2921, %v2510
    %v2929 = vmul.f32 %v2921, %v2515
    %v2930 = vmul.f32 %v2921, %v2520
    %v2931 = vmul.f32 %v2921, %v2525
    %v2932 = vmul.f32 %v2921, %v2530
    %v2933 = vmul.f32 %v2921, %v2535
    %v2934 = vmul.f32 %v2921, %v2540
    %v2935 = vmul.f32 %v2921, %v2545
    %v2936 = vmul.f32 %v2921, %v2550
    %v2937 = vmul.f32 %v2921, %v2555
    %v2938 = vmul.f32 %v2921, %v2560
    %v2956 = vrot.slane %v2922, 4
    %v2957 = vrot.slane %v2923, 4
    %v2958 = vsel %vm997, %v2956, %v2957
    %v2959 = vrot.slane %v2924, 4
    %v2960 = vsel %vm997, %v2957, %v2959
    %v2961 = vrot.slane %v2925, 4
    %v2962 = vsel %vm997, %v2959, %v2961
    %v2963 = vrot.slane %v2926, 4
    %v2964 = vsel %vm997, %v2961, %v2963
    %v2965 = vrot.slane %v2927, 4
    %v2966 = vsel %vm997, %v2963, %v2965
    %v2967 = vrot.slane %v2928, 4
    %v2968 = vsel %vm997, %v2965, %v2967
    %v2969 = vrot.slane %v2929, 4
    %v2970 = vsel %vm997, %v2967, %v2969
    %v2971 = vrot.slane %v2930, 4
    %v2972 = vsel %vm997, %v2969, %v2971
    %v2973 = vrot.slane %v2931, 4
    %v2974 = vsel %vm997, %v2971, %v2973
    %v2975 = vrot.slane %v2932, 4
    %v2976 = vsel %vm997, %v2973, %v2975
    %v2977 = vrot.slane %v2933, 4
    %v2978 = vsel %vm997, %v2975, %v2977
    %v2979 = vrot.slane %v2934, 4
    %v2980 = vsel %vm997, %v2977, %v2979
    %v2981 = vrot.slane %v2935, 4
    %v2982 = vsel %vm997, %v2979, %v2981
    %v2983 = vrot.slane %v2936, 4
    %v2984 = vsel %vm997, %v2981, %v2983
    %v2985 = vrot.slane %v2937, 4
    %v2986 = vsel %vm997, %v2983, %v2985
    %v2987 = vrot.slane %v2938, 4
    %v2988 = vsel %vm997, %v2985, %v2987
    %v3006 = vadd.f32 %v2901, %v2958
    %v3007 = vadd.f32 %v2902, %v2960
    %v3008 = vadd.f32 %v2903, %v2962
    %v3009 = vadd.f32 %v2904, %v2964
    %v3010 = vadd.f32 %v2905, %v2966
    %v3011 = vadd.f32 %v2906, %v2968
    %v3012 = vadd.f32 %v2907, %v2970
    %v3013 = vadd.f32 %v2908, %v2972
    %v3014 = vadd.f32 %v2909, %v2974
    %v3015 = vadd.f32 %v2910, %v2976
    %v3016 = vadd.f32 %v2911, %v2978
    %v3017 = vadd.f32 %v2912, %v2980
    %v3018 = vadd.f32 %v2913, %v2982
    %v3019 = vadd.f32 %v2914, %v2984
    %v3020 = vadd.f32 %v2915, %v2986
    %v3021 = vadd.f32 %v2916, %v2988
    %v3022 = vadd.f32 %v2917, %v2987
    %v3023 = vlaneseq
    %v3024 = vshrl.u32 %v3023, 7
    %v3025 = vsub.s32 5, %v3024
    %v3026 = vrot.slane %v2563, %v3025
    %v3027 = vmul.f32 %v3026, %v2480
    %v3028 = vmul.f32 %v3026, %v2485
    %v3029 = vmul.f32 %v3026, %v2490
    %v3030 = vmul.f32 %v3026, %v2495
    %v3031 = vmul.f32 %v3026, %v2500
    %v3032 = vmul.f32 %v3026, %v2505
    %v3033 = vmul.f32 %v3026, %v2510
    %v3034 = vmul.f32 %v3026, %v2515
    %v3035 = vmul.f32 %v3026, %v2520
    %v3036 = vmul.f32 %v3026, %v2525
    %v3037 = vmul.f32 %v3026, %v2530
    %v3038 = vmul.f32 %v3026, %v2535
    %v3039 = vmul.f32 %v3026, %v2540
    %v3040 = vmul.f32 %v3026, %v2545
    %v3041 = vmul.f32 %v3026, %v2550
    %v3042 = vmul.f32 %v3026, %v2555
    %v3043 = vmul.f32 %v3026, %v2560
    %v3061 = vrot.slane %v3027, 5
    %v3062 = vrot.slane %v3028, 5
    %v3063 = vsel %vm1203, %v3061, %v3062
    %v3064 = vrot.slane %v3029, 5
    %v3065 = vsel %vm1203, %v3062, %v3064
    %v3066 = vrot.slane %v3030, 5
    %v3067 = vsel %vm1203, %v3064, %v3066
    %v3068 = vrot.slane %v3031, 5
    %v3069 = vsel %vm1203, %v3066, %v3068
    %v3070 = vrot.slane %v3032, 5
    %v3071 = vsel %vm1203, %v3068, %v3070
    %v3072 = vrot.slane %v3033, 5
    %v3073 = vsel %vm1203, %v3070, %v3072
    %v3074 = vrot.slane %v3034, 5
    %v3075 = vsel %vm1203, %v3072, %v3074
    %v3076 = vrot.slane %v3035, 5
    %v3077 = vsel %vm1203, %v3074, %v3076
    %v3078 = vrot.slane %v3036, 5
    %v3079 = vsel %vm1203, %v3076, %v3078
    %v3080 = vrot.slane %v3037, 5
    %v3081 = vsel %vm1203, %v3078, %v3080
    %v3082 = vrot.slane %v3038, 5
    %v3083 = vsel %vm1203, %v3080, %v3082
    %v3084 = vrot.slane %v3039, 5
    %v3085 = vsel %vm1203, %v3082, %v3084
    %v3086 = vrot.slane %v3040, 5
    %v3087 = vsel %vm1203, %v3084, %v3086
    %v3088 = vrot.slane %v3041, 5
    %v3089 = vsel %vm1203, %v3086, %v3088
    %v3090 = vrot.slane %v3042, 5
    %v3091 = vsel %vm1203, %v3088, %v3090
    %v3092 = vrot.slane %v3043, 5
    %v3093 = vsel %vm1203, %v3090, %v3092
    %v3111 = vadd.f32 %v3006, %v3063
    %v3112 = vadd.f32 %v3007, %v3065
    %v3113 = vadd.f32 %v3008, %v3067
    %v3114 = vadd.f32 %v3009, %v3069
    %v3115 = vadd.f32 %v3010, %v3071
    %v3116 = vadd.f32 %v3011, %v3073
    %v3117 = vadd.f32 %v3012, %v3075
    %v3118 = vadd.f32 %v3013, %v3077
    %v3119 = vadd.f32 %v3014, %v3079
    %v3120 = vadd.f32 %v3015, %v3081
    %v3121 = vadd.f32 %v3016, %v3083
    %v3122 = vadd.f32 %v3017, %v3085
    %v3123 = vadd.f32 %v3018, %v3087
    %v3124 = vadd.f32 %v3019, %v3089
    %v3125 = vadd.f32 %v3020, %v3091
    %v3126 = vadd.f32 %v3021, %v3093
    %v3127 = vadd.f32 %v3022, %v3092
    %v3128 = vlaneseq
    %v3129 = vshrl.u32 %v3128, 7
    %v3130 = vsub.s32 6, %v3129
    %v3131 = vrot.slane %v2563, %v3130
    %v3132 = vmul.f32 %v3131, %v2480
    %v3133 = vmul.f32 %v3131, %v2485
    %v3134 = vmul.f32 %v3131, %v2490
    %v3135 = vmul.f32 %v3131, %v2495
    %v3136 = vmul.f32 %v3131, %v2500
    %v3137 = vmul.f32 %v3131, %v2505
    %v3138 = vmul.f32 %v3131, %v2510
    %v3139 = vmul.f32 %v3131, %v2515
    %v3140 = vmul.f32 %v3131, %v2520
    %v3141 = vmul.f32 %v3131, %v2525
    %v3142 = vmul.f32 %v3131, %v2530
    %v3143 = vmul.f32 %v3131, %v2535
    %v3144 = vmul.f32 %v3131, %v2540
    %v3145 = vmul.f32 %v3131, %v2545
    %v3146 = vmul.f32 %v3131, %v2550
    %v3147 = vmul.f32 %v3131, %v2555
    %v3148 = vmul.f32 %v3131, %v2560
    %v3166 = vrot.slane %v3132, 6
    %v3167 = vrot.slane %v3133, 6
    %v3168 = vsel %vm1409, %v3166, %v3167
    %v3169 = vrot.slane %v3134, 6
    %v3170 = vsel %vm1409, %v3167, %v3169
    %v3171 = vrot.slane %v3135, 6
    %v3172 = vsel %vm1409, %v3169, %v3171
    %v3173 = vrot.slane %v3136, 6
    %v3174 = vsel %vm1409, %v3171, %v3173
    %v3175 = vrot.slane %v3137, 6
    %v3176 = vsel %vm1409, %v3173, %v3175
    %v3177 = vrot.slane %v3138, 6
    %v3178 = vsel %vm1409, %v3175, %v3177
    %v3179 = vrot.slane %v3139, 6
    %v3180 = vsel %vm1409, %v3177, %v3179
    %v3181 = vrot.slane %v3140, 6
    %v3182 = vsel %vm1409, %v3179, %v3181
    %v3183 = vrot.slane %v3141, 6
    %v3184 = vsel %vm1409, %v3181, %v3183
    %v3185 = vrot.slane %v3142, 6
    %v3186 = vsel %vm1409, %v3183, %v3185
    %v3187 = vrot.slane %v3143, 6
    %v3188 = vsel %vm1409, %v3185, %v3187
    %v3189 = vrot.slane %v3144, 6
    %v3190 = vsel %vm1409, %v3187, %v3189
    %v3191 = vrot.slane %v3145, 6
    %v3192 = vsel %vm1409, %v3189, %v3191
    %v3193 = vrot.slane %v3146, 6
    %v3194 = vsel %vm1409, %v3191, %v3193
    %v3195 = vrot.slane %v3147, 6
    %v3196 = vsel %vm1409, %v3193, %v3195
    %v3197 = vrot.slane %v3148, 6
    %v3198 = vsel %vm1409, %v3195, %v3197
    %v3216 = vadd.f32 %v3111, %v3168
    %v3217 = vadd.f32 %v3112, %v3170
    %v3218 = vadd.f32 %v3113, %v3172
    %v3219 = vadd.f32 %v3114, %v3174
    %v3220 = vadd.f32 %v3115, %v3176
    %v3221 = vadd.f32 %v3116, %v3178
    %v3222 = vadd.f32 %v3117, %v3180
    %v3223 = vadd.f32 %v3118, %v3182
    %v3224 = vadd.f32 %v3119, %v3184
    %v3225 = vadd.f32 %v3120, %v3186
    %v3226 = vadd.f32 %v3121, %v3188
    %v3227 = vadd.f32 %v3122, %v3190
    %v3228 = vadd.f32 %v3123, %v3192
    %v3229 = vadd.f32 %v3124, %v3194
    %v3230 = vadd.f32 %v3125, %v3196
    %v3231 = vadd.f32 %v3126, %v3198
    %v3232 = vadd.f32 %v3127, %v3197
    %v3233 = vlaneseq
    %v3234 = vshrl.u32 %v3233, 7
    %v3235 = vsub.s32 7, %v3234
    %v3236 = vrot.slane %v2563, %v3235
    %v3237 = vmul.f32 %v3236, %v2480
    %v3238 = vmul.f32 %v3236, %v2485
    %v3239 = vmul.f32 %v3236, %v2490
    %v3240 = vmul.f32 %v3236, %v2495
    %v3241 = vmul.f32 %v3236, %v2500
    %v3242 = vmul.f32 %v3236, %v2505
    %v3243 = vmul.f32 %v3236, %v2510
    %v3244 = vmul.f32 %v3236, %v2515
    %v3245 = vmul.f32 %v3236, %v2520
    %v3246 = vmul.f32 %v3236, %v2525
    %v3247 = vmul.f32 %v3236, %v2530
    %v3248 = vmul.f32 %v3236, %v2535
    %v3249 = vmul.f32 %v3236, %v2540
    %v3250 = vmul.f32 %v3236, %v2545
    %v3251 = vmul.f32 %v3236, %v2550
    %v3252 = vmul.f32 %v3236, %v2555
    %v3253 = vmul.f32 %v3236, %v2560
    %v3271 = vrot.slane %v3237, 7
    %v3272 = vrot.slane %v3238, 7
    %v3273 = vsel %vm1615, %v3271, %v3272
    %v3274 = vrot.slane %v3239, 7
    %v3275 = vsel %vm1615, %v3272, %v3274
    %v3276 = vrot.slane %v3240, 7
    %v3277 = vsel %vm1615, %v3274, %v3276
    %v3278 = vrot.slane %v3241, 7
    %v3279 = vsel %vm1615, %v3276, %v3278
    %v3280 = vrot.slane %v3242, 7
    %v3281 = vsel %vm1615, %v3278, %v3280
    %v3282 = vrot.slane %v3243, 7
    %v3283 = vsel %vm1615, %v3280, %v3282
    %v3284 = vrot.slane %v3244, 7
    %v3285 = vsel %vm1615, %v3282, %v3284
    %v3286 = vrot.slane %v3245, 7
    %v3287 = vsel %vm1615, %v3284, %v3286
    %v3288 = vrot.slane %v3246, 7
    %v3289 = vsel %vm1615, %v3286, %v3288
    %v3290 = vrot.slane %v3247, 7
    %v3291 = vsel %vm1615, %v3288, %v3290
    %v3292 = vrot.slane %v3248, 7
    %v3293 = vsel %vm1615, %v3290, %v3292
    %v3294 = vrot.slane %v3249, 7
    %v3295 = vsel %vm1615, %v3292, %v3294
    %v3296 = vrot.slane %v3250, 7
    %v3297 = vsel %vm1615, %v3294, %v3296
    %v3298 = vrot.slane %v3251, 7
    %v3299 = vsel %vm1615, %v3296, %v3298
    %v3300 = vrot.slane %v3252, 7
    %v3301 = vsel %vm1615, %v3298, %v3300
    %v3302 = vrot.slane %v3253, 7
    %v3303 = vsel %vm1615, %v3300, %v3302
    %v3321 = vadd.f32 %v3216, %v3273
    %v3322 = vadd.f32 %v3217, %v3275
    %v3323 = vadd.f32 %v3218, %v3277
    %v3324 = vadd.f32 %v3219, %v3279
    %v3325 = vadd.f32 %v3220, %v3281
    %v3326 = vadd.f32 %v3221, %v3283
    %v3327 = vadd.f32 %v3222, %v3285
    %v3328 = vadd.f32 %v3223, %v3287
    %v3329 = vadd.f32 %v3224, %v3289
    %v3330 = vadd.f32 %v3225, %v3291
    %v3331 = vadd.f32 %v3226, %v3293
    %v3332 = vadd.f32 %v3227, %v3295
    %v3333 = vadd.f32 %v3228, %v3297
    %v3334 = vadd.f32 %v3229, %v3299
    %v3335 = vadd.f32 %v3230, %v3301
    %v3336 = vadd.f32 %v3231, %v3303
    %v3337 = vadd.f32 %v3232, %v3302
    %v3338 = vlaneseq
    %v3339 = vshrl.u32 %v3338, 7
    %v3340 = vsub.s32 0, %v3339
    %v3341 = vrot.slane %v2564, %v3340
    %v3342 = vadd.f32 %v3321, %v3341
    %v3343 = vadd.f32 %v3322, %v3341
    %v3344 = vadd.f32 %v3323, %v3341
    %v3345 = vadd.f32 %v3324, %v3341
    %v3346 = vadd.f32 %v3325, %v3341
    %v3347 = vadd.f32 %v3326, %v3341
    %v3348 = vadd.f32 %v3327, %v3341
    %v3349 = vadd.f32 %v3328, %v3341
    %v3350 = vadd.f32 %v3329, %v3341
    %v3351 = vadd.f32 %v3330, %v3341
    %v3352 = vadd.f32 %v3331, %v3341
    %v3353 = vadd.f32 %v3332, %v3341
    %v3354 = vadd.f32 %v3333, %v3341
    %v3355 = vadd.f32 %v3334, %v3341
    %v3356 = vadd.f32 %v3335, %v3341
    %v3357 = vadd.f32 %v3336, %v3341
    %v3358 = vadd.f32 %v3337, %v3341
    %v3359 = vld [vmem:[%s13] sm:$0xff]
    %v3360 = vld [vmem:[%s13 + $0x8] sm:$0xff]
    %v3361 = vld [vmem:[%s13 + $0x10] sm:$0xff]
    %v3362 = vld [vmem:[%s13 + $0x18] sm:$0xff]
    %v3363 = vld [vmem:[%s13 + $0x20] sm:$0x1]
    %v3364 = vlaneseq
    %v3365 = vshrl.u32 %v3364, 7
    %v3366 = vsub.s32 0, %v3365
    %v3367 = vrot.slane %v3363, %v3366
    %vm3368 = vcmask 261120
    %v3370 = vsel %vm3368, %v3342, 0
    %v3373 = vsel %vm3368, %v3343, 0
    %v3376 = vsel %vm3368, %v3344, 0
    %v3379 = vsel %vm3368, %v3345, 0
    %v3382 = vsel %vm3368, %v3346, 0
    %v3385 = vsel %vm3368, %v3347, 0
    %v3388 = vsel %vm3368, %v3348, 0
    %v3391 = vsel %vm3368, %v3349, 0
    %v3394 = vsel %vm3368, %v3350, 0
    %v3397 = vsel %vm3368, %v3351, 0
    %v3400 = vsel %vm3368, %v3352, 0
    %v3403 = vsel %vm3368, %v3353, 0
    %v3406 = vsel %vm3368, %v3354, 0
    %v3409 = vsel %vm3368, %v3355, 0
    %v3412 = vsel %vm3368, %v3356, 0
    %v3415 = vsel %vm3368, %v3357, 0
    %v3418 = vsel %vm3368, %v3358, 0
    %3420 = vmatprep.subr.mxu0 0.0
    %3421 = vmatpush1.msra.mxu0 %v3359
    %3422 = vmatprep.subr.mxu0 0.0
    %3423 = vmatpush1.msra.mxu0 %v3360
    %3424 = vmatprep.subr.mxu0 0.0
    %3425 = vmatpush1.msra.mxu0 %v3361
    %3426 = vmatprep.subr.mxu0 0.0
    %3427 = vmatpush1.msra.mxu0 %v3362
    %3428 = vmatprep.subr.mxu0 0.0
    %3429 = vmatpush1.msra.mxu0 0.0
    %3430 = vmatprep.subr.mxu0 0.0
    %3431 = vmatpush1.msra.mxu0 0.0
    %3432 = vmatprep.subr.mxu0 0.0
    %3433 = vmatpush1.msra.mxu0 0.0
    %3434 = vmatprep.subr.mxu0 0.0
    %3435 = vmatpush1.msra.mxu0 0.0
    %3436 = vmatprep.subr.mxu0 0.0
    %3437 = vmatpush1.msra.mxu0 0.0
    %3438 = vmatprep.subr.mxu0 0.0
    %3439 = vmatpush1.msra.mxu0 0.0
    %3440 = vmatprep.subr.mxu0 0.0
    %3441 = vmatpush1.msra.mxu0 0.0
    %3442 = vmatprep.subr.mxu0 0.0
    %3443 = vmatpush1.msra.mxu0 0.0
    %3444 = vmatprep.subr.mxu0 0.0
    %3445 = vmatpush1.msra.mxu0 0.0
    %3446 = vmatprep.subr.mxu0 0.0
    %3447 = vmatpush1.msra.mxu0 0.0
    %3448 = vmatprep.subr.mxu0 0.0
    %3449 = vmatpush1.msra.mxu0 0.0
    %3450 = vmatprep.subr.mxu0 0.0
    %3451 = vmatpush1.msra.mxu0 0.0
    %3452 = vmatprep.subr.mxu0 0.0
    %3453 = vmatpush1.msra.mxu0 0.0
    %3454 = vmatprep.subr.mxu0 0.0
    %3455 = vmatpush1.msra.mxu0 0.0
    %3456 = vmatprep.subr.mxu0 0.0
    %3457 = vmatpush1.msra.mxu0 0.0
    %3458 = vmatprep.subr.mxu0 0.0
    %3459 = vmatpush1.msra.mxu0 0.0
    %3460 = vmatprep.subr.mxu0 0.0
    %3461 = vmatpush1.msra.mxu0 0.0
    %3462 = vmatprep.subr.mxu0 0.0
    %3463 = vmatpush1.msra.mxu0 0.0
    %3464 = vmatprep.subr.mxu0 0.0
    %3465 = vmatpush1.msra.mxu0 0.0
    %3466 = vmatprep.subr.mxu0 0.0
    %3467 = vmatpush1.msra.mxu0 0.0
    %3468 = vmatprep.subr.mxu0 0.0
    %3469 = vmatpush1.msra.mxu0 0.0
    %3470 = vmatprep.subr.mxu0 0.0
    %3471 = vmatpush1.msra.mxu0 0.0
    %3472 = vmatprep.subr.mxu0 0.0
    %3473 = vmatpush1.msra.mxu0 0.0
    %3474 = vmatprep.subr.mxu0 0.0
    %3475 = vmatpush1.msra.mxu0 0.0
    %3476 = vmatprep.subr.mxu0 0.0
    %3477 = vmatpush1.msra.mxu0 0.0
    %3478 = vmatprep.subr.mxu0 0.0
    %3479 = vmatpush1.msra.mxu0 0.0
    %3480 = vmatprep.subr.mxu0 0.0
    %3481 = vmatpush1.msra.mxu0 0.0
    %3482 = vmatprep.subr.mxu0 0.0
    %3483 = vmatpush1.msra.mxu0 0.0
    %3484 = vmatprep.mubr.f32.mxu0 0.0
    %3485 = vmatmul.mubr.f32.gmra.mrb[0].mxu0 %v3370
    %v3486 = vpop.f32.mrb[0].mxu0
    %v3487 = vadd.f32 %v3367, %v3486
    %v3488 = vpop.f32.mrb[0].mxu0
    %3489 = vmatprep.mubr.f32.mxu0 0.0
    %3490 = vmatmul.mubr.f32.gmra.mrb[0].mxu0 %v3373
    %v3491 = vpop.f32.mrb[0].mxu0
    %v3492 = vadd.f32 %v3367, %v3491
    %v3493 = vpop.f32.mrb[0].mxu0
    %3494 = vmatprep.mubr.f32.mxu0 0.0
    %3495 = vmatmul.mubr.f32.gmra.mrb[0].mxu0 %v3376
    %v3496 = vpop.f32.mrb[0].mxu0
    %v3497 = vadd.f32 %v3367, %v3496
    %v3498 = vpop.f32.mrb[0].mxu0
    %3499 = vmatprep.mubr.f32.mxu0 0.0
    %3500 = vmatmul.mubr.f32.gmra.mrb[0].mxu0 %v3379
    %v3501 = vpop.f32.mrb[0].mxu0
    %v3502 = vadd.f32 %v3367, %v3501
    %v3503 = vpop.f32.mrb[0].mxu0
    %3504 = vmatprep.mubr.f32.mxu0 0.0
    %3505 = vmatmul.mubr.f32.gmra.mrb[0].mxu0 %v3382
    %v3506 = vpop.f32.mrb[0].mxu0
    %v3507 = vadd.f32 %v3367, %v3506
    %v3508 = vpop.f32.mrb[0].mxu0
    %3509 = vmatprep.mubr.f32.mxu0 0.0
    %3510 = vmatmul.mubr.f32.gmra.mrb[0].mxu0 %v3385
    %v3511 = vpop.f32.mrb[0].mxu0
    %v3512 = vadd.f32 %v3367, %v3511
    %v3513 = vpop.f32.mrb[0].mxu0
    %3514 = vmatprep.mubr.f32.mxu0 0.0
    %3515 = vmatmul.mubr.f32.gmra.mrb[0].mxu0 %v3388
    %v3516 = vpop.f32.mrb[0].mxu0
    %v3517 = vadd.f32 %v3367, %v3516
    %v3518 = vpop.f32.mrb[0].mxu0
    %3519 = vmatprep.mubr.f32.mxu0 0.0
    %3520 = vmatmul.mubr.f32.gmra.mrb[0].mxu0 %v3391
    %v3521 = vpop.f32.mrb[0].mxu0
    %v3522 = vadd.f32 %v3367, %v3521
    %v3523 = vpop.f32.mrb[0].mxu0
    %3524 = vmatprep.mubr.f32.mxu0 0.0
    %3525 = vmatmul.mubr.f32.gmra.mrb[0].mxu0 %v3394
    %v3526 = vpop.f32.mrb[0].mxu0
    %v3527 = vadd.f32 %v3367, %v3526
    %v3528 = vpop.f32.mrb[0].mxu0
    %3529 = vmatprep.mubr.f32.mxu0 0.0
    %3530 = vmatmul.mubr.f32.gmra.mrb[0].mxu0 %v3397
    %v3531 = vpop.f32.mrb[0].mxu0
    %v3532 = vadd.f32 %v3367, %v3531
    %v3533 = vpop.f32.mrb[0].mxu0
    %3534 = vmatprep.mubr.f32.mxu0 0.0
    %3535 = vmatmul.mubr.f32.gmra.mrb[0].mxu0 %v3400
    %v3536 = vpop.f32.mrb[0].mxu0
    %v3537 = vadd.f32 %v3367, %v3536
    %v3538 = vpop.f32.mrb[0].mxu0
    %3539 = vmatprep.mubr.f32.mxu0 0.0
    %3540 = vmatmul.mubr.f32.gmra.mrb[0].mxu0 %v3403
    %v3541 = vpop.f32.mrb[0].mxu0
    %v3542 = vadd.f32 %v3367, %v3541
    %v3543 = vpop.f32.mrb[0].mxu0
    %3544 = vmatprep.mubr.f32.mxu0 0.0
    %3545 = vmatmul.mubr.f32.gmra.mrb[0].mxu0 %v3406
    %v3546 = vpop.f32.mrb[0].mxu0
    %v3547 = vadd.f32 %v3367, %v3546
    %v3548 = vpop.f32.mrb[0].mxu0
    %3549 = vmatprep.mubr.f32.mxu0 0.0
    %3550 = vmatmul.mubr.f32.gmra.mrb[0].mxu0 %v3409
    %v3551 = vpop.f32.mrb[0].mxu0
    %v3552 = vadd.f32 %v3367, %v3551
    %v3553 = vpop.f32.mrb[0].mxu0
    %3554 = vmatprep.mubr.f32.mxu0 0.0
    %3555 = vmatmul.mubr.f32.gmra.mrb[0].mxu0 %v3412
    %v3556 = vpop.f32.mrb[0].mxu0
    %v3557 = vadd.f32 %v3367, %v3556
    %v3558 = vpop.f32.mrb[0].mxu0
    %3559 = vmatprep.mubr.f32.mxu0 0.0
    %3560 = vmatmul.mubr.f32.gmra.mrb[0].mxu0 %v3415
    %v3561 = vpop.f32.mrb[0].mxu0
    %v3562 = vadd.f32 %v3367, %v3561
    %v3563 = vpop.f32.mrb[0].mxu0
    %3564 = vmatprep.mubr.f32.mxu0 0.0
    %3565 = vmatmul.mubr.f32.gmra.mrb[0].mxu0 %v3418
    %v3566 = vpop.f32.mrb[0].mxu0
    %v3567 = vadd.f32 %v3367, %v3566
    %v3568 = vpop.f32.mrb[0].mxu0
    %3569 = vdwg.mxu0
    %v3570 = vmax.f32 %v3487, 0.0
    %v3571 = vmax.f32 %v3492, 0.0
    %v3572 = vmax.f32 %v3497, 0.0
    %v3573 = vmax.f32 %v3502, 0.0
    %v3574 = vmax.f32 %v3507, 0.0
    %v3575 = vmax.f32 %v3512, 0.0
    %v3576 = vmax.f32 %v3517, 0.0
    %v3577 = vmax.f32 %v3522, 0.0
    %v3578 = vmax.f32 %v3527, 0.0
    %v3579 = vmax.f32 %v3532, 0.0
    %v3580 = vmax.f32 %v3537, 0.0
    %v3581 = vmax.f32 %v3542, 0.0
    %v3582 = vmax.f32 %v3547, 0.0
    %v3583 = vmax.f32 %v3552, 0.0
    %v3584 = vmax.f32 %v3557, 0.0
    %v3585 = vmax.f32 %v3562, 0.0
    %v3586 = vmax.f32 %v3567, 0.0
    %v3587 = vld [vmem:[%s15] sm:$0xff]
    %v3588 = vld [vmem:[%s15 + $0x8] sm:$0xff]
    %v3589 = vld [vmem:[%s15 + $0x10] sm:$0xff]
    %v3590 = vld [vmem:[%s15 + $0x18] sm:$0xff]
    %v3591 = vld [vmem:[%s15 + $0x20] sm:$0xff]
    %v3592 = vld [vmem:[%s15 + $0x28] sm:$0xff]
    %v3593 = vld [vmem:[%s15 + $0x30] sm:$0xff]
    %v3594 = vld [vmem:[%s15 + $0x38] sm:$0xff]
    %v3595 = vld [vmem:[%s15 + $0x40] sm:$0xff]
    %v3596 = vld [vmem:[%s15 + $0x48] sm:$0xff]
    %vm3597 = vcmask 7168
    %v3599 = vsel %vm3597, %v3588, 0
    %v3602 = vsel %vm3597, %v3590, 0
    %v3605 = vsel %vm3597, %v3592, 0
    %v3608 = vsel %vm3597, %v3594, 0
    %v3611 = vsel %vm3597, %v3596, 0
    %v3614 = vsel %vm1615, %v3586, 0
    %3616 = vmatprep.subr.mxu0 0.0
    %3617 = vmatpush1.msra.mxu0 %v3570
    %3618 = vmatprep.subr.mxu0 0.0
    %3619 = vmatpush1.msra.mxu0 %v3571
    %3620 = vmatprep.subr.mxu0 0.0
    %3621 = vmatpush1.msra.mxu0 %v3572
    %3622 = vmatprep.subr.mxu0 0.0
    %3623 = vmatpush1.msra.mxu0 %v3573
    %3624 = vmatprep.subr.mxu0 0.0
    %3625 = vmatpush1.msra.mxu0 %v3574
    %3626 = vmatprep.subr.mxu0 0.0
    %3627 = vmatpush1.msra.mxu0 %v3575
    %3628 = vmatprep.subr.mxu0 0.0
    %3629 = vmatpush1.msra.mxu0 %v3576
    %3630 = vmatprep.subr.mxu0 0.0
    %3631 = vmatpush1.msra.mxu0 %v3577
    %3632 = vmatprep.subr.mxu0 0.0
    %3633 = vmatpush1.msra.mxu0 %v3578
    %3634 = vmatprep.subr.mxu0 0.0
    %3635 = vmatpush1.msra.mxu0 %v3579
    %3636 = vmatprep.subr.mxu0 0.0
    %3637 = vmatpush1.msra.mxu0 %v3580
    %3638 = vmatprep.subr.mxu0 0.0
    %3639 = vmatpush1.msra.mxu0 %v3581
    %3640 = vmatprep.subr.mxu0 0.0
    %3641 = vmatpush1.msra.mxu0 %v3582
    %3642 = vmatprep.subr.mxu0 0.0
    %3643 = vmatpush1.msra.mxu0 %v3583
    %3644 = vmatprep.subr.mxu0 0.0
    %3645 = vmatpush1.msra.mxu0 %v3584
    %3646 = vmatprep.subr.mxu0 0.0
    %3647 = vmatpush1.msra.mxu0 %v3585
    %3648 = vmatprep.subr.mxu0 0.0
    %3649 = vmatpush1.msra.mxu0 %v3614
    %3650 = vmatprep.subr.mxu0 0.0
    %3651 = vmatpush1.msra.mxu0 0.0
    %3652 = vmatprep.subr.mxu0 0.0
    %3653 = vmatpush1.msra.mxu0 0.0
    %3654 = vmatprep.subr.mxu0 0.0
    %3655 = vmatpush1.msra.mxu0 0.0
    %3656 = vmatprep.subr.mxu0 0.0
    %3657 = vmatpush1.msra.mxu0 0.0
    %3658 = vmatprep.subr.mxu0 0.0
    %3659 = vmatpush1.msra.mxu0 0.0
    %3660 = vmatprep.subr.mxu0 0.0
    %3661 = vmatpush1.msra.mxu0 0.0
    %3662 = vmatprep.subr.mxu0 0.0
    %3663 = vmatpush1.msra.mxu0 0.0
    %3664 = vmatprep.subr.mxu0 0.0
    %3665 = vmatpush1.msra.mxu0 0.0
    %3666 = vmatprep.subr.mxu0 0.0
    %3667 = vmatpush1.msra.mxu0 0.0
    %3668 = vmatprep.subr.mxu0 0.0
    %3669 = vmatpush1.msra.mxu0 0.0
    %3670 = vmatprep.subr.mxu0 0.0
    %3671 = vmatpush1.msra.mxu0 0.0
    %3672 = vmatprep.subr.mxu0 0.0
    %3673 = vmatpush1.msra.mxu0 0.0
    %3674 = vmatprep.subr.mxu0 0.0
    %3675 = vmatpush1.msra.mxu0 0.0
    %3676 = vmatprep.subr.mxu0 0.0
    %3677 = vmatpush1.msra.mxu0 0.0
    %3678 = vmatprep.subr.mxu0 0.0
    %3679 = vmatpush1.msra.mxu0 0.0
    %3680 = vmatprep.mubr.f32.mxu0 %v3599
    %3681 = vmatmul.mubr.f32.gmra.mrb[0].mxu0 %v3587
    %v3682 = vpop.f32.mrb[0].mxu0
    %v3683 = vadd.f32 0.0, %v3682
    %v3684 = vpop.f32.mrb[0].mxu0
    %3685 = vmatprep.mubr.f32.mxu0 %v3602
    %3686 = vmatmul.mubr.f32.gmra.mrb[0].mxu0 %v3589
    %v3687 = vpop.f32.mrb[0].mxu0
    %v3688 = vadd.f32 0.0, %v3687
    %v3689 = vpop.f32.mrb[0].mxu0
    %3690 = vmatprep.mubr.f32.mxu0 %v3605
    %3691 = vmatmul.mubr.f32.gmra.mrb[0].mxu0 %v3591
    %v3692 = vpop.f32.mrb[0].mxu0
    %v3693 = vadd.f32 0.0, %v3692
    %v3694 = vpop.f32.mrb[0].mxu0
    %3695 = vmatprep.mubr.f32.mxu0 %v3608
    %3696 = vmatmul.mubr.f32.gmra.mrb[0].mxu0 %v3593
    %v3697 = vpop.f32.mrb[0].mxu0
    %v3698 = vadd.f32 0.0, %v3697
    %v3699 = vpop.f32.mrb[0].mxu0
    %3700 = vmatprep.mubr.f32.mxu0 %v3611
    %3701 = vmatmul.mubr.f32.gmra.mrb[0].mxu0 %v3595
    %v3702 = vpop.f32.mrb[0].mxu0
    %v3703 = vadd.f32 0.0, %v3702
    %v3704 = vpop.f32.mrb[0].mxu0
    %3705 = vdwg.mxu0
    %v3706 = vld [vmem:[%s17] sm:$0xff]
    %v3707 = vld [vmem:[%s17 + $0x8] sm:$0x1]
    %v3708 = vlaneseq
    %v3709 = vshrl.u32 %v3708, 7
    %v3710 = vsub.s32 0, %v3709
    %v3711 = vrot.slane %v3706, %v3710
    %v3712 = vmul.f32 %v3711, %v3683
    %v3713 = vmul.f32 %v3711, %v3688
    %v3714 = vmul.f32 %v3711, %v3693
    %v3715 = vmul.f32 %v3711, %v3698
    %v3716 = vmul.f32 %v3711, %v3703
    %v3717 = vadd.f32 %v3712, 0.0
    %v3718 = vadd.f32 %v3713, 0.0
    %v3719 = vadd.f32 %v3714, 0.0
    %v3720 = vadd.f32 %v3715, 0.0
    %v3721 = vadd.f32 %v3716, 0.0
    %v3722 = vlaneseq
    %v3723 = vshrl.u32 %v3722, 7
    %v3724 = vsub.s32 1, %v3723
    %v3725 = vrot.slane %v3706, %v3724
    %v3726 = vmul.f32 %v3725, %v3683
    %v3727 = vmul.f32 %v3725, %v3688
    %v3728 = vmul.f32 %v3725, %v3693
    %v3729 = vmul.f32 %v3725, %v3698
    %v3730 = vmul.f32 %v3725, %v3703
    %v3736 = vrot.slane %v3726, 1
    %v3737 = vrot.slane %v3727, 1
    %v3738 = vsel %vm389, %v3736, %v3737
    %v3739 = vrot.slane %v3728, 1
    %v3740 = vsel %vm389, %v3737, %v3739
    %v3741 = vrot.slane %v3729, 1
    %v3742 = vsel %vm389, %v3739, %v3741
    %v3743 = vrot.slane %v3730, 1
    %v3744 = vsel %vm389, %v3741, %v3743
    %v3750 = vadd.f32 %v3717, %v3738
    %v3751 = vadd.f32 %v3718, %v3740
    %v3752 = vadd.f32 %v3719, %v3742
    %v3753 = vadd.f32 %v3720, %v3744
    %v3754 = vadd.f32 %v3721, %v3743
    %v3755 = vlaneseq
    %v3756 = vshrl.u32 %v3755, 7
    %v3757 = vsub.s32 2, %v3756
    %v3758 = vrot.slane %v3706, %v3757
    %v3759 = vmul.f32 %v3758, %v3683
    %v3760 = vmul.f32 %v3758, %v3688
    %v3761 = vmul.f32 %v3758, %v3693
    %v3762 = vmul.f32 %v3758, %v3698
    %v3763 = vmul.f32 %v3758, %v3703
    %v3769 = vrot.slane %v3759, 2
    %v3770 = vrot.slane %v3760, 2
    %v3771 = vsel %vm591, %v3769, %v3770
    %v3772 = vrot.slane %v3761, 2
    %v3773 = vsel %vm591, %v3770, %v3772
    %v3774 = vrot.slane %v3762, 2
    %v3775 = vsel %vm591, %v3772, %v3774
    %v3776 = vrot.slane %v3763, 2
    %v3777 = vsel %vm591, %v3774, %v3776
    %v3783 = vadd.f32 %v3750, %v3771
    %v3784 = vadd.f32 %v3751, %v3773
    %v3785 = vadd.f32 %v3752, %v3775
    %v3786 = vadd.f32 %v3753, %v3777
    %v3787 = vadd.f32 %v3754, %v3776
    %v3788 = vlaneseq
    %v3789 = vshrl.u32 %v3788, 7
    %v3790 = vsub.s32 3, %v3789
    %v3791 = vrot.slane %v3706, %v3790
    %v3792 = vmul.f32 %v3791, %v3683
    %v3793 = vmul.f32 %v3791, %v3688
    %v3794 = vmul.f32 %v3791, %v3693
    %v3795 = vmul.f32 %v3791, %v3698
    %v3796 = vmul.f32 %v3791, %v3703
    %v3802 = vrot.slane %v3792, 3
    %v3803 = vrot.slane %v3793, 3
    %v3804 = vsel %vm793, %v3802, %v3803
    %v3805 = vrot.slane %v3794, 3
    %v3806 = vsel %vm793, %v3803, %v3805
    %v3807 = vrot.slane %v3795, 3
    %v3808 = vsel %vm793, %v3805, %v3807
    %v3809 = vrot.slane %v3796, 3
    %v3810 = vsel %vm793, %v3807, %v3809
    %v3816 = vadd.f32 %v3783, %v3804
    %v3817 = vadd.f32 %v3784, %v3806
    %v3818 = vadd.f32 %v3785, %v3808
    %v3819 = vadd.f32 %v3786, %v3810
    %v3820 = vadd.f32 %v3787, %v3809
    %v3821 = vlaneseq
    %v3822 = vshrl.u32 %v3821, 7
    %v3823 = vsub.s32 4, %v3822
    %v3824 = vrot.slane %v3706, %v3823
    %v3825 = vmul.f32 %v3824, %v3683
    %v3826 = vmul.f32 %v3824, %v3688
    %v3827 = vmul.f32 %v3824, %v3693
    %v3828 = vmul.f32 %v3824, %v3698
    %v3829 = vmul.f32 %v3824, %v3703
    %v3835 = vrot.slane %v3825, 4
    %v3836 = vrot.slane %v3826, 4
    %v3837 = vsel %vm997, %v3835, %v3836
    %v3838 = vrot.slane %v3827, 4
    %v3839 = vsel %vm997, %v3836, %v3838
    %v3840 = vrot.slane %v3828, 4
    %v3841 = vsel %vm997, %v3838, %v3840
    %v3842 = vrot.slane %v3829, 4
    %v3843 = vsel %vm997, %v3840, %v3842
    %v3849 = vadd.f32 %v3816, %v3837
    %v3850 = vadd.f32 %v3817, %v3839
    %v3851 = vadd.f32 %v3818, %v3841
    %v3852 = vadd.f32 %v3819, %v3843
    %v3853 = vadd.f32 %v3820, %v3842
    %v3854 = vlaneseq
    %v3855 = vshrl.u32 %v3854, 7
    %v3856 = vsub.s32 5, %v3855
    %v3857 = vrot.slane %v3706, %v3856
    %v3858 = vmul.f32 %v3857, %v3683
    %v3859 = vmul.f32 %v3857, %v3688
    %v3860 = vmul.f32 %v3857, %v3693
    %v3861 = vmul.f32 %v3857, %v3698
    %v3862 = vmul.f32 %v3857, %v3703
    %v3868 = vrot.slane %v3858, 5
    %v3869 = vrot.slane %v3859, 5
    %v3870 = vsel %vm1203, %v3868, %v3869
    %v3871 = vrot.slane %v3860, 5
    %v3872 = vsel %vm1203, %v3869, %v3871
    %v3873 = vrot.slane %v3861, 5
    %v3874 = vsel %vm1203, %v3871, %v3873
    %v3875 = vrot.slane %v3862, 5
    %v3876 = vsel %vm1203, %v3873, %v3875
    %v3882 = vadd.f32 %v3849, %v3870
    %v3883 = vadd.f32 %v3850, %v3872
    %v3884 = vadd.f32 %v3851, %v3874
    %v3885 = vadd.f32 %v3852, %v3876
    %v3886 = vadd.f32 %v3853, %v3875
    %v3887 = vlaneseq
    %v3888 = vshrl.u32 %v3887, 7
    %v3889 = vsub.s32 6, %v3888
    %v3890 = vrot.slane %v3706, %v3889
    %v3891 = vmul.f32 %v3890, %v3683
    %v3892 = vmul.f32 %v3890, %v3688
    %v3893 = vmul.f32 %v3890, %v3693
    %v3894 = vmul.f32 %v3890, %v3698
    %v3895 = vmul.f32 %v3890, %v3703
    %v3901 = vrot.slane %v3891, 6
    %v3902 = vrot.slane %v3892, 6
    %v3903 = vsel %vm1409, %v3901, %v3902
    %v3904 = vrot.slane %v3893, 6
    %v3905 = vsel %vm1409, %v3902, %v3904
    %v3906 = vrot.slane %v3894, 6
    %v3907 = vsel %vm1409, %v3904, %v3906
    %v3908 = vrot.slane %v3895, 6
    %v3909 = vsel %vm1409, %v3906, %v3908
    %v3915 = vadd.f32 %v3882, %v3903
    %v3916 = vadd.f32 %v3883, %v3905
    %v3917 = vadd.f32 %v3884, %v3907
    %v3918 = vadd.f32 %v3885, %v3909
    %v3919 = vadd.f32 %v3886, %v3908
    %v3920 = vlaneseq
    %v3921 = vshrl.u32 %v3920, 7
    %v3922 = vsub.s32 7, %v3921
    %v3923 = vrot.slane %v3706, %v3922
    %v3924 = vmul.f32 %v3923, %v3683
    %v3925 = vmul.f32 %v3923, %v3688
    %v3926 = vmul.f32 %v3923, %v3693
    %v3927 = vmul.f32 %v3923, %v3698
    %v3928 = vmul.f32 %v3923, %v3703
    %v3934 = vrot.slane %v3924, 7
    %v3935 = vrot.slane %v3925, 7
    %v3936 = vsel %vm1615, %v3934, %v3935
    %v3937 = vrot.slane %v3926, 7
    %v3938 = vsel %vm1615, %v3935, %v3937
    %v3939 = vrot.slane %v3927, 7
    %v3940 = vsel %vm1615, %v3937, %v3939
    %v3941 = vrot.slane %v3928, 7
    %v3942 = vsel %vm1615, %v3939, %v3941
    %v3948 = vadd.f32 %v3915, %v3936
    %v3949 = vadd.f32 %v3916, %v3938
    %v3950 = vadd.f32 %v3917, %v3940
    %v3951 = vadd.f32 %v3918, %v3942
    %v3952 = vadd.f32 %v3919, %v3941
    %v3953 = vlaneseq
    %v3954 = vshrl.u32 %v3953, 7
    %v3955 = vsub.s32 0, %v3954
    %v3956 = vrot.slane %v3707, %v3955
    %v3957 = vadd.f32 %v3948, %v3956
    %v3958 = vadd.f32 %v3949, %v3956
    %v3959 = vadd.f32 %v3950, %v3956
    %v3960 = vadd.f32 %v3951, %v3956
    %v3961 = vadd.f32 %v3952, %v3956
    %v3962 = vld [vmem:[%s19] sm:$0xff]
    %v3963 = vld [vmem:[%s19 + $0x8] sm:$0xff]
    %v3964 = vld [vmem:[%s19 + $0x10] sm:$0xff]
    %v3965 = vld [vmem:[%s19 + $0x18] sm:$0xff]
    %v3966 = vld [vmem:[%s19 + $0x20] sm:$0xff]
    %v3967 = vld [vmem:[%s19 + $0x28] sm:$0xff]
    %v3968 = vld [vmem:[%s19 + $0x30] sm:$0xff]
    %v3969 = vld [vmem:[%s19 + $0x38] sm:$0xff]
    %v3970 = vld [vmem:[%s19 + $0x40] sm:$0x1]
    %v3971 = vlaneseq
    %v3972 = vshrl.u32 %v3971, 7
    %v3973 = vsub.s32 0, %v3972
    %v3974 = vrot.slane %v3970, %v3973
    %vm3975 = vcmask 523264
    %v3977 = vsel %vm3975, %v3957, 0
    %v3980 = vsel %vm3975, %v3958, 0
    %v3983 = vsel %vm3975, %v3959, 0
    %v3986 = vsel %vm3975, %v3960, 0
    %v3989 = vsel %vm3975, %v3961, 0
    %3991 = vmatprep.subr.mxu0 0.0
    %3992 = vmatpush1.msra.mxu0 %v3962
    %3993 = vmatprep.subr.mxu0 0.0
    %3994 = vmatpush1.msra.mxu0 %v3963
    %3995 = vmatprep.subr.mxu0 0.0
    %3996 = vmatpush1.msra.mxu0 %v3964
    %3997 = vmatprep.subr.mxu0 0.0
    %3998 = vmatpush1.msra.mxu0 %v3965
    %3999 = vmatprep.subr.mxu0 0.0
    %4000 = vmatpush1.msra.mxu0 %v3966
    %4001 = vmatprep.subr.mxu0 0.0
    %4002 = vmatpush1.msra.mxu0 %v3967
    %4003 = vmatprep.subr.mxu0 0.0
    %4004 = vmatpush1.msra.mxu0 %v3968
    %4005 = vmatprep.subr.mxu0 0.0
    %4006 = vmatpush1.msra.mxu0 %v3969
    %4007 = vmatprep.subr.mxu0 0.0
    %4008 = vmatpush1.msra.mxu0 0.0
    %4009 = vmatprep.subr.mxu0 0.0
    %4010 = vmatpush1.msra.mxu0 0.0
    %4011 = vmatprep.subr.mxu0 0.0
    %4012 = vmatpush1.msra.mxu0 0.0
    %4013 = vmatprep.subr.mxu0 0.0
    %4014 = vmatpush1.msra.mxu0 0.0
    %4015 = vmatprep.subr.mxu0 0.0
    %4016 = vmatpush1.msra.mxu0 0.0
    %4017 = vmatprep.subr.mxu0 0.0
    %4018 = vmatpush1.msra.mxu0 0.0
    %4019 = vmatprep.subr.mxu0 0.0
    %4020 = vmatpush1.msra.mxu0 0.0
    %4021 = vmatprep.subr.mxu0 0.0
    %4022 = vmatpush1.msra.mxu0 0.0
    %4023 = vmatprep.subr.mxu0 0.0
    %4024 = vmatpush1.msra.mxu0 0.0
    %4025 = vmatprep.subr.mxu0 0.0
    %4026 = vmatpush1.msra.mxu0 0.0
    %4027 = vmatprep.subr.mxu0 0.0
    %4028 = vmatpush1.msra.mxu0 0.0
    %4029 = vmatprep.subr.mxu0 0.0
    %4030 = vmatpush1.msra.mxu0 0.0
    %4031 = vmatprep.subr.mxu0 0.0
    %4032 = vmatpush1.msra.mxu0 0.0
    %4033 = vmatprep.subr.mxu0 0.0
    %4034 = vmatpush1.msra.mxu0 0.0
    %4035 = vmatprep.subr.mxu0 0.0
    %4036 = vmatpush1.msra.mxu0 0.0
    %4037 = vmatprep.subr.mxu0 0.0
    %4038 = vmatpush1.msra.mxu0 0.0
    %4039 = vmatprep.subr.mxu0 0.0
    %4040 = vmatpush1.msra.mxu0 0.0
    %4041 = vmatprep.subr.mxu0 0.0
    %4042 = vmatpush1.msra.mxu0 0.0
    %4043 = vmatprep.subr.mxu0 0.0
    %4044 = vmatpush1.msra.mxu0 0.0
    %4045 = vmatprep.subr.mxu0 0.0
    %4046 = vmatpush1.msra.mxu0 0.0
    %4047 = vmatprep.subr.mxu0 0.0
    %4048 = vmatpush1.msra.mxu0 0.0
    %4049 = vmatprep.subr.mxu0 0.0
    %4050 = vmatpush1.msra.mxu0 0.0
    %4051 = vmatprep.subr.mxu0 0.0
    %4052 = vmatpush1.msra.mxu0 0.0
    %4053 = vmatprep.subr.mxu0 0.0
    %4054 = vmatpush1.msra.mxu0 0.0
    %4055 = vmatprep.mubr.f32.mxu0 0.0
    %4056 = vmatmul.mubr.f32.gmra.mrb[0].mxu0 %v3977
    %v4057 = vpop.f32.mrb[0].mxu0
    %v4058 = vadd.f32 %v3974, %v4057
    %v4059 = vpop.f32.mrb[0].mxu0
    %4060 = vmatprep.mubr.f32.mxu0 0.0
    %4061 = vmatmul.mubr.f32.gmra.mrb[0].mxu0 %v3980
    %v4062 = vpop.f32.mrb[0].mxu0
    %v4063 = vadd.f32 %v3974, %v4062
    %v4064 = vpop.f32.mrb[0].mxu0
    %4065 = vmatprep.mubr.f32.mxu0 0.0
    %4066 = vmatmul.mubr.f32.gmra.mrb[0].mxu0 %v3983
    %v4067 = vpop.f32.mrb[0].mxu0
    %v4068 = vadd.f32 %v3974, %v4067
    %v4069 = vpop.f32.mrb[0].mxu0
    %4070 = vmatprep.mubr.f32.mxu0 0.0
    %4071 = vmatmul.mubr.f32.gmra.mrb[0].mxu0 %v3986
    %v4072 = vpop.f32.mrb[0].mxu0
    %v4073 = vadd.f32 %v3974, %v4072
    %v4074 = vpop.f32.mrb[0].mxu0
    %4075 = vmatprep.mubr.f32.mxu0 0.0
    %4076 = vmatmul.mubr.f32.gmra.mrb[0].mxu0 %v3989
    %v4077 = vpop.f32.mrb[0].mxu0
    %v4078 = vadd.f32 %v3974, %v4077
    %v4079 = vpop.f32.mrb[0].mxu0
    %4080 = vdwg.mxu0
    %v4081 = vmax.f32 %v4058, 0.0
    %v4082 = vmax.f32 %v4063, 0.0
    %v4083 = vmax.f32 %v4068, 0.0
    %v4084 = vmax.f32 %v4073, 0.0
    %v4085 = vmax.f32 %v4078, 0.0
    %v4086 = vld [vmem:[%s21] sm:$0xff]
    %v4087 = vld [vmem:[%s21 + $0x8] sm:$0xff]
    %vm4088 = vcmask 269312
    %v4090 = vsel %vm4088, %v4086, 0
    %v4093 = vsel %vm4088, %v4087, 0
    %v4096 = vsel %vm1615, %v4085, 0
    %4098 = vmatprep.subr.mxu0 0.0
    %4099 = vmatpush1.msra.mxu0 %v4081
    %4100 = vmatprep.subr.mxu0 0.0
    %4101 = vmatpush1.msra.mxu0 %v4082
    %4102 = vmatprep.subr.mxu0 0.0
    %4103 = vmatpush1.msra.mxu0 %v4083
    %4104 = vmatprep.subr.mxu0 0.0
    %4105 = vmatpush1.msra.mxu0 %v4084
    %4106 = vmatprep.subr.mxu0 0.0
    %4107 = vmatpush1.msra.mxu0 %v4096
    %4108 = vmatprep.subr.mxu0 0.0
    %4109 = vmatpush1.msra.mxu0 0.0
    %4110 = vmatprep.subr.mxu0 0.0
    %4111 = vmatpush1.msra.mxu0 0.0
    %4112 = vmatprep.subr.mxu0 0.0
    %4113 = vmatpush1.msra.mxu0 0.0
    %4114 = vmatprep.subr.mxu0 0.0
    %4115 = vmatpush1.msra.mxu0 0.0
    %4116 = vmatprep.subr.mxu0 0.0
    %4117 = vmatpush1.msra.mxu0 0.0
    %4118 = vmatprep.subr.mxu0 0.0
    %4119 = vmatpush1.msra.mxu0 0.0
    %4120 = vmatprep.subr.mxu0 0.0
    %4121 = vmatpush1.msra.mxu0 0.0
    %4122 = vmatprep.subr.mxu0 0.0
    %4123 = vmatpush1.msra.mxu0 0.0
    %4124 = vmatprep.subr.mxu0 0.0
    %4125 = vmatpush1.msra.mxu0 0.0
    %4126 = vmatprep.subr.mxu0 0.0
    %4127 = vmatpush1.msra.mxu0 0.0
    %4128 = vmatprep.subr.mxu0 0.0
    %4129 = vmatpush1.msra.mxu0 0.0
    %4130 = vmatprep.subr.mxu0 0.0
    %4131 = vmatpush1.msra.mxu0 0.0
    %4132 = vmatprep.subr.mxu0 0.0
    %4133 = vmatpush1.msra.mxu0 0.0
    %4134 = vmatprep.subr.mxu0 0.0
    %4135 = vmatpush1.msra.mxu0 0.0
    %4136 = vmatprep.subr.mxu0 0.0
    %4137 = vmatpush1.msra.mxu0 0.0
    %4138 = vmatprep.subr.mxu0 0.0
    %4139 = vmatpush1.msra.mxu0 0.0
    %4140 = vmatprep.subr.mxu0 0.0
    %4141 = vmatpush1.msra.mxu0 0.0
    %4142 = vmatprep.subr.mxu0 0.0
    %4143 = vmatpush1.msra.mxu0 0.0
    %4144 = vmatprep.subr.mxu0 0.0
    %4145 = vmatpush1.msra.mxu0 0.0
    %4146 = vmatprep.subr.mxu0 0.0
    %4147 = vmatpush1.msra.mxu0 0.0
    %4148 = vmatprep.subr.mxu0 0.0
    %4149 = vmatpush1.msra.mxu0 0.0
    %4150 = vmatprep.subr.mxu0 0.0
    %4151 = vmatpush1.msra.mxu0 0.0
    %4152 = vmatprep.subr.mxu0 0.0
    %4153 = vmatpush1.msra.mxu0 0.0
    %4154 = vmatprep.subr.mxu0 0.0
    %4155 = vmatpush1.msra.mxu0 0.0
    %4156 = vmatprep.subr.mxu0 0.0
    %4157 = vmatpush1.msra.mxu0 0.0
    %4158 = vmatprep.subr.mxu0 0.0
    %4159 = vmatpush1.msra.mxu0 0.0
    %4160 = vmatprep.subr.mxu0 0.0
    %4161 = vmatpush1.msra.mxu0 0.0
    %4162 = vmatprep.mubr.f32.mxu0 0.0
    %4163 = vmatmul.mubr.f32.gmra.mrb[0].mxu0 %v4090
    %v4164 = vpop.f32.mrb[0].mxu0
    %v4165 = vadd.f32 0.0, %v4164
    %v4166 = vpop.f32.mrb[0].mxu0
    %4167 = vmatprep.mubr.f32.mxu0 0.0
    %4168 = vmatmul.mubr.f32.gmra.mrb[0].mxu0 %v4093
    %v4169 = vpop.f32.mrb[0].mxu0
    %v4170 = vadd.f32 0.0, %v4169
    %v4171 = vpop.f32.mrb[0].mxu0
    %4172 = vdwg.mxu0
    %v4173 = vld [vmem:[%s23] sm:$0xff]
    %v4174 = vld [vmem:[%s23 + $0x8] sm:$0x1]
    %v4175 = vlaneseq
    %v4176 = vshrl.u32 %v4175, 7
    %v4177 = vsub.s32 0, %v4176
    %v4178 = vrot.slane %v4173, %v4177
    %v4179 = vmul.f32 %v4178, %v4165
    %v4180 = vmul.f32 %v4178, %v4170
    %v4181 = vadd.f32 %v4179, 0.0
    %v4182 = vadd.f32 %v4180, 0.0
    %v4183 = vlaneseq
    %v4184 = vshrl.u32 %v4183, 7
    %v4185 = vsub.s32 1, %v4184
    %v4186 = vrot.slane %v4173, %v4185
    %v4187 = vmul.f32 %v4186, %v4165
    %v4188 = vmul.f32 %v4186, %v4170
    %v4191 = vrot.slane %v4187, 1
    %v4192 = vrot.slane %v4188, 1
    %v4193 = vsel %vm389, %v4191, %v4192
    %v4196 = vadd.f32 %v4181, %v4193
    %v4197 = vadd.f32 %v4182, %v4192
    %v4198 = vlaneseq
    %v4199 = vshrl.u32 %v4198, 7
    %v4200 = vsub.s32 2, %v4199
    %v4201 = vrot.slane %v4173, %v4200
    %v4202 = vmul.f32 %v4201, %v4165
    %v4203 = vmul.f32 %v4201, %v4170
    %v4206 = vrot.slane %v4202, 2
    %v4207 = vrot.slane %v4203, 2
    %v4208 = vsel %vm591, %v4206, %v4207
    %v4211 = vadd.f32 %v4196, %v4208
    %v4212 = vadd.f32 %v4197, %v4207
    %v4213 = vlaneseq
    %v4214 = vshrl.u32 %v4213, 7
    %v4215 = vsub.s32 3, %v4214
    %v4216 = vrot.slane %v4173, %v4215
    %v4217 = vmul.f32 %v4216, %v4165
    %v4218 = vmul.f32 %v4216, %v4170
    %v4221 = vrot.slane %v4217, 3
    %v4222 = vrot.slane %v4218, 3
    %v4223 = vsel %vm793, %v4221, %v4222
    %v4226 = vadd.f32 %v4211, %v4223
    %v4227 = vadd.f32 %v4212, %v4222
    %v4228 = vlaneseq
    %v4229 = vshrl.u32 %v4228, 7
    %v4230 = vsub.s32 4, %v4229
    %v4231 = vrot.slane %v4173, %v4230
    %v4232 = vmul.f32 %v4231, %v4165
    %v4233 = vmul.f32 %v4231, %v4170
    %v4236 = vrot.slane %v4232, 4
    %v4237 = vrot.slane %v4233, 4
    %v4238 = vsel %vm997, %v4236, %v4237
    %v4241 = vadd.f32 %v4226, %v4238
    %v4242 = vadd.f32 %v4227, %v4237
    %v4243 = vlaneseq
    %v4244 = vshrl.u32 %v4243, 7
    %v4245 = vsub.s32 5, %v4244
    %v4246 = vrot.slane %v4173, %v4245
    %v4247 = vmul.f32 %v4246, %v4165
    %v4248 = vmul.f32 %v4246, %v4170
    %v4251 = vrot.slane %v4247, 5
    %v4252 = vrot.slane %v4248, 5
    %v4253 = vsel %vm1203, %v4251, %v4252
    %v4256 = vadd.f32 %v4241, %v4253
    %v4257 = vadd.f32 %v4242, %v4252
    %v4258 = vlaneseq
    %v4259 = vshrl.u32 %v4258, 7
    %v4260 = vsub.s32 6, %v4259
    %v4261 = vrot.slane %v4173, %v4260
    %v4262 = vmul.f32 %v4261, %v4165
    %v4263 = vmul.f32 %v4261, %v4170
    %v4266 = vrot.slane %v4262, 6
    %v4267 = vrot.slane %v4263, 6
    %v4268 = vsel %vm1409, %v4266, %v4267
    %v4271 = vadd.f32 %v4256, %v4268
    %v4272 = vadd.f32 %v4257, %v4267
    %v4273 = vlaneseq
    %v4274 = vshrl.u32 %v4273, 7
    %v4275 = vsub.s32 7, %v4274
    %v4276 = vrot.slane %v4173, %v4275
    %v4277 = vmul.f32 %v4276, %v4165
    %v4278 = vmul.f32 %v4276, %v4170
    %v4281 = vrot.slane %v4277, 7
    %v4282 = vrot.slane %v4278, 7
    %v4283 = vsel %vm1615, %v4281, %v4282
    %v4286 = vadd.f32 %v4271, %v4283
    %v4287 = vadd.f32 %v4272, %v4282
    %v4288 = vlaneseq
    %v4289 = vshrl.u32 %v4288, 7
    %v4290 = vsub.s32 0, %v4289
    %v4291 = vrot.slane %v4174, %v4290
    %v4292 = vadd.f32 %v4286, %v4291
    %v4293 = vadd.f32 %v4287, %v4291
    %v4294 = vld [vmem:[%s25] sm:$0xff]
    %v4295 = vld [vmem:[%s25 + $0x8] sm:$0xff]
    %v4296 = vld [vmem:[%s25 + $0x10] sm:$0xff]
    %v4297 = vld [vmem:[%s25 + $0x18] sm:$0xff]
    %v4298 = vld [vmem:[%s25 + $0x20] sm:$0xff]
    %v4299 = vld [vmem:[%s25 + $0x28] sm:$0xff]
    %v4300 = vld [vmem:[%s25 + $0x30] sm:$0xff]
    %v4301 = vld [vmem:[%s25 + $0x38] sm:$0xff]
    %v4302 = vld [vmem:[%s25 + $0x40] sm:$0xff]
    %v4303 = vld [vmem:[%s25 + $0x48] sm:$0xff]
    %v4304 = vld [vmem:[%s25 + $0x50] sm:$0xff]
    %v4305 = vld [vmem:[%s25 + $0x58] sm:$0xff]
    %v4306 = vld [vmem:[%s25 + $0x60] sm:$0xff]
    %v4307 = vld [vmem:[%s25 + $0x68] sm:$0xff]
    %v4308 = vld [vmem:[%s25 + $0x70] sm:$0xff]
    %v4309 = vld [vmem:[%s25 + $0x78] sm:$0xff]
    %v4310 = vld [vmem:[%s25 + $0x80] sm:$0xff]
    %v4311 = vld [vmem:[%s25 + $0x88] sm:$0xff]
    %v4312 = vld [vmem:[%s25 + $0x90] sm:$0xff]
    %v4313 = vld [vmem:[%s25 + $0x98] sm:$0xff]
    %v4314 = vld [vmem:[%s25 + $0xa0] sm:$0xff]
    %v4315 = vld [vmem:[%s25 + $0xa8] sm:$0xff]
    %v4316 = vld [vmem:[%s25 + $0xb0] sm:$0xff]
    %v4317 = vld [vmem:[%s25 + $0xb8] sm:$0xff]
    %v4318 = vld [vmem:[%s25 + $0xc0] sm:$0xff]
    %v4319 = vld [vmem:[%s25 + $0xc8] sm:$0xff]
    %v4320 = vld [vmem:[%s25 + $0xd0] sm:$0xff]
    %v4321 = vld [vmem:[%s25 + $0xd8] sm:$0xff]
    %v4322 = vld [vmem:[%s25 + $0xe0] sm:$0xff]
    %v4323 = vld [vmem:[%s25 + $0xe8] sm:$0xff]
    %v4324 = vld [vmem:[%s25 + $0xf0] sm:$0xff]
    %v4325 = vld [vmem:[%s25 + $0xf8] sm:$0xff]
    %v4326 = vld [vmem:[%s25 + $0x100] sm:$0x1]
    %v4327 = vld [vmem:[%s25 + $0x108] sm:$0x1]
    %v4328 = vlaneseq
    %v4329 = vshrl.u32 %v4328, 7
    %v4330 = vsub.s32 0, %v4329
    %v4331 = vrot.slane %v4326, %v4330
    %v4332 = vlaneseq
    %v4333 = vshrl.u32 %v4332, 7
    %v4334 = vsub.s32 0, %v4333
    %v4335 = vrot.slane %v4327, %v4334
    %4336 = vmatprep.subr.mxu0 %v4295
    %4337 = vmatpush1.msra.mxu0 %v4294
    %4338 = vmatprep.subr.mxu0 %v4297
    %4339 = vmatpush1.msra.mxu0 %v4296
    %4340 = vmatprep.subr.mxu0 %v4299
    %4341 = vmatpush1.msra.mxu0 %v4298
    %4342 = vmatprep.subr.mxu0 %v4301
    %4343 = vmatpush1.msra.mxu0 %v4300
    %4344 = vmatprep.subr.mxu0 %v4303
    %4345 = vmatpush1.msra.mxu0 %v4302
    %4346 = vmatprep.subr.mxu0 %v4305
    %4347 = vmatpush1.msra.mxu0 %v4304
    %4348 = vmatprep.subr.mxu0 %v4307
    %4349 = vmatpush1.msra.mxu0 %v4306
    %4350 = vmatprep.subr.mxu0 %v4309
    %4351 = vmatpush1.msra.mxu0 %v4308
    %4352 = vmatprep.subr.mxu0 %v4311
    %4353 = vmatpush1.msra.mxu0 %v4310
    %4354 = vmatprep.subr.mxu0 %v4313
    %4355 = vmatpush1.msra.mxu0 %v4312
    %4356 = vmatprep.subr.mxu0 %v4315
    %4357 = vmatpush1.msra.mxu0 %v4314
    %4358 = vmatprep.subr.mxu0 %v4317
    %4359 = vmatpush1.msra.mxu0 %v4316
    %4360 = vmatprep.subr.mxu0 %v4319
    %4361 = vmatpush1.msra.mxu0 %v4318
    %4362 = vmatprep.subr.mxu0 %v4321
    %4363 = vmatpush1.msra.mxu0 %v4320
    %4364 = vmatprep.subr.mxu0 %v4323
    %4365 = vmatpush1.msra.mxu0 %v4322
    %4366 = vmatprep.subr.mxu0 %v4325
    %4367 = vmatpush1.msra.mxu0 %v4324
    %4368 = vmatprep.subr.mxu0 0.0
    %4369 = vmatpush1.msra.mxu0 0.0
    %4370 = vmatprep.subr.mxu0 0.0
    %4371 = vmatpush1.msra.mxu0 0.0
    %4372 = vmatprep.subr.mxu0 0.0
    %4373 = vmatpush1.msra.mxu0 0.0
    %4374 = vmatprep.subr.mxu0 0.0
    %4375 = vmatpush1.msra.mxu0 0.0
    %4376 = vmatprep.subr.mxu0 0.0
    %4377 = vmatpush1.msra.mxu0 0.0
    %4378 = vmatprep.subr.mxu0 0.0
    %4379 = vmatpush1.msra.mxu0 0.0
    %4380 = vmatprep.subr.mxu0 0.0
    %4381 = vmatpush1.msra.mxu0 0.0
    %4382 = vmatprep.subr.mxu0 0.0
    %4383 = vmatpush1.msra.mxu0 0.0
    %4384 = vmatprep.subr.mxu0 0.0
    %4385 = vmatpush1.msra.mxu0 0.0
    %4386 = vmatprep.subr.mxu0 0.0
    %4387 = vmatpush1.msra.mxu0 0.0
    %4388 = vmatprep.subr.mxu0 0.0
    %4389 = vmatpush1.msra.mxu0 0.0
    %4390 = vmatprep.subr.mxu0 0.0
    %4391 = vmatpush1.msra.mxu0 0.0
    %4392 = vmatprep.subr.mxu0 0.0
    %4393 = vmatpush1.msra.mxu0 0.0
    %4394 = vmatprep.subr.mxu0 0.0
    %4395 = vmatpush1.msra.mxu0 0.0
    %4396 = vmatprep.subr.mxu0 0.0
    %4397 = vmatpush1.msra.mxu0 0.0
    %4398 = vmatprep.subr.mxu0 0.0
    %4399 = vmatpush1.msra.mxu0 0.0
    %4400 = vmatprep.mubr.f32.mxu0 0.0
    %4401 = vmatmul.mubr.f32.gmra.mrb[0].mxu0 %v4292
    %v4402 = vpop.f32.mrb[0].mxu0
    %v4403 = vadd.f32 %v4331, %v4402
    %v4404 = vpop.f32.mrb[0].mxu0
    %v4405 = vadd.f32 %v4335, %v4404
    %4406 = vmatprep.mubr.f32.mxu0 0.0
    %4407 = vmatmul.mubr.f32.gmra.mrb[0].mxu0 %v4293
    %v4408 = vpop.f32.mrb[0].mxu0
    %v4409 = vadd.f32 %v4331, %v4408
    %v4410 = vpop.f32.mrb[0].mxu0
    %v4411 = vadd.f32 %v4335, %v4410
    %4412 = vdwg.mxu0
    %v4413 = vmax.f32 %v4403, 0.0
    %v4414 = vmax.f32 %v4405, 0.0
    %v4415 = vmax.f32 %v4409, 0.0
    %v4416 = vmax.f32 %v4411, 0.0
    %v4417 = vld [vmem:[%s27] sm:$0x3]
    %vm4418 = vcmask 72704
    %v4420 = vsel %vm4418, %v4417, 0
    %v4423 = vsel %vm1615, %v4415, 0
    %v4426 = vsel %vm1615, %v4416, 0
    %4428 = vmatprep.subr.mxu0 %v4414
    %4429 = vmatpush1.msra.mxu0 %v4413
    %4430 = vmatprep.subr.mxu0 %v4426
    %4431 = vmatpush1.msra.mxu0 %v4423
    %4432 = vmatprep.subr.mxu0 0.0
    %4433 = vmatpush1.msra.mxu0 0.0
    %4434 = vmatprep.subr.mxu0 0.0
    %4435 = vmatpush1.msra.mxu0 0.0
    %4436 = vmatprep.subr.mxu0 0.0
    %4437 = vmatpush1.msra.mxu0 0.0
    %4438 = vmatprep.subr.mxu0 0.0
    %4439 = vmatpush1.msra.mxu0 0.0
    %4440 = vmatprep.subr.mxu0 0.0
    %4441 = vmatpush1.msra.mxu0 0.0
    %4442 = vmatprep.subr.mxu0 0.0
    %4443 = vmatpush1.msra.mxu0 0.0
    %4444 = vmatprep.subr.mxu0 0.0
    %4445 = vmatpush1.msra.mxu0 0.0
    %4446 = vmatprep.subr.mxu0 0.0
    %4447 = vmatpush1.msra.mxu0 0.0
    %4448 = vmatprep.subr.mxu0 0.0
    %4449 = vmatpush1.msra.mxu0 0.0
    %4450 = vmatprep.subr.mxu0 0.0
    %4451 = vmatpush1.msra.mxu0 0.0
    %4452 = vmatprep.subr.mxu0 0.0
    %4453 = vmatpush1.msra.mxu0 0.0
    %4454 = vmatprep.subr.mxu0 0.0
    %4455 = vmatpush1.msra.mxu0 0.0
    %4456 = vmatprep.subr.mxu0 0.0
    %4457 = vmatpush1.msra.mxu0 0.0
    %4458 = vmatprep.subr.mxu0 0.0
    %4459 = vmatpush1.msra.mxu0 0.0
    %4460 = vmatprep.subr.mxu0 0.0
    %4461 = vmatpush1.msra.mxu0 0.0
    %4462 = vmatprep.subr.mxu0 0.0
    %4463 = vmatpush1.msra.mxu0 0.0
    %4464 = vmatprep.subr.mxu0 0.0
    %4465 = vmatpush1.msra.mxu0 0.0
    %4466 = vmatprep.subr.mxu0 0.0
    %4467 = vmatpush1.msra.mxu0 0.0
    %4468 = vmatprep.subr.mxu0 0.0
    %4469 = vmatpush1.msra.mxu0 0.0
    %4470 = vmatprep.subr.mxu0 0.0
    %4471 = vmatpush1.msra.mxu0 0.0
    %4472 = vmatprep.subr.mxu0 0.0
    %4473 = vmatpush1.msra.mxu0 0.0
    %4474 = vmatprep.subr.mxu0 0.0
    %4475 = vmatpush1.msra.mxu0 0.0
    %4476 = vmatprep.subr.mxu0 0.0
    %4477 = vmatpush1.msra.mxu0 0.0
    %4478 = vmatprep.subr.mxu0 0.0
    %4479 = vmatpush1.msra.mxu0 0.0
    %4480 = vmatprep.subr.mxu0 0.0
    %4481 = vmatpush1.msra.mxu0 0.0
    %4482 = vmatprep.subr.mxu0 0.0
    %4483 = vmatpush1.msra.mxu0 0.0
    %4484 = vmatprep.subr.mxu0 0.0
    %4485 = vmatpush1.msra.mxu0 0.0
    %4486 = vmatprep.subr.mxu0 0.0
    %4487 = vmatpush1.msra.mxu0 0.0
    %4488 = vmatprep.subr.mxu0 0.0
    %4489 = vmatpush1.msra.mxu0 0.0
    %4490 = vmatprep.subr.mxu0 0.0
    %4491 = vmatpush1.msra.mxu0 0.0
    %4492 = vmatprep.mubr.f32.mxu0 0.0
    %4493 = vmatmul.mubr.f32.gmra.mrb[0].mxu0 %v4420
    %v4494 = vpop.f32.mrb[0].mxu0
    %v4495 = vadd.f32 0.0, %v4494
    %v4496 = vpop.f32.mrb[0].mxu0
    %v4497 = vadd.f32 0.0, %v4496
    %4498 = vdwg.mxu0
    %v4499 = vld [vmem:[%s59] sm:$0xff]
    %v4500 = vld [vmem:[%s59 + $0x8] sm:$0xff]
    %v4501 = vld [vmem:[%s59 + $0x10] sm:$0xff]
    %v4502 = vld [vmem:[%s59 + $0x18] sm:$0xff]
    %v4503 = vld [vmem:[%s59 + $0x20] sm:$0xff]
    %v4504 = vld [vmem:[%s59 + $0x28] sm:$0xff]
    %v4505 = vld [vmem:[%s59 + $0x30] sm:$0xff]
    %v4506 = vld [vmem:[%s59 + $0x38] sm:$0xff]
    %v4507 = vld [vmem:[%s59 + $0x40] sm:$0xff]
    %v4508 = vld [vmem:[%s59 + $0x48] sm:$0xff]
    %v4509 = vld [vmem:[%s59 + $0x50] sm:$0xff]
    %v4510 = vld [vmem:[%s59 + $0x58] sm:$0xff]
    %v4511 = vld [vmem:[%s59 + $0x60] sm:$0xff]
    %v4512 = vld [vmem:[%s59 + $0x68] sm:$0xff]
    %v4513 = vld [vmem:[%s59 + $0x70] sm:$0xff]
    %v4514 = vld [vmem:[%s59 + $0x78] sm:$0xff]
    %v4515 = vld [vmem:[%s59 + $0x80] sm:$0xff]
    %v4516 = vld [vmem:[%s59 + $0x88] sm:$0xff]
    %v4517 = vld [vmem:[%s59 + $0x90] sm:$0xff]
    %v4518 = vld [vmem:[%s59 + $0x98] sm:$0xff]
    %v4519 = vld [vmem:[%s59 + $0xa0] sm:$0xff]
    %v4520 = vld [vmem:[%s59 + $0xa8] sm:$0xff]
    %v4521 = vld [vmem:[%s59 + $0xb0] sm:$0xff]
    %v4522 = vld [vmem:[%s59 + $0xb8] sm:$0xff]
    %v4523 = vld [vmem:[%s59 + $0xc0] sm:$0xff]
    %v4524 = vld [vmem:[%s59 + $0xc8] sm:$0xff]
    %v4525 = vld [vmem:[%s59 + $0xd0] sm:$0xff]
    %v4526 = vld [vmem:[%s59 + $0xd8] sm:$0xff]
    %v4527 = vld [vmem:[%s59 + $0xe0] sm:$0xff]
    %v4528 = vld [vmem:[%s59 + $0xe8] sm:$0xff]
    %v4529 = vld [vmem:[%s59 + $0xf0] sm:$0xff]
    %v4530 = vld [vmem:[%s59 + $0xf8] sm:$0xff]
    %v4531 = vld [vmem:[%s59 + $0x100] sm:$0x1]
    %v4532 = vlaneseq
    %v4533 = vshrl.u32 %v4532, 7
    %v4534 = vsub.s32 0, %v4533
    %v4535 = vrot.slane %v4531, %v4534
    %4536 = vmatprep.subr.mxu0 0.0
    %4537 = vmatpush1.msra.mxu0 %v4499
    %4538 = vmatprep.subr.mxu0 0.0
    %4539 = vmatpush1.msra.mxu0 %v4500
    %4540 = vmatprep.subr.mxu0 0.0
    %4541 = vmatpush1.msra.mxu0 %v4501
    %4542 = vmatprep.subr.mxu0 0.0
    %4543 = vmatpush1.msra.mxu0 %v4502
    %4544 = vmatprep.subr.mxu0 0.0
    %4545 = vmatpush1.msra.mxu0 %v4503
    %4546 = vmatprep.subr.mxu0 0.0
    %4547 = vmatpush1.msra.mxu0 %v4504
    %4548 = vmatprep.subr.mxu0 0.0
    %4549 = vmatpush1.msra.mxu0 %v4505
    %4550 = vmatprep.subr.mxu0 0.0
    %4551 = vmatpush1.msra.mxu0 %v4506
    %4552 = vmatprep.subr.mxu0 0.0
    %4553 = vmatpush1.msra.mxu0 %v4507
    %4554 = vmatprep.subr.mxu0 0.0
    %4555 = vmatpush1.msra.mxu0 %v4508
    %4556 = vmatprep.subr.mxu0 0.0
    %4557 = vmatpush1.msra.mxu0 %v4509
    %4558 = vmatprep.subr.mxu0 0.0
    %4559 = vmatpush1.msra.mxu0 %v4510
    %4560 = vmatprep.subr.mxu0 0.0
    %4561 = vmatpush1.msra.mxu0 %v4511
    %4562 = vmatprep.subr.mxu0 0.0
    %4563 = vmatpush1.msra.mxu0 %v4512
    %4564 = vmatprep.subr.mxu0 0.0
    %4565 = vmatpush1.msra.mxu0 %v4513
    %4566 = vmatprep.subr.mxu0 0.0
    %4567 = vmatpush1.msra.mxu0 %v4514
    %4568 = vmatprep.subr.mxu0 0.0
    %4569 = vmatpush1.msra.mxu0 %v4515
    %4570 = vmatprep.subr.mxu0 0.0
    %4571 = vmatpush1.msra.mxu0 %v4516
    %4572 = vmatprep.subr.mxu0 0.0
    %4573 = vmatpush1.msra.mxu0 %v4517
    %4574 = vmatprep.subr.mxu0 0.0
    %4575 = vmatpush1.msra.mxu0 %v4518
    %4576 = vmatprep.subr.mxu0 0.0
    %4577 = vmatpush1.msra.mxu0 %v4519
    %4578 = vmatprep.subr.mxu0 0.0
    %4579 = vmatpush1.msra.mxu0 %v4520
    %4580 = vmatprep.subr.mxu0 0.0
    %4581 = vmatpush1.msra.mxu0 %v4521
    %4582 = vmatprep.subr.mxu0 0.0
    %4583 = vmatpush1.msra.mxu0 %v4522
    %4584 = vmatprep.subr.mxu0 0.0
    %4585 = vmatpush1.msra.mxu0 %v4523
    %4586 = vmatprep.subr.mxu0 0.0
    %4587 = vmatpush1.msra.mxu0 %v4524
    %4588 = vmatprep.subr.mxu0 0.0
    %4589 = vmatpush1.msra.mxu0 %v4525
    %4590 = vmatprep.subr.mxu0 0.0
    %4591 = vmatpush1.msra.mxu0 %v4526
    %4592 = vmatprep.subr.mxu0 0.0
    %4593 = vmatpush1.msra.mxu0 %v4527
    %4594 = vmatprep.subr.mxu0 0.0
    %4595 = vmatpush1.msra.mxu0 %v4528
    %4596 = vmatprep.subr.mxu0 0.0
    %4597 = vmatpush1.msra.mxu0 %v4529
    %4598 = vmatprep.subr.mxu0 0.0
    %4599 = vmatpush1.msra.mxu0 %v4530
    %4600 = vmatprep.mubr.f32.mxu0 %v4497
    %4601 = vmatmul.mubr.f32.gmra.mrb[0].mxu0 %v4495
    %v4602 = vpop.f32.mrb[0].mxu0
    %v4603 = vadd.f32 %v4535, %v4602
    %v4604 = vpop.f32.mrb[0].mxu0
    %4605 = vdwg.mxu0
    %v4606 = vmax.f32 %v4603, 0.0
    %v4607 = vld [vmem:[%s61] sm:$0xff]
    %v4608 = vld [vmem:[%s61 + $0x8] sm:$0xff]
    %v4609 = vld [vmem:[%s61 + $0x10] sm:$0xff]
    %v4610 = vld [vmem:[%s61 + $0x18] sm:$0xff]
    %v4611 = vld [vmem:[%s61 + $0x20] sm:$0xff]
    %v4612 = vld [vmem:[%s61 + $0x28] sm:$0xff]
    %v4613 = vld [vmem:[%s61 + $0x30] sm:$0xff]
    %v4614 = vld [vmem:[%s61 + $0x38] sm:$0xff]
    %v4615 = vld [vmem:[%s61 + $0x40] sm:$0x1]
    %v4616 = vlaneseq
    %v4617 = vshrl.u32 %v4616, 7
    %v4618 = vsub.s32 0, %v4617
    %v4619 = vrot.slane %v4615, %v4618
    %v4621 = vsel %vm3975, %v4606, 0
    %4623 = vmatprep.subr.mxu0 0.0
    %4624 = vmatpush1.msra.mxu0 %v4607
    %4625 = vmatprep.subr.mxu0 0.0
    %4626 = vmatpush1.msra.mxu0 %v4608
    %4627 = vmatprep.subr.mxu0 0.0
    %4628 = vmatpush1.msra.mxu0 %v4609
    %4629 = vmatprep.subr.mxu0 0.0
    %4630 = vmatpush1.msra.mxu0 %v4610
    %4631 = vmatprep.subr.mxu0 0.0
    %4632 = vmatpush1.msra.mxu0 %v4611
    %4633 = vmatprep.subr.mxu0 0.0
    %4634 = vmatpush1.msra.mxu0 %v4612
    %4635 = vmatprep.subr.mxu0 0.0
    %4636 = vmatpush1.msra.mxu0 %v4613
    %4637 = vmatprep.subr.mxu0 0.0
    %4638 = vmatpush1.msra.mxu0 %v4614
    %4639 = vmatprep.subr.mxu0 0.0
    %4640 = vmatpush1.msra.mxu0 0.0
    %4641 = vmatprep.subr.mxu0 0.0
    %4642 = vmatpush1.msra.mxu0 0.0
    %4643 = vmatprep.subr.mxu0 0.0
    %4644 = vmatpush1.msra.mxu0 0.0
    %4645 = vmatprep.subr.mxu0 0.0
    %4646 = vmatpush1.msra.mxu0 0.0
    %4647 = vmatprep.subr.mxu0 0.0
    %4648 = vmatpush1.msra.mxu0 0.0
    %4649 = vmatprep.subr.mxu0 0.0
    %4650 = vmatpush1.msra.mxu0 0.0
    %4651 = vmatprep.subr.mxu0 0.0
    %4652 = vmatpush1.msra.mxu0 0.0
    %4653 = vmatprep.subr.mxu0 0.0
    %4654 = vmatpush1.msra.mxu0 0.0
    %4655 = vmatprep.subr.mxu0 0.0
    %4656 = vmatpush1.msra.mxu0 0.0
    %4657 = vmatprep.subr.mxu0 0.0
    %4658 = vmatpush1.msra.mxu0 0.0
    %4659 = vmatprep.subr.mxu0 0.0
    %4660 = vmatpush1.msra.mxu0 0.0
    %4661 = vmatprep.subr.mxu0 0.0
    %4662 = vmatpush1.msra.mxu0 0.0
    %4663 = vmatprep.subr.mxu0 0.0
    %4664 = vmatpush1.msra.mxu0 0.0
    %4665 = vmatprep.subr.mxu0 0.0
    %4666 = vmatpush1.msra.mxu0 0.0
    %4667 = vmatprep.subr.mxu0 0.0
    %4668 = vmatpush1.msra.mxu0 0.0
    %4669 = vmatprep.subr.mxu0 0.0
    %4670 = vmatpush1.msra.mxu0 0.0
    %4671 = vmatprep.subr.mxu0 0.0
    %4672 = vmatpush1.msra.mxu0 0.0
    %4673 = vmatprep.subr.mxu0 0.0
    %4674 = vmatpush1.msra.mxu0 0.0
    %4675 = vmatprep.subr.mxu0 0.0
    %4676 = vmatpush1.msra.mxu0 0.0
    %4677 = vmatprep.subr.mxu0 0.0
    %4678 = vmatpush1.msra.mxu0 0.0
    %4679 = vmatprep.subr.mxu0 0.0
    %4680 = vmatpush1.msra.mxu0 0.0
    %4681 = vmatprep.subr.mxu0 0.0
    %4682 = vmatpush1.msra.mxu0 0.0
    %4683 = vmatprep.subr.mxu0 0.0
    %4684 = vmatpush1.msra.mxu0 0.0
    %4685 = vmatprep.subr.mxu0 0.0
    %4686 = vmatpush1.msra.mxu0 0.0
    %4687 = vmatprep.mubr.f32.mxu0 0.0
    %4688 = vmatmul.mubr.f32.gmra.mrb[0].mxu0 %v4621
    %v4689 = vpop.f32.mrb[0].mxu0
    %v4690 = vadd.f32 %v4619, %v4689
    %v4691 = vpop.f32.mrb[0].mxu0
    %4692 = vdwg.mxu0
    %v4693 = vmax.f32 %v4690, 0.0
    %v4694 = vld [vmem:[%s3] sm:$0xff]
    %v4695 = vld [vmem:[%s3 + $0x8] sm:$0xff]
    %v4696 = vld [vmem:[%s3 + $0x10] sm:$0xff]
    %v4697 = vld [vmem:[%s3 + $0x18] sm:$0xff]
    %v4698 = vld [vmem:[%s3 + $0x20] sm:$0xff]
    %v4699 = vld [vmem:[%s3 + $0x28] sm:$0xff]
    %v4700 = vld [vmem:[%s3 + $0x30] sm:$0xff]
    %v4701 = vld [vmem:[%s3 + $0x38] sm:$0xff]
    %v4702 = vld [vmem:[%s3 + $0x40] sm:$0xff]
    %v4703 = vld [vmem:[%s3 + $0x48] sm:$0xff]
    %v4704 = vld [vmem:[%s3 + $0x50] sm:$0xff]
    %v4705 = vld [vmem:[%s3 + $0x58] sm:$0xff]
    %v4706 = vld [vmem:[%s3 + $0x60] sm:$0xff]
    %v4707 = vld [vmem:[%s3 + $0x68] sm:$0xff]
    %v4708 = vld [vmem:[%s3 + $0x70] sm:$0xff]
    %v4709 = vld [vmem:[%s3 + $0x78] sm:$0xff]
    %v4710 = vld [vmem:[%s3 + $0x80] sm:$0xff]
    %v4711 = vld [vmem:[%s3 + $0x88] sm:$0xff]
    %v4712 = vld [vmem:[%s3 + $0x90] sm:$0xff]
    %v4713 = vld [vmem:[%s3 + $0x98] sm:$0xff]
    %v4714 = vld [vmem:[%s3 + $0xa0] sm:$0xff]
    %v4715 = vld [vmem:[%s3 + $0xa8] sm:$0xff]
    %v4716 = vld [vmem:[%s3 + $0xb0] sm:$0xff]
    %v4717 = vld [vmem:[%s3 + $0xb8] sm:$0xff]
    %v4718 = vld [vmem:[%s3 + $0xc0] sm:$0xff]
    %v4719 = vld [vmem:[%s3 + $0xc8] sm:$0xff]
    %v4720 = vld [vmem:[%s3 + $0xd0] sm:$0xff]
    %v4721 = vld [vmem:[%s3 + $0xd8] sm:$0xff]
    %v4722 = vld [vmem:[%s3 + $0xe0] sm:$0xff]
    %v4723 = vld [vmem:[%s3 + $0xe8] sm:$0xff]
    %v4724 = vld [vmem:[%s3 + $0xf0] sm:$0xff]
    %v4725 = vld [vmem:[%s3 + $0xf8] sm:$0xff]
    %v4726 = vld [vmem:[%s3 + $0x100] sm:$0xff]
    %v4727 = vld [vmem:[%s3 + $0x108] sm:$0xff]
    %v4728 = vld [vmem:[%s29] sm:$0xff]
    %v4729 = vld [vmem:[%s29 + $0x8] sm:$0x1]
    %v4730 = vlaneseq
    %v4731 = vshrl.u32 %v4730, 7
    %v4732 = vsub.s32 0, %v4731
    %v4733 = vrot.slane %v4728, %v4732
    %v4734 = vmul.f32 %v4733, %v4694
    %v4735 = vmul.f32 %v4733, %v4695
    %v4736 = vmul.f32 %v4733, %v4696
    %v4737 = vmul.f32 %v4733, %v4697
    %v4738 = vmul.f32 %v4733, %v4698
    %v4739 = vmul.f32 %v4733, %v4699
    %v4740 = vmul.f32 %v4733, %v4700
    %v4741 = vmul.f32 %v4733, %v4701
    %v4742 = vmul.f32 %v4733, %v4702
    %v4743 = vmul.f32 %v4733, %v4703
    %v4744 = vmul.f32 %v4733, %v4704
    %v4745 = vmul.f32 %v4733, %v4705
    %v4746 = vmul.f32 %v4733, %v4706
    %v4747 = vmul.f32 %v4733, %v4707
    %v4748 = vmul.f32 %v4733, %v4708
    %v4749 = vmul.f32 %v4733, %v4709
    %v4750 = vmul.f32 %v4733, %v4710
    %v4751 = vmul.f32 %v4733, %v4711
    %v4752 = vmul.f32 %v4733, %v4712
    %v4753 = vmul.f32 %v4733, %v4713
    %v4754 = vmul.f32 %v4733, %v4714
    %v4755 = vmul.f32 %v4733, %v4715
    %v4756 = vmul.f32 %v4733, %v4716
    %v4757 = vmul.f32 %v4733, %v4717
    %v4758 = vmul.f32 %v4733, %v4718
    %v4759 = vmul.f32 %v4733, %v4719
    %v4760 = vmul.f32 %v4733, %v4720
    %v4761 = vmul.f32 %v4733, %v4721
    %v4762 = vmul.f32 %v4733, %v4722
    %v4763 = vmul.f32 %v4733, %v4723
    %v4764 = vmul.f32 %v4733, %v4724
    %v4765 = vmul.f32 %v4733, %v4725
    %v4766 = vmul.f32 %v4733, %v4726
    %v4767 = vmul.f32 %v4733, %v4727
    %v4768 = vadd.f32 %v4734, 0.0
    %v4769 = vadd.f32 %v4735, 0.0
    %v4770 = vadd.f32 %v4736, 0.0
    %v4771 = vadd.f32 %v4737, 0.0
    %v4772 = vadd.f32 %v4738, 0.0
    %v4773 = vadd.f32 %v4739, 0.0
    %v4774 = vadd.f32 %v4740, 0.0
    %v4775 = vadd.f32 %v4741, 0.0
    %v4776 = vadd.f32 %v4742, 0.0
    %v4777 = vadd.f32 %v4743, 0.0
    %v4778 = vadd.f32 %v4744, 0.0
    %v4779 = vadd.f32 %v4745, 0.0
    %v4780 = vadd.f32 %v4746, 0.0
    %v4781 = vadd.f32 %v4747, 0.0
    %v4782 = vadd.f32 %v4748, 0.0
    %v4783 = vadd.f32 %v4749, 0.0
    %v4784 = vadd.f32 %v4750, 0.0
    %v4785 = vadd.f32 %v4751, 0.0
    %v4786 = vadd.f32 %v4752, 0.0
    %v4787 = vadd.f32 %v4753, 0.0
    %v4788 = vadd.f32 %v4754, 0.0
    %v4789 = vadd.f32 %v4755, 0.0
    %v4790 = vadd.f32 %v4756, 0.0
    %v4791 = vadd.f32 %v4757, 0.0
    %v4792 = vadd.f32 %v4758, 0.0
    %v4793 = vadd.f32 %v4759, 0.0
    %v4794 = vadd.f32 %v4760, 0.0
    %v4795 = vadd.f32 %v4761, 0.0
    %v4796 = vadd.f32 %v4762, 0.0
    %v4797 = vadd.f32 %v4763, 0.0
    %v4798 = vadd.f32 %v4764, 0.0
    %v4799 = vadd.f32 %v4765, 0.0
    %v4800 = vadd.f32 %v4766, 0.0
    %v4801 = vadd.f32 %v4767, 0.0
    %v4802 = vlaneseq
    %v4803 = vshrl.u32 %v4802, 7
    %v4804 = vsub.s32 1, %v4803
    %v4805 = vrot.slane %v4728, %v4804
    %v4806 = vmul.f32 %v4805, %v4694
    %v4807 = vmul.f32 %v4805, %v4695
    %v4808 = vmul.f32 %v4805, %v4696
    %v4809 = vmul.f32 %v4805, %v4697
    %v4810 = vmul.f32 %v4805, %v4698
    %v4811 = vmul.f32 %v4805, %v4699
    %v4812 = vmul.f32 %v4805, %v4700
    %v4813 = vmul.f32 %v4805, %v4701
    %v4814 = vmul.f32 %v4805, %v4702
    %v4815 = vmul.f32 %v4805, %v4703
    %v4816 = vmul.f32 %v4805, %v4704
    %v4817 = vmul.f32 %v4805, %v4705
    %v4818 = vmul.f32 %v4805, %v4706
    %v4819 = vmul.f32 %v4805, %v4707
    %v4820 = vmul.f32 %v4805, %v4708
    %v4821 = vmul.f32 %v4805, %v4709
    %v4822 = vmul.f32 %v4805, %v4710
    %v4823 = vmul.f32 %v4805, %v4711
    %v4824 = vmul.f32 %v4805, %v4712
    %v4825 = vmul.f32 %v4805, %v4713
    %v4826 = vmul.f32 %v4805, %v4714
    %v4827 = vmul.f32 %v4805, %v4715
    %v4828 = vmul.f32 %v4805, %v4716
    %v4829 = vmul.f32 %v4805, %v4717
    %v4830 = vmul.f32 %v4805, %v4718
    %v4831 = vmul.f32 %v4805, %v4719
    %v4832 = vmul.f32 %v4805, %v4720
    %v4833 = vmul.f32 %v4805, %v4721
    %v4834 = vmul.f32 %v4805, %v4722
    %v4835 = vmul.f32 %v4805, %v4723
    %v4836 = vmul.f32 %v4805, %v4724
    %v4837 = vmul.f32 %v4805, %v4725
    %v4838 = vmul.f32 %v4805, %v4726
    %v4839 = vmul.f32 %v4805, %v4727
    %v4874 = vrot.slane %v4806, 1
    %v4875 = vrot.slane %v4807, 1
    %v4876 = vsel %vm389, %v4874, %v4875
    %v4877 = vrot.slane %v4808, 1
    %v4878 = vsel %vm389, %v4875, %v4877
    %v4879 = vrot.slane %v4809, 1
    %v4880 = vsel %vm389, %v4877, %v4879
    %v4881 = vrot.slane %v4810, 1
    %v4882 = vsel %vm389, %v4879, %v4881
    %v4883 = vrot.slane %v4811, 1
    %v4884 = vsel %vm389, %v4881, %v4883
    %v4885 = vrot.slane %v4812, 1
    %v4886 = vsel %vm389, %v4883, %v4885
    %v4887 = vrot.slane %v4813, 1
    %v4888 = vsel %vm389, %v4885, %v4887
    %v4889 = vrot.slane %v4814, 1
    %v4890 = vsel %vm389, %v4887, %v4889
    %v4891 = vrot.slane %v4815, 1
    %v4892 = vsel %vm389, %v4889, %v4891
    %v4893 = vrot.slane %v4816, 1
    %v4894 = vsel %vm389, %v4891, %v4893
    %v4895 = vrot.slane %v4817, 1
    %v4896 = vsel %vm389, %v4893, %v4895
    %v4897 = vrot.slane %v4818, 1
    %v4898 = vsel %vm389, %v4895, %v4897
    %v4899 = vrot.slane %v4819, 1
    %v4900 = vsel %vm389, %v4897, %v4899
    %v4901 = vrot.slane %v4820, 1
    %v4902 = vsel %vm389, %v4899, %v4901
    %v4903 = vrot.slane %v4821, 1
    %v4904 = vsel %vm389, %v4901, %v4903
    %v4905 = vrot.slane %v4822, 1
    %v4906 = vsel %vm389, %v4903, %v4905
    %v4907 = vrot.slane %v4823, 1
    %v4908 = vsel %vm389, %v4905, %v4907
    %v4909 = vrot.slane %v4824, 1
    %v4910 = vsel %vm389, %v4907, %v4909
    %v4911 = vrot.slane %v4825, 1
    %v4912 = vsel %vm389, %v4909, %v4911
    %v4913 = vrot.slane %v4826, 1
    %v4914 = vsel %vm389, %v4911, %v4913
    %v4915 = vrot.slane %v4827, 1
    %v4916 = vsel %vm389, %v4913, %v4915
    %v4917 = vrot.slane %v4828, 1
    %v4918 = vsel %vm389, %v4915, %v4917
    %v4919 = vrot.slane %v4829, 1
    %v4920 = vsel %vm389, %v4917, %v4919
    %v4921 = vrot.slane %v4830, 1
    %v4922 = vsel %vm389, %v4919, %v4921
    %v4923 = vrot.slane %v4831, 1
    %v4924 = vsel %vm389, %v4921, %v4923
    %v4925 = vrot.slane %v4832, 1
    %v4926 = vsel %vm389, %v4923, %v4925
    %v4927 = vrot.slane %v4833, 1
    %v4928 = vsel %vm389, %v4925, %v4927
    %v4929 = vrot.slane %v4834, 1
    %v4930 = vsel %vm389, %v4927, %v4929
    %v4931 = vrot.slane %v4835, 1
    %v4932 = vsel %vm389, %v4929, %v4931
    %v4933 = vrot.slane %v4836, 1
    %v4934 = vsel %vm389, %v4931, %v4933
    %v4935 = vrot.slane %v4837, 1
    %v4936 = vsel %vm389, %v4933, %v4935
    %v4937 = vrot.slane %v4838, 1
    %v4938 = vsel %vm389, %v4935, %v4937
    %v4939 = vrot.slane %v4839, 1
    %v4940 = vsel %vm389, %v4937, %v4939
    %v4975 = vadd.f32 %v4768, %v4876
    %v4976 = vadd.f32 %v4769, %v4878
    %v4977 = vadd.f32 %v4770, %v4880
    %v4978 = vadd.f32 %v4771, %v4882
    %v4979 = vadd.f32 %v4772, %v4884
    %v4980 = vadd.f32 %v4773, %v4886
    %v4981 = vadd.f32 %v4774, %v4888
    %v4982 = vadd.f32 %v4775, %v4890
    %v4983 = vadd.f32 %v4776, %v4892
    %v4984 = vadd.f32 %v4777, %v4894
    %v4985 = vadd.f32 %v4778, %v4896
    %v4986 = vadd.f32 %v4779, %v4898
    %v4987 = vadd.f32 %v4780, %v4900
    %v4988 = vadd.f32 %v4781, %v4902
    %v4989 = vadd.f32 %v4782, %v4904
    %v4990 = vadd.f32 %v4783, %v4906
    %v4991 = vadd.f32 %v4784, %v4908
    %v4992 = vadd.f32 %v4785, %v4910
    %v4993 = vadd.f32 %v4786, %v4912
    %v4994 = vadd.f32 %v4787, %v4914
    %v4995 = vadd.f32 %v4788, %v4916
    %v4996 = vadd.f32 %v4789, %v4918
    %v4997 = vadd.f32 %v4790, %v4920
    %v4998 = vadd.f32 %v4791, %v4922
    %v4999 = vadd.f32 %v4792, %v4924
    %v5000 = vadd.f32 %v4793, %v4926
    %v5001 = vadd.f32 %v4794, %v4928
    %v5002 = vadd.f32 %v4795, %v4930
    %v5003 = vadd.f32 %v4796, %v4932
    %v5004 = vadd.f32 %v4797, %v4934
    %v5005 = vadd.f32 %v4798, %v4936
    %v5006 = vadd.f32 %v4799, %v4938
    %v5007 = vadd.f32 %v4800, %v4940
    %v5008 = vadd.f32 %v4801, %v4939
    %v5009 = vlaneseq
    %v5010 = vshrl.u32 %v5009, 7
    %v5011 = vsub.s32 2, %v5010
    %v5012 = vrot.slane %v4728, %v5011
    %v5013 = vmul.f32 %v5012, %v4694
    %v5014 = vmul.f32 %v5012, %v4695
    %v5015 = vmul.f32 %v5012, %v4696
    %v5016 = vmul.f32 %v5012, %v4697
    %v5017 = vmul.f32 %v5012, %v4698
    %v5018 = vmul.f32 %v5012, %v4699
    %v5019 = vmul.f32 %v5012, %v4700
    %v5020 = vmul.f32 %v5012, %v4701
    %v5021 = vmul.f32 %v5012, %v4702
    %v5022 = vmul.f32 %v5012, %v4703
    %v5023 = vmul.f32 %v5012, %v4704
    %v5024 = vmul.f32 %v5012, %v4705
    %v5025 = vmul.f32 %v5012, %v4706
    %v5026 = vmul.f32 %v5012, %v4707
    %v5027 = vmul.f32 %v5012, %v4708
    %v5028 = vmul.f32 %v5012, %v4709
    %v5029 = vmul.f32 %v5012, %v4710
    %v5030 = vmul.f32 %v5012, %v4711
    %v5031 = vmul.f32 %v5012, %v4712
    %v5032 = vmul.f32 %v5012, %v4713
    %v5033 = vmul.f32 %v5012, %v4714
    %v5034 = vmul.f32 %v5012, %v4715
    %v5035 = vmul.f32 %v5012, %v4716
    %v5036 = vmul.f32 %v5012, %v4717
    %v5037 = vmul.f32 %v5012, %v4718
    %v5038 = vmul.f32 %v5012, %v4719
    %v5039 = vmul.f32 %v5012, %v4720
    %v5040 = vmul.f32 %v5012, %v4721
    %v5041 = vmul.f32 %v5012, %v4722
    %v5042 = vmul.f32 %v5012, %v4723
    %v5043 = vmul.f32 %v5012, %v4724
    %v5044 = vmul.f32 %v5012, %v4725
    %v5045 = vmul.f32 %v5012, %v4726
    %v5046 = vmul.f32 %v5012, %v4727
    %v5081 = vrot.slane %v5013, 2
    %v5082 = vrot.slane %v5014, 2
    %v5083 = vsel %vm591, %v5081, %v5082
    %v5084 = vrot.slane %v5015, 2
    %v5085 = vsel %vm591, %v5082, %v5084
    %v5086 = vrot.slane %v5016, 2
    %v5087 = vsel %vm591, %v5084, %v5086
    %v5088 = vrot.slane %v5017, 2
    %v5089 = vsel %vm591, %v5086, %v5088
    %v5090 = vrot.slane %v5018, 2
    %v5091 = vsel %vm591, %v5088, %v5090
    %v5092 = vrot.slane %v5019, 2
    %v5093 = vsel %vm591, %v5090, %v5092
    %v5094 = vrot.slane %v5020, 2
    %v5095 = vsel %vm591, %v5092, %v5094
    %v5096 = vrot.slane %v5021, 2
    %v5097 = vsel %vm591, %v5094, %v5096
    %v5098 = vrot.slane %v5022, 2
    %v5099 = vsel %vm591, %v5096, %v5098
    %v5100 = vrot.slane %v5023, 2
    %v5101 = vsel %vm591, %v5098, %v5100
    %v5102 = vrot.slane %v5024, 2
    %v5103 = vsel %vm591, %v5100, %v5102
    %v5104 = vrot.slane %v5025, 2
    %v5105 = vsel %vm591, %v5102, %v5104
    %v5106 = vrot.slane %v5026, 2
    %v5107 = vsel %vm591, %v5104, %v5106
    %v5108 = vrot.slane %v5027, 2
    %v5109 = vsel %vm591, %v5106, %v5108
    %v5110 = vrot.slane %v5028, 2
    %v5111 = vsel %vm591, %v5108, %v5110
    %v5112 = vrot.slane %v5029, 2
    %v5113 = vsel %vm591, %v5110, %v5112
    %v5114 = vrot.slane %v5030, 2
    %v5115 = vsel %vm591, %v5112, %v5114
    %v5116 = vrot.slane %v5031, 2
    %v5117 = vsel %vm591, %v5114, %v5116
    %v5118 = vrot.slane %v5032, 2
    %v5119 = vsel %vm591, %v5116, %v5118
    %v5120 = vrot.slane %v5033, 2
    %v5121 = vsel %vm591, %v5118, %v5120
    %v5122 = vrot.slane %v5034, 2
    %v5123 = vsel %vm591, %v5120, %v5122
    %v5124 = vrot.slane %v5035, 2
    %v5125 = vsel %vm591, %v5122, %v5124
    %v5126 = vrot.slane %v5036, 2
    %v5127 = vsel %vm591, %v5124, %v5126
    %v5128 = vrot.slane %v5037, 2
    %v5129 = vsel %vm591, %v5126, %v5128
    %v5130 = vrot.slane %v5038, 2
    %v5131 = vsel %vm591, %v5128, %v5130
    %v5132 = vrot.slane %v5039, 2
    %v5133 = vsel %vm591, %v5130, %v5132
    %v5134 = vrot.slane %v5040, 2
    %v5135 = vsel %vm591, %v5132, %v5134
    %v5136 = vrot.slane %v5041, 2
    %v5137 = vsel %vm591, %v5134, %v5136
    %v5138 = vrot.slane %v5042, 2
    %v5139 = vsel %vm591, %v5136, %v5138
    %v5140 = vrot.slane %v5043, 2
    %v5141 = vsel %vm591, %v5138, %v5140
    %v5142 = vrot.slane %v5044, 2
    %v5143 = vsel %vm591, %v5140, %v5142
    %v5144 = vrot.slane %v5045, 2
    %v5145 = vsel %vm591, %v5142, %v5144
    %v5146 = vrot.slane %v5046, 2
    %v5147 = vsel %vm591, %v5144, %v5146
    %v5182 = vadd.f32 %v4975, %v5083
    %v5183 = vadd.f32 %v4976, %v5085
    %v5184 = vadd.f32 %v4977, %v5087
    %v5185 = vadd.f32 %v4978, %v5089
    %v5186 = vadd.f32 %v4979, %v5091
    %v5187 = vadd.f32 %v4980, %v5093
    %v5188 = vadd.f32 %v4981, %v5095
    %v5189 = vadd.f32 %v4982, %v5097
    %v5190 = vadd.f32 %v4983, %v5099
    %v5191 = vadd.f32 %v4984, %v5101
    %v5192 = vadd.f32 %v4985, %v5103
    %v5193 = vadd.f32 %v4986, %v5105
    %v5194 = vadd.f32 %v4987, %v5107
    %v5195 = vadd.f32 %v4988, %v5109
    %v5196 = vadd.f32 %v4989, %v5111
    %v5197 = vadd.f32 %v4990, %v5113
    %v5198 = vadd.f32 %v4991, %v5115
    %v5199 = vadd.f32 %v4992, %v5117
    %v5200 = vadd.f32 %v4993, %v5119
    %v5201 = vadd.f32 %v4994, %v5121
    %v5202 = vadd.f32 %v4995, %v5123
    %v5203 = vadd.f32 %v4996, %v5125
    %v5204 = vadd.f32 %v4997, %v5127
    %v5205 = vadd.f32 %v4998, %v5129
    %v5206 = vadd.f32 %v4999, %v5131
    %v5207 = vadd.f32 %v5000, %v5133
    %v5208 = vadd.f32 %v5001, %v5135
    %v5209 = vadd.f32 %v5002, %v5137
    %v5210 = vadd.f32 %v5003, %v5139
    %v5211 = vadd.f32 %v5004, %v5141
    %v5212 = vadd.f32 %v5005, %v5143
    %v5213 = vadd.f32 %v5006, %v5145
    %v5214 = vadd.f32 %v5007, %v5147
    %v5215 = vadd.f32 %v5008, %v5146
    %v5216 = vlaneseq
    %v5217 = vshrl.u32 %v5216, 7
    %v5218 = vsub.s32 3, %v5217
    %v5219 = vrot.slane %v4728, %v5218
    %v5220 = vmul.f32 %v5219, %v4694
    %v5221 = vmul.f32 %v5219, %v4695
    %v5222 = vmul.f32 %v5219, %v4696
    %v5223 = vmul.f32 %v5219, %v4697
    %v5224 = vmul.f32 %v5219, %v4698
    %v5225 = vmul.f32 %v5219, %v4699
    %v5226 = vmul.f32 %v5219, %v4700
    %v5227 = vmul.f32 %v5219, %v4701
    %v5228 = vmul.f32 %v5219, %v4702
    %v5229 = vmul.f32 %v5219, %v4703
    %v5230 = vmul.f32 %v5219, %v4704
    %v5231 = vmul.f32 %v5219, %v4705
    %v5232 = vmul.f32 %v5219, %v4706
    %v5233 = vmul.f32 %v5219, %v4707
    %v5234 = vmul.f32 %v5219, %v4708
    %v5235 = vmul.f32 %v5219, %v4709
    %v5236 = vmul.f32 %v5219, %v4710
    %v5237 = vmul.f32 %v5219, %v4711
    %v5238 = vmul.f32 %v5219, %v4712
    %v5239 = vmul.f32 %v5219, %v4713
    %v5240 = vmul.f32 %v5219, %v4714
    %v5241 = vmul.f32 %v5219, %v4715
    %v5242 = vmul.f32 %v5219, %v4716
    %v5243 = vmul.f32 %v5219, %v4717
    %v5244 = vmul.f32 %v5219, %v4718
    %v5245 = vmul.f32 %v5219, %v4719
    %v5246 = vmul.f32 %v5219, %v4720
    %v5247 = vmul.f32 %v5219, %v4721
    %v5248 = vmul.f32 %v5219, %v4722
    %v5249 = vmul.f32 %v5219, %v4723
    %v5250 = vmul.f32 %v5219, %v4724
    %v5251 = vmul.f32 %v5219, %v4725
    %v5252 = vmul.f32 %v5219, %v4726
    %v5253 = vmul.f32 %v5219, %v4727
    %v5288 = vrot.slane %v5220, 3
    %v5289 = vrot.slane %v5221, 3
    %v5290 = vsel %vm793, %v5288, %v5289
    %v5291 = vrot.slane %v5222, 3
    %v5292 = vsel %vm793, %v5289, %v5291
    %v5293 = vrot.slane %v5223, 3
    %v5294 = vsel %vm793, %v5291, %v5293
    %v5295 = vrot.slane %v5224, 3
    %v5296 = vsel %vm793, %v5293, %v5295
    %v5297 = vrot.slane %v5225, 3
    %v5298 = vsel %vm793, %v5295, %v5297
    %v5299 = vrot.slane %v5226, 3
    %v5300 = vsel %vm793, %v5297, %v5299
    %v5301 = vrot.slane %v5227, 3
    %v5302 = vsel %vm793, %v5299, %v5301
    %v5303 = vrot.slane %v5228, 3
    %v5304 = vsel %vm793, %v5301, %v5303
    %v5305 = vrot.slane %v5229, 3
    %v5306 = vsel %vm793, %v5303, %v5305
    %v5307 = vrot.slane %v5230, 3
    %v5308 = vsel %vm793, %v5305, %v5307
    %v5309 = vrot.slane %v5231, 3
    %v5310 = vsel %vm793, %v5307, %v5309
    %v5311 = vrot.slane %v5232, 3
    %v5312 = vsel %vm793, %v5309, %v5311
    %v5313 = vrot.slane %v5233, 3
    %v5314 = vsel %vm793, %v5311, %v5313
    %v5315 = vrot.slane %v5234, 3
    %v5316 = vsel %vm793, %v5313, %v5315
    %v5317 = vrot.slane %v5235, 3
    %v5318 = vsel %vm793, %v5315, %v5317
    %v5319 = vrot.slane %v5236, 3
    %v5320 = vsel %vm793, %v5317, %v5319
    %v5321 = vrot.slane %v5237, 3
    %v5322 = vsel %vm793, %v5319, %v5321
    %v5323 = vrot.slane %v5238, 3
    %v5324 = vsel %vm793, %v5321, %v5323
    %v5325 = vrot.slane %v5239, 3
    %v5326 = vsel %vm793, %v5323, %v5325
    %v5327 = vrot.slane %v5240, 3
    %v5328 = vsel %vm793, %v5325, %v5327
    %v5329 = vrot.slane %v5241, 3
    %v5330 = vsel %vm793, %v5327, %v5329
    %v5331 = vrot.slane %v5242, 3
    %v5332 = vsel %vm793, %v5329, %v5331
    %v5333 = vrot.slane %v5243, 3
    %v5334 = vsel %vm793, %v5331, %v5333
    %v5335 = vrot.slane %v5244, 3
    %v5336 = vsel %vm793, %v5333, %v5335
    %v5337 = vrot.slane %v5245, 3
    %v5338 = vsel %vm793, %v5335, %v5337
    %v5339 = vrot.slane %v5246, 3
    %v5340 = vsel %vm793, %v5337, %v5339
    %v5341 = vrot.slane %v5247, 3
    %v5342 = vsel %vm793, %v5339, %v5341
    %v5343 = vrot.slane %v5248, 3
    %v5344 = vsel %vm793, %v5341, %v5343
    %v5345 = vrot.slane %v5249, 3
    %v5346 = vsel %vm793, %v5343, %v5345
    %v5347 = vrot.slane %v5250, 3
    %v5348 = vsel %vm793, %v5345, %v5347
    %v5349 = vrot.slane %v5251, 3
    %v5350 = vsel %vm793, %v5347, %v5349
    %v5351 = vrot.slane %v5252, 3
    %v5352 = vsel %vm793, %v5349, %v5351
    %v5353 = vrot.slane %v5253, 3
    %v5354 = vsel %vm793, %v5351, %v5353
    %v5389 = vadd.f32 %v5182, %v5290
    %v5390 = vadd.f32 %v5183, %v5292
    %v5391 = vadd.f32 %v5184, %v5294
    %v5392 = vadd.f32 %v5185, %v5296
    %v5393 = vadd.f32 %v5186, %v5298
    %v5394 = vadd.f32 %v5187, %v5300
    %v5395 = vadd.f32 %v5188, %v5302
    %v5396 = vadd.f32 %v5189, %v5304
    %v5397 = vadd.f32 %v5190, %v5306
    %v5398 = vadd.f32 %v5191, %v5308
    %v5399 = vadd.f32 %v5192, %v5310
    %v5400 = vadd.f32 %v5193, %v5312
    %v5401 = vadd.f32 %v5194, %v5314
    %v5402 = vadd.f32 %v5195, %v5316
    %v5403 = vadd.f32 %v5196, %v5318
    %v5404 = vadd.f32 %v5197, %v5320
    %v5405 = vadd.f32 %v5198, %v5322
    %v5406 = vadd.f32 %v5199, %v5324
    %v5407 = vadd.f32 %v5200, %v5326
    %v5408 = vadd.f32 %v5201, %v5328
    %v5409 = vadd.f32 %v5202, %v5330
    %v5410 = vadd.f32 %v5203, %v5332
    %v5411 = vadd.f32 %v5204, %v5334
    %v5412 = vadd.f32 %v5205, %v5336
    %v5413 = vadd.f32 %v5206, %v5338
    %v5414 = vadd.f32 %v5207, %v5340
    %v5415 = vadd.f32 %v5208, %v5342
    %v5416 = vadd.f32 %v5209, %v5344
    %v5417 = vadd.f32 %v5210, %v5346
    %v5418 = vadd.f32 %v5211, %v5348
    %v5419 = vadd.f32 %v5212, %v5350
    %v5420 = vadd.f32 %v5213, %v5352
    %v5421 = vadd.f32 %v5214, %v5354
    %v5422 = vadd.f32 %v5215, %v5353
    %v5423 = vlaneseq
    %v5424 = vshrl.u32 %v5423, 7
    %v5425 = vsub.s32 4, %v5424
    %v5426 = vrot.slane %v4728, %v5425
    %v5427 = vmul.f32 %v5426, %v4694
    %v5428 = vmul.f32 %v5426, %v4695
    %v5429 = vmul.f32 %v5426, %v4696
    %v5430 = vmul.f32 %v5426, %v4697
    %v5431 = vmul.f32 %v5426, %v4698
    %v5432 = vmul.f32 %v5426, %v4699
    %v5433 = vmul.f32 %v5426, %v4700
    %v5434 = vmul.f32 %v5426, %v4701
    %v5435 = vmul.f32 %v5426, %v4702
    %v5436 = vmul.f32 %v5426, %v4703
    %v5437 = vmul.f32 %v5426, %v4704
    %v5438 = vmul.f32 %v5426, %v4705
    %v5439 = vmul.f32 %v5426, %v4706
    %v5440 = vmul.f32 %v5426, %v4707
    %v5441 = vmul.f32 %v5426, %v4708
    %v5442 = vmul.f32 %v5426, %v4709
    %v5443 = vmul.f32 %v5426, %v4710
    %v5444 = vmul.f32 %v5426, %v4711
    %v5445 = vmul.f32 %v5426, %v4712
    %v5446 = vmul.f32 %v5426, %v4713
    %v5447 = vmul.f32 %v5426, %v4714
    %v5448 = vmul.f32 %v5426, %v4715
    %v5449 = vmul.f32 %v5426, %v4716
    %v5450 = vmul.f32 %v5426, %v4717
    %v5451 = vmul.f32 %v5426, %v4718
    %v5452 = vmul.f32 %v5426, %v4719
    %v5453 = vmul.f32 %v5426, %v4720
    %v5454 = vmul.f32 %v5426, %v4721
    %v5455 = vmul.f32 %v5426, %v4722
    %v5456 = vmul.f32 %v5426, %v4723
    %v5457 = vmul.f32 %v5426, %v4724
    %v5458 = vmul.f32 %v5426, %v4725
    %v5459 = vmul.f32 %v5426, %v4726
    %v5460 = vmul.f32 %v5426, %v4727
    %v5495 = vrot.slane %v5427, 4
    %v5496 = vrot.slane %v5428, 4
    %v5497 = vsel %vm997, %v5495, %v5496
    %v5498 = vrot.slane %v5429, 4
    %v5499 = vsel %vm997, %v5496, %v5498
    %v5500 = vrot.slane %v5430, 4
    %v5501 = vsel %vm997, %v5498, %v5500
    %v5502 = vrot.slane %v5431, 4
    %v5503 = vsel %vm997, %v5500, %v5502
    %v5504 = vrot.slane %v5432, 4
    %v5505 = vsel %vm997, %v5502, %v5504
    %v5506 = vrot.slane %v5433, 4
    %v5507 = vsel %vm997, %v5504, %v5506
    %v5508 = vrot.slane %v5434, 4
    %v5509 = vsel %vm997, %v5506, %v5508
    %v5510 = vrot.slane %v5435, 4
    %v5511 = vsel %vm997, %v5508, %v5510
    %v5512 = vrot.slane %v5436, 4
    %v5513 = vsel %vm997, %v5510, %v5512
    %v5514 = vrot.slane %v5437, 4
    %v5515 = vsel %vm997, %v5512, %v5514
    %v5516 = vrot.slane %v5438, 4
    %v5517 = vsel %vm997, %v5514, %v5516
    %v5518 = vrot.slane %v5439, 4
    %v5519 = vsel %vm997, %v5516, %v5518
    %v5520 = vrot.slane %v5440, 4
    %v5521 = vsel %vm997, %v5518, %v5520
    %v5522 = vrot.slane %v5441, 4
    %v5523 = vsel %vm997, %v5520, %v5522
    %v5524 = vrot.slane %v5442, 4
    %v5525 = vsel %vm997, %v5522, %v5524
    %v5526 = vrot.slane %v5443, 4
    %v5527 = vsel %vm997, %v5524, %v5526
    %v5528 = vrot.slane %v5444, 4
    %v5529 = vsel %vm997, %v5526, %v5528
    %v5530 = vrot.slane %v5445, 4
    %v5531 = vsel %vm997, %v5528, %v5530
    %v5532 = vrot.slane %v5446, 4
    %v5533 = vsel %vm997, %v5530, %v5532
    %v5534 = vrot.slane %v5447, 4
    %v5535 = vsel %vm997, %v5532, %v5534
    %v5536 = vrot.slane %v5448, 4
    %v5537 = vsel %vm997, %v5534, %v5536
    %v5538 = vrot.slane %v5449, 4
    %v5539 = vsel %vm997, %v5536, %v5538
    %v5540 = vrot.slane %v5450, 4
    %v5541 = vsel %vm997, %v5538, %v5540
    %v5542 = vrot.slane %v5451, 4
    %v5543 = vsel %vm997, %v5540, %v5542
    %v5544 = vrot.slane %v5452, 4
    %v5545 = vsel %vm997, %v5542, %v5544
    %v5546 = vrot.slane %v5453, 4
    %v5547 = vsel %vm997, %v5544, %v5546
    %v5548 = vrot.slane %v5454, 4
    %v5549 = vsel %vm997, %v5546, %v5548
    %v5550 = vrot.slane %v5455, 4
    %v5551 = vsel %vm997, %v5548, %v5550
    %v5552 = vrot.slane %v5456, 4
    %v5553 = vsel %vm997, %v5550, %v5552
    %v5554 = vrot.slane %v5457, 4
    %v5555 = vsel %vm997, %v5552, %v5554
    %v5556 = vrot.slane %v5458, 4
    %v5557 = vsel %vm997, %v5554, %v5556
    %v5558 = vrot.slane %v5459, 4
    %v5559 = vsel %vm997, %v5556, %v5558
    %v5560 = vrot.slane %v5460, 4
    %v5561 = vsel %vm997, %v5558, %v5560
    %v5596 = vadd.f32 %v5389, %v5497
    %v5597 = vadd.f32 %v5390, %v5499
    %v5598 = vadd.f32 %v5391, %v5501
    %v5599 = vadd.f32 %v5392, %v5503
    %v5600 = vadd.f32 %v5393, %v5505
    %v5601 = vadd.f32 %v5394, %v5507
    %v5602 = vadd.f32 %v5395, %v5509
    %v5603 = vadd.f32 %v5396, %v5511
    %v5604 = vadd.f32 %v5397, %v5513
    %v5605 = vadd.f32 %v5398, %v5515
    %v5606 = vadd.f32 %v5399, %v5517
    %v5607 = vadd.f32 %v5400, %v5519
    %v5608 = vadd.f32 %v5401, %v5521
    %v5609 = vadd.f32 %v5402, %v5523
    %v5610 = vadd.f32 %v5403, %v5525
    %v5611 = vadd.f32 %v5404, %v5527
    %v5612 = vadd.f32 %v5405, %v5529
    %v5613 = vadd.f32 %v5406, %v5531
    %v5614 = vadd.f32 %v5407, %v5533
    %v5615 = vadd.f32 %v5408, %v5535
    %v5616 = vadd.f32 %v5409, %v5537
    %v5617 = vadd.f32 %v5410, %v5539
    %v5618 = vadd.f32 %v5411, %v5541
    %v5619 = vadd.f32 %v5412, %v5543
    %v5620 = vadd.f32 %v5413, %v5545
    %v5621 = vadd.f32 %v5414, %v5547
    %v5622 = vadd.f32 %v5415, %v5549
    %v5623 = vadd.f32 %v5416, %v5551
    %v5624 = vadd.f32 %v5417, %v5553
    %v5625 = vadd.f32 %v5418, %v5555
    %v5626 = vadd.f32 %v5419, %v5557
    %v5627 = vadd.f32 %v5420, %v5559
    %v5628 = vadd.f32 %v5421, %v5561
    %v5629 = vadd.f32 %v5422, %v5560
    %v5630 = vlaneseq
    %v5631 = vshrl.u32 %v5630, 7
    %v5632 = vsub.s32 5, %v5631
    %v5633 = vrot.slane %v4728, %v5632
    %v5634 = vmul.f32 %v5633, %v4694
    %v5635 = vmul.f32 %v5633, %v4695
    %v5636 = vmul.f32 %v5633, %v4696
    %v5637 = vmul.f32 %v5633, %v4697
    %v5638 = vmul.f32 %v5633, %v4698
    %v5639 = vmul.f32 %v5633, %v4699
    %v5640 = vmul.f32 %v5633, %v4700
    %v5641 = vmul.f32 %v5633, %v4701
    %v5642 = vmul.f32 %v5633, %v4702
    %v5643 = vmul.f32 %v5633, %v4703
    %v5644 = vmul.f32 %v5633, %v4704
    %v5645 = vmul.f32 %v5633, %v4705
    %v5646 = vmul.f32 %v5633, %v4706
    %v5647 = vmul.f32 %v5633, %v4707
    %v5648 = vmul.f32 %v5633, %v4708
    %v5649 = vmul.f32 %v5633, %v4709
    %v5650 = vmul.f32 %v5633, %v4710
    %v5651 = vmul.f32 %v5633, %v4711
    %v5652 = vmul.f32 %v5633, %v4712
    %v5653 = vmul.f32 %v5633, %v4713
    %v5654 = vmul.f32 %v5633, %v4714
    %v5655 = vmul.f32 %v5633, %v4715
    %v5656 = vmul.f32 %v5633, %v4716
    %v5657 = vmul.f32 %v5633, %v4717
    %v5658 = vmul.f32 %v5633, %v4718
    %v5659 = vmul.f32 %v5633, %v4719
    %v5660 = vmul.f32 %v5633, %v4720
    %v5661 = vmul.f32 %v5633, %v4721
    %v5662 = vmul.f32 %v5633, %v4722
    %v5663 = vmul.f32 %v5633, %v4723
    %v5664 = vmul.f32 %v5633, %v4724
    %v5665 = vmul.f32 %v5633, %v4725
    %v5666 = vmul.f32 %v5633, %v4726
    %v5667 = vmul.f32 %v5633, %v4727
    %v5702 = vrot.slane %v5634, 5
    %v5703 = vrot.slane %v5635, 5
    %v5704 = vsel %vm1203, %v5702, %v5703
    %v5705 = vrot.slane %v5636, 5
    %v5706 = vsel %vm1203, %v5703, %v5705
    %v5707 = vrot.slane %v5637, 5
    %v5708 = vsel %vm1203, %v5705, %v5707
    %v5709 = vrot.slane %v5638, 5
    %v5710 = vsel %vm1203, %v5707, %v5709
    %v5711 = vrot.slane %v5639, 5
    %v5712 = vsel %vm1203, %v5709, %v5711
    %v5713 = vrot.slane %v5640, 5
    %v5714 = vsel %vm1203, %v5711, %v5713
    %v5715 = vrot.slane %v5641, 5
    %v5716 = vsel %vm1203, %v5713, %v5715
    %v5717 = vrot.slane %v5642, 5
    %v5718 = vsel %vm1203, %v5715, %v5717
    %v5719 = vrot.slane %v5643, 5
    %v5720 = vsel %vm1203, %v5717, %v5719
    %v5721 = vrot.slane %v5644, 5
    %v5722 = vsel %vm1203, %v5719, %v5721
    %v5723 = vrot.slane %v5645, 5
    %v5724 = vsel %vm1203, %v5721, %v5723
    %v5725 = vrot.slane %v5646, 5
    %v5726 = vsel %vm1203, %v5723, %v5725
    %v5727 = vrot.slane %v5647, 5
    %v5728 = vsel %vm1203, %v5725, %v5727
    %v5729 = vrot.slane %v5648, 5
    %v5730 = vsel %vm1203, %v5727, %v5729
    %v5731 = vrot.slane %v5649, 5
    %v5732 = vsel %vm1203, %v5729, %v5731
    %v5733 = vrot.slane %v5650, 5
    %v5734 = vsel %vm1203, %v5731, %v5733
    %v5735 = vrot.slane %v5651, 5
    %v5736 = vsel %vm1203, %v5733, %v5735
    %v5737 = vrot.slane %v5652, 5
    %v5738 = vsel %vm1203, %v5735, %v5737
    %v5739 = vrot.slane %v5653, 5
    %v5740 = vsel %vm1203, %v5737, %v5739
    %v5741 = vrot.slane %v5654, 5
    %v5742 = vsel %vm1203, %v5739, %v5741
    %v5743 = vrot.slane %v5655, 5
    %v5744 = vsel %vm1203, %v5741, %v5743
    %v5745 = vrot.slane %v5656, 5
    %v5746 = vsel %vm1203, %v5743, %v5745
    %v5747 = vrot.slane %v5657, 5
    %v5748 = vsel %vm1203, %v5745, %v5747
    %v5749 = vrot.slane %v5658, 5
    %v5750 = vsel %vm1203, %v5747, %v5749
    %v5751 = vrot.slane %v5659, 5
    %v5752 = vsel %vm1203, %v5749, %v5751
    %v5753 = vrot.slane %v5660, 5
    %v5754 = vsel %vm1203, %v5751, %v5753
    %v5755 = vrot.slane %v5661, 5
    %v5756 = vsel %vm1203, %v5753, %v5755
    %v5757 = vrot.slane %v5662, 5
    %v5758 = vsel %vm1203, %v5755, %v5757
    %v5759 = vrot.slane %v5663, 5
    %v5760 = vsel %vm1203, %v5757, %v5759
    %v5761 = vrot.slane %v5664, 5
    %v5762 = vsel %vm1203, %v5759, %v5761
    %v5763 = vrot.slane %v5665, 5
    %v5764 = vsel %vm1203, %v5761, %v5763
    %v5765 = vrot.slane %v5666, 5
    %v5766 = vsel %vm1203, %v5763, %v5765
    %v5767 = vrot.slane %v5667, 5
    %v5768 = vsel %vm1203, %v5765, %v5767
    %v5803 = vadd.f32 %v5596, %v5704
    %v5804 = vadd.f32 %v5597, %v5706
    %v5805 = vadd.f32 %v5598, %v5708
    %v5806 = vadd.f32 %v5599, %v5710
    %v5807 = vadd.f32 %v5600, %v5712
    %v5808 = vadd.f32 %v5601, %v5714
    %v5809 = vadd.f32 %v5602, %v5716
    %v5810 = vadd.f32 %v5603, %v5718
    %v5811 = vadd.f32 %v5604, %v5720
    %v5812 = vadd.f32 %v5605, %v5722
    %v5813 = vadd.f32 %v5606, %v5724
    %v5814 = vadd.f32 %v5607, %v5726
    %v5815 = vadd.f32 %v5608, %v5728
    %v5816 = vadd.f32 %v5609, %v5730
    %v5817 = vadd.f32 %v5610, %v5732
    %v5818 = vadd.f32 %v5611, %v5734
    %v5819 = vadd.f32 %v5612, %v5736
    %v5820 = vadd.f32 %v5613, %v5738
    %v5821 = vadd.f32 %v5614, %v5740
    %v5822 = vadd.f32 %v5615, %v5742
    %v5823 = vadd.f32 %v5616, %v5744
    %v5824 = vadd.f32 %v5617, %v5746
    %v5825 = vadd.f32 %v5618, %v5748
    %v5826 = vadd.f32 %v5619, %v5750
    %v5827 = vadd.f32 %v5620, %v5752
    %v5828 = vadd.f32 %v5621, %v5754
    %v5829 = vadd.f32 %v5622, %v5756
    %v5830 = vadd.f32 %v5623, %v5758
    %v5831 = vadd.f32 %v5624, %v5760
    %v5832 = vadd.f32 %v5625, %v5762
    %v5833 = vadd.f32 %v5626, %v5764
    %v5834 = vadd.f32 %v5627, %v5766
    %v5835 = vadd.f32 %v5628, %v5768
    %v5836 = vadd.f32 %v5629, %v5767
    %v5837 = vlaneseq
    %v5838 = vshrl.u32 %v5837, 7
    %v5839 = vsub.s32 6, %v5838
    %v5840 = vrot.slane %v4728, %v5839
    %v5841 = vmul.f32 %v5840, %v4694
    %v5842 = vmul.f32 %v5840, %v4695
    %v5843 = vmul.f32 %v5840, %v4696
    %v5844 = vmul.f32 %v5840, %v4697
    %v5845 = vmul.f32 %v5840, %v4698
    %v5846 = vmul.f32 %v5840, %v4699
    %v5847 = vmul.f32 %v5840, %v4700
    %v5848 = vmul.f32 %v5840, %v4701
    %v5849 = vmul.f32 %v5840, %v4702
    %v5850 = vmul.f32 %v5840, %v4703
    %v5851 = vmul.f32 %v5840, %v4704
    %v5852 = vmul.f32 %v5840, %v4705
    %v5853 = vmul.f32 %v5840, %v4706
    %v5854 = vmul.f32 %v5840, %v4707
    %v5855 = vmul.f32 %v5840, %v4708
    %v5856 = vmul.f32 %v5840, %v4709
    %v5857 = vmul.f32 %v5840, %v4710
    %v5858 = vmul.f32 %v5840, %v4711
    %v5859 = vmul.f32 %v5840, %v4712
    %v5860 = vmul.f32 %v5840, %v4713
    %v5861 = vmul.f32 %v5840, %v4714
    %v5862 = vmul.f32 %v5840, %v4715
    %v5863 = vmul.f32 %v5840, %v4716
    %v5864 = vmul.f32 %v5840, %v4717
    %v5865 = vmul.f32 %v5840, %v4718
    %v5866 = vmul.f32 %v5840, %v4719
    %v5867 = vmul.f32 %v5840, %v4720
    %v5868 = vmul.f32 %v5840, %v4721
    %v5869 = vmul.f32 %v5840, %v4722
    %v5870 = vmul.f32 %v5840, %v4723
    %v5871 = vmul.f32 %v5840, %v4724
    %v5872 = vmul.f32 %v5840, %v4725
    %v5873 = vmul.f32 %v5840, %v4726
    %v5874 = vmul.f32 %v5840, %v4727
    %v5909 = vrot.slane %v5841, 6
    %v5910 = vrot.slane %v5842, 6
    %v5911 = vsel %vm1409, %v5909, %v5910
    %v5912 = vrot.slane %v5843, 6
    %v5913 = vsel %vm1409, %v5910, %v5912
    %v5914 = vrot.slane %v5844, 6
    %v5915 = vsel %vm1409, %v5912, %v5914
    %v5916 = vrot.slane %v5845, 6
    %v5917 = vsel %vm1409, %v5914, %v5916
    %v5918 = vrot.slane %v5846, 6
    %v5919 = vsel %vm1409, %v5916, %v5918
    %v5920 = vrot.slane %v5847, 6
    %v5921 = vsel %vm1409, %v5918, %v5920
    %v5922 = vrot.slane %v5848, 6
    %v5923 = vsel %vm1409, %v5920, %v5922
    %v5924 = vrot.slane %v5849, 6
    %v5925 = vsel %vm1409, %v5922, %v5924
    %v5926 = vrot.slane %v5850, 6
    %v5927 = vsel %vm1409, %v5924, %v5926
    %v5928 = vrot.slane %v5851, 6
    %v5929 = vsel %vm1409, %v5926, %v5928
    %v5930 = vrot.slane %v5852, 6
    %v5931 = vsel %vm1409, %v5928, %v5930
    %v5932 = vrot.slane %v5853, 6
    %v5933 = vsel %vm1409, %v5930, %v5932
    %v5934 = vrot.slane %v5854, 6
    %v5935 = vsel %vm1409, %v5932, %v5934
    %v5936 = vrot.slane %v5855, 6
    %v5937 = vsel %vm1409, %v5934, %v5936
    %v5938 = vrot.slane %v5856, 6
    %v5939 = vsel %vm1409, %v5936, %v5938
    %v5940 = vrot.slane %v5857, 6
    %v5941 = vsel %vm1409, %v5938, %v5940
    %v5942 = vrot.slane %v5858, 6
    %v5943 = vsel %vm1409, %v5940, %v5942
    %v5944 = vrot.slane %v5859, 6
    %v5945 = vsel %vm1409, %v5942, %v5944
    %v5946 = vrot.slane %v5860, 6
    %v5947 = vsel %vm1409, %v5944, %v5946
    %v5948 = vrot.slane %v5861, 6
    %v5949 = vsel %vm1409, %v5946, %v5948
    %v5950 = vrot.slane %v5862, 6
    %v5951 = vsel %vm1409, %v5948, %v5950
    %v5952 = vrot.slane %v5863, 6
    %v5953 = vsel %vm1409, %v5950, %v5952
    %v5954 = vrot.slane %v5864, 6
    %v5955 = vsel %vm1409, %v5952, %v5954
    %v5956 = vrot.slane %v5865, 6
    %v5957 = vsel %vm1409, %v5954, %v5956
    %v5958 = vrot.slane %v5866, 6
    %v5959 = vsel %vm1409, %v5956, %v5958
    %v5960 = vrot.slane %v5867, 6
    %v5961 = vsel %vm1409, %v5958, %v5960
    %v5962 = vrot.slane %v5868, 6
    %v5963 = vsel %vm1409, %v5960, %v5962
    %v5964 = vrot.slane %v5869, 6
    %v5965 = vsel %vm1409, %v5962, %v5964
    %v5966 = vrot.slane %v5870, 6
    %v5967 = vsel %vm1409, %v5964, %v5966
    %v5968 = vrot.slane %v5871, 6
    %v5969 = vsel %vm1409, %v5966, %v5968
    %v5970 = vrot.slane %v5872, 6
    %v5971 = vsel %vm1409, %v5968, %v5970
    %v5972 = vrot.slane %v5873, 6
    %v5973 = vsel %vm1409, %v5970, %v5972
    %v5974 = vrot.slane %v5874, 6
    %v5975 = vsel %vm1409, %v5972, %v5974
    %v6010 = vadd.f32 %v5803, %v5911
    %v6011 = vadd.f32 %v5804, %v5913
    %v6012 = vadd.f32 %v5805, %v5915
    %v6013 = vadd.f32 %v5806, %v5917
    %v6014 = vadd.f32 %v5807, %v5919
    %v6015 = vadd.f32 %v5808, %v5921
    %v6016 = vadd.f32 %v5809, %v5923
    %v6017 = vadd.f32 %v5810, %v5925
    %v6018 = vadd.f32 %v5811, %v5927
    %v6019 = vadd.f32 %v5812, %v5929
    %v6020 = vadd.f32 %v5813, %v5931
    %v6021 = vadd.f32 %v5814, %v5933
    %v6022 = vadd.f32 %v5815, %v5935
    %v6023 = vadd.f32 %v5816, %v5937
    %v6024 = vadd.f32 %v5817, %v5939
    %v6025 = vadd.f32 %v5818, %v5941
    %v6026 = vadd.f32 %v5819, %v5943
    %v6027 = vadd.f32 %v5820, %v5945
    %v6028 = vadd.f32 %v5821, %v5947
    %v6029 = vadd.f32 %v5822, %v5949
    %v6030 = vadd.f32 %v5823, %v5951
    %v6031 = vadd.f32 %v5824, %v5953
    %v6032 = vadd.f32 %v5825, %v5955
    %v6033 = vadd.f32 %v5826, %v5957
    %v6034 = vadd.f32 %v5827, %v5959
    %v6035 = vadd.f32 %v5828, %v5961
    %v6036 = vadd.f32 %v5829, %v5963
    %v6037 = vadd.f32 %v5830, %v5965
    %v6038 = vadd.f32 %v5831, %v5967
    %v6039 = vadd.f32 %v5832, %v5969
    %v6040 = vadd.f32 %v5833, %v5971
    %v6041 = vadd.f32 %v5834, %v5973
    %v6042 = vadd.f32 %v5835, %v5975
    %v6043 = vadd.f32 %v5836, %v5974
    %v6044 = vlaneseq
    %v6045 = vshrl.u32 %v6044, 7
    %v6046 = vsub.s32 7, %v6045
    %v6047 = vrot.slane %v4728, %v6046
    %v6048 = vmul.f32 %v6047, %v4694
    %v6049 = vmul.f32 %v6047, %v4695
    %v6050 = vmul.f32 %v6047, %v4696
    %v6051 = vmul.f32 %v6047, %v4697
    %v6052 = vmul.f32 %v6047, %v4698
    %v6053 = vmul.f32 %v6047, %v4699
    %v6054 = vmul.f32 %v6047, %v4700
    %v6055 = vmul.f32 %v6047, %v4701
    %v6056 = vmul.f32 %v6047, %v4702
    %v6057 = vmul.f32 %v6047, %v4703
    %v6058 = vmul.f32 %v6047, %v4704
    %v6059 = vmul.f32 %v6047, %v4705
    %v6060 = vmul.f32 %v6047, %v4706
    %v6061 = vmul.f32 %v6047, %v4707
    %v6062 = vmul.f32 %v6047, %v4708
    %v6063 = vmul.f32 %v6047, %v4709
    %v6064 = vmul.f32 %v6047, %v4710
    %v6065 = vmul.f32 %v6047, %v4711
    %v6066 = vmul.f32 %v6047, %v4712
    %v6067 = vmul.f32 %v6047, %v4713
    %v6068 = vmul.f32 %v6047, %v4714
    %v6069 = vmul.f32 %v6047, %v4715
    %v6070 = vmul.f32 %v6047, %v4716
    %v6071 = vmul.f32 %v6047, %v4717
    %v6072 = vmul.f32 %v6047, %v4718
    %v6073 = vmul.f32 %v6047, %v4719
    %v6074 = vmul.f32 %v6047, %v4720
    %v6075 = vmul.f32 %v6047, %v4721
    %v6076 = vmul.f32 %v6047, %v4722
    %v6077 = vmul.f32 %v6047, %v4723
    %v6078 = vmul.f32 %v6047, %v4724
    %v6079 = vmul.f32 %v6047, %v4725
    %v6080 = vmul.f32 %v6047, %v4726
    %v6081 = vmul.f32 %v6047, %v4727
    %v6116 = vrot.slane %v6048, 7
    %v6117 = vrot.slane %v6049, 7
    %v6118 = vsel %vm1615, %v6116, %v6117
    %v6119 = vrot.slane %v6050, 7
    %v6120 = vsel %vm1615, %v6117, %v6119
    %v6121 = vrot.slane %v6051, 7
    %v6122 = vsel %vm1615, %v6119, %v6121
    %v6123 = vrot.slane %v6052, 7
    %v6124 = vsel %vm1615, %v6121, %v6123
    %v6125 = vrot.slane %v6053, 7
    %v6126 = vsel %vm1615, %v6123, %v6125
    %v6127 = vrot.slane %v6054, 7
    %v6128 = vsel %vm1615, %v6125, %v6127
    %v6129 = vrot.slane %v6055, 7
    %v6130 = vsel %vm1615, %v6127, %v6129
    %v6131 = vrot.slane %v6056, 7
    %v6132 = vsel %vm1615, %v6129, %v6131
    %v6133 = vrot.slane %v6057, 7
    %v6134 = vsel %vm1615, %v6131, %v6133
    %v6135 = vrot.slane %v6058, 7
    %v6136 = vsel %vm1615, %v6133, %v6135
    %v6137 = vrot.slane %v6059, 7
    %v6138 = vsel %vm1615, %v6135, %v6137
    %v6139 = vrot.slane %v6060, 7
    %v6140 = vsel %vm1615, %v6137, %v6139
    %v6141 = vrot.slane %v6061, 7
    %v6142 = vsel %vm1615, %v6139, %v6141
    %v6143 = vrot.slane %v6062, 7
    %v6144 = vsel %vm1615, %v6141, %v6143
    %v6145 = vrot.slane %v6063, 7
    %v6146 = vsel %vm1615, %v6143, %v6145
    %v6147 = vrot.slane %v6064, 7
    %v6148 = vsel %vm1615, %v6145, %v6147
    %v6149 = vrot.slane %v6065, 7
    %v6150 = vsel %vm1615, %v6147, %v6149
    %v6151 = vrot.slane %v6066, 7
    %v6152 = vsel %vm1615, %v6149, %v6151
    %v6153 = vrot.slane %v6067, 7
    %v6154 = vsel %vm1615, %v6151, %v6153
    %v6155 = vrot.slane %v6068, 7
    %v6156 = vsel %vm1615, %v6153, %v6155
    %v6157 = vrot.slane %v6069, 7
    %v6158 = vsel %vm1615, %v6155, %v6157
    %v6159 = vrot.slane %v6070, 7
    %v6160 = vsel %vm1615, %v6157, %v6159
    %v6161 = vrot.slane %v6071, 7
    %v6162 = vsel %vm1615, %v6159, %v6161
    %v6163 = vrot.slane %v6072, 7
    %v6164 = vsel %vm1615, %v6161, %v6163
    %v6165 = vrot.slane %v6073, 7
    %v6166 = vsel %vm1615, %v6163, %v6165
    %v6167 = vrot.slane %v6074, 7
    %v6168 = vsel %vm1615, %v6165, %v6167
    %v6169 = vrot.slane %v6075, 7
    %v6170 = vsel %vm1615, %v6167, %v6169
    %v6171 = vrot.slane %v6076, 7
    %v6172 = vsel %vm1615, %v6169, %v6171
    %v6173 = vrot.slane %v6077, 7
    %v6174 = vsel %vm1615, %v6171, %v6173
    %v6175 = vrot.slane %v6078, 7
    %v6176 = vsel %vm1615, %v6173, %v6175
    %v6177 = vrot.slane %v6079, 7
    %v6178 = vsel %vm1615, %v6175, %v6177
    %v6179 = vrot.slane %v6080, 7
    %v6180 = vsel %vm1615, %v6177, %v6179
    %v6181 = vrot.slane %v6081, 7
    %v6182 = vsel %vm1615, %v6179, %v6181
    %v6217 = vadd.f32 %v6010, %v6118
    %v6218 = vadd.f32 %v6011, %v6120
    %v6219 = vadd.f32 %v6012, %v6122
    %v6220 = vadd.f32 %v6013, %v6124
    %v6221 = vadd.f32 %v6014, %v6126
    %v6222 = vadd.f32 %v6015, %v6128
    %v6223 = vadd.f32 %v6016, %v6130
    %v6224 = vadd.f32 %v6017, %v6132
    %v6225 = vadd.f32 %v6018, %v6134
    %v6226 = vadd.f32 %v6019, %v6136
    %v6227 = vadd.f32 %v6020, %v6138
    %v6228 = vadd.f32 %v6021, %v6140
    %v6229 = vadd.f32 %v6022, %v6142
    %v6230 = vadd.f32 %v6023, %v6144
    %v6231 = vadd.f32 %v6024, %v6146
    %v6232 = vadd.f32 %v6025, %v6148
    %v6233 = vadd.f32 %v6026, %v6150
    %v6234 = vadd.f32 %v6027, %v6152
    %v6235 = vadd.f32 %v6028, %v6154
    %v6236 = vadd.f32 %v6029, %v6156
    %v6237 = vadd.f32 %v6030, %v6158
    %v6238 = vadd.f32 %v6031, %v6160
    %v6239 = vadd.f32 %v6032, %v6162
    %v6240 = vadd.f32 %v6033, %v6164
    %v6241 = vadd.f32 %v6034, %v6166
    %v6242 = vadd.f32 %v6035, %v6168
    %v6243 = vadd.f32 %v6036, %v6170
    %v6244 = vadd.f32 %v6037, %v6172
    %v6245 = vadd.f32 %v6038, %v6174
    %v6246 = vadd.f32 %v6039, %v6176
    %v6247 = vadd.f32 %v6040, %v6178
    %v6248 = vadd.f32 %v6041, %v6180
    %v6249 = vadd.f32 %v6042, %v6182
    %v6250 = vadd.f32 %v6043, %v6181
    %v6251 = vlaneseq
    %v6252 = vshrl.u32 %v6251, 7
    %v6253 = vsub.s32 0, %v6252
    %v6254 = vrot.slane %v4729, %v6253
    %v6255 = vadd.f32 %v6217, %v6254
    %v6256 = vadd.f32 %v6218, %v6254
    %v6257 = vadd.f32 %v6219, %v6254
    %v6258 = vadd.f32 %v6220, %v6254
    %v6259 = vadd.f32 %v6221, %v6254
    %v6260 = vadd.f32 %v6222, %v6254
    %v6261 = vadd.f32 %v6223, %v6254
    %v6262 = vadd.f32 %v6224, %v6254
    %v6263 = vadd.f32 %v6225, %v6254
    %v6264 = vadd.f32 %v6226, %v6254
    %v6265 = vadd.f32 %v6227, %v6254
    %v6266 = vadd.f32 %v6228, %v6254
    %v6267 = vadd.f32 %v6229, %v6254
    %v6268 = vadd.f32 %v6230, %v6254
    %v6269 = vadd.f32 %v6231, %v6254
    %v6270 = vadd.f32 %v6232, %v6254
    %v6271 = vadd.f32 %v6233, %v6254
    %v6272 = vadd.f32 %v6234, %v6254
    %v6273 = vadd.f32 %v6235, %v6254
    %v6274 = vadd.f32 %v6236, %v6254
    %v6275 = vadd.f32 %v6237, %v6254
    %v6276 = vadd.f32 %v6238, %v6254
    %v6277 = vadd.f32 %v6239, %v6254
    %v6278 = vadd.f32 %v6240, %v6254
    %v6279 = vadd.f32 %v6241, %v6254
    %v6280 = vadd.f32 %v6242, %v6254
    %v6281 = vadd.f32 %v6243, %v6254
    %v6282 = vadd.f32 %v6244, %v6254
    %v6283 = vadd.f32 %v6245, %v6254
    %v6284 = vadd.f32 %v6246, %v6254
    %v6285 = vadd.f32 %v6247, %v6254
    %v6286 = vadd.f32 %v6248, %v6254
    %v6287 = vadd.f32 %v6249, %v6254
    %v6288 = vadd.f32 %v6250, %v6254
    %v6289 = vld [vmem:[#allocation2] sm:$0x1f]
    %v6290 = vlaneseq
    %v6291 = vshrl.u32 %v6290, 7
    %v6292 = vsub.s32 4, %v6291
    %v6293 = vrot.slane %v6289, %v6292
    %v6295 = vsel %vm1791, %v6255, 0
    %v6298 = vsel %vm1791, %v6256, 0
    %v6301 = vsel %vm1791, %v6257, 0
    %v6304 = vsel %vm1791, %v6258, 0
    %v6307 = vsel %vm1791, %v6259, 0
    %v6310 = vsel %vm1791, %v6260, 0
    %v6313 = vsel %vm1791, %v6261, 0
    %v6316 = vsel %vm1791, %v6262, 0
    %v6319 = vsel %vm1791, %v6263, 0
    %v6322 = vsel %vm1791, %v6264, 0
    %v6325 = vsel %vm1791, %v6265, 0
    %v6328 = vsel %vm1791, %v6266, 0
    %v6331 = vsel %vm1791, %v6267, 0
    %v6334 = vsel %vm1791, %v6268, 0
    %v6337 = vsel %vm1791, %v6269, 0
    %v6340 = vsel %vm1791, %v6270, 0
    %v6343 = vsel %vm1791, %v6271, 0
    %v6346 = vsel %vm1791, %v6272, 0
    %v6349 = vsel %vm1791, %v6273, 0
    %v6352 = vsel %vm1791, %v6274, 0
    %v6355 = vsel %vm1791, %v6275, 0
    %v6358 = vsel %vm1791, %v6276, 0
    %v6361 = vsel %vm1791, %v6277, 0
    %v6364 = vsel %vm1791, %v6278, 0
    %v6367 = vsel %vm1791, %v6279, 0
    %v6370 = vsel %vm1791, %v6280, 0
    %v6373 = vsel %vm1791, %v6281, 0
    %v6376 = vsel %vm1791, %v6282, 0
    %v6379 = vsel %vm1791, %v6283, 0
    %v6382 = vsel %vm1791, %v6284, 0
    %v6385 = vsel %vm1791, %v6285, 0
    %v6388 = vsel %vm1791, %v6286, 0
    %v6391 = vsel %vm1791, %v6287, 0
    %v6394 = vsel %vm1791, %v6288, 0
    %v6397 = vsel %vm997, %v6289, 0
    %6399 = vmatprep.subr.mxu0 0.0
    %6400 = vmatpush1.msra.mxu0 %v6397
    %6401 = vmatprep.subr.mxu0 0.0
    %6402 = vmatpush1.msra.mxu0 0.0
    %6403 = vmatprep.subr.mxu0 0.0
    %6404 = vmatpush1.msra.mxu0 0.0
    %6405 = vmatprep.subr.mxu0 0.0
    %6406 = vmatpush1.msra.mxu0 0.0
    %6407 = vmatprep.subr.mxu0 0.0
    %6408 = vmatpush1.msra.mxu0 0.0
    %6409 = vmatprep.subr.mxu0 0.0
    %6410 = vmatpush1.msra.mxu0 0.0
    %6411 = vmatprep.subr.mxu0 0.0
    %6412 = vmatpush1.msra.mxu0 0.0
    %6413 = vmatprep.subr.mxu0 0.0
    %6414 = vmatpush1.msra.mxu0 0.0
    %6415 = vmatprep.subr.mxu0 0.0
    %6416 = vmatpush1.msra.mxu0 0.0
    %6417 = vmatprep.subr.mxu0 0.0
    %6418 = vmatpush1.msra.mxu0 0.0
    %6419 = vmatprep.subr.mxu0 0.0
    %6420 = vmatpush1.msra.mxu0 0.0
    %6421 = vmatprep.subr.mxu0 0.0
    %6422 = vmatpush1.msra.mxu0 0.0
    %6423 = vmatprep.subr.mxu0 0.0
    %6424 = vmatpush1.msra.mxu0 0.0
    %6425 = vmatprep.subr.mxu0 0.0
    %6426 = vmatpush1.msra.mxu0 0.0
    %6427 = vmatprep.subr.mxu0 0.0
    %6428 = vmatpush1.msra.mxu0 0.0
    %6429 = vmatprep.subr.mxu0 0.0
    %6430 = vmatpush1.msra.mxu0 0.0
    %6431 = vmatprep.subr.mxu0 0.0
    %6432 = vmatpush1.msra.mxu0 0.0
    %6433 = vmatprep.subr.mxu0 0.0
    %6434 = vmatpush1.msra.mxu0 0.0
    %6435 = vmatprep.subr.mxu0 0.0
    %6436 = vmatpush1.msra.mxu0 0.0
    %6437 = vmatprep.subr.mxu0 0.0
    %6438 = vmatpush1.msra.mxu0 0.0
    %6439 = vmatprep.subr.mxu0 0.0
    %6440 = vmatpush1.msra.mxu0 0.0
    %6441 = vmatprep.subr.mxu0 0.0
    %6442 = vmatpush1.msra.mxu0 0.0
    %6443 = vmatprep.subr.mxu0 0.0
    %6444 = vmatpush1.msra.mxu0 0.0
    %6445 = vmatprep.subr.mxu0 0.0
    %6446 = vmatpush1.msra.mxu0 0.0
    %6447 = vmatprep.subr.mxu0 0.0
    %6448 = vmatpush1.msra.mxu0 0.0
    %6449 = vmatprep.subr.mxu0 0.0
    %6450 = vmatpush1.msra.mxu0 0.0
    %6451 = vmatprep.subr.mxu0 0.0
    %6452 = vmatpush1.msra.mxu0 0.0
    %6453 = vmatprep.subr.mxu0 0.0
    %6454 = vmatpush1.msra.mxu0 0.0
    %6455 = vmatprep.subr.mxu0 0.0
    %6456 = vmatpush1.msra.mxu0 0.0
    %6457 = vmatprep.subr.mxu0 0.0
    %6458 = vmatpush1.msra.mxu0 0.0
    %6459 = vmatprep.subr.mxu0 0.0
    %6460 = vmatpush1.msra.mxu0 0.0
    %6461 = vmatprep.subr.mxu0 0.0
    %6462 = vmatpush1.msra.mxu0 0.0
    %6463 = vmatprep.mubr.f32.mxu0 0.0
    %6464 = vmatmul.mubr.f32.gmra.mrb[0].mxu0 %v6295
    %v6465 = vpop.f32.mrb[0].mxu0
    %v6466 = vadd.f32 %v6293, %v6465
    %v6467 = vpop.f32.mrb[0].mxu0
    %6468 = vmatprep.mubr.f32.mxu0 0.0
    %6469 = vmatmul.mubr.f32.gmra.mrb[0].mxu0 %v6298
    %v6470 = vpop.f32.mrb[0].mxu0
    %v6471 = vadd.f32 %v6293, %v6470
    %v6472 = vpop.f32.mrb[0].mxu0
    %6473 = vmatprep.mubr.f32.mxu0 0.0
    %6474 = vmatmul.mubr.f32.gmra.mrb[0].mxu0 %v6301
    %v6475 = vpop.f32.mrb[0].mxu0
    %v6476 = vadd.f32 %v6293, %v6475
    %v6477 = vpop.f32.mrb[0].mxu0
    %6478 = vmatprep.mubr.f32.mxu0 0.0
    %6479 = vmatmul.mubr.f32.gmra.mrb[0].mxu0 %v6304
    %v6480 = vpop.f32.mrb[0].mxu0
    %v6481 = vadd.f32 %v6293, %v6480
    %v6482 = vpop.f32.mrb[0].mxu0
    %6483 = vmatprep.mubr.f32.mxu0 0.0
    %6484 = vmatmul.mubr.f32.gmra.mrb[0].mxu0 %v6307
    %v6485 = vpop.f32.mrb[0].mxu0
    %v6486 = vadd.f32 %v6293, %v6485
    %v6487 = vpop.f32.mrb[0].mxu0
    %6488 = vmatprep.mubr.f32.mxu0 0.0
    %6489 = vmatmul.mubr.f32.gmra.mrb[0].mxu0 %v6310
    %v6490 = vpop.f32.mrb[0].mxu0
    %v6491 = vadd.f32 %v6293, %v6490
    %v6492 = vpop.f32.mrb[0].mxu0
    %6493 = vmatprep.mubr.f32.mxu0 0.0
    %6494 = vmatmul.mubr.f32.gmra.mrb[0].mxu0 %v6313
    %v6495 = vpop.f32.mrb[0].mxu0
    %v6496 = vadd.f32 %v6293, %v6495
    %v6497 = vpop.f32.mrb[0].mxu0
    %6498 = vmatprep.mubr.f32.mxu0 0.0
    %6499 = vmatmul.mubr.f32.gmra.mrb[0].mxu0 %v6316
    %v6500 = vpop.f32.mrb[0].mxu0
    %v6501 = vadd.f32 %v6293, %v6500
    %v6502 = vpop.f32.mrb[0].mxu0
    %6503 = vmatprep.mubr.f32.mxu0 0.0
    %6504 = vmatmul.mubr.f32.gmra.mrb[0].mxu0 %v6319
    %v6505 = vpop.f32.mrb[0].mxu0
    %v6506 = vadd.f32 %v6293, %v6505
    %v6507 = vpop.f32.mrb[0].mxu0
    %6508 = vmatprep.mubr.f32.mxu0 0.0
    %6509 = vmatmul.mubr.f32.gmra.mrb[0].mxu0 %v6322
    %v6510 = vpop.f32.mrb[0].mxu0
    %v6511 = vadd.f32 %v6293, %v6510
    %v6512 = vpop.f32.mrb[0].mxu0
    %6513 = vmatprep.mubr.f32.mxu0 0.0
    %6514 = vmatmul.mubr.f32.gmra.mrb[0].mxu0 %v6325
    %v6515 = vpop.f32.mrb[0].mxu0
    %v6516 = vadd.f32 %v6293, %v6515
    %v6517 = vpop.f32.mrb[0].mxu0
    %6518 = vmatprep.mubr.f32.mxu0 0.0
    %6519 = vmatmul.mubr.f32.gmra.mrb[0].mxu0 %v6328
    %v6520 = vpop.f32.mrb[0].mxu0
    %v6521 = vadd.f32 %v6293, %v6520
    %v6522 = vpop.f32.mrb[0].mxu0
    %6523 = vmatprep.mubr.f32.mxu0 0.0
    %6524 = vmatmul.mubr.f32.gmra.mrb[0].mxu0 %v6331
    %v6525 = vpop.f32.mrb[0].mxu0
    %v6526 = vadd.f32 %v6293, %v6525
    %v6527 = vpop.f32.mrb[0].mxu0
    %6528 = vmatprep.mubr.f32.mxu0 0.0
    %6529 = vmatmul.mubr.f32.gmra.mrb[0].mxu0 %v6334
    %v6530 = vpop.f32.mrb[0].mxu0
    %v6531 = vadd.f32 %v6293, %v6530
    %v6532 = vpop.f32.mrb[0].mxu0
    %6533 = vmatprep.mubr.f32.mxu0 0.0
    %6534 = vmatmul.mubr.f32.gmra.mrb[0].mxu0 %v6337
    %v6535 = vpop.f32.mrb[0].mxu0
    %v6536 = vadd.f32 %v6293, %v6535
    %v6537 = vpop.f32.mrb[0].mxu0
    %6538 = vmatprep.mubr.f32.mxu0 0.0
    %6539 = vmatmul.mubr.f32.gmra.mrb[0].mxu0 %v6340
    %v6540 = vpop.f32.mrb[0].mxu0
    %v6541 = vadd.f32 %v6293, %v6540
    %v6542 = vpop.f32.mrb[0].mxu0
    %6543 = vmatprep.mubr.f32.mxu0 0.0
    %6544 = vmatmul.mubr.f32.gmra.mrb[0].mxu0 %v6343
    %v6545 = vpop.f32.mrb[0].mxu0
    %v6546 = vadd.f32 %v6293, %v6545
    %v6547 = vpop.f32.mrb[0].mxu0
    %6548 = vmatprep.mubr.f32.mxu0 0.0
    %6549 = vmatmul.mubr.f32.gmra.mrb[0].mxu0 %v6346
    %v6550 = vpop.f32.mrb[0].mxu0
    %v6551 = vadd.f32 %v6293, %v6550
    %v6552 = vpop.f32.mrb[0].mxu0
    %6553 = vmatprep.mubr.f32.mxu0 0.0
    %6554 = vmatmul.mubr.f32.gmra.mrb[0].mxu0 %v6349
    %v6555 = vpop.f32.mrb[0].mxu0
    %v6556 = vadd.f32 %v6293, %v6555
    %v6557 = vpop.f32.mrb[0].mxu0
    %6558 = vmatprep.mubr.f32.mxu0 0.0
    %6559 = vmatmul.mubr.f32.gmra.mrb[0].mxu0 %v6352
    %v6560 = vpop.f32.mrb[0].mxu0
    %v6561 = vadd.f32 %v6293, %v6560
    %v6562 = vpop.f32.mrb[0].mxu0
    %6563 = vmatprep.mubr.f32.mxu0 0.0
    %6564 = vmatmul.mubr.f32.gmra.mrb[0].mxu0 %v6355
    %v6565 = vpop.f32.mrb[0].mxu0
    %v6566 = vadd.f32 %v6293, %v6565
    %v6567 = vpop.f32.mrb[0].mxu0
    %6568 = vmatprep.mubr.f32.mxu0 0.0
    %6569 = vmatmul.mubr.f32.gmra.mrb[0].mxu0 %v6358
    %v6570 = vpop.f32.mrb[0].mxu0
    %v6571 = vadd.f32 %v6293, %v6570
    %v6572 = vpop.f32.mrb[0].mxu0
    %6573 = vmatprep.mubr.f32.mxu0 0.0
    %6574 = vmatmul.mubr.f32.gmra.mrb[0].mxu0 %v6361
    %v6575 = vpop.f32.mrb[0].mxu0
    %v6576 = vadd.f32 %v6293, %v6575
    %v6577 = vpop.f32.mrb[0].mxu0
    %6578 = vmatprep.mubr.f32.mxu0 0.0
    %6579 = vmatmul.mubr.f32.gmra.mrb[0].mxu0 %v6364
    %v6580 = vpop.f32.mrb[0].mxu0
    %v6581 = vadd.f32 %v6293, %v6580
    %v6582 = vpop.f32.mrb[0].mxu0
    %6583 = vmatprep.mubr.f32.mxu0 0.0
    %6584 = vmatmul.mubr.f32.gmra.mrb[0].mxu0 %v6367
    %v6585 = vpop.f32.mrb[0].mxu0
    %v6586 = vadd.f32 %v6293, %v6585
    %v6587 = vpop.f32.mrb[0].mxu0
    %6588 = vmatprep.mubr.f32.mxu0 0.0
    %6589 = vmatmul.mubr.f32.gmra.mrb[0].mxu0 %v6370
    %v6590 = vpop.f32.mrb[0].mxu0
    %v6591 = vadd.f32 %v6293, %v6590
    %v6592 = vpop.f32.mrb[0].mxu0
    %6593 = vmatprep.mubr.f32.mxu0 0.0
    %6594 = vmatmul.mubr.f32.gmra.mrb[0].mxu0 %v6373
    %v6595 = vpop.f32.mrb[0].mxu0
    %v6596 = vadd.f32 %v6293, %v6595
    %v6597 = vpop.f32.mrb[0].mxu0
    %6598 = vmatprep.mubr.f32.mxu0 0.0
    %6599 = vmatmul.mubr.f32.gmra.mrb[0].mxu0 %v6376
    %v6600 = vpop.f32.mrb[0].mxu0
    %v6601 = vadd.f32 %v6293, %v6600
    %v6602 = vpop.f32.mrb[0].mxu0
    %6603 = vmatprep.mubr.f32.mxu0 0.0
    %6604 = vmatmul.mubr.f32.gmra.mrb[0].mxu0 %v6379
    %v6605 = vpop.f32.mrb[0].mxu0
    %v6606 = vadd.f32 %v6293, %v6605
    %v6607 = vpop.f32.mrb[0].mxu0
    %6608 = vmatprep.mubr.f32.mxu0 0.0
    %6609 = vmatmul.mubr.f32.gmra.mrb[0].mxu0 %v6382
    %v6610 = vpop.f32.mrb[0].mxu0
    %v6611 = vadd.f32 %v6293, %v6610
    %v6612 = vpop.f32.mrb[0].mxu0
    %6613 = vmatprep.mubr.f32.mxu0 0.0
    %6614 = vmatmul.mubr.f32.gmra.mrb[0].mxu0 %v6385
    %v6615 = vpop.f32.mrb[0].mxu0
    %v6616 = vadd.f32 %v6293, %v6615
    %v6617 = vpop.f32.mrb[0].mxu0
    %6618 = vmatprep.mubr.f32.mxu0 0.0
    %6619 = vmatmul.mubr.f32.gmra.mrb[0].mxu0 %v6388
    %v6620 = vpop.f32.mrb[0].mxu0
    %v6621 = vadd.f32 %v6293, %v6620
    %v6622 = vpop.f32.mrb[0].mxu0
    %6623 = vmatprep.mubr.f32.mxu0 0.0
    %6624 = vmatmul.mubr.f32.gmra.mrb[0].mxu0 %v6391
    %v6625 = vpop.f32.mrb[0].mxu0
    %v6626 = vadd.f32 %v6293, %v6625
    %v6627 = vpop.f32.mrb[0].mxu0
    %6628 = vmatprep.mubr.f32.mxu0 0.0
    %6629 = vmatmul.mubr.f32.gmra.mrb[0].mxu0 %v6394
    %v6630 = vpop.f32.mrb[0].mxu0
    %v6631 = vadd.f32 %v6293, %v6630
    %v6632 = vpop.f32.mrb[0].mxu0
    %6633 = vdwg.mxu0
    %v6634 = vmax.f32 %v6466, 0.0
    %v6635 = vmax.f32 %v6471, 0.0
    %v6636 = vmax.f32 %v6476, 0.0
    %v6637 = vmax.f32 %v6481, 0.0
    %v6638 = vmax.f32 %v6486, 0.0
    %v6639 = vmax.f32 %v6491, 0.0
    %v6640 = vmax.f32 %v6496, 0.0
    %v6641 = vmax.f32 %v6501, 0.0
    %v6642 = vmax.f32 %v6506, 0.0
    %v6643 = vmax.f32 %v6511, 0.0
    %v6644 = vmax.f32 %v6516, 0.0
    %v6645 = vmax.f32 %v6521, 0.0
    %v6646 = vmax.f32 %v6526, 0.0
    %v6647 = vmax.f32 %v6531, 0.0
    %v6648 = vmax.f32 %v6536, 0.0
    %v6649 = vmax.f32 %v6541, 0.0
    %v6650 = vmax.f32 %v6546, 0.0
    %v6651 = vmax.f32 %v6551, 0.0
    %v6652 = vmax.f32 %v6556, 0.0
    %v6653 = vmax.f32 %v6561, 0.0
    %v6654 = vmax.f32 %v6566, 0.0
    %v6655 = vmax.f32 %v6571, 0.0
    %v6656 = vmax.f32 %v6576, 0.0
    %v6657 = vmax.f32 %v6581, 0.0
    %v6658 = vmax.f32 %v6586, 0.0
    %v6659 = vmax.f32 %v6591, 0.0
    %v6660 = vmax.f32 %v6596, 0.0
    %v6661 = vmax.f32 %v6601, 0.0
    %v6662 = vmax.f32 %v6606, 0.0
    %v6663 = vmax.f32 %v6611, 0.0
    %v6664 = vmax.f32 %v6616, 0.0
    %v6665 = vmax.f32 %v6621, 0.0
    %v6666 = vmax.f32 %v6626, 0.0
    %v6667 = vmax.f32 %v6631, 0.0
    %v6668 = vld [vmem:[%s33] sm:$0xff]
    %v6669 = vld [vmem:[%s33 + $0x8] sm:$0xff]
    %v6670 = vld [vmem:[%s33 + $0x10] sm:$0xff]
    %v6671 = vld [vmem:[%s33 + $0x18] sm:$0xff]
    %v6672 = vld [vmem:[%s33 + $0x20] sm:$0xff]
    %v6673 = vld [vmem:[%s33 + $0x28] sm:$0xff]
    %v6674 = vld [vmem:[%s33 + $0x30] sm:$0xff]
    %v6675 = vld [vmem:[%s33 + $0x38] sm:$0xff]
    %v6676 = vld [vmem:[%s33 + $0x40] sm:$0xff]
    %v6677 = vld [vmem:[%s33 + $0x48] sm:$0xff]
    %v6678 = vld [vmem:[%s33 + $0x50] sm:$0xff]
    %v6679 = vld [vmem:[%s33 + $0x58] sm:$0xff]
    %v6680 = vld [vmem:[%s33 + $0x60] sm:$0xff]
    %v6681 = vld [vmem:[%s33 + $0x68] sm:$0xff]
    %v6682 = vld [vmem:[%s33 + $0x70] sm:$0xff]
    %v6683 = vld [vmem:[%s33 + $0x78] sm:$0xff]
    %v6684 = vld [vmem:[%s33 + $0x80] sm:$0xff]
    %v6685 = vld [vmem:[%s33 + $0x88] sm:$0xff]
    %v6686 = vld [vmem:[%s33 + $0x90] sm:$0xff]
    %v6687 = vld [vmem:[%s33 + $0x98] sm:$0xff]
    %v6688 = vld [vmem:[%s33 + $0xa0] sm:$0xff]
    %v6689 = vld [vmem:[%s33 + $0xa8] sm:$0xff]
    %v6690 = vld [vmem:[%s33 + $0xb0] sm:$0xff]
    %v6691 = vld [vmem:[%s33 + $0xb8] sm:$0xff]
    %v6692 = vld [vmem:[%s33 + $0xc0] sm:$0xff]
    %v6693 = vld [vmem:[%s33 + $0xc8] sm:$0xff]
    %v6694 = vld [vmem:[%s33 + $0xd0] sm:$0xff]
    %v6695 = vld [vmem:[%s33 + $0xd8] sm:$0xff]
    %v6696 = vld [vmem:[%s33 + $0xe0] sm:$0xff]
    %v6697 = vld [vmem:[%s33 + $0xe8] sm:$0xff]
    %v6698 = vld [vmem:[%s33 + $0xf0] sm:$0xff]
    %v6699 = vld [vmem:[%s33 + $0xf8] sm:$0xff]
    %v6700 = vld [vmem:[%s33 + $0x100] sm:$0xff]
    %v6701 = vld [vmem:[%s33 + $0x108] sm:$0xff]
    %v6702 = vld [vmem:[%s33 + $0x110] sm:$0xff]
    %v6703 = vld [vmem:[%s33 + $0x118] sm:$0xff]
    %v6704 = vld [vmem:[%s33 + $0x120] sm:$0xff]
    %v6705 = vld [vmem:[%s33 + $0x128] sm:$0xff]
    %v6706 = vld [vmem:[%s33 + $0x130] sm:$0xff]
    %v6707 = vld [vmem:[%s33 + $0x138] sm:$0xff]
    %v6708 = vld [vmem:[%s33 + $0x140] sm:$0xff]
    %v6709 = vld [vmem:[%s33 + $0x148] sm:$0xff]
    %v6710 = vld [vmem:[%s33 + $0x150] sm:$0xff]
    %v6711 = vld [vmem:[%s33 + $0x158] sm:$0xff]
    %v6712 = vld [vmem:[%s33 + $0x160] sm:$0xff]
    %v6713 = vld [vmem:[%s33 + $0x168] sm:$0xff]
    %v6714 = vld [vmem:[%s33 + $0x170] sm:$0xff]
    %v6715 = vld [vmem:[%s33 + $0x178] sm:$0xff]
    %v6716 = vld [vmem:[%s33 + $0x180] sm:$0xff]
    %v6717 = vld [vmem:[%s33 + $0x188] sm:$0xff]
    %v6718 = vld [vmem:[%s33 + $0x190] sm:$0xff]
    %v6719 = vld [vmem:[%s33 + $0x198] sm:$0xff]
    %v6720 = vld [vmem:[%s33 + $0x1a0] sm:$0xff]
    %v6721 = vld [vmem:[%s33 + $0x1a8] sm:$0xff]
    %v6722 = vld [vmem:[%s33 + $0x1b0] sm:$0x3]
    %v6723 = vld [vmem:[%s33 + $0x1b8] sm:$0x3]
    %v6724 = vld [vmem:[%s33 + $0x1c0] sm:$0x3]
    %v6726 = vsel %vm4418, %v6670, 0
    %v6729 = vsel %vm4418, %v6673, 0
    %v6732 = vsel %vm4418, %v6676, 0
    %v6735 = vsel %vm4418, %v6679, 0
    %v6738 = vsel %vm4418, %v6682, 0
    %v6741 = vsel %vm4418, %v6685, 0
    %v6744 = vsel %vm4418, %v6688, 0
    %v6747 = vsel %vm4418, %v6691, 0
    %v6750 = vsel %vm4418, %v6694, 0
    %v6753 = vsel %vm4418, %v6697, 0
    %v6756 = vsel %vm4418, %v6700, 0
    %v6759 = vsel %vm4418, %v6703, 0
    %v6762 = vsel %vm4418, %v6706, 0
    %v6765 = vsel %vm4418, %v6709, 0
    %v6768 = vsel %vm4418, %v6712, 0
    %v6771 = vsel %vm4418, %v6715, 0
    %v6774 = vsel %vm4418, %v6718, 0
    %v6777 = vsel %vm4418, %v6721, 0
    %v6780 = vsel %vm4418, %v6724, 0
    %v6783 = vsel %vm1615, %v6667, 0
    %6785 = vmatprep.subr.mxu0 0.0
    %6786 = vmatpush1.msra.mxu0 %v6634
    %6787 = vmatprep.subr.mxu0 0.0
    %6788 = vmatpush1.msra.mxu0 %v6635
    %6789 = vmatprep.subr.mxu0 0.0
    %6790 = vmatpush1.msra.mxu0 %v6636
    %6791 = vmatprep.subr.mxu0 0.0
    %6792 = vmatpush1.msra.mxu0 %v6637
    %6793 = vmatprep.subr.mxu0 0.0
    %6794 = vmatpush1.msra.mxu0 %v6638
    %6795 = vmatprep.subr.mxu0 0.0
    %6796 = vmatpush1.msra.mxu0 %v6639
    %6797 = vmatprep.subr.mxu0 0.0
    %6798 = vmatpush1.msra.mxu0 %v6640
    %6799 = vmatprep.subr.mxu0 0.0
    %6800 = vmatpush1.msra.mxu0 %v6641
    %6801 = vmatprep.subr.mxu0 0.0
    %6802 = vmatpush1.msra.mxu0 %v6642
    %6803 = vmatprep.subr.mxu0 0.0
    %6804 = vmatpush1.msra.mxu0 %v6643
    %6805 = vmatprep.subr.mxu0 0.0
    %6806 = vmatpush1.msra.mxu0 %v6644
    %6807 = vmatprep.subr.mxu0 0.0
    %6808 = vmatpush1.msra.mxu0 %v6645
    %6809 = vmatprep.subr.mxu0 0.0
    %6810 = vmatpush1.msra.mxu0 %v6646
    %6811 = vmatprep.subr.mxu0 0.0
    %6812 = vmatpush1.msra.mxu0 %v6647
    %6813 = vmatprep.subr.mxu0 0.0
    %6814 = vmatpush1.msra.mxu0 %v6648
    %6815 = vmatprep.subr.mxu0 0.0
    %6816 = vmatpush1.msra.mxu0 %v6649
    %6817 = vmatprep.subr.mxu0 0.0
    %6818 = vmatpush1.msra.mxu0 %v6650
    %6819 = vmatprep.subr.mxu0 0.0
    %6820 = vmatpush1.msra.mxu0 %v6651
    %6821 = vmatprep.subr.mxu0 0.0
    %6822 = vmatpush1.msra.mxu0 %v6652
    %6823 = vmatprep.subr.mxu0 0.0
    %6824 = vmatpush1.msra.mxu0 %v6653
    %6825 = vmatprep.subr.mxu0 0.0
    %6826 = vmatpush1.msra.mxu0 %v6654
    %6827 = vmatprep.subr.mxu0 0.0
    %6828 = vmatpush1.msra.mxu0 %v6655
    %6829 = vmatprep.subr.mxu0 0.0
    %6830 = vmatpush1.msra.mxu0 %v6656
    %6831 = vmatprep.subr.mxu0 0.0
    %6832 = vmatpush1.msra.mxu0 %v6657
    %6833 = vmatprep.subr.mxu0 0.0
    %6834 = vmatpush1.msra.mxu0 %v6658
    %6835 = vmatprep.subr.mxu0 0.0
    %6836 = vmatpush1.msra.mxu0 %v6659
    %6837 = vmatprep.subr.mxu0 0.0
    %6838 = vmatpush1.msra.mxu0 %v6660
    %6839 = vmatprep.subr.mxu0 0.0
    %6840 = vmatpush1.msra.mxu0 %v6661
    %6841 = vmatprep.subr.mxu0 0.0
    %6842 = vmatpush1.msra.mxu0 %v6662
    %6843 = vmatprep.subr.mxu0 0.0
    %6844 = vmatpush1.msra.mxu0 %v6663
    %6845 = vmatprep.subr.mxu0 0.0
    %6846 = vmatpush1.msra.mxu0 %v6664
    %6847 = vmatprep.subr.mxu0 0.0
    %6848 = vmatpush1.msra.mxu0 %v6665
    %6849 = vmatprep.mubr.f32.mxu0 %v6669
    %6850 = vmatmul.mubr.f32.gmra.mrb[0].mxu0 %v6668
    %v6851 = vpop.f32.mrb[0].mxu0
    %v6852 = vadd.f32 0.0, %v6851
    %v6853 = vpop.f32.mrb[0].mxu0
    %6854 = vmatprep.mubr.f32.mxu0 %v6672
    %6855 = vmatmul.mubr.f32.gmra.mrb[0].mxu0 %v6671
    %v6856 = vpop.f32.mrb[0].mxu0
    %v6857 = vadd.f32 0.0, %v6856
    %v6858 = vpop.f32.mrb[0].mxu0
    %6859 = vmatprep.mubr.f32.mxu0 %v6675
    %6860 = vmatmul.mubr.f32.gmra.mrb[0].mxu0 %v6674
    %v6861 = vpop.f32.mrb[0].mxu0
    %v6862 = vadd.f32 0.0, %v6861
    %v6863 = vpop.f32.mrb[0].mxu0
    %6864 = vmatprep.mubr.f32.mxu0 %v6678
    %6865 = vmatmul.mubr.f32.gmra.mrb[0].mxu0 %v6677
    %v6866 = vpop.f32.mrb[0].mxu0
    %v6867 = vadd.f32 0.0, %v6866
    %v6868 = vpop.f32.mrb[0].mxu0
    %6869 = vmatprep.mubr.f32.mxu0 %v6681
    %6870 = vmatmul.mubr.f32.gmra.mrb[0].mxu0 %v6680
    %v6871 = vpop.f32.mrb[0].mxu0
    %v6872 = vadd.f32 0.0, %v6871
    %v6873 = vpop.f32.mrb[0].mxu0
    %6874 = vmatprep.mubr.f32.mxu0 %v6684
    %6875 = vmatmul.mubr.f32.gmra.mrb[0].mxu0 %v6683
    %v6876 = vpop.f32.mrb[0].mxu0
    %v6877 = vadd.f32 0.0, %v6876
    %v6878 = vpop.f32.mrb[0].mxu0
    %6879 = vmatprep.mubr.f32.mxu0 %v6687
    %6880 = vmatmul.mubr.f32.gmra.mrb[0].mxu0 %v6686
    %v6881 = vpop.f32.mrb[0].mxu0
    %v6882 = vadd.f32 0.0, %v6881
    %v6883 = vpop.f32.mrb[0].mxu0
    %6884 = vmatprep.mubr.f32.mxu0 %v6690
    %6885 = vmatmul.mubr.f32.gmra.mrb[0].mxu0 %v6689
    %v6886 = vpop.f32.mrb[0].mxu0
    %v6887 = vadd.f32 0.0, %v6886
    %v6888 = vpop.f32.mrb[0].mxu0
    %6889 = vmatprep.mubr.f32.mxu0 %v6693
    %6890 = vmatmul.mubr.f32.gmra.mrb[0].mxu0 %v6692
    %v6891 = vpop.f32.mrb[0].mxu0
    %v6892 = vadd.f32 0.0, %v6891
    %v6893 = vpop.f32.mrb[0].mxu0
    %6894 = vmatprep.mubr.f32.mxu0 %v6696
    %6895 = vmatmul.mubr.f32.gmra.mrb[0].mxu0 %v6695
    %v6896 = vpop.f32.mrb[0].mxu0
    %v6897 = vadd.f32 0.0, %v6896
    %v6898 = vpop.f32.mrb[0].mxu0
    %6899 = vmatprep.mubr.f32.mxu0 %v6699
    %6900 = vmatmul.mubr.f32.gmra.mrb[0].mxu0 %v6698
    %v6901 = vpop.f32.mrb[0].mxu0
    %v6902 = vadd.f32 0.0, %v6901
    %v6903 = vpop.f32.mrb[0].mxu0
    %6904 = vmatprep.mubr.f32.mxu0 %v6702
    %6905 = vmatmul.mubr.f32.gmra.mrb[0].mxu0 %v6701
    %v6906 = vpop.f32.mrb[0].mxu0
    %v6907 = vadd.f32 0.0, %v6906
    %v6908 = vpop.f32.mrb[0].mxu0
    %6909 = vmatprep.mubr.f32.mxu0 %v6705
    %6910 = vmatmul.mubr.f32.gmra.mrb[0].mxu0 %v6704
    %v6911 = vpop.f32.mrb[0].mxu0
    %v6912 = vadd.f32 0.0, %v6911
    %v6913 = vpop.f32.mrb[0].mxu0
    %6914 = vmatprep.mubr.f32.mxu0 %v6708
    %6915 = vmatmul.mubr.f32.gmra.mrb[0].mxu0 %v6707
    %v6916 = vpop.f32.mrb[0].mxu0
    %v6917 = vadd.f32 0.0, %v6916
    %v6918 = vpop.f32.mrb[0].mxu0
    %6919 = vmatprep.mubr.f32.mxu0 %v6711
    %6920 = vmatmul.mubr.f32.gmra.mrb[0].mxu0 %v6710
    %v6921 = vpop.f32.mrb[0].mxu0
    %v6922 = vadd.f32 0.0, %v6921
    %v6923 = vpop.f32.mrb[0].mxu0
    %6924 = vmatprep.mubr.f32.mxu0 %v6714
    %6925 = vmatmul.mubr.f32.gmra.mrb[0].mxu0 %v6713
    %v6926 = vpop.f32.mrb[0].mxu0
    %v6927 = vadd.f32 0.0, %v6926
    %v6928 = vpop.f32.mrb[0].mxu0
    %6929 = vmatprep.mubr.f32.mxu0 %v6717
    %6930 = vmatmul.mubr.f32.gmra.mrb[0].mxu0 %v6716
    %v6931 = vpop.f32.mrb[0].mxu0
    %v6932 = vadd.f32 0.0, %v6931
    %v6933 = vpop.f32.mrb[0].mxu0
    %6934 = vmatprep.mubr.f32.mxu0 %v6720
    %6935 = vmatmul.mubr.f32.gmra.mrb[0].mxu0 %v6719
    %v6936 = vpop.f32.mrb[0].mxu0
    %v6937 = vadd.f32 0.0, %v6936
    %v6938 = vpop.f32.mrb[0].mxu0
    %6939 = vmatprep.mubr.f32.mxu0 %v6723
    %6940 = vmatmul.mubr.f32.gmra.mrb[0].mxu0 %v6722
    %v6941 = vpop.f32.mrb[0].mxu0
    %v6942 = vadd.f32 0.0, %v6941
    %v6943 = vpop.f32.mrb[0].mxu0
    %6944 = vdwg.mxu0
    %6945 = vmatprep.subr.mxu0 0.0
    %6946 = vmatpush1.msra.mxu0 %v6666
    %6947 = vmatprep.subr.mxu0 0.0
    %6948 = vmatpush1.msra.mxu0 %v6783
    %6949 = vmatprep.subr.mxu0 0.0
    %6950 = vmatpush1.msra.mxu0 0.0
    %6951 = vmatprep.subr.mxu0 0.0
    %6952 = vmatpush1.msra.mxu0 0.0
    %6953 = vmatprep.subr.mxu0 0.0
    %6954 = vmatpush1.msra.mxu0 0.0
    %6955 = vmatprep.subr.mxu0 0.0
    %6956 = vmatpush1.msra.mxu0 0.0
    %6957 = vmatprep.subr.mxu0 0.0
    %6958 = vmatpush1.msra.mxu0 0.0
    %6959 = vmatprep.subr.mxu0 0.0
    %6960 = vmatpush1.msra.mxu0 0.0
    %6961 = vmatprep.subr.mxu0 0.0
    %6962 = vmatpush1.msra.mxu0 0.0
    %6963 = vmatprep.subr.mxu0 0.0
    %6964 = vmatpush1.msra.mxu0 0.0
    %6965 = vmatprep.subr.mxu0 0.0
    %6966 = vmatpush1.msra.mxu0 0.0
    %6967 = vmatprep.subr.mxu0 0.0
    %6968 = vmatpush1.msra.mxu0 0.0
    %6969 = vmatprep.subr.mxu0 0.0
    %6970 = vmatpush1.msra.mxu0 0.0
    %6971 = vmatprep.subr.mxu0 0.0
    %6972 = vmatpush1.msra.mxu0 0.0
    %6973 = vmatprep.subr.mxu0 0.0
    %6974 = vmatpush1.msra.mxu0 0.0
    %6975 = vmatprep.subr.mxu0 0.0
    %6976 = vmatpush1.msra.mxu0 0.0
    %6977 = vmatprep.subr.mxu0 0.0
    %6978 = vmatpush1.msra.mxu0 0.0
    %6979 = vmatprep.subr.mxu0 0.0
    %6980 = vmatpush1.msra.mxu0 0.0
    %6981 = vmatprep.subr.mxu0 0.0
    %6982 = vmatpush1.msra.mxu0 0.0
    %6983 = vmatprep.subr.mxu0 0.0
    %6984 = vmatpush1.msra.mxu0 0.0
    %6985 = vmatprep.subr.mxu0 0.0
    %6986 = vmatpush1.msra.mxu0 0.0
    %6987 = vmatprep.subr.mxu0 0.0
    %6988 = vmatpush1.msra.mxu0 0.0
    %6989 = vmatprep.subr.mxu0 0.0
    %6990 = vmatpush1.msra.mxu0 0.0
    %6991 = vmatprep.subr.mxu0 0.0
    %6992 = vmatpush1.msra.mxu0 0.0
    %6993 = vmatprep.subr.mxu0 0.0
    %6994 = vmatpush1.msra.mxu0 0.0
    %6995 = vmatprep.subr.mxu0 0.0
    %6996 = vmatpush1.msra.mxu0 0.0
    %6997 = vmatprep.subr.mxu0 0.0
    %6998 = vmatpush1.msra.mxu0 0.0
    %6999 = vmatprep.subr.mxu0 0.0
    %7000 = vmatpush1.msra.mxu0 0.0
    %7001 = vmatprep.subr.mxu0 0.0
    %7002 = vmatpush1.msra.mxu0 0.0
    %7003 = vmatprep.subr.mxu0 0.0
    %7004 = vmatpush1.msra.mxu0 0.0
    %7005 = vmatprep.subr.mxu0 0.0
    %7006 = vmatpush1.msra.mxu0 0.0
    %7007 = vmatprep.subr.mxu0 0.0
    %7008 = vmatpush1.msra.mxu0 0.0
    %7009 = vmatprep.mubr.f32.mxu0 0.0
    %7010 = vmatmul.mubr.f32.gmra.mrb[0].mxu0 %v6726
    %v7011 = vpop.f32.mrb[0].mxu0
    %v7012 = vadd.f32 %v6852, %v7011
    %v7013 = vpop.f32.mrb[0].mxu0
    %7014 = vmatprep.mubr.f32.mxu0 0.0
    %7015 = vmatmul.mubr.f32.gmra.mrb[0].mxu0 %v6729
    %v7016 = vpop.f32.mrb[0].mxu0
    %v7017 = vadd.f32 %v6857, %v7016
    %v7018 = vpop.f32.mrb[0].mxu0
    %7019 = vmatprep.mubr.f32.mxu0 0.0
    %7020 = vmatmul.mubr.f32.gmra.mrb[0].mxu0 %v6732
    %v7021 = vpop.f32.mrb[0].mxu0
    %v7022 = vadd.f32 %v6862, %v7021
    %v7023 = vpop.f32.mrb[0].mxu0
    %7024 = vmatprep.mubr.f32.mxu0 0.0
    %7025 = vmatmul.mubr.f32.gmra.mrb[0].mxu0 %v6735
    %v7026 = vpop.f32.mrb[0].mxu0
    %v7027 = vadd.f32 %v6867, %v7026
    %v7028 = vpop.f32.mrb[0].mxu0
    %7029 = vmatprep.mubr.f32.mxu0 0.0
    %7030 = vmatmul.mubr.f32.gmra.mrb[0].mxu0 %v6738
    %v7031 = vpop.f32.mrb[0].mxu0
    %v7032 = vadd.f32 %v6872, %v7031
    %v7033 = vpop.f32.mrb[0].mxu0
    %7034 = vmatprep.mubr.f32.mxu0 0.0
    %7035 = vmatmul.mubr.f32.gmra.mrb[0].mxu0 %v6741
    %v7036 = vpop.f32.mrb[0].mxu0
    %v7037 = vadd.f32 %v6877, %v7036
    %v7038 = vpop.f32.mrb[0].mxu0
    %7039 = vmatprep.mubr.f32.mxu0 0.0
    %7040 = vmatmul.mubr.f32.gmra.mrb[0].mxu0 %v6744
    %v7041 = vpop.f32.mrb[0].mxu0
    %v7042 = vadd.f32 %v6882, %v7041
    %v7043 = vpop.f32.mrb[0].mxu0
    %7044 = vmatprep.mubr.f32.mxu0 0.0
    %7045 = vmatmul.mubr.f32.gmra.mrb[0].mxu0 %v6747
    %v7046 = vpop.f32.mrb[0].mxu0
    %v7047 = vadd.f32 %v6887, %v7046
    %v7048 = vpop.f32.mrb[0].mxu0
    %7049 = vmatprep.mubr.f32.mxu0 0.0
    %7050 = vmatmul.mubr.f32.gmra.mrb[0].mxu0 %v6750
    %v7051 = vpop.f32.mrb[0].mxu0
    %v7052 = vadd.f32 %v6892, %v7051
    %v7053 = vpop.f32.mrb[0].mxu0
    %7054 = vmatprep.mubr.f32.mxu0 0.0
    %7055 = vmatmul.mubr.f32.gmra.mrb[0].mxu0 %v6753
    %v7056 = vpop.f32.mrb[0].mxu0
    %v7057 = vadd.f32 %v6897, %v7056
    %v7058 = vpop.f32.mrb[0].mxu0
    %7059 = vmatprep.mubr.f32.mxu0 0.0
    %7060 = vmatmul.mubr.f32.gmra.mrb[0].mxu0 %v6756
    %v7061 = vpop.f32.mrb[0].mxu0
    %v7062 = vadd.f32 %v6902, %v7061
    %v7063 = vpop.f32.mrb[0].mxu0
    %7064 = vmatprep.mubr.f32.mxu0 0.0
    %7065 = vmatmul.mubr.f32.gmra.mrb[0].mxu0 %v6759
    %v7066 = vpop.f32.mrb[0].mxu0
    %v7067 = vadd.f32 %v6907, %v7066
    %v7068 = vpop.f32.mrb[0].mxu0
    %7069 = vmatprep.mubr.f32.mxu0 0.0
    %7070 = vmatmul.mubr.f32.gmra.mrb[0].mxu0 %v6762
    %v7071 = vpop.f32.mrb[0].mxu0
    %v7072 = vadd.f32 %v6912, %v7071
    %v7073 = vpop.f32.mrb[0].mxu0
    %7074 = vmatprep.mubr.f32.mxu0 0.0
    %7075 = vmatmul.mubr.f32.gmra.mrb[0].mxu0 %v6765
    %v7076 = vpop.f32.mrb[0].mxu0
    %v7077 = vadd.f32 %v6917, %v7076
    %v7078 = vpop.f32.mrb[0].mxu0
    %7079 = vmatprep.mubr.f32.mxu0 0.0
    %7080 = vmatmul.mubr.f32.gmra.mrb[0].mxu0 %v6768
    %v7081 = vpop.f32.mrb[0].mxu0
    %v7082 = vadd.f32 %v6922, %v7081
    %v7083 = vpop.f32.mrb[0].mxu0
    %7084 = vmatprep.mubr.f32.mxu0 0.0
    %7085 = vmatmul.mubr.f32.gmra.mrb[0].mxu0 %v6771
    %v7086 = vpop.f32.mrb[0].mxu0
    %v7087 = vadd.f32 %v6927, %v7086
    %v7088 = vpop.f32.mrb[0].mxu0
    %7089 = vmatprep.mubr.f32.mxu0 0.0
    %7090 = vmatmul.mubr.f32.gmra.mrb[0].mxu0 %v6774
    %v7091 = vpop.f32.mrb[0].mxu0
    %v7092 = vadd.f32 %v6932, %v7091
    %v7093 = vpop.f32.mrb[0].mxu0
    %7094 = vmatprep.mubr.f32.mxu0 0.0
    %7095 = vmatmul.mubr.f32.gmra.mrb[0].mxu0 %v6777
    %v7096 = vpop.f32.mrb[0].mxu0
    %v7097 = vadd.f32 %v6937, %v7096
    %v7098 = vpop.f32.mrb[0].mxu0
    %7099 = vmatprep.mubr.f32.mxu0 0.0
    %7100 = vmatmul.mubr.f32.gmra.mrb[0].mxu0 %v6780
    %v7101 = vpop.f32.mrb[0].mxu0
    %v7102 = vadd.f32 %v6942, %v7101
    %v7103 = vpop.f32.mrb[0].mxu0
    %7104 = vdwg.mxu0
    %v7105 = vld [vmem:[#allocation5] sm:$0xff]
    %v7106 = vld [vmem:[#allocation5 + $0x8] sm:$0x1]
    %v7107 = vlaneseq
    %v7108 = vshrl.u32 %v7107, 7
    %v7109 = vsub.s32 0, %v7108
    %v7110 = vrot.slane %v7105, %v7109
    %v7111 = vmul.f32 %v7110, %v7012
    %v7112 = vmul.f32 %v7110, %v7017
    %v7113 = vmul.f32 %v7110, %v7022
    %v7114 = vmul.f32 %v7110, %v7027
    %v7115 = vmul.f32 %v7110, %v7032
    %v7116 = vmul.f32 %v7110, %v7037
    %v7117 = vmul.f32 %v7110, %v7042
    %v7118 = vmul.f32 %v7110, %v7047
    %v7119 = vmul.f32 %v7110, %v7052
    %v7120 = vmul.f32 %v7110, %v7057
    %v7121 = vmul.f32 %v7110, %v7062
    %v7122 = vmul.f32 %v7110, %v7067
    %v7123 = vmul.f32 %v7110, %v7072
    %v7124 = vmul.f32 %v7110, %v7077
    %v7125 = vmul.f32 %v7110, %v7082
    %v7126 = vmul.f32 %v7110, %v7087
    %v7127 = vmul.f32 %v7110, %v7092
    %v7128 = vmul.f32 %v7110, %v7097
    %v7129 = vadd.f32 %v7111, 0.0
    %v7130 = vadd.f32 %v7112, 0.0
    %v7131 = vadd.f32 %v7113, 0.0
    %v7132 = vadd.f32 %v7114, 0.0
    %v7133 = vadd.f32 %v7115, 0.0
    %v7134 = vadd.f32 %v7116, 0.0
    %v7135 = vadd.f32 %v7117, 0.0
    %v7136 = vadd.f32 %v7118, 0.0
    %v7137 = vadd.f32 %v7119, 0.0
    %v7138 = vadd.f32 %v7120, 0.0
    %v7139 = vadd.f32 %v7121, 0.0
    %v7140 = vadd.f32 %v7122, 0.0
    %v7141 = vadd.f32 %v7123, 0.0
    %v7142 = vadd.f32 %v7124, 0.0
    %v7143 = vadd.f32 %v7125, 0.0
    %v7144 = vadd.f32 %v7126, 0.0
    %v7145 = vadd.f32 %v7127, 0.0
    %v7146 = vadd.f32 %v7128, 0.0
    %v7147 = vlaneseq
    %v7148 = vshrl.u32 %v7147, 7
    %v7149 = vsub.s32 1, %v7148
    %v7150 = vrot.slane %v7105, %v7149
    %v7151 = vmul.f32 %v7150, %v7012
    %v7152 = vmul.f32 %v7150, %v7017
    %v7153 = vmul.f32 %v7150, %v7022
    %v7154 = vmul.f32 %v7150, %v7027
    %v7155 = vmul.f32 %v7150, %v7032
    %v7156 = vmul.f32 %v7150, %v7037
    %v7157 = vmul.f32 %v7150, %v7042
    %v7158 = vmul.f32 %v7150, %v7047
    %v7159 = vmul.f32 %v7150, %v7052
    %v7160 = vmul.f32 %v7150, %v7057
    %v7161 = vmul.f32 %v7150, %v7062
    %v7162 = vmul.f32 %v7150, %v7067
    %v7163 = vmul.f32 %v7150, %v7072
    %v7164 = vmul.f32 %v7150, %v7077
    %v7165 = vmul.f32 %v7150, %v7082
    %v7166 = vmul.f32 %v7150, %v7087
    %v7167 = vmul.f32 %v7150, %v7092
    %v7168 = vmul.f32 %v7150, %v7097
    %v7187 = vrot.slane %v7151, 1
    %v7188 = vrot.slane %v7152, 1
    %v7189 = vsel %vm389, %v7187, %v7188
    %v7190 = vrot.slane %v7153, 1
    %v7191 = vsel %vm389, %v7188, %v7190
    %v7192 = vrot.slane %v7154, 1
    %v7193 = vsel %vm389, %v7190, %v7192
    %v7194 = vrot.slane %v7155, 1
    %v7195 = vsel %vm389, %v7192, %v7194
    %v7196 = vrot.slane %v7156, 1
    %v7197 = vsel %vm389, %v7194, %v7196
    %v7198 = vrot.slane %v7157, 1
    %v7199 = vsel %vm389, %v7196, %v7198
    %v7200 = vrot.slane %v7158, 1
    %v7201 = vsel %vm389, %v7198, %v7200
    %v7202 = vrot.slane %v7159, 1
    %v7203 = vsel %vm389, %v7200, %v7202
    %v7204 = vrot.slane %v7160, 1
    %v7205 = vsel %vm389, %v7202, %v7204
    %v7206 = vrot.slane %v7161, 1
    %v7207 = vsel %vm389, %v7204, %v7206
    %v7208 = vrot.slane %v7162, 1
    %v7209 = vsel %vm389, %v7206, %v7208
    %v7210 = vrot.slane %v7163, 1
    %v7211 = vsel %vm389, %v7208, %v7210
    %v7212 = vrot.slane %v7164, 1
    %v7213 = vsel %vm389, %v7210, %v7212
    %v7214 = vrot.slane %v7165, 1
    %v7215 = vsel %vm389, %v7212, %v7214
    %v7216 = vrot.slane %v7166, 1
    %v7217 = vsel %vm389, %v7214, %v7216
    %v7218 = vrot.slane %v7167, 1
    %v7219 = vsel %vm389, %v7216, %v7218
    %v7220 = vrot.slane %v7168, 1
    %v7221 = vsel %vm389, %v7218, %v7220
    %v7240 = vadd.f32 %v7129, %v7189
    %v7241 = vadd.f32 %v7130, %v7191
    %v7242 = vadd.f32 %v7131, %v7193
    %v7243 = vadd.f32 %v7132, %v7195
    %v7244 = vadd.f32 %v7133, %v7197
    %v7245 = vadd.f32 %v7134, %v7199
    %v7246 = vadd.f32 %v7135, %v7201
    %v7247 = vadd.f32 %v7136, %v7203
    %v7248 = vadd.f32 %v7137, %v7205
    %v7249 = vadd.f32 %v7138, %v7207
    %v7250 = vadd.f32 %v7139, %v7209
    %v7251 = vadd.f32 %v7140, %v7211
    %v7252 = vadd.f32 %v7141, %v7213
    %v7253 = vadd.f32 %v7142, %v7215
    %v7254 = vadd.f32 %v7143, %v7217
    %v7255 = vadd.f32 %v7144, %v7219
    %v7256 = vadd.f32 %v7145, %v7221
    %v7257 = vadd.f32 %v7146, %v7220
    %v7258 = vlaneseq
    %v7259 = vshrl.u32 %v7258, 7
    %v7260 = vsub.s32 2, %v7259
    %v7261 = vrot.slane %v7105, %v7260
    %v7262 = vmul.f32 %v7261, %v7012
    %v7263 = vmul.f32 %v7261, %v7017
    %v7264 = vmul.f32 %v7261, %v7022
    %v7265 = vmul.f32 %v7261, %v7027
    %v7266 = vmul.f32 %v7261, %v7032
    %v7267 = vmul.f32 %v7261, %v7037
    %v7268 = vmul.f32 %v7261, %v7042
    %v7269 = vmul.f32 %v7261, %v7047
    %v7270 = vmul.f32 %v7261, %v7052
    %v7271 = vmul.f32 %v7261, %v7057
    %v7272 = vmul.f32 %v7261, %v7062
    %v7273 = vmul.f32 %v7261, %v7067
    %v7274 = vmul.f32 %v7261, %v7072
    %v7275 = vmul.f32 %v7261, %v7077
    %v7276 = vmul.f32 %v7261, %v7082
    %v7277 = vmul.f32 %v7261, %v7087
    %v7278 = vmul.f32 %v7261, %v7092
    %v7279 = vmul.f32 %v7261, %v7097
    %v7298 = vrot.slane %v7262, 2
    %v7299 = vrot.slane %v7263, 2
    %v7300 = vsel %vm591, %v7298, %v7299
    %v7301 = vrot.slane %v7264, 2
    %v7302 = vsel %vm591, %v7299, %v7301
    %v7303 = vrot.slane %v7265, 2
    %v7304 = vsel %vm591, %v7301, %v7303
    %v7305 = vrot.slane %v7266, 2
    %v7306 = vsel %vm591, %v7303, %v7305
    %v7307 = vrot.slane %v7267, 2
    %v7308 = vsel %vm591, %v7305, %v7307
    %v7309 = vrot.slane %v7268, 2
    %v7310 = vsel %vm591, %v7307, %v7309
    %v7311 = vrot.slane %v7269, 2
    %v7312 = vsel %vm591, %v7309, %v7311
    %v7313 = vrot.slane %v7270, 2
    %v7314 = vsel %vm591, %v7311, %v7313
    %v7315 = vrot.slane %v7271, 2
    %v7316 = vsel %vm591, %v7313, %v7315
    %v7317 = vrot.slane %v7272, 2
    %v7318 = vsel %vm591, %v7315, %v7317
    %v7319 = vrot.slane %v7273, 2
    %v7320 = vsel %vm591, %v7317, %v7319
    %v7321 = vrot.slane %v7274, 2
    %v7322 = vsel %vm591, %v7319, %v7321
    %v7323 = vrot.slane %v7275, 2
    %v7324 = vsel %vm591, %v7321, %v7323
    %v7325 = vrot.slane %v7276, 2
    %v7326 = vsel %vm591, %v7323, %v7325
    %v7327 = vrot.slane %v7277, 2
    %v7328 = vsel %vm591, %v7325, %v7327
    %v7329 = vrot.slane %v7278, 2
    %v7330 = vsel %vm591, %v7327, %v7329
    %v7331 = vrot.slane %v7279, 2
    %v7332 = vsel %vm591, %v7329, %v7331
    %v7351 = vadd.f32 %v7240, %v7300
    %v7352 = vadd.f32 %v7241, %v7302
    %v7353 = vadd.f32 %v7242, %v7304
    %v7354 = vadd.f32 %v7243, %v7306
    %v7355 = vadd.f32 %v7244, %v7308
    %v7356 = vadd.f32 %v7245, %v7310
    %v7357 = vadd.f32 %v7246, %v7312
    %v7358 = vadd.f32 %v7247, %v7314
    %v7359 = vadd.f32 %v7248, %v7316
    %v7360 = vadd.f32 %v7249, %v7318
    %v7361 = vadd.f32 %v7250, %v7320
    %v7362 = vadd.f32 %v7251, %v7322
    %v7363 = vadd.f32 %v7252, %v7324
    %v7364 = vadd.f32 %v7253, %v7326
    %v7365 = vadd.f32 %v7254, %v7328
    %v7366 = vadd.f32 %v7255, %v7330
    %v7367 = vadd.f32 %v7256, %v7332
    %v7368 = vadd.f32 %v7257, %v7331
    %v7369 = vlaneseq
    %v7370 = vshrl.u32 %v7369, 7
    %v7371 = vsub.s32 3, %v7370
    %v7372 = vrot.slane %v7105, %v7371
    %v7373 = vmul.f32 %v7372, %v7012
    %v7374 = vmul.f32 %v7372, %v7017
    %v7375 = vmul.f32 %v7372, %v7022
    %v7376 = vmul.f32 %v7372, %v7027
    %v7377 = vmul.f32 %v7372, %v7032
    %v7378 = vmul.f32 %v7372, %v7037
    %v7379 = vmul.f32 %v7372, %v7042
    %v7380 = vmul.f32 %v7372, %v7047
    %v7381 = vmul.f32 %v7372, %v7052
    %v7382 = vmul.f32 %v7372, %v7057
    %v7383 = vmul.f32 %v7372, %v7062
    %v7384 = vmul.f32 %v7372, %v7067
    %v7385 = vmul.f32 %v7372, %v7072
    %v7386 = vmul.f32 %v7372, %v7077
    %v7387 = vmul.f32 %v7372, %v7082
    %v7388 = vmul.f32 %v7372, %v7087
    %v7389 = vmul.f32 %v7372, %v7092
    %v7390 = vmul.f32 %v7372, %v7097
    %v7409 = vrot.slane %v7373, 3
    %v7410 = vrot.slane %v7374, 3
    %v7411 = vsel %vm793, %v7409, %v7410
    %v7412 = vrot.slane %v7375, 3
    %v7413 = vsel %vm793, %v7410, %v7412
    %v7414 = vrot.slane %v7376, 3
    %v7415 = vsel %vm793, %v7412, %v7414
    %v7416 = vrot.slane %v7377, 3
    %v7417 = vsel %vm793, %v7414, %v7416
    %v7418 = vrot.slane %v7378, 3
    %v7419 = vsel %vm793, %v7416, %v7418
    %v7420 = vrot.slane %v7379, 3
    %v7421 = vsel %vm793, %v7418, %v7420
    %v7422 = vrot.slane %v7380, 3
    %v7423 = vsel %vm793, %v7420, %v7422
    %v7424 = vrot.slane %v7381, 3
    %v7425 = vsel %vm793, %v7422, %v7424
    %v7426 = vrot.slane %v7382, 3
    %v7427 = vsel %vm793, %v7424, %v7426
    %v7428 = vrot.slane %v7383, 3
    %v7429 = vsel %vm793, %v7426, %v7428
    %v7430 = vrot.slane %v7384, 3
    %v7431 = vsel %vm793, %v7428, %v7430
    %v7432 = vrot.slane %v7385, 3
    %v7433 = vsel %vm793, %v7430, %v7432
    %v7434 = vrot.slane %v7386, 3
    %v7435 = vsel %vm793, %v7432, %v7434
    %v7436 = vrot.slane %v7387, 3
    %v7437 = vsel %vm793, %v7434, %v7436
    %v7438 = vrot.slane %v7388, 3
    %v7439 = vsel %vm793, %v7436, %v7438
    %v7440 = vrot.slane %v7389, 3
    %v7441 = vsel %vm793, %v7438, %v7440
    %v7442 = vrot.slane %v7390, 3
    %v7443 = vsel %vm793, %v7440, %v7442
    %v7462 = vadd.f32 %v7351, %v7411
    %v7463 = vadd.f32 %v7352, %v7413
    %v7464 = vadd.f32 %v7353, %v7415
    %v7465 = vadd.f32 %v7354, %v7417
    %v7466 = vadd.f32 %v7355, %v7419
    %v7467 = vadd.f32 %v7356, %v7421
    %v7468 = vadd.f32 %v7357, %v7423
    %v7469 = vadd.f32 %v7358, %v7425
    %v7470 = vadd.f32 %v7359, %v7427
    %v7471 = vadd.f32 %v7360, %v7429
    %v7472 = vadd.f32 %v7361, %v7431
    %v7473 = vadd.f32 %v7362, %v7433
    %v7474 = vadd.f32 %v7363, %v7435
    %v7475 = vadd.f32 %v7364, %v7437
    %v7476 = vadd.f32 %v7365, %v7439
    %v7477 = vadd.f32 %v7366, %v7441
    %v7478 = vadd.f32 %v7367, %v7443
    %v7479 = vadd.f32 %v7368, %v7442
    %v7480 = vlaneseq
    %v7481 = vshrl.u32 %v7480, 7
    %v7482 = vsub.s32 4, %v7481
    %v7483 = vrot.slane %v7105, %v7482
    %v7484 = vmul.f32 %v7483, %v7012
    %v7485 = vmul.f32 %v7483, %v7017
    %v7486 = vmul.f32 %v7483, %v7022
    %v7487 = vmul.f32 %v7483, %v7027
    %v7488 = vmul.f32 %v7483, %v7032
    %v7489 = vmul.f32 %v7483, %v7037
    %v7490 = vmul.f32 %v7483, %v7042
    %v7491 = vmul.f32 %v7483, %v7047
    %v7492 = vmul.f32 %v7483, %v7052
    %v7493 = vmul.f32 %v7483, %v7057
    %v7494 = vmul.f32 %v7483, %v7062
    %v7495 = vmul.f32 %v7483, %v7067
    %v7496 = vmul.f32 %v7483, %v7072
    %v7497 = vmul.f32 %v7483, %v7077
    %v7498 = vmul.f32 %v7483, %v7082
    %v7499 = vmul.f32 %v7483, %v7087
    %v7500 = vmul.f32 %v7483, %v7092
    %v7501 = vmul.f32 %v7483, %v7097
    %v7520 = vrot.slane %v7484, 4
    %v7521 = vrot.slane %v7485, 4
    %v7522 = vsel %vm997, %v7520, %v7521
    %v7523 = vrot.slane %v7486, 4
    %v7524 = vsel %vm997, %v7521, %v7523
    %v7525 = vrot.slane %v7487, 4
    %v7526 = vsel %vm997, %v7523, %v7525
    %v7527 = vrot.slane %v7488, 4
    %v7528 = vsel %vm997, %v7525, %v7527
    %v7529 = vrot.slane %v7489, 4
    %v7530 = vsel %vm997, %v7527, %v7529
    %v7531 = vrot.slane %v7490, 4
    %v7532 = vsel %vm997, %v7529, %v7531
    %v7533 = vrot.slane %v7491, 4
    %v7534 = vsel %vm997, %v7531, %v7533
    %v7535 = vrot.slane %v7492, 4
    %v7536 = vsel %vm997, %v7533, %v7535
    %v7537 = vrot.slane %v7493, 4
    %v7538 = vsel %vm997, %v7535, %v7537
    %v7539 = vrot.slane %v7494, 4
    %v7540 = vsel %vm997, %v7537, %v7539
    %v7541 = vrot.slane %v7495, 4
    %v7542 = vsel %vm997, %v7539, %v7541
    %v7543 = vrot.slane %v7496, 4
    %v7544 = vsel %vm997, %v7541, %v7543
    %v7545 = vrot.slane %v7497, 4
    %v7546 = vsel %vm997, %v7543, %v7545
    %v7547 = vrot.slane %v7498, 4
    %v7548 = vsel %vm997, %v7545, %v7547
    %v7549 = vrot.slane %v7499, 4
    %v7550 = vsel %vm997, %v7547, %v7549
    %v7551 = vrot.slane %v7500, 4
    %v7552 = vsel %vm997, %v7549, %v7551
    %v7553 = vrot.slane %v7501, 4
    %v7554 = vsel %vm997, %v7551, %v7553
    %v7573 = vadd.f32 %v7462, %v7522
    %v7574 = vadd.f32 %v7463, %v7524
    %v7575 = vadd.f32 %v7464, %v7526
    %v7576 = vadd.f32 %v7465, %v7528
    %v7577 = vadd.f32 %v7466, %v7530
    %v7578 = vadd.f32 %v7467, %v7532
    %v7579 = vadd.f32 %v7468, %v7534
    %v7580 = vadd.f32 %v7469, %v7536
    %v7581 = vadd.f32 %v7470, %v7538
    %v7582 = vadd.f32 %v7471, %v7540
    %v7583 = vadd.f32 %v7472, %v7542
    %v7584 = vadd.f32 %v7473, %v7544
    %v7585 = vadd.f32 %v7474, %v7546
    %v7586 = vadd.f32 %v7475, %v7548
    %v7587 = vadd.f32 %v7476, %v7550
    %v7588 = vadd.f32 %v7477, %v7552
    %v7589 = vadd.f32 %v7478, %v7554
    %v7590 = vadd.f32 %v7479, %v7553
    %v7591 = vlaneseq
    %v7592 = vshrl.u32 %v7591, 7
    %v7593 = vsub.s32 5, %v7592
    %v7594 = vrot.slane %v7105, %v7593
    %v7595 = vmul.f32 %v7594, %v7012
    %v7596 = vmul.f32 %v7594, %v7017
    %v7597 = vmul.f32 %v7594, %v7022
    %v7598 = vmul.f32 %v7594, %v7027
    %v7599 = vmul.f32 %v7594, %v7032
    %v7600 = vmul.f32 %v7594, %v7037
    %v7601 = vmul.f32 %v7594, %v7042
    %v7602 = vmul.f32 %v7594, %v7047
    %v7603 = vmul.f32 %v7594, %v7052
    %v7604 = vmul.f32 %v7594, %v7057
    %v7605 = vmul.f32 %v7594, %v7062
    %v7606 = vmul.f32 %v7594, %v7067
    %v7607 = vmul.f32 %v7594, %v7072
    %v7608 = vmul.f32 %v7594, %v7077
    %v7609 = vmul.f32 %v7594, %v7082
    %v7610 = vmul.f32 %v7594, %v7087
    %v7611 = vmul.f32 %v7594, %v7092
    %v7612 = vmul.f32 %v7594, %v7097
    %v7631 = vrot.slane %v7595, 5
    %v7632 = vrot.slane %v7596, 5
    %v7633 = vsel %vm1203, %v7631, %v7632
    %v7634 = vrot.slane %v7597, 5
    %v7635 = vsel %vm1203, %v7632, %v7634
    %v7636 = vrot.slane %v7598, 5
    %v7637 = vsel %vm1203, %v7634, %v7636
    %v7638 = vrot.slane %v7599, 5
    %v7639 = vsel %vm1203, %v7636, %v7638
    %v7640 = vrot.slane %v7600, 5
    %v7641 = vsel %vm1203, %v7638, %v7640
    %v7642 = vrot.slane %v7601, 5
    %v7643 = vsel %vm1203, %v7640, %v7642
    %v7644 = vrot.slane %v7602, 5
    %v7645 = vsel %vm1203, %v7642, %v7644
    %v7646 = vrot.slane %v7603, 5
    %v7647 = vsel %vm1203, %v7644, %v7646
    %v7648 = vrot.slane %v7604, 5
    %v7649 = vsel %vm1203, %v7646, %v7648
    %v7650 = vrot.slane %v7605, 5
    %v7651 = vsel %vm1203, %v7648, %v7650
    %v7652 = vrot.slane %v7606, 5
    %v7653 = vsel %vm1203, %v7650, %v7652
    %v7654 = vrot.slane %v7607, 5
    %v7655 = vsel %vm1203, %v7652, %v7654
    %v7656 = vrot.slane %v7608, 5
    %v7657 = vsel %vm1203, %v7654, %v7656
    %v7658 = vrot.slane %v7609, 5
    %v7659 = vsel %vm1203, %v7656, %v7658
    %v7660 = vrot.slane %v7610, 5
    %v7661 = vsel %vm1203, %v7658, %v7660
    %v7662 = vrot.slane %v7611, 5
    %v7663 = vsel %vm1203, %v7660, %v7662
    %v7664 = vrot.slane %v7612, 5
    %v7665 = vsel %vm1203, %v7662, %v7664
    %v7684 = vadd.f32 %v7573, %v7633
    %v7685 = vadd.f32 %v7574, %v7635
    %v7686 = vadd.f32 %v7575, %v7637
    %v7687 = vadd.f32 %v7576, %v7639
    %v7688 = vadd.f32 %v7577, %v7641
    %v7689 = vadd.f32 %v7578, %v7643
    %v7690 = vadd.f32 %v7579, %v7645
    %v7691 = vadd.f32 %v7580, %v7647
    %v7692 = vadd.f32 %v7581, %v7649
    %v7693 = vadd.f32 %v7582, %v7651
    %v7694 = vadd.f32 %v7583, %v7653
    %v7695 = vadd.f32 %v7584, %v7655
    %v7696 = vadd.f32 %v7585, %v7657
    %v7697 = vadd.f32 %v7586, %v7659
    %v7698 = vadd.f32 %v7587, %v7661
    %v7699 = vadd.f32 %v7588, %v7663
    %v7700 = vadd.f32 %v7589, %v7665
    %v7701 = vadd.f32 %v7590, %v7664
    %v7702 = vlaneseq
    %v7703 = vshrl.u32 %v7702, 7
    %v7704 = vsub.s32 6, %v7703
    %v7705 = vrot.slane %v7105, %v7704
    %v7706 = vmul.f32 %v7705, %v7012
    %v7707 = vmul.f32 %v7705, %v7017
    %v7708 = vmul.f32 %v7705, %v7022
    %v7709 = vmul.f32 %v7705, %v7027
    %v7710 = vmul.f32 %v7705, %v7032
    %v7711 = vmul.f32 %v7705, %v7037
    %v7712 = vmul.f32 %v7705, %v7042
    %v7713 = vmul.f32 %v7705, %v7047
    %v7714 = vmul.f32 %v7705, %v7052
    %v7715 = vmul.f32 %v7705, %v7057
    %v7716 = vmul.f32 %v7705, %v7062
    %v7717 = vmul.f32 %v7705, %v7067
    %v7718 = vmul.f32 %v7705, %v7072
    %v7719 = vmul.f32 %v7705, %v7077
    %v7720 = vmul.f32 %v7705, %v7082
    %v7721 = vmul.f32 %v7705, %v7087
    %v7722 = vmul.f32 %v7705, %v7092
    %v7723 = vmul.f32 %v7705, %v7097
    %v7724 = vmul.f32 %v7705, %v7102
    %v7744 = vrot.slane %v7706, 6
    %v7745 = vrot.slane %v7707, 6
    %v7746 = vsel %vm1409, %v7744, %v7745
    %v7747 = vrot.slane %v7708, 6
    %v7748 = vsel %vm1409, %v7745, %v7747
    %v7749 = vrot.slane %v7709, 6
    %v7750 = vsel %vm1409, %v7747, %v7749
    %v7751 = vrot.slane %v7710, 6
    %v7752 = vsel %vm1409, %v7749, %v7751
    %v7753 = vrot.slane %v7711, 6
    %v7754 = vsel %vm1409, %v7751, %v7753
    %v7755 = vrot.slane %v7712, 6
    %v7756 = vsel %vm1409, %v7753, %v7755
    %v7757 = vrot.slane %v7713, 6
    %v7758 = vsel %vm1409, %v7755, %v7757
    %v7759 = vrot.slane %v7714, 6
    %v7760 = vsel %vm1409, %v7757, %v7759
    %v7761 = vrot.slane %v7715, 6
    %v7762 = vsel %vm1409, %v7759, %v7761
    %v7763 = vrot.slane %v7716, 6
    %v7764 = vsel %vm1409, %v7761, %v7763
    %v7765 = vrot.slane %v7717, 6
    %v7766 = vsel %vm1409, %v7763, %v7765
    %v7767 = vrot.slane %v7718, 6
    %v7768 = vsel %vm1409, %v7765, %v7767
    %v7769 = vrot.slane %v7719, 6
    %v7770 = vsel %vm1409, %v7767, %v7769
    %v7771 = vrot.slane %v7720, 6
    %v7772 = vsel %vm1409, %v7769, %v7771
    %v7773 = vrot.slane %v7721, 6
    %v7774 = vsel %vm1409, %v7771, %v7773
    %v7775 = vrot.slane %v7722, 6
    %v7776 = vsel %vm1409, %v7773, %v7775
    %v7777 = vrot.slane %v7723, 6
    %v7778 = vsel %vm1409, %v7775, %v7777
    %v7779 = vrot.slane %v7724, 6
    %v7780 = vsel %vm1409, %v7777, %v7779
    %v7799 = vadd.f32 %v7684, %v7746
    %v7800 = vadd.f32 %v7685, %v7748
    %v7801 = vadd.f32 %v7686, %v7750
    %v7802 = vadd.f32 %v7687, %v7752
    %v7803 = vadd.f32 %v7688, %v7754
    %v7804 = vadd.f32 %v7689, %v7756
    %v7805 = vadd.f32 %v7690, %v7758
    %v7806 = vadd.f32 %v7691, %v7760
    %v7807 = vadd.f32 %v7692, %v7762
    %v7808 = vadd.f32 %v7693, %v7764
    %v7809 = vadd.f32 %v7694, %v7766
    %v7810 = vadd.f32 %v7695, %v7768
    %v7811 = vadd.f32 %v7696, %v7770
    %v7812 = vadd.f32 %v7697, %v7772
    %v7813 = vadd.f32 %v7698, %v7774
    %v7814 = vadd.f32 %v7699, %v7776
    %v7815 = vadd.f32 %v7700, %v7778
    %v7816 = vadd.f32 %v7701, %v7780
    %v7817 = vlaneseq
    %v7818 = vshrl.u32 %v7817, 7
    %v7819 = vsub.s32 7, %v7818
    %v7820 = vrot.slane %v7105, %v7819
    %v7821 = vmul.f32 %v7820, %v7012
    %v7822 = vmul.f32 %v7820, %v7017
    %v7823 = vmul.f32 %v7820, %v7022
    %v7824 = vmul.f32 %v7820, %v7027
    %v7825 = vmul.f32 %v7820, %v7032
    %v7826 = vmul.f32 %v7820, %v7037
    %v7827 = vmul.f32 %v7820, %v7042
    %v7828 = vmul.f32 %v7820, %v7047
    %v7829 = vmul.f32 %v7820, %v7052
    %v7830 = vmul.f32 %v7820, %v7057
    %v7831 = vmul.f32 %v7820, %v7062
    %v7832 = vmul.f32 %v7820, %v7067
    %v7833 = vmul.f32 %v7820, %v7072
    %v7834 = vmul.f32 %v7820, %v7077
    %v7835 = vmul.f32 %v7820, %v7082
    %v7836 = vmul.f32 %v7820, %v7087
    %v7837 = vmul.f32 %v7820, %v7092
    %v7838 = vmul.f32 %v7820, %v7097
    %v7839 = vmul.f32 %v7820, %v7102
    %v7859 = vrot.slane %v7821, 7
    %v7860 = vrot.slane %v7822, 7
    %v7861 = vsel %vm1615, %v7859, %v7860
    %v7862 = vrot.slane %v7823, 7
    %v7863 = vsel %vm1615, %v7860, %v7862
    %v7864 = vrot.slane %v7824, 7
    %v7865 = vsel %vm1615, %v7862, %v7864
    %v7866 = vrot.slane %v7825, 7
    %v7867 = vsel %vm1615, %v7864, %v7866
    %v7868 = vrot.slane %v7826, 7
    %v7869 = vsel %vm1615, %v7866, %v7868
    %v7870 = vrot.slane %v7827, 7
    %v7871 = vsel %vm1615, %v7868, %v7870
    %v7872 = vrot.slane %v7828, 7
    %v7873 = vsel %vm1615, %v7870, %v7872
    %v7874 = vrot.slane %v7829, 7
    %v7875 = vsel %vm1615, %v7872, %v7874
    %v7876 = vrot.slane %v7830, 7
    %v7877 = vsel %vm1615, %v7874, %v7876
    %v7878 = vrot.slane %v7831, 7
    %v7879 = vsel %vm1615, %v7876, %v7878
    %v7880 = vrot.slane %v7832, 7
    %v7881 = vsel %vm1615, %v7878, %v7880
    %v7882 = vrot.slane %v7833, 7
    %v7883 = vsel %vm1615, %v7880, %v7882
    %v7884 = vrot.slane %v7834, 7
    %v7885 = vsel %vm1615, %v7882, %v7884
    %v7886 = vrot.slane %v7835, 7
    %v7887 = vsel %vm1615, %v7884, %v7886
    %v7888 = vrot.slane %v7836, 7
    %v7889 = vsel %vm1615, %v7886, %v7888
    %v7890 = vrot.slane %v7837, 7
    %v7891 = vsel %vm1615, %v7888, %v7890
    %v7892 = vrot.slane %v7838, 7
    %v7893 = vsel %vm1615, %v7890, %v7892
    %v7894 = vrot.slane %v7839, 7
    %v7895 = vsel %vm1615, %v7892, %v7894
    %v7914 = vadd.f32 %v7799, %v7861
    %v7915 = vadd.f32 %v7800, %v7863
    %v7916 = vadd.f32 %v7801, %v7865
    %v7917 = vadd.f32 %v7802, %v7867
    %v7918 = vadd.f32 %v7803, %v7869
    %v7919 = vadd.f32 %v7804, %v7871
    %v7920 = vadd.f32 %v7805, %v7873
    %v7921 = vadd.f32 %v7806, %v7875
    %v7922 = vadd.f32 %v7807, %v7877
    %v7923 = vadd.f32 %v7808, %v7879
    %v7924 = vadd.f32 %v7809, %v7881
    %v7925 = vadd.f32 %v7810, %v7883
    %v7926 = vadd.f32 %v7811, %v7885
    %v7927 = vadd.f32 %v7812, %v7887
    %v7928 = vadd.f32 %v7813, %v7889
    %v7929 = vadd.f32 %v7814, %v7891
    %v7930 = vadd.f32 %v7815, %v7893
    %v7931 = vadd.f32 %v7816, %v7895
    %v7932 = vlaneseq
    %v7933 = vshrl.u32 %v7932, 7
    %v7934 = vsub.s32 0, %v7933
    %v7935 = vrot.slane %v7106, %v7934
    %v7936 = vadd.f32 %v7914, %v7935
    %v7937 = vadd.f32 %v7915, %v7935
    %v7938 = vadd.f32 %v7916, %v7935
    %v7939 = vadd.f32 %v7917, %v7935
    %v7940 = vadd.f32 %v7918, %v7935
    %v7941 = vadd.f32 %v7919, %v7935
    %v7942 = vadd.f32 %v7920, %v7935
    %v7943 = vadd.f32 %v7921, %v7935
    %v7944 = vadd.f32 %v7922, %v7935
    %v7945 = vadd.f32 %v7923, %v7935
    %v7946 = vadd.f32 %v7924, %v7935
    %v7947 = vadd.f32 %v7925, %v7935
    %v7948 = vadd.f32 %v7926, %v7935
    %v7949 = vadd.f32 %v7927, %v7935
    %v7950 = vadd.f32 %v7928, %v7935
    %v7951 = vadd.f32 %v7929, %v7935
    %v7952 = vadd.f32 %v7930, %v7935
    %v7953 = vadd.f32 %v7931, %v7935
    %v7954 = vld [vmem:[%s37] sm:$0xff]
    %v7955 = vld [vmem:[%s37 + $0x8] sm:$0xff]
    %v7956 = vld [vmem:[%s37 + $0x10] sm:$0xff]
    %v7957 = vld [vmem:[%s37 + $0x18] sm:$0xff]
    %v7958 = vld [vmem:[%s37 + $0x20] sm:$0x1]
    %v7959 = vlaneseq
    %v7960 = vshrl.u32 %v7959, 7
    %v7961 = vsub.s32 0, %v7960
    %v7962 = vrot.slane %v7958, %v7961
    %v7964 = vsel %vm3368, %v7936, 0
    %v7967 = vsel %vm3368, %v7937, 0
    %v7970 = vsel %vm3368, %v7938, 0
    %v7973 = vsel %vm3368, %v7939, 0
    %v7976 = vsel %vm3368, %v7940, 0
    %v7979 = vsel %vm3368, %v7941, 0
    %v7982 = vsel %vm3368, %v7942, 0
    %v7985 = vsel %vm3368, %v7943, 0
    %v7988 = vsel %vm3368, %v7944, 0
    %v7991 = vsel %vm3368, %v7945, 0
    %v7994 = vsel %vm3368, %v7946, 0
    %v7997 = vsel %vm3368, %v7947, 0
    %v8000 = vsel %vm3368, %v7948, 0
    %v8003 = vsel %vm3368, %v7949, 0
    %v8006 = vsel %vm3368, %v7950, 0
    %v8009 = vsel %vm3368, %v7951, 0
    %v8012 = vsel %vm3368, %v7952, 0
    %v8015 = vsel %vm3368, %v7953, 0
    %8017 = vmatprep.subr.mxu0 0.0
    %8018 = vmatpush1.msra.mxu0 %v7954
    %8019 = vmatprep.subr.mxu0 0.0
    %8020 = vmatpush1.msra.mxu0 %v7955
    %8021 = vmatprep.subr.mxu0 0.0
    %8022 = vmatpush1.msra.mxu0 %v7956
    %8023 = vmatprep.subr.mxu0 0.0
    %8024 = vmatpush1.msra.mxu0 %v7957
    %8025 = vmatprep.subr.mxu0 0.0
    %8026 = vmatpush1.msra.mxu0 0.0
    %8027 = vmatprep.subr.mxu0 0.0
    %8028 = vmatpush1.msra.mxu0 0.0
    %8029 = vmatprep.subr.mxu0 0.0
    %8030 = vmatpush1.msra.mxu0 0.0
    %8031 = vmatprep.subr.mxu0 0.0
    %8032 = vmatpush1.msra.mxu0 0.0
    %8033 = vmatprep.subr.mxu0 0.0
    %8034 = vmatpush1.msra.mxu0 0.0
    %8035 = vmatprep.subr.mxu0 0.0
    %8036 = vmatpush1.msra.mxu0 0.0
    %8037 = vmatprep.subr.mxu0 0.0
    %8038 = vmatpush1.msra.mxu0 0.0
    %8039 = vmatprep.subr.mxu0 0.0
    %8040 = vmatpush1.msra.mxu0 0.0
    %8041 = vmatprep.subr.mxu0 0.0
    %8042 = vmatpush1.msra.mxu0 0.0
    %8043 = vmatprep.subr.mxu0 0.0
    %8044 = vmatpush1.msra.mxu0 0.0
    %8045 = vmatprep.subr.mxu0 0.0
    %8046 = vmatpush1.msra.mxu0 0.0
    %8047 = vmatprep.subr.mxu0 0.0
    %8048 = vmatpush1.msra.mxu0 0.0
    %8049 = vmatprep.subr.mxu0 0.0
    %8050 = vmatpush1.msra.mxu0 0.0
    %8051 = vmatprep.subr.mxu0 0.0
    %8052 = vmatpush1.msra.mxu0 0.0
    %8053 = vmatprep.subr.mxu0 0.0
    %8054 = vmatpush1.msra.mxu0 0.0
    %8055 = vmatprep.subr.mxu0 0.0
    %8056 = vmatpush1.msra.mxu0 0.0
    %8057 = vmatprep.subr.mxu0 0.0
    %8058 = vmatpush1.msra.mxu0 0.0
    %8059 = vmatprep.subr.mxu0 0.0
    %8060 = vmatpush1.msra.mxu0 0.0
    %8061 = vmatprep.subr.mxu0 0.0
    %8062 = vmatpush1.msra.mxu0 0.0
    %8063 = vmatprep.subr.mxu0 0.0
    %8064 = vmatpush1.msra.mxu0 0.0
    %8065 = vmatprep.subr.mxu0 0.0
    %8066 = vmatpush1.msra.mxu0 0.0
    %8067 = vmatprep.subr.mxu0 0.0
    %8068 = vmatpush1.msra.mxu0 0.0
    %8069 = vmatprep.subr.mxu0 0.0
    %8070 = vmatpush1.msra.mxu0 0.0
    %8071 = vmatprep.subr.mxu0 0.0
    %8072 = vmatpush1.msra.mxu0 0.0
    %8073 = vmatprep.subr.mxu0 0.0
    %8074 = vmatpush1.msra.mxu0 0.0
    %8075 = vmatprep.subr.mxu0 0.0
    %8076 = vmatpush1.msra.mxu0 0.0
    %8077 = vmatprep.subr.mxu0 0.0
    %8078 = vmatpush1.msra.mxu0 0.0
    %8079 = vmatprep.subr.mxu0 0.0
    %8080 = vmatpush1.msra.mxu0 0.0
    %8081 = vmatprep.mubr.f32.mxu0 0.0
    %8082 = vmatmul.mubr.f32.gmra.mrb[0].mxu0 %v7964
    %v8083 = vpop.f32.mrb[0].mxu0
    %v8084 = vadd.f32 %v7962, %v8083
    %v8085 = vpop.f32.mrb[0].mxu0
    %8086 = vmatprep.mubr.f32.mxu0 0.0
    %8087 = vmatmul.mubr.f32.gmra.mrb[0].mxu0 %v7967
    %v8088 = vpop.f32.mrb[0].mxu0
    %v8089 = vadd.f32 %v7962, %v8088
    %v8090 = vpop.f32.mrb[0].mxu0
    %8091 = vmatprep.mubr.f32.mxu0 0.0
    %8092 = vmatmul.mubr.f32.gmra.mrb[0].mxu0 %v7970
    %v8093 = vpop.f32.mrb[0].mxu0
    %v8094 = vadd.f32 %v7962, %v8093
    %v8095 = vpop.f32.mrb[0].mxu0
    %8096 = vmatprep.mubr.f32.mxu0 0.0
    %8097 = vmatmul.mubr.f32.gmra.mrb[0].mxu0 %v7973
    %v8098 = vpop.f32.mrb[0].mxu0
    %v8099 = vadd.f32 %v7962, %v8098
    %v8100 = vpop.f32.mrb[0].mxu0
    %8101 = vmatprep.mubr.f32.mxu0 0.0
    %8102 = vmatmul.mubr.f32.gmra.mrb[0].mxu0 %v7976
    %v8103 = vpop.f32.mrb[0].mxu0
    %v8104 = vadd.f32 %v7962, %v8103
    %v8105 = vpop.f32.mrb[0].mxu0
    %8106 = vmatprep.mubr.f32.mxu0 0.0
    %8107 = vmatmul.mubr.f32.gmra.mrb[0].mxu0 %v7979
    %v8108 = vpop.f32.mrb[0].mxu0
    %v8109 = vadd.f32 %v7962, %v8108
    %v8110 = vpop.f32.mrb[0].mxu0
    %8111 = vmatprep.mubr.f32.mxu0 0.0
    %8112 = vmatmul.mubr.f32.gmra.mrb[0].mxu0 %v7982
    %v8113 = vpop.f32.mrb[0].mxu0
    %v8114 = vadd.f32 %v7962, %v8113
    %v8115 = vpop.f32.mrb[0].mxu0
    %8116 = vmatprep.mubr.f32.mxu0 0.0
    %8117 = vmatmul.mubr.f32.gmra.mrb[0].mxu0 %v7985
    %v8118 = vpop.f32.mrb[0].mxu0
    %v8119 = vadd.f32 %v7962, %v8118
    %v8120 = vpop.f32.mrb[0].mxu0
    %8121 = vmatprep.mubr.f32.mxu0 0.0
    %8122 = vmatmul.mubr.f32.gmra.mrb[0].mxu0 %v7988
    %v8123 = vpop.f32.mrb[0].mxu0
    %v8124 = vadd.f32 %v7962, %v8123
    %v8125 = vpop.f32.mrb[0].mxu0
    %8126 = vmatprep.mubr.f32.mxu0 0.0
    %8127 = vmatmul.mubr.f32.gmra.mrb[0].mxu0 %v7991
    %v8128 = vpop.f32.mrb[0].mxu0
    %v8129 = vadd.f32 %v7962, %v8128
    %v8130 = vpop.f32.mrb[0].mxu0
    %8131 = vmatprep.mubr.f32.mxu0 0.0
    %8132 = vmatmul.mubr.f32.gmra.mrb[0].mxu0 %v7994
    %v8133 = vpop.f32.mrb[0].mxu0
    %v8134 = vadd.f32 %v7962, %v8133
    %v8135 = vpop.f32.mrb[0].mxu0
    %8136 = vmatprep.mubr.f32.mxu0 0.0
    %8137 = vmatmul.mubr.f32.gmra.mrb[0].mxu0 %v7997
    %v8138 = vpop.f32.mrb[0].mxu0
    %v8139 = vadd.f32 %v7962, %v8138
    %v8140 = vpop.f32.mrb[0].mxu0
    %8141 = vmatprep.mubr.f32.mxu0 0.0
    %8142 = vmatmul.mubr.f32.gmra.mrb[0].mxu0 %v8000
    %v8143 = vpop.f32.mrb[0].mxu0
    %v8144 = vadd.f32 %v7962, %v8143
    %v8145 = vpop.f32.mrb[0].mxu0
    %8146 = vmatprep.mubr.f32.mxu0 0.0
    %8147 = vmatmul.mubr.f32.gmra.mrb[0].mxu0 %v8003
    %v8148 = vpop.f32.mrb[0].mxu0
    %v8149 = vadd.f32 %v7962, %v8148
    %v8150 = vpop.f32.mrb[0].mxu0
    %8151 = vmatprep.mubr.f32.mxu0 0.0
    %8152 = vmatmul.mubr.f32.gmra.mrb[0].mxu0 %v8006
    %v8153 = vpop.f32.mrb[0].mxu0
    %v8154 = vadd.f32 %v7962, %v8153
    %v8155 = vpop.f32.mrb[0].mxu0
    %8156 = vmatprep.mubr.f32.mxu0 0.0
    %8157 = vmatmul.mubr.f32.gmra.mrb[0].mxu0 %v8009
    %v8158 = vpop.f32.mrb[0].mxu0
    %v8159 = vadd.f32 %v7962, %v8158
    %v8160 = vpop.f32.mrb[0].mxu0
    %8161 = vmatprep.mubr.f32.mxu0 0.0
    %8162 = vmatmul.mubr.f32.gmra.mrb[0].mxu0 %v8012
    %v8163 = vpop.f32.mrb[0].mxu0
    %v8164 = vadd.f32 %v7962, %v8163
    %v8165 = vpop.f32.mrb[0].mxu0
    %8166 = vmatprep.mubr.f32.mxu0 0.0
    %8167 = vmatmul.mubr.f32.gmra.mrb[0].mxu0 %v8015
    %v8168 = vpop.f32.mrb[0].mxu0
    %v8169 = vadd.f32 %v7962, %v8168
    %v8170 = vpop.f32.mrb[0].mxu0
    %8171 = vdwg.mxu0
    %v8172 = vmax.f32 %v8084, 0.0
    %v8173 = vmax.f32 %v8089, 0.0
    %v8174 = vmax.f32 %v8094, 0.0
    %v8175 = vmax.f32 %v8099, 0.0
    %v8176 = vmax.f32 %v8104, 0.0
    %v8177 = vmax.f32 %v8109, 0.0
    %v8178 = vmax.f32 %v8114, 0.0
    %v8179 = vmax.f32 %v8119, 0.0
    %v8180 = vmax.f32 %v8124, 0.0
    %v8181 = vmax.f32 %v8129, 0.0
    %v8182 = vmax.f32 %v8134, 0.0
    %v8183 = vmax.f32 %v8139, 0.0
    %v8184 = vmax.f32 %v8144, 0.0
    %v8185 = vmax.f32 %v8149, 0.0
    %v8186 = vmax.f32 %v8154, 0.0
    %v8187 = vmax.f32 %v8159, 0.0
    %v8188 = vmax.f32 %v8164, 0.0
    %v8189 = vmax.f32 %v8169, 0.0
    %v8190 = vld [vmem:[%s39] sm:$0xff]
    %v8191 = vld [vmem:[%s39 + $0x8] sm:$0xff]
    %v8192 = vld [vmem:[%s39 + $0x10] sm:$0xff]
    %v8193 = vld [vmem:[%s39 + $0x18] sm:$0xff]
    %v8194 = vld [vmem:[%s39 + $0x20] sm:$0xff]
    %v8195 = vld [vmem:[%s39 + $0x28] sm:$0xff]
    %v8196 = vld [vmem:[%s39 + $0x30] sm:$0xff]
    %v8197 = vld [vmem:[%s39 + $0x38] sm:$0xff]
    %v8198 = vld [vmem:[%s39 + $0x40] sm:$0xff]
    %v8199 = vld [vmem:[%s39 + $0x48] sm:$0xff]
    %v8200 = vld [vmem:[%s39 + $0x50] sm:$0xff]
    %v8201 = vld [vmem:[%s39 + $0x58] sm:$0xff]
    %v8202 = vld [vmem:[%s39 + $0x60] sm:$0xff]
    %v8203 = vld [vmem:[%s39 + $0x68] sm:$0xff]
    %v8204 = vld [vmem:[%s39 + $0x70] sm:$0xff]
    %v8205 = vld [vmem:[%s39 + $0x78] sm:$0xff]
    %v8206 = vld [vmem:[%s39 + $0x80] sm:$0xff]
    %v8207 = vld [vmem:[%s39 + $0x88] sm:$0xff]
    %v8208 = vld [vmem:[%s39 + $0x90] sm:$0xff]
    %v8209 = vld [vmem:[%s39 + $0x98] sm:$0xff]
    %v8210 = vld [vmem:[%s39 + $0xa0] sm:$0x3]
    %v8211 = vld [vmem:[%s39 + $0xa8] sm:$0x3]
    %vm8212 = vcmask 89088
    %v8214 = vsel %vm8212, %v8191, 0
    %v8217 = vsel %vm8212, %v8193, 0
    %v8220 = vsel %vm8212, %v8195, 0
    %v8223 = vsel %vm8212, %v8197, 0
    %v8226 = vsel %vm8212, %v8199, 0
    %v8229 = vsel %vm8212, %v8201, 0
    %v8232 = vsel %vm8212, %v8203, 0
    %v8235 = vsel %vm8212, %v8205, 0
    %v8238 = vsel %vm8212, %v8207, 0
    %v8241 = vsel %vm8212, %v8209, 0
    %v8244 = vsel %vm8212, %v8211, 0
    %v8247 = vsel %vm1203, %v8189, 0
    %8249 = vmatprep.subr.mxu0 0.0
    %8250 = vmatpush1.msra.mxu0 %v8172
    %8251 = vmatprep.subr.mxu0 0.0
    %8252 = vmatpush1.msra.mxu0 %v8173
    %8253 = vmatprep.subr.mxu0 0.0
    %8254 = vmatpush1.msra.mxu0 %v8174
    %8255 = vmatprep.subr.mxu0 0.0
    %8256 = vmatpush1.msra.mxu0 %v8175
    %8257 = vmatprep.subr.mxu0 0.0
    %8258 = vmatpush1.msra.mxu0 %v8176
    %8259 = vmatprep.subr.mxu0 0.0
    %8260 = vmatpush1.msra.mxu0 %v8177
    %8261 = vmatprep.subr.mxu0 0.0
    %8262 = vmatpush1.msra.mxu0 %v8178
    %8263 = vmatprep.subr.mxu0 0.0
    %8264 = vmatpush1.msra.mxu0 %v8179
    %8265 = vmatprep.subr.mxu0 0.0
    %8266 = vmatpush1.msra.mxu0 %v8180
    %8267 = vmatprep.subr.mxu0 0.0
    %8268 = vmatpush1.msra.mxu0 %v8181
    %8269 = vmatprep.subr.mxu0 0.0
    %8270 = vmatpush1.msra.mxu0 %v8182
    %8271 = vmatprep.subr.mxu0 0.0
    %8272 = vmatpush1.msra.mxu0 %v8183
    %8273 = vmatprep.subr.mxu0 0.0
    %8274 = vmatpush1.msra.mxu0 %v8184
    %8275 = vmatprep.subr.mxu0 0.0
    %8276 = vmatpush1.msra.mxu0 %v8185
    %8277 = vmatprep.subr.mxu0 0.0
    %8278 = vmatpush1.msra.mxu0 %v8186
    %8279 = vmatprep.subr.mxu0 0.0
    %8280 = vmatpush1.msra.mxu0 %v8187
    %8281 = vmatprep.subr.mxu0 0.0
    %8282 = vmatpush1.msra.mxu0 %v8188
    %8283 = vmatprep.subr.mxu0 0.0
    %8284 = vmatpush1.msra.mxu0 %v8247
    %8285 = vmatprep.subr.mxu0 0.0
    %8286 = vmatpush1.msra.mxu0 0.0
    %8287 = vmatprep.subr.mxu0 0.0
    %8288 = vmatpush1.msra.mxu0 0.0
    %8289 = vmatprep.subr.mxu0 0.0
    %8290 = vmatpush1.msra.mxu0 0.0
    %8291 = vmatprep.subr.mxu0 0.0
    %8292 = vmatpush1.msra.mxu0 0.0
    %8293 = vmatprep.subr.mxu0 0.0
    %8294 = vmatpush1.msra.mxu0 0.0
    %8295 = vmatprep.subr.mxu0 0.0
    %8296 = vmatpush1.msra.mxu0 0.0
    %8297 = vmatprep.subr.mxu0 0.0
    %8298 = vmatpush1.msra.mxu0 0.0
    %8299 = vmatprep.subr.mxu0 0.0
    %8300 = vmatpush1.msra.mxu0 0.0
    %8301 = vmatprep.subr.mxu0 0.0
    %8302 = vmatpush1.msra.mxu0 0.0
    %8303 = vmatprep.subr.mxu0 0.0
    %8304 = vmatpush1.msra.mxu0 0.0
    %8305 = vmatprep.subr.mxu0 0.0
    %8306 = vmatpush1.msra.mxu0 0.0
    %8307 = vmatprep.subr.mxu0 0.0
    %8308 = vmatpush1.msra.mxu0 0.0
    %8309 = vmatprep.subr.mxu0 0.0
    %8310 = vmatpush1.msra.mxu0 0.0
    %8311 = vmatprep.subr.mxu0 0.0
    %8312 = vmatpush1.msra.mxu0 0.0
    %8313 = vmatprep.mubr.f32.mxu0 %v8214
    %8314 = vmatmul.mubr.f32.gmra.mrb[0].mxu0 %v8190
    %v8315 = vpop.f32.mrb[0].mxu0
    %v8316 = vadd.f32 0.0, %v8315
    %v8317 = vpop.f32.mrb[0].mxu0
    %8318 = vmatprep.mubr.f32.mxu0 %v8217
    %8319 = vmatmul.mubr.f32.gmra.mrb[0].mxu0 %v8192
    %v8320 = vpop.f32.mrb[0].mxu0
    %v8321 = vadd.f32 0.0, %v8320
    %v8322 = vpop.f32.mrb[0].mxu0
    %8323 = vmatprep.mubr.f32.mxu0 %v8220
    %8324 = vmatmul.mubr.f32.gmra.mrb[0].mxu0 %v8194
    %v8325 = vpop.f32.mrb[0].mxu0
    %v8326 = vadd.f32 0.0, %v8325
    %v8327 = vpop.f32.mrb[0].mxu0
    %8328 = vmatprep.mubr.f32.mxu0 %v8223
    %8329 = vmatmul.mubr.f32.gmra.mrb[0].mxu0 %v8196
    %v8330 = vpop.f32.mrb[0].mxu0
    %v8331 = vadd.f32 0.0, %v8330
    %v8332 = vpop.f32.mrb[0].mxu0
    %8333 = vmatprep.mubr.f32.mxu0 %v8226
    %8334 = vmatmul.mubr.f32.gmra.mrb[0].mxu0 %v8198
    %v8335 = vpop.f32.mrb[0].mxu0
    %v8336 = vadd.f32 0.0, %v8335
    %v8337 = vpop.f32.mrb[0].mxu0
    %8338 = vmatprep.mubr.f32.mxu0 %v8229
    %8339 = vmatmul.mubr.f32.gmra.mrb[0].mxu0 %v8200
    %v8340 = vpop.f32.mrb[0].mxu0
    %v8341 = vadd.f32 0.0, %v8340
    %v8342 = vpop.f32.mrb[0].mxu0
    %8343 = vmatprep.mubr.f32.mxu0 %v8232
    %8344 = vmatmul.mubr.f32.gmra.mrb[0].mxu0 %v8202
    %v8345 = vpop.f32.mrb[0].mxu0
    %v8346 = vadd.f32 0.0, %v8345
    %v8347 = vpop.f32.mrb[0].mxu0
    %8348 = vmatprep.mubr.f32.mxu0 %v8235
    %8349 = vmatmul.mubr.f32.gmra.mrb[0].mxu0 %v8204
    %v8350 = vpop.f32.mrb[0].mxu0
    %v8351 = vadd.f32 0.0, %v8350
    %v8352 = vpop.f32.mrb[0].mxu0
    %8353 = vmatprep.mubr.f32.mxu0 %v8238
    %8354 = vmatmul.mubr.f32.gmra.mrb[0].mxu0 %v8206
    %v8355 = vpop.f32.mrb[0].mxu0
    %v8356 = vadd.f32 0.0, %v8355
    %v8357 = vpop.f32.mrb[0].mxu0
    %8358 = vmatprep.mubr.f32.mxu0 %v8241
    %8359 = vmatmul.mubr.f32.gmra.mrb[0].mxu0 %v8208
    %v8360 = vpop.f32.mrb[0].mxu0
    %v8361 = vadd.f32 0.0, %v8360
    %v8362 = vpop.f32.mrb[0].mxu0
    %8363 = vmatprep.mubr.f32.mxu0 %v8244
    %8364 = vmatmul.mubr.f32.gmra.mrb[0].mxu0 %v8210
    %v8365 = vpop.f32.mrb[0].mxu0
    %v8366 = vadd.f32 0.0, %v8365
    %v8367 = vpop.f32.mrb[0].mxu0
    %8368 = vdwg.mxu0
    %v8369 = vld [vmem:[#allocation7] sm:$0xff]
    %v8370 = vld [vmem:[#allocation7 + $0x8] sm:$0x1]
    %v8371 = vlaneseq
    %v8372 = vshrl.u32 %v8371, 7
    %v8373 = vsub.s32 0, %v8372
    %v8374 = vrot.slane %v8369, %v8373
    %v8375 = vmul.f32 %v8374, %v8316
    %v8376 = vmul.f32 %v8374, %v8321
    %v8377 = vmul.f32 %v8374, %v8326
    %v8378 = vmul.f32 %v8374, %v8331
    %v8379 = vmul.f32 %v8374, %v8336
    %v8380 = vmul.f32 %v8374, %v8341
    %v8381 = vmul.f32 %v8374, %v8346
    %v8382 = vmul.f32 %v8374, %v8351
    %v8383 = vmul.f32 %v8374, %v8356
    %v8384 = vmul.f32 %v8374, %v8361
    %v8385 = vadd.f32 %v8375, 0.0
    %v8386 = vadd.f32 %v8376, 0.0
    %v8387 = vadd.f32 %v8377, 0.0
    %v8388 = vadd.f32 %v8378, 0.0
    %v8389 = vadd.f32 %v8379, 0.0
    %v8390 = vadd.f32 %v8380, 0.0
    %v8391 = vadd.f32 %v8381, 0.0
    %v8392 = vadd.f32 %v8382, 0.0
    %v8393 = vadd.f32 %v8383, 0.0
    %v8394 = vadd.f32 %v8384, 0.0
    %v8395 = vlaneseq
    %v8396 = vshrl.u32 %v8395, 7
    %v8397 = vsub.s32 1, %v8396
    %v8398 = vrot.slane %v8369, %v8397
    %v8399 = vmul.f32 %v8398, %v8316
    %v8400 = vmul.f32 %v8398, %v8321
    %v8401 = vmul.f32 %v8398, %v8326
    %v8402 = vmul.f32 %v8398, %v8331
    %v8403 = vmul.f32 %v8398, %v8336
    %v8404 = vmul.f32 %v8398, %v8341
    %v8405 = vmul.f32 %v8398, %v8346
    %v8406 = vmul.f32 %v8398, %v8351
    %v8407 = vmul.f32 %v8398, %v8356
    %v8408 = vmul.f32 %v8398, %v8361
    %v8419 = vrot.slane %v8399, 1
    %v8420 = vrot.slane %v8400, 1
    %v8421 = vsel %vm389, %v8419, %v8420
    %v8422 = vrot.slane %v8401, 1
    %v8423 = vsel %vm389, %v8420, %v8422
    %v8424 = vrot.slane %v8402, 1
    %v8425 = vsel %vm389, %v8422, %v8424
    %v8426 = vrot.slane %v8403, 1
    %v8427 = vsel %vm389, %v8424, %v8426
    %v8428 = vrot.slane %v8404, 1
    %v8429 = vsel %vm389, %v8426, %v8428
    %v8430 = vrot.slane %v8405, 1
    %v8431 = vsel %vm389, %v8428, %v8430
    %v8432 = vrot.slane %v8406, 1
    %v8433 = vsel %vm389, %v8430, %v8432
    %v8434 = vrot.slane %v8407, 1
    %v8435 = vsel %vm389, %v8432, %v8434
    %v8436 = vrot.slane %v8408, 1
    %v8437 = vsel %vm389, %v8434, %v8436
    %v8448 = vadd.f32 %v8385, %v8421
    %v8449 = vadd.f32 %v8386, %v8423
    %v8450 = vadd.f32 %v8387, %v8425
    %v8451 = vadd.f32 %v8388, %v8427
    %v8452 = vadd.f32 %v8389, %v8429
    %v8453 = vadd.f32 %v8390, %v8431
    %v8454 = vadd.f32 %v8391, %v8433
    %v8455 = vadd.f32 %v8392, %v8435
    %v8456 = vadd.f32 %v8393, %v8437
    %v8457 = vadd.f32 %v8394, %v8436
    %v8458 = vlaneseq
    %v8459 = vshrl.u32 %v8458, 7
    %v8460 = vsub.s32 2, %v8459
    %v8461 = vrot.slane %v8369, %v8460
    %v8462 = vmul.f32 %v8461, %v8316
    %v8463 = vmul.f32 %v8461, %v8321
    %v8464 = vmul.f32 %v8461, %v8326
    %v8465 = vmul.f32 %v8461, %v8331
    %v8466 = vmul.f32 %v8461, %v8336
    %v8467 = vmul.f32 %v8461, %v8341
    %v8468 = vmul.f32 %v8461, %v8346
    %v8469 = vmul.f32 %v8461, %v8351
    %v8470 = vmul.f32 %v8461, %v8356
    %v8471 = vmul.f32 %v8461, %v8361
    %v8482 = vrot.slane %v8462, 2
    %v8483 = vrot.slane %v8463, 2
    %v8484 = vsel %vm591, %v8482, %v8483
    %v8485 = vrot.slane %v8464, 2
    %v8486 = vsel %vm591, %v8483, %v8485
    %v8487 = vrot.slane %v8465, 2
    %v8488 = vsel %vm591, %v8485, %v8487
    %v8489 = vrot.slane %v8466, 2
    %v8490 = vsel %vm591, %v8487, %v8489
    %v8491 = vrot.slane %v8467, 2
    %v8492 = vsel %vm591, %v8489, %v8491
    %v8493 = vrot.slane %v8468, 2
    %v8494 = vsel %vm591, %v8491, %v8493
    %v8495 = vrot.slane %v8469, 2
    %v8496 = vsel %vm591, %v8493, %v8495
    %v8497 = vrot.slane %v8470, 2
    %v8498 = vsel %vm591, %v8495, %v8497
    %v8499 = vrot.slane %v8471, 2
    %v8500 = vsel %vm591, %v8497, %v8499
    %v8511 = vadd.f32 %v8448, %v8484
    %v8512 = vadd.f32 %v8449, %v8486
    %v8513 = vadd.f32 %v8450, %v8488
    %v8514 = vadd.f32 %v8451, %v8490
    %v8515 = vadd.f32 %v8452, %v8492
    %v8516 = vadd.f32 %v8453, %v8494
    %v8517 = vadd.f32 %v8454, %v8496
    %v8518 = vadd.f32 %v8455, %v8498
    %v8519 = vadd.f32 %v8456, %v8500
    %v8520 = vadd.f32 %v8457, %v8499
    %v8521 = vlaneseq
    %v8522 = vshrl.u32 %v8521, 7
    %v8523 = vsub.s32 3, %v8522
    %v8524 = vrot.slane %v8369, %v8523
    %v8525 = vmul.f32 %v8524, %v8316
    %v8526 = vmul.f32 %v8524, %v8321
    %v8527 = vmul.f32 %v8524, %v8326
    %v8528 = vmul.f32 %v8524, %v8331
    %v8529 = vmul.f32 %v8524, %v8336
    %v8530 = vmul.f32 %v8524, %v8341
    %v8531 = vmul.f32 %v8524, %v8346
    %v8532 = vmul.f32 %v8524, %v8351
    %v8533 = vmul.f32 %v8524, %v8356
    %v8534 = vmul.f32 %v8524, %v8361
    %v8545 = vrot.slane %v8525, 3
    %v8546 = vrot.slane %v8526, 3
    %v8547 = vsel %vm793, %v8545, %v8546
    %v8548 = vrot.slane %v8527, 3
    %v8549 = vsel %vm793, %v8546, %v8548
    %v8550 = vrot.slane %v8528, 3
    %v8551 = vsel %vm793, %v8548, %v8550
    %v8552 = vrot.slane %v8529, 3
    %v8553 = vsel %vm793, %v8550, %v8552
    %v8554 = vrot.slane %v8530, 3
    %v8555 = vsel %vm793, %v8552, %v8554
    %v8556 = vrot.slane %v8531, 3
    %v8557 = vsel %vm793, %v8554, %v8556
    %v8558 = vrot.slane %v8532, 3
    %v8559 = vsel %vm793, %v8556, %v8558
    %v8560 = vrot.slane %v8533, 3
    %v8561 = vsel %vm793, %v8558, %v8560
    %v8562 = vrot.slane %v8534, 3
    %v8563 = vsel %vm793, %v8560, %v8562
    %v8574 = vadd.f32 %v8511, %v8547
    %v8575 = vadd.f32 %v8512, %v8549
    %v8576 = vadd.f32 %v8513, %v8551
    %v8577 = vadd.f32 %v8514, %v8553
    %v8578 = vadd.f32 %v8515, %v8555
    %v8579 = vadd.f32 %v8516, %v8557
    %v8580 = vadd.f32 %v8517, %v8559
    %v8581 = vadd.f32 %v8518, %v8561
    %v8582 = vadd.f32 %v8519, %v8563
    %v8583 = vadd.f32 %v8520, %v8562
    %v8584 = vlaneseq
    %v8585 = vshrl.u32 %v8584, 7
    %v8586 = vsub.s32 4, %v8585
    %v8587 = vrot.slane %v8369, %v8586
    %v8588 = vmul.f32 %v8587, %v8316
    %v8589 = vmul.f32 %v8587, %v8321
    %v8590 = vmul.f32 %v8587, %v8326
    %v8591 = vmul.f32 %v8587, %v8331
    %v8592 = vmul.f32 %v8587, %v8336
    %v8593 = vmul.f32 %v8587, %v8341
    %v8594 = vmul.f32 %v8587, %v8346
    %v8595 = vmul.f32 %v8587, %v8351
    %v8596 = vmul.f32 %v8587, %v8356
    %v8597 = vmul.f32 %v8587, %v8361
    %v8608 = vrot.slane %v8588, 4
    %v8609 = vrot.slane %v8589, 4
    %v8610 = vsel %vm997, %v8608, %v8609
    %v8611 = vrot.slane %v8590, 4
    %v8612 = vsel %vm997, %v8609, %v8611
    %v8613 = vrot.slane %v8591, 4
    %v8614 = vsel %vm997, %v8611, %v8613
    %v8615 = vrot.slane %v8592, 4
    %v8616 = vsel %vm997, %v8613, %v8615
    %v8617 = vrot.slane %v8593, 4
    %v8618 = vsel %vm997, %v8615, %v8617
    %v8619 = vrot.slane %v8594, 4
    %v8620 = vsel %vm997, %v8617, %v8619
    %v8621 = vrot.slane %v8595, 4
    %v8622 = vsel %vm997, %v8619, %v8621
    %v8623 = vrot.slane %v8596, 4
    %v8624 = vsel %vm997, %v8621, %v8623
    %v8625 = vrot.slane %v8597, 4
    %v8626 = vsel %vm997, %v8623, %v8625
    %v8637 = vadd.f32 %v8574, %v8610
    %v8638 = vadd.f32 %v8575, %v8612
    %v8639 = vadd.f32 %v8576, %v8614
    %v8640 = vadd.f32 %v8577, %v8616
    %v8641 = vadd.f32 %v8578, %v8618
    %v8642 = vadd.f32 %v8579, %v8620
    %v8643 = vadd.f32 %v8580, %v8622
    %v8644 = vadd.f32 %v8581, %v8624
    %v8645 = vadd.f32 %v8582, %v8626
    %v8646 = vadd.f32 %v8583, %v8625
    %v8647 = vlaneseq
    %v8648 = vshrl.u32 %v8647, 7
    %v8649 = vsub.s32 5, %v8648
    %v8650 = vrot.slane %v8369, %v8649
    %v8651 = vmul.f32 %v8650, %v8316
    %v8652 = vmul.f32 %v8650, %v8321
    %v8653 = vmul.f32 %v8650, %v8326
    %v8654 = vmul.f32 %v8650, %v8331
    %v8655 = vmul.f32 %v8650, %v8336
    %v8656 = vmul.f32 %v8650, %v8341
    %v8657 = vmul.f32 %v8650, %v8346
    %v8658 = vmul.f32 %v8650, %v8351
    %v8659 = vmul.f32 %v8650, %v8356
    %v8660 = vmul.f32 %v8650, %v8361
    %v8671 = vrot.slane %v8651, 5
    %v8672 = vrot.slane %v8652, 5
    %v8673 = vsel %vm1203, %v8671, %v8672
    %v8674 = vrot.slane %v8653, 5
    %v8675 = vsel %vm1203, %v8672, %v8674
    %v8676 = vrot.slane %v8654, 5
    %v8677 = vsel %vm1203, %v8674, %v8676
    %v8678 = vrot.slane %v8655, 5
    %v8679 = vsel %vm1203, %v8676, %v8678
    %v8680 = vrot.slane %v8656, 5
    %v8681 = vsel %vm1203, %v8678, %v8680
    %v8682 = vrot.slane %v8657, 5
    %v8683 = vsel %vm1203, %v8680, %v8682
    %v8684 = vrot.slane %v8658, 5
    %v8685 = vsel %vm1203, %v8682, %v8684
    %v8686 = vrot.slane %v8659, 5
    %v8687 = vsel %vm1203, %v8684, %v8686
    %v8688 = vrot.slane %v8660, 5
    %v8689 = vsel %vm1203, %v8686, %v8688
    %v8700 = vadd.f32 %v8637, %v8673
    %v8701 = vadd.f32 %v8638, %v8675
    %v8702 = vadd.f32 %v8639, %v8677
    %v8703 = vadd.f32 %v8640, %v8679
    %v8704 = vadd.f32 %v8641, %v8681
    %v8705 = vadd.f32 %v8642, %v8683
    %v8706 = vadd.f32 %v8643, %v8685
    %v8707 = vadd.f32 %v8644, %v8687
    %v8708 = vadd.f32 %v8645, %v8689
    %v8709 = vadd.f32 %v8646, %v8688
    %v8710 = vlaneseq
    %v8711 = vshrl.u32 %v8710, 7
    %v8712 = vsub.s32 6, %v8711
    %v8713 = vrot.slane %v8369, %v8712
    %v8714 = vmul.f32 %v8713, %v8316
    %v8715 = vmul.f32 %v8713, %v8321
    %v8716 = vmul.f32 %v8713, %v8326
    %v8717 = vmul.f32 %v8713, %v8331
    %v8718 = vmul.f32 %v8713, %v8336
    %v8719 = vmul.f32 %v8713, %v8341
    %v8720 = vmul.f32 %v8713, %v8346
    %v8721 = vmul.f32 %v8713, %v8351
    %v8722 = vmul.f32 %v8713, %v8356
    %v8723 = vmul.f32 %v8713, %v8361
    %v8724 = vmul.f32 %v8713, %v8366
    %v8736 = vrot.slane %v8714, 6
    %v8737 = vrot.slane %v8715, 6
    %v8738 = vsel %vm1409, %v8736, %v8737
    %v8739 = vrot.slane %v8716, 6
    %v8740 = vsel %vm1409, %v8737, %v8739
    %v8741 = vrot.slane %v8717, 6
    %v8742 = vsel %vm1409, %v8739, %v8741
    %v8743 = vrot.slane %v8718, 6
    %v8744 = vsel %vm1409, %v8741, %v8743
    %v8745 = vrot.slane %v8719, 6
    %v8746 = vsel %vm1409, %v8743, %v8745
    %v8747 = vrot.slane %v8720, 6
    %v8748 = vsel %vm1409, %v8745, %v8747
    %v8749 = vrot.slane %v8721, 6
    %v8750 = vsel %vm1409, %v8747, %v8749
    %v8751 = vrot.slane %v8722, 6
    %v8752 = vsel %vm1409, %v8749, %v8751
    %v8753 = vrot.slane %v8723, 6
    %v8754 = vsel %vm1409, %v8751, %v8753
    %v8755 = vrot.slane %v8724, 6
    %v8756 = vsel %vm1409, %v8753, %v8755
    %v8767 = vadd.f32 %v8700, %v8738
    %v8768 = vadd.f32 %v8701, %v8740
    %v8769 = vadd.f32 %v8702, %v8742
    %v8770 = vadd.f32 %v8703, %v8744
    %v8771 = vadd.f32 %v8704, %v8746
    %v8772 = vadd.f32 %v8705, %v8748
    %v8773 = vadd.f32 %v8706, %v8750
    %v8774 = vadd.f32 %v8707, %v8752
    %v8775 = vadd.f32 %v8708, %v8754
    %v8776 = vadd.f32 %v8709, %v8756
    %v8777 = vlaneseq
    %v8778 = vshrl.u32 %v8777, 7
    %v8779 = vsub.s32 7, %v8778
    %v8780 = vrot.slane %v8369, %v8779
    %v8781 = vmul.f32 %v8780, %v8316
    %v8782 = vmul.f32 %v8780, %v8321
    %v8783 = vmul.f32 %v8780, %v8326
    %v8784 = vmul.f32 %v8780, %v8331
    %v8785 = vmul.f32 %v8780, %v8336
    %v8786 = vmul.f32 %v8780, %v8341
    %v8787 = vmul.f32 %v8780, %v8346
    %v8788 = vmul.f32 %v8780, %v8351
    %v8789 = vmul.f32 %v8780, %v8356
    %v8790 = vmul.f32 %v8780, %v8361
    %v8791 = vmul.f32 %v8780, %v8366
    %v8803 = vrot.slane %v8781, 7
    %v8804 = vrot.slane %v8782, 7
    %v8805 = vsel %vm1615, %v8803, %v8804
    %v8806 = vrot.slane %v8783, 7
    %v8807 = vsel %vm1615, %v8804, %v8806
    %v8808 = vrot.slane %v8784, 7
    %v8809 = vsel %vm1615, %v8806, %v8808
    %v8810 = vrot.slane %v8785, 7
    %v8811 = vsel %vm1615, %v8808, %v8810
    %v8812 = vrot.slane %v8786, 7
    %v8813 = vsel %vm1615, %v8810, %v8812
    %v8814 = vrot.slane %v8787, 7
    %v8815 = vsel %vm1615, %v8812, %v8814
    %v8816 = vrot.slane %v8788, 7
    %v8817 = vsel %vm1615, %v8814, %v8816
    %v8818 = vrot.slane %v8789, 7
    %v8819 = vsel %vm1615, %v8816, %v8818
    %v8820 = vrot.slane %v8790, 7
    %v8821 = vsel %vm1615, %v8818, %v8820
    %v8822 = vrot.slane %v8791, 7
    %v8823 = vsel %vm1615, %v8820, %v8822
    %v8834 = vadd.f32 %v8767, %v8805
    %v8835 = vadd.f32 %v8768, %v8807
    %v8836 = vadd.f32 %v8769, %v8809
    %v8837 = vadd.f32 %v8770, %v8811
    %v8838 = vadd.f32 %v8771, %v8813
    %v8839 = vadd.f32 %v8772, %v8815
    %v8840 = vadd.f32 %v8773, %v8817
    %v8841 = vadd.f32 %v8774, %v8819
    %v8842 = vadd.f32 %v8775, %v8821
    %v8843 = vadd.f32 %v8776, %v8823
    %v8844 = vlaneseq
    %v8845 = vshrl.u32 %v8844, 7
    %v8846 = vsub.s32 0, %v8845
    %v8847 = vrot.slane %v8370, %v8846
    %v8848 = vadd.f32 %v8834, %v8847
    %v8849 = vadd.f32 %v8835, %v8847
    %v8850 = vadd.f32 %v8836, %v8847
    %v8851 = vadd.f32 %v8837, %v8847
    %v8852 = vadd.f32 %v8838, %v8847
    %v8853 = vadd.f32 %v8839, %v8847
    %v8854 = vadd.f32 %v8840, %v8847
    %v8855 = vadd.f32 %v8841, %v8847
    %v8856 = vadd.f32 %v8842, %v8847
    %v8857 = vadd.f32 %v8843, %v8847
    %v8858 = vld [vmem:[%s43] sm:$0xff]
    %v8859 = vld [vmem:[%s43 + $0x8] sm:$0xff]
    %v8860 = vld [vmem:[%s43 + $0x10] sm:$0xff]
    %v8861 = vld [vmem:[%s43 + $0x18] sm:$0xff]
    %v8862 = vld [vmem:[%s43 + $0x20] sm:$0xff]
    %v8863 = vld [vmem:[%s43 + $0x28] sm:$0xff]
    %v8864 = vld [vmem:[%s43 + $0x30] sm:$0xff]
    %v8865 = vld [vmem:[%s43 + $0x38] sm:$0xff]
    %v8866 = vld [vmem:[%s43 + $0x40] sm:$0x1]
    %v8867 = vlaneseq
    %v8868 = vshrl.u32 %v8867, 7
    %v8869 = vsub.s32 0, %v8868
    %v8870 = vrot.slane %v8866, %v8869
    %v8872 = vsel %vm3975, %v8848, 0
    %v8875 = vsel %vm3975, %v8849, 0
    %v8878 = vsel %vm3975, %v8850, 0
    %v8881 = vsel %vm3975, %v8851, 0
    %v8884 = vsel %vm3975, %v8852, 0
    %v8887 = vsel %vm3975, %v8853, 0
    %v8890 = vsel %vm3975, %v8854, 0
    %v8893 = vsel %vm3975, %v8855, 0
    %v8896 = vsel %vm3975, %v8856, 0
    %v8899 = vsel %vm3975, %v8857, 0
    %8901 = vmatprep.subr.mxu0 0.0
    %8902 = vmatpush1.msra.mxu0 %v8858
    %8903 = vmatprep.subr.mxu0 0.0
    %8904 = vmatpush1.msra.mxu0 %v8859
    %8905 = vmatprep.subr.mxu0 0.0
    %8906 = vmatpush1.msra.mxu0 %v8860
    %8907 = vmatprep.subr.mxu0 0.0
    %8908 = vmatpush1.msra.mxu0 %v8861
    %8909 = vmatprep.subr.mxu0 0.0
    %8910 = vmatpush1.msra.mxu0 %v8862
    %8911 = vmatprep.subr.mxu0 0.0
    %8912 = vmatpush1.msra.mxu0 %v8863
    %8913 = vmatprep.subr.mxu0 0.0
    %8914 = vmatpush1.msra.mxu0 %v8864
    %8915 = vmatprep.subr.mxu0 0.0
    %8916 = vmatpush1.msra.mxu0 %v8865
    %8917 = vmatprep.subr.mxu0 0.0
    %8918 = vmatpush1.msra.mxu0 0.0
    %8919 = vmatprep.subr.mxu0 0.0
    %8920 = vmatpush1.msra.mxu0 0.0
    %8921 = vmatprep.subr.mxu0 0.0
    %8922 = vmatpush1.msra.mxu0 0.0
    %8923 = vmatprep.subr.mxu0 0.0
    %8924 = vmatpush1.msra.mxu0 0.0
    %8925 = vmatprep.subr.mxu0 0.0
    %8926 = vmatpush1.msra.mxu0 0.0
    %8927 = vmatprep.subr.mxu0 0.0
    %8928 = vmatpush1.msra.mxu0 0.0
    %8929 = vmatprep.subr.mxu0 0.0
    %8930 = vmatpush1.msra.mxu0 0.0
    %8931 = vmatprep.subr.mxu0 0.0
    %8932 = vmatpush1.msra.mxu0 0.0
    %8933 = vmatprep.subr.mxu0 0.0
    %8934 = vmatpush1.msra.mxu0 0.0
    %8935 = vmatprep.subr.mxu0 0.0
    %8936 = vmatpush1.msra.mxu0 0.0
    %8937 = vmatprep.subr.mxu0 0.0
    %8938 = vmatpush1.msra.mxu0 0.0
    %8939 = vmatprep.subr.mxu0 0.0
    %8940 = vmatpush1.msra.mxu0 0.0
    %8941 = vmatprep.subr.mxu0 0.0
    %8942 = vmatpush1.msra.mxu0 0.0
    %8943 = vmatprep.subr.mxu0 0.0
    %8944 = vmatpush1.msra.mxu0 0.0
    %8945 = vmatprep.subr.mxu0 0.0
    %8946 = vmatpush1.msra.mxu0 0.0
    %8947 = vmatprep.subr.mxu0 0.0
    %8948 = vmatpush1.msra.mxu0 0.0
    %8949 = vmatprep.subr.mxu0 0.0
    %8950 = vmatpush1.msra.mxu0 0.0
    %8951 = vmatprep.subr.mxu0 0.0
    %8952 = vmatpush1.msra.mxu0 0.0
    %8953 = vmatprep.subr.mxu0 0.0
    %8954 = vmatpush1.msra.mxu0 0.0
    %8955 = vmatprep.subr.mxu0 0.0
    %8956 = vmatpush1.msra.mxu0 0.0
    %8957 = vmatprep.subr.mxu0 0.0
    %8958 = vmatpush1.msra.mxu0 0.0
    %8959 = vmatprep.subr.mxu0 0.0
    %8960 = vmatpush1.msra.mxu0 0.0
    %8961 = vmatprep.subr.mxu0 0.0
    %8962 = vmatpush1.msra.mxu0 0.0
    %8963 = vmatprep.subr.mxu0 0.0
    %8964 = vmatpush1.msra.mxu0 0.0
    %8965 = vmatprep.mubr.f32.mxu0 0.0
    %8966 = vmatmul.mubr.f32.gmra.mrb[0].mxu0 %v8872
    %v8967 = vpop.f32.mrb[0].mxu0
    %v8968 = vadd.f32 %v8870, %v8967
    %v8969 = vpop.f32.mrb[0].mxu0
    %8970 = vmatprep.mubr.f32.mxu0 0.0
    %8971 = vmatmul.mubr.f32.gmra.mrb[0].mxu0 %v8875
    %v8972 = vpop.f32.mrb[0].mxu0
    %v8973 = vadd.f32 %v8870, %v8972
    %v8974 = vpop.f32.mrb[0].mxu0
    %8975 = vmatprep.mubr.f32.mxu0 0.0
    %8976 = vmatmul.mubr.f32.gmra.mrb[0].mxu0 %v8878
    %v8977 = vpop.f32.mrb[0].mxu0
    %v8978 = vadd.f32 %v8870, %v8977
    %v8979 = vpop.f32.mrb[0].mxu0
    %8980 = vmatprep.mubr.f32.mxu0 0.0
    %8981 = vmatmul.mubr.f32.gmra.mrb[0].mxu0 %v8881
    %v8982 = vpop.f32.mrb[0].mxu0
    %v8983 = vadd.f32 %v8870, %v8982
    %v8984 = vpop.f32.mrb[0].mxu0
    %8985 = vmatprep.mubr.f32.mxu0 0.0
    %8986 = vmatmul.mubr.f32.gmra.mrb[0].mxu0 %v8884
    %v8987 = vpop.f32.mrb[0].mxu0
    %v8988 = vadd.f32 %v8870, %v8987
    %v8989 = vpop.f32.mrb[0].mxu0
    %8990 = vmatprep.mubr.f32.mxu0 0.0
    %8991 = vmatmul.mubr.f32.gmra.mrb[0].mxu0 %v8887
    %v8992 = vpop.f32.mrb[0].mxu0
    %v8993 = vadd.f32 %v8870, %v8992
    %v8994 = vpop.f32.mrb[0].mxu0
    %8995 = vmatprep.mubr.f32.mxu0 0.0
    %8996 = vmatmul.mubr.f32.gmra.mrb[0].mxu0 %v8890
    %v8997 = vpop.f32.mrb[0].mxu0
    %v8998 = vadd.f32 %v8870, %v8997
    %v8999 = vpop.f32.mrb[0].mxu0
    %9000 = vmatprep.mubr.f32.mxu0 0.0
    %9001 = vmatmul.mubr.f32.gmra.mrb[0].mxu0 %v8893
    %v9002 = vpop.f32.mrb[0].mxu0
    %v9003 = vadd.f32 %v8870, %v9002
    %v9004 = vpop.f32.mrb[0].mxu0
    %9005 = vmatprep.mubr.f32.mxu0 0.0
    %9006 = vmatmul.mubr.f32.gmra.mrb[0].mxu0 %v8896
    %v9007 = vpop.f32.mrb[0].mxu0
    %v9008 = vadd.f32 %v8870, %v9007
    %v9009 = vpop.f32.mrb[0].mxu0
    %9010 = vmatprep.mubr.f32.mxu0 0.0
    %9011 = vmatmul.mubr.f32.gmra.mrb[0].mxu0 %v8899
    %v9012 = vpop.f32.mrb[0].mxu0
    %v9013 = vadd.f32 %v8870, %v9012
    %v9014 = vpop.f32.mrb[0].mxu0
    %9015 = vdwg.mxu0
    %v9016 = vmax.f32 %v8968, 0.0
    %v9017 = vmax.f32 %v8973, 0.0
    %v9018 = vmax.f32 %v8978, 0.0
    %v9019 = vmax.f32 %v8983, 0.0
    %v9020 = vmax.f32 %v8988, 0.0
    %v9021 = vmax.f32 %v8993, 0.0
    %v9022 = vmax.f32 %v8998, 0.0
    %v9023 = vmax.f32 %v9003, 0.0
    %v9024 = vmax.f32 %v9008, 0.0
    %v9025 = vmax.f32 %v9013, 0.0
    %v9026 = vld [vmem:[%s45] sm:$0xff]
    %v9027 = vld [vmem:[%s45 + $0x8] sm:$0xff]
    %v9028 = vld [vmem:[%s45 + $0x10] sm:$0xff]
    %v9029 = vld [vmem:[%s45 + $0x18] sm:$0xff]
    %v9030 = vld [vmem:[%s45 + $0x20] sm:$0x3]
    %vm9031 = vcmask 613376
    %v9033 = vsel %vm9031, %v9026, 0
    %v9036 = vsel %vm9031, %v9027, 0
    %v9039 = vsel %vm9031, %v9028, 0
    %v9042 = vsel %vm9031, %v9029, 0
    %v9045 = vsel %vm9031, %v9030, 0
    %v9048 = vsel %vm1203, %v9025, 0
    %9050 = vmatprep.subr.mxu0 0.0
    %9051 = vmatpush1.msra.mxu0 %v9016
    %9052 = vmatprep.subr.mxu0 0.0
    %9053 = vmatpush1.msra.mxu0 %v9017
    %9054 = vmatprep.subr.mxu0 0.0
    %9055 = vmatpush1.msra.mxu0 %v9018
    %9056 = vmatprep.subr.mxu0 0.0
    %9057 = vmatpush1.msra.mxu0 %v9019
    %9058 = vmatprep.subr.mxu0 0.0
    %9059 = vmatpush1.msra.mxu0 %v9020
    %9060 = vmatprep.subr.mxu0 0.0
    %9061 = vmatpush1.msra.mxu0 %v9021
    %9062 = vmatprep.subr.mxu0 0.0
    %9063 = vmatpush1.msra.mxu0 %v9022
    %9064 = vmatprep.subr.mxu0 0.0
    %9065 = vmatpush1.msra.mxu0 %v9023
    %9066 = vmatprep.subr.mxu0 0.0
    %9067 = vmatpush1.msra.mxu0 %v9024
    %9068 = vmatprep.subr.mxu0 0.0
    %9069 = vmatpush1.msra.mxu0 %v9048
    %9070 = vmatprep.subr.mxu0 0.0
    %9071 = vmatpush1.msra.mxu0 0.0
    %9072 = vmatprep.subr.mxu0 0.0
    %9073 = vmatpush1.msra.mxu0 0.0
    %9074 = vmatprep.subr.mxu0 0.0
    %9075 = vmatpush1.msra.mxu0 0.0
    %9076 = vmatprep.subr.mxu0 0.0
    %9077 = vmatpush1.msra.mxu0 0.0
    %9078 = vmatprep.subr.mxu0 0.0
    %9079 = vmatpush1.msra.mxu0 0.0
    %9080 = vmatprep.subr.mxu0 0.0
    %9081 = vmatpush1.msra.mxu0 0.0
    %9082 = vmatprep.subr.mxu0 0.0
    %9083 = vmatpush1.msra.mxu0 0.0
    %9084 = vmatprep.subr.mxu0 0.0
    %9085 = vmatpush1.msra.mxu0 0.0
    %9086 = vmatprep.subr.mxu0 0.0
    %9087 = vmatpush1.msra.mxu0 0.0
    %9088 = vmatprep.subr.mxu0 0.0
    %9089 = vmatpush1.msra.mxu0 0.0
    %9090 = vmatprep.subr.mxu0 0.0
    %9091 = vmatpush1.msra.mxu0 0.0
    %9092 = vmatprep.subr.mxu0 0.0
    %9093 = vmatpush1.msra.mxu0 0.0
    %9094 = vmatprep.subr.mxu0 0.0
    %9095 = vmatpush1.msra.mxu0 0.0
    %9096 = vmatprep.subr.mxu0 0.0
    %9097 = vmatpush1.msra.mxu0 0.0
    %9098 = vmatprep.subr.mxu0 0.0
    %9099 = vmatpush1.msra.mxu0 0.0
    %9100 = vmatprep.subr.mxu0 0.0
    %9101 = vmatpush1.msra.mxu0 0.0
    %9102 = vmatprep.subr.mxu0 0.0
    %9103 = vmatpush1.msra.mxu0 0.0
    %9104 = vmatprep.subr.mxu0 0.0
    %9105 = vmatpush1.msra.mxu0 0.0
    %9106 = vmatprep.subr.mxu0 0.0
    %9107 = vmatpush1.msra.mxu0 0.0
    %9108 = vmatprep.subr.mxu0 0.0
    %9109 = vmatpush1.msra.mxu0 0.0
    %9110 = vmatprep.subr.mxu0 0.0
    %9111 = vmatpush1.msra.mxu0 0.0
    %9112 = vmatprep.subr.mxu0 0.0
    %9113 = vmatpush1.msra.mxu0 0.0
    %9114 = vmatprep.mubr.f32.mxu0 0.0
    %9115 = vmatmul.mubr.f32.gmra.mrb[0].mxu0 %v9033
    %v9116 = vpop.f32.mrb[0].mxu0
    %v9117 = vadd.f32 0.0, %v9116
    %v9118 = vpop.f32.mrb[0].mxu0
    %9119 = vmatprep.mubr.f32.mxu0 0.0
    %9120 = vmatmul.mubr.f32.gmra.mrb[0].mxu0 %v9036
    %v9121 = vpop.f32.mrb[0].mxu0
    %v9122 = vadd.f32 0.0, %v9121
    %v9123 = vpop.f32.mrb[0].mxu0
    %9124 = vmatprep.mubr.f32.mxu0 0.0
    %9125 = vmatmul.mubr.f32.gmra.mrb[0].mxu0 %v9039
    %v9126 = vpop.f32.mrb[0].mxu0
    %v9127 = vadd.f32 0.0, %v9126
    %v9128 = vpop.f32.mrb[0].mxu0
    %9129 = vmatprep.mubr.f32.mxu0 0.0
    %9130 = vmatmul.mubr.f32.gmra.mrb[0].mxu0 %v9042
    %v9131 = vpop.f32.mrb[0].mxu0
    %v9132 = vadd.f32 0.0, %v9131
    %v9133 = vpop.f32.mrb[0].mxu0
    %9134 = vmatprep.mubr.f32.mxu0 0.0
    %9135 = vmatmul.mubr.f32.gmra.mrb[0].mxu0 %v9045
    %v9136 = vpop.f32.mrb[0].mxu0
    %v9137 = vadd.f32 0.0, %v9136
    %v9138 = vpop.f32.mrb[0].mxu0
    %9139 = vdwg.mxu0
    %v9140 = vld [vmem:[#allocation8] sm:$0xff]
    %v9141 = vld [vmem:[#allocation8 + $0x8] sm:$0x1]
    %v9142 = vlaneseq
    %v9143 = vshrl.u32 %v9142, 7
    %v9144 = vsub.s32 0, %v9143
    %v9145 = vrot.slane %v9140, %v9144
    %v9146 = vmul.f32 %v9145, %v9117
    %v9147 = vmul.f32 %v9145, %v9122
    %v9148 = vmul.f32 %v9145, %v9127
    %v9149 = vmul.f32 %v9145, %v9132
    %v9150 = vadd.f32 %v9146, 0.0
    %v9151 = vadd.f32 %v9147, 0.0
    %v9152 = vadd.f32 %v9148, 0.0
    %v9153 = vadd.f32 %v9149, 0.0
    %v9154 = vlaneseq
    %v9155 = vshrl.u32 %v9154, 7
    %v9156 = vsub.s32 1, %v9155
    %v9157 = vrot.slane %v9140, %v9156
    %v9158 = vmul.f32 %v9157, %v9117
    %v9159 = vmul.f32 %v9157, %v9122
    %v9160 = vmul.f32 %v9157, %v9127
    %v9161 = vmul.f32 %v9157, %v9132
    %v9166 = vrot.slane %v9158, 1
    %v9167 = vrot.slane %v9159, 1
    %v9168 = vsel %vm389, %v9166, %v9167
    %v9169 = vrot.slane %v9160, 1
    %v9170 = vsel %vm389, %v9167, %v9169
    %v9171 = vrot.slane %v9161, 1
    %v9172 = vsel %vm389, %v9169, %v9171
    %v9177 = vadd.f32 %v9150, %v9168
    %v9178 = vadd.f32 %v9151, %v9170
    %v9179 = vadd.f32 %v9152, %v9172
    %v9180 = vadd.f32 %v9153, %v9171
    %v9181 = vlaneseq
    %v9182 = vshrl.u32 %v9181, 7
    %v9183 = vsub.s32 2, %v9182
    %v9184 = vrot.slane %v9140, %v9183
    %v9185 = vmul.f32 %v9184, %v9117
    %v9186 = vmul.f32 %v9184, %v9122
    %v9187 = vmul.f32 %v9184, %v9127
    %v9188 = vmul.f32 %v9184, %v9132
    %v9193 = vrot.slane %v9185, 2
    %v9194 = vrot.slane %v9186, 2
    %v9195 = vsel %vm591, %v9193, %v9194
    %v9196 = vrot.slane %v9187, 2
    %v9197 = vsel %vm591, %v9194, %v9196
    %v9198 = vrot.slane %v9188, 2
    %v9199 = vsel %vm591, %v9196, %v9198
    %v9204 = vadd.f32 %v9177, %v9195
    %v9205 = vadd.f32 %v9178, %v9197
    %v9206 = vadd.f32 %v9179, %v9199
    %v9207 = vadd.f32 %v9180, %v9198
    %v9208 = vlaneseq
    %v9209 = vshrl.u32 %v9208, 7
    %v9210 = vsub.s32 3, %v9209
    %v9211 = vrot.slane %v9140, %v9210
    %v9212 = vmul.f32 %v9211, %v9117
    %v9213 = vmul.f32 %v9211, %v9122
    %v9214 = vmul.f32 %v9211, %v9127
    %v9215 = vmul.f32 %v9211, %v9132
    %v9220 = vrot.slane %v9212, 3
    %v9221 = vrot.slane %v9213, 3
    %v9222 = vsel %vm793, %v9220, %v9221
    %v9223 = vrot.slane %v9214, 3
    %v9224 = vsel %vm793, %v9221, %v9223
    %v9225 = vrot.slane %v9215, 3
    %v9226 = vsel %vm793, %v9223, %v9225
    %v9231 = vadd.f32 %v9204, %v9222
    %v9232 = vadd.f32 %v9205, %v9224
    %v9233 = vadd.f32 %v9206, %v9226
    %v9234 = vadd.f32 %v9207, %v9225
    %v9235 = vlaneseq
    %v9236 = vshrl.u32 %v9235, 7
    %v9237 = vsub.s32 4, %v9236
    %v9238 = vrot.slane %v9140, %v9237
    %v9239 = vmul.f32 %v9238, %v9117
    %v9240 = vmul.f32 %v9238, %v9122
    %v9241 = vmul.f32 %v9238, %v9127
    %v9242 = vmul.f32 %v9238, %v9132
    %v9247 = vrot.slane %v9239, 4
    %v9248 = vrot.slane %v9240, 4
    %v9249 = vsel %vm997, %v9247, %v9248
    %v9250 = vrot.slane %v9241, 4
    %v9251 = vsel %vm997, %v9248, %v9250
    %v9252 = vrot.slane %v9242, 4
    %v9253 = vsel %vm997, %v9250, %v9252
    %v9258 = vadd.f32 %v9231, %v9249
    %v9259 = vadd.f32 %v9232, %v9251
    %v9260 = vadd.f32 %v9233, %v9253
    %v9261 = vadd.f32 %v9234, %v9252
    %v9262 = vlaneseq
    %v9263 = vshrl.u32 %v9262, 7
    %v9264 = vsub.s32 5, %v9263
    %v9265 = vrot.slane %v9140, %v9264
    %v9266 = vmul.f32 %v9265, %v9117
    %v9267 = vmul.f32 %v9265, %v9122
    %v9268 = vmul.f32 %v9265, %v9127
    %v9269 = vmul.f32 %v9265, %v9132
    %v9274 = vrot.slane %v9266, 5
    %v9275 = vrot.slane %v9267, 5
    %v9276 = vsel %vm1203, %v9274, %v9275
    %v9277 = vrot.slane %v9268, 5
    %v9278 = vsel %vm1203, %v9275, %v9277
    %v9279 = vrot.slane %v9269, 5
    %v9280 = vsel %vm1203, %v9277, %v9279
    %v9285 = vadd.f32 %v9258, %v9276
    %v9286 = vadd.f32 %v9259, %v9278
    %v9287 = vadd.f32 %v9260, %v9280
    %v9288 = vadd.f32 %v9261, %v9279
    %v9289 = vlaneseq
    %v9290 = vshrl.u32 %v9289, 7
    %v9291 = vsub.s32 6, %v9290
    %v9292 = vrot.slane %v9140, %v9291
    %v9293 = vmul.f32 %v9292, %v9117
    %v9294 = vmul.f32 %v9292, %v9122
    %v9295 = vmul.f32 %v9292, %v9127
    %v9296 = vmul.f32 %v9292, %v9132
    %v9297 = vmul.f32 %v9292, %v9137
    %v9303 = vrot.slane %v9293, 6
    %v9304 = vrot.slane %v9294, 6
    %v9305 = vsel %vm1409, %v9303, %v9304
    %v9306 = vrot.slane %v9295, 6
    %v9307 = vsel %vm1409, %v9304, %v9306
    %v9308 = vrot.slane %v9296, 6
    %v9309 = vsel %vm1409, %v9306, %v9308
    %v9310 = vrot.slane %v9297, 6
    %v9311 = vsel %vm1409, %v9308, %v9310
    %v9316 = vadd.f32 %v9285, %v9305
    %v9317 = vadd.f32 %v9286, %v9307
    %v9318 = vadd.f32 %v9287, %v9309
    %v9319 = vadd.f32 %v9288, %v9311
    %v9320 = vlaneseq
    %v9321 = vshrl.u32 %v9320, 7
    %v9322 = vsub.s32 7, %v9321
    %v9323 = vrot.slane %v9140, %v9322
    %v9324 = vmul.f32 %v9323, %v9117
    %v9325 = vmul.f32 %v9323, %v9122
    %v9326 = vmul.f32 %v9323, %v9127
    %v9327 = vmul.f32 %v9323, %v9132
    %v9328 = vmul.f32 %v9323, %v9137
    %v9334 = vrot.slane %v9324, 7
    %v9335 = vrot.slane %v9325, 7
    %v9336 = vsel %vm1615, %v9334, %v9335
    %v9337 = vrot.slane %v9326, 7
    %v9338 = vsel %vm1615, %v9335, %v9337
    %v9339 = vrot.slane %v9327, 7
    %v9340 = vsel %vm1615, %v9337, %v9339
    %v9341 = vrot.slane %v9328, 7
    %v9342 = vsel %vm1615, %v9339, %v9341
    %v9347 = vadd.f32 %v9316, %v9336
    %v9348 = vadd.f32 %v9317, %v9338
    %v9349 = vadd.f32 %v9318, %v9340
    %v9350 = vadd.f32 %v9319, %v9342
    %v9351 = vlaneseq
    %v9352 = vshrl.u32 %v9351, 7
    %v9353 = vsub.s32 0, %v9352
    %v9354 = vrot.slane %v9141, %v9353
    %v9355 = vadd.f32 %v9347, %v9354
    %v9356 = vadd.f32 %v9348, %v9354
    %v9357 = vadd.f32 %v9349, %v9354
    %v9358 = vadd.f32 %v9350, %v9354
    %v9359 = vld [vmem:[%s49] sm:$0xff]
    %v9360 = vld [vmem:[%s49 + $0x8] sm:$0xff]
    %v9361 = vld [vmem:[%s49 + $0x10] sm:$0xff]
    %v9362 = vld [vmem:[%s49 + $0x18] sm:$0xff]
    %v9363 = vld [vmem:[%s49 + $0x20] sm:$0xff]
    %v9364 = vld [vmem:[%s49 + $0x28] sm:$0xff]
    %v9365 = vld [vmem:[%s49 + $0x30] sm:$0xff]
    %v9366 = vld [vmem:[%s49 + $0x38] sm:$0xff]
    %v9367 = vld [vmem:[%s49 + $0x40] sm:$0xff]
    %v9368 = vld [vmem:[%s49 + $0x48] sm:$0xff]
    %v9369 = vld [vmem:[%s49 + $0x50] sm:$0xff]
    %v9370 = vld [vmem:[%s49 + $0x58] sm:$0xff]
    %v9371 = vld [vmem:[%s49 + $0x60] sm:$0xff]
    %v9372 = vld [vmem:[%s49 + $0x68] sm:$0xff]
    %v9373 = vld [vmem:[%s49 + $0x70] sm:$0xff]
    %v9374 = vld [vmem:[%s49 + $0x78] sm:$0xff]
    %v9375 = vld [vmem:[%s49 + $0x80] sm:$0x1]
    %v9376 = vlaneseq
    %v9377 = vshrl.u32 %v9376, 7
    %v9378 = vsub.s32 0, %v9377
    %v9379 = vrot.slane %v9375, %v9378
    %9380 = vmatprep.subr.mxu0 0.0
    %9381 = vmatpush1.msra.mxu0 %v9359
    %9382 = vmatprep.subr.mxu0 0.0
    %9383 = vmatpush1.msra.mxu0 %v9360
    %9384 = vmatprep.subr.mxu0 0.0
    %9385 = vmatpush1.msra.mxu0 %v9361
    %9386 = vmatprep.subr.mxu0 0.0
    %9387 = vmatpush1.msra.mxu0 %v9362
    %9388 = vmatprep.subr.mxu0 0.0
    %9389 = vmatpush1.msra.mxu0 %v9363
    %9390 = vmatprep.subr.mxu0 0.0
    %9391 = vmatpush1.msra.mxu0 %v9364
    %9392 = vmatprep.subr.mxu0 0.0
    %9393 = vmatpush1.msra.mxu0 %v9365
    %9394 = vmatprep.subr.mxu0 0.0
    %9395 = vmatpush1.msra.mxu0 %v9366
    %9396 = vmatprep.subr.mxu0 0.0
    %9397 = vmatpush1.msra.mxu0 %v9367
    %9398 = vmatprep.subr.mxu0 0.0
    %9399 = vmatpush1.msra.mxu0 %v9368
    %9400 = vmatprep.subr.mxu0 0.0
    %9401 = vmatpush1.msra.mxu0 %v9369
    %9402 = vmatprep.subr.mxu0 0.0
    %9403 = vmatpush1.msra.mxu0 %v9370
    %9404 = vmatprep.subr.mxu0 0.0
    %9405 = vmatpush1.msra.mxu0 %v9371
    %9406 = vmatprep.subr.mxu0 0.0
    %9407 = vmatpush1.msra.mxu0 %v9372
    %9408 = vmatprep.subr.mxu0 0.0
    %9409 = vmatpush1.msra.mxu0 %v9373
    %9410 = vmatprep.subr.mxu0 0.0
    %9411 = vmatpush1.msra.mxu0 %v9374
    %9412 = vmatprep.subr.mxu0 0.0
    %9413 = vmatpush1.msra.mxu0 0.0
    %9414 = vmatprep.subr.mxu0 0.0
    %9415 = vmatpush1.msra.mxu0 0.0
    %9416 = vmatprep.subr.mxu0 0.0
    %9417 = vmatpush1.msra.mxu0 0.0
    %9418 = vmatprep.subr.mxu0 0.0
    %9419 = vmatpush1.msra.mxu0 0.0
    %9420 = vmatprep.subr.mxu0 0.0
    %9421 = vmatpush1.msra.mxu0 0.0
    %9422 = vmatprep.subr.mxu0 0.0
    %9423 = vmatpush1.msra.mxu0 0.0
    %9424 = vmatprep.subr.mxu0 0.0
    %9425 = vmatpush1.msra.mxu0 0.0
    %9426 = vmatprep.subr.mxu0 0.0
    %9427 = vmatpush1.msra.mxu0 0.0
    %9428 = vmatprep.subr.mxu0 0.0
    %9429 = vmatpush1.msra.mxu0 0.0
    %9430 = vmatprep.subr.mxu0 0.0
    %9431 = vmatpush1.msra.mxu0 0.0
    %9432 = vmatprep.subr.mxu0 0.0
    %9433 = vmatpush1.msra.mxu0 0.0
    %9434 = vmatprep.subr.mxu0 0.0
    %9435 = vmatpush1.msra.mxu0 0.0
    %9436 = vmatprep.subr.mxu0 0.0
    %9437 = vmatpush1.msra.mxu0 0.0
    %9438 = vmatprep.subr.mxu0 0.0
    %9439 = vmatpush1.msra.mxu0 0.0
    %9440 = vmatprep.subr.mxu0 0.0
    %9441 = vmatpush1.msra.mxu0 0.0
    %9442 = vmatprep.subr.mxu0 0.0
    %9443 = vmatpush1.msra.mxu0 0.0
    %9444 = vmatprep.mubr.f32.mxu0 0.0
    %9445 = vmatmul.mubr.f32.gmra.mrb[0].mxu0 %v9355
    %v9446 = vpop.f32.mrb[0].mxu0
    %v9447 = vadd.f32 %v9379, %v9446
    %v9448 = vpop.f32.mrb[0].mxu0
    %9449 = vmatprep.mubr.f32.mxu0 0.0
    %9450 = vmatmul.mubr.f32.gmra.mrb[0].mxu0 %v9356
    %v9451 = vpop.f32.mrb[0].mxu0
    %v9452 = vadd.f32 %v9379, %v9451
    %v9453 = vpop.f32.mrb[0].mxu0
    %9454 = vmatprep.mubr.f32.mxu0 0.0
    %9455 = vmatmul.mubr.f32.gmra.mrb[0].mxu0 %v9357
    %v9456 = vpop.f32.mrb[0].mxu0
    %v9457 = vadd.f32 %v9379, %v9456
    %v9458 = vpop.f32.mrb[0].mxu0
    %9459 = vmatprep.mubr.f32.mxu0 0.0
    %9460 = vmatmul.mubr.f32.gmra.mrb[0].mxu0 %v9358
    %v9461 = vpop.f32.mrb[0].mxu0
    %v9462 = vadd.f32 %v9379, %v9461
    %v9463 = vpop.f32.mrb[0].mxu0
    %9464 = vdwg.mxu0
    %v9465 = vmax.f32 %v9447, 0.0
    %v9466 = vmax.f32 %v9452, 0.0
    %v9467 = vmax.f32 %v9457, 0.0
    %v9468 = vmax.f32 %v9462, 0.0
    %v9469 = vld [vmem:[%s51] sm:$0xff]
    %v9470 = vld [vmem:[%s51 + $0x8] sm:$0xff]
    %v9471 = vld [vmem:[%s51 + $0x10] sm:$0x3]
    %vm9472 = vcmask 220160
    %v9474 = vsel %vm9472, %v9469, 0
    %v9477 = vsel %vm9472, %v9470, 0
    %v9480 = vsel %vm9472, %v9471, 0
    %v9483 = vsel %vm1203, %v9468, 0
    %9485 = vmatprep.subr.mxu0 0.0
    %9486 = vmatpush1.msra.mxu0 %v9465
    %9487 = vmatprep.subr.mxu0 0.0
    %9488 = vmatpush1.msra.mxu0 %v9466
    %9489 = vmatprep.subr.mxu0 0.0
    %9490 = vmatpush1.msra.mxu0 %v9467
    %9491 = vmatprep.subr.mxu0 0.0
    %9492 = vmatpush1.msra.mxu0 %v9483
    %9493 = vmatprep.subr.mxu0 0.0
    %9494 = vmatpush1.msra.mxu0 0.0
    %9495 = vmatprep.subr.mxu0 0.0
    %9496 = vmatpush1.msra.mxu0 0.0
    %9497 = vmatprep.subr.mxu0 0.0
    %9498 = vmatpush1.msra.mxu0 0.0
    %9499 = vmatprep.subr.mxu0 0.0
    %9500 = vmatpush1.msra.mxu0 0.0
    %9501 = vmatprep.subr.mxu0 0.0
    %9502 = vmatpush1.msra.mxu0 0.0
    %9503 = vmatprep.subr.mxu0 0.0
    %9504 = vmatpush1.msra.mxu0 0.0
    %9505 = vmatprep.subr.mxu0 0.0
    %9506 = vmatpush1.msra.mxu0 0.0
    %9507 = vmatprep.subr.mxu0 0.0
    %9508 = vmatpush1.msra.mxu0 0.0
    %9509 = vmatprep.subr.mxu0 0.0
    %9510 = vmatpush1.msra.mxu0 0.0
    %9511 = vmatprep.subr.mxu0 0.0
    %9512 = vmatpush1.msra.mxu0 0.0
    %9513 = vmatprep.subr.mxu0 0.0
    %9514 = vmatpush1.msra.mxu0 0.0
    %9515 = vmatprep.subr.mxu0 0.0
    %9516 = vmatpush1.msra.mxu0 0.0
    %9517 = vmatprep.subr.mxu0 0.0
    %9518 = vmatpush1.msra.mxu0 0.0
    %9519 = vmatprep.subr.mxu0 0.0
    %9520 = vmatpush1.msra.mxu0 0.0
    %9521 = vmatprep.subr.mxu0 0.0
    %9522 = vmatpush1.msra.mxu0 0.0
    %9523 = vmatprep.subr.mxu0 0.0
    %9524 = vmatpush1.msra.mxu0 0.0
    %9525 = vmatprep.subr.mxu0 0.0
    %9526 = vmatpush1.msra.mxu0 0.0
    %9527 = vmatprep.subr.mxu0 0.0
    %9528 = vmatpush1.msra.mxu0 0.0
    %9529 = vmatprep.subr.mxu0 0.0
    %9530 = vmatpush1.msra.mxu0 0.0
    %9531 = vmatprep.subr.mxu0 0.0
    %9532 = vmatpush1.msra.mxu0 0.0
    %9533 = vmatprep.subr.mxu0 0.0
    %9534 = vmatpush1.msra.mxu0 0.0
    %9535 = vmatprep.subr.mxu0 0.0
    %9536 = vmatpush1.msra.mxu0 0.0
    %9537 = vmatprep.subr.mxu0 0.0
    %9538 = vmatpush1.msra.mxu0 0.0
    %9539 = vmatprep.subr.mxu0 0.0
    %9540 = vmatpush1.msra.mxu0 0.0
    %9541 = vmatprep.subr.mxu0 0.0
    %9542 = vmatpush1.msra.mxu0 0.0
    %9543 = vmatprep.subr.mxu0 0.0
    %9544 = vmatpush1.msra.mxu0 0.0
    %9545 = vmatprep.subr.mxu0 0.0
    %9546 = vmatpush1.msra.mxu0 0.0
    %9547 = vmatprep.subr.mxu0 0.0
    %9548 = vmatpush1.msra.mxu0 0.0
    %9549 = vmatprep.mubr.f32.mxu0 0.0
    %9550 = vmatmul.mubr.f32.gmra.mrb[0].mxu0 %v9474
    %v9551 = vpop.f32.mrb[0].mxu0
    %v9552 = vadd.f32 0.0, %v9551
    %v9553 = vpop.f32.mrb[0].mxu0
    %9554 = vmatprep.mubr.f32.mxu0 0.0
    %9555 = vmatmul.mubr.f32.gmra.mrb[0].mxu0 %v9477
    %v9556 = vpop.f32.mrb[0].mxu0
    %v9557 = vadd.f32 0.0, %v9556
    %v9558 = vpop.f32.mrb[0].mxu0
    %9559 = vmatprep.mubr.f32.mxu0 0.0
    %9560 = vmatmul.mubr.f32.gmra.mrb[0].mxu0 %v9480
    %v9561 = vpop.f32.mrb[0].mxu0
    %v9562 = vadd.f32 0.0, %v9561
    %v9563 = vpop.f32.mrb[0].mxu0
    %9564 = vdwg.mxu0
    %v9565 = vld [vmem:[#allocation10] sm:$0xff]
    %v9566 = vld [vmem:[#allocation10 + $0x8] sm:$0x1]
    %v9567 = vlaneseq
    %v9568 = vshrl.u32 %v9567, 7
    %v9569 = vsub.s32 0, %v9568
    %v9570 = vrot.slane %v9565, %v9569
    %v9571 = vmul.f32 %v9570, %v9552
    %v9572 = vmul.f32 %v9570, %v9557
    %v9573 = vadd.f32 %v9571, 0.0
    %v9574 = vadd.f32 %v9572, 0.0
    %v9575 = vlaneseq
    %v9576 = vshrl.u32 %v9575, 7
    %v9577 = vsub.s32 1, %v9576
    %v9578 = vrot.slane %v9565, %v9577
    %v9579 = vmul.f32 %v9578, %v9552
    %v9580 = vmul.f32 %v9578, %v9557
    %v9583 = vrot.slane %v9579, 1
    %v9584 = vrot.slane %v9580, 1
    %v9585 = vsel %vm389, %v9583, %v9584
    %v9588 = vadd.f32 %v9573, %v9585
    %v9589 = vadd.f32 %v9574, %v9584
    %v9590 = vlaneseq
    %v9591 = vshrl.u32 %v9590, 7
    %v9592 = vsub.s32 2, %v9591
    %v9593 = vrot.slane %v9565, %v9592
    %v9594 = vmul.f32 %v9593, %v9552
    %v9595 = vmul.f32 %v9593, %v9557
    %v9598 = vrot.slane %v9594, 2
    %v9599 = vrot.slane %v9595, 2
    %v9600 = vsel %vm591, %v9598, %v9599
    %v9603 = vadd.f32 %v9588, %v9600
    %v9604 = vadd.f32 %v9589, %v9599
    %v9605 = vlaneseq
    %v9606 = vshrl.u32 %v9605, 7
    %v9607 = vsub.s32 3, %v9606
    %v9608 = vrot.slane %v9565, %v9607
    %v9609 = vmul.f32 %v9608, %v9552
    %v9610 = vmul.f32 %v9608, %v9557
    %v9613 = vrot.slane %v9609, 3
    %v9614 = vrot.slane %v9610, 3
    %v9615 = vsel %vm793, %v9613, %v9614
    %v9618 = vadd.f32 %v9603, %v9615
    %v9619 = vadd.f32 %v9604, %v9614
    %v9620 = vlaneseq
    %v9621 = vshrl.u32 %v9620, 7
    %v9622 = vsub.s32 4, %v9621
    %v9623 = vrot.slane %v9565, %v9622
    %v9624 = vmul.f32 %v9623, %v9552
    %v9625 = vmul.f32 %v9623, %v9557
    %v9628 = vrot.slane %v9624, 4
    %v9629 = vrot.slane %v9625, 4
    %v9630 = vsel %vm997, %v9628, %v9629
    %v9633 = vadd.f32 %v9618, %v9630
    %v9634 = vadd.f32 %v9619, %v9629
    %v9635 = vlaneseq
    %v9636 = vshrl.u32 %v9635, 7
    %v9637 = vsub.s32 5, %v9636
    %v9638 = vrot.slane %v9565, %v9637
    %v9639 = vmul.f32 %v9638, %v9552
    %v9640 = vmul.f32 %v9638, %v9557
    %v9643 = vrot.slane %v9639, 5
    %v9644 = vrot.slane %v9640, 5
    %v9645 = vsel %vm1203, %v9643, %v9644
    %v9648 = vadd.f32 %v9633, %v9645
    %v9649 = vadd.f32 %v9634, %v9644
    %v9650 = vlaneseq
    %v9651 = vshrl.u32 %v9650, 7
    %v9652 = vsub.s32 6, %v9651
    %v9653 = vrot.slane %v9565, %v9652
    %v9654 = vmul.f32 %v9653, %v9552
    %v9655 = vmul.f32 %v9653, %v9557
    %v9656 = vmul.f32 %v9653, %v9562
    %v9660 = vrot.slane %v9654, 6
    %v9661 = vrot.slane %v9655, 6
    %v9662 = vsel %vm1409, %v9660, %v9661
    %v9663 = vrot.slane %v9656, 6
    %v9664 = vsel %vm1409, %v9661, %v9663
    %v9667 = vadd.f32 %v9648, %v9662
    %v9668 = vadd.f32 %v9649, %v9664
    %v9669 = vlaneseq
    %v9670 = vshrl.u32 %v9669, 7
    %v9671 = vsub.s32 7, %v9670
    %v9672 = vrot.slane %v9565, %v9671
    %v9673 = vmul.f32 %v9672, %v9552
    %v9674 = vmul.f32 %v9672, %v9557
    %v9675 = vmul.f32 %v9672, %v9562
    %v9679 = vrot.slane %v9673, 7
    %v9680 = vrot.slane %v9674, 7
    %v9681 = vsel %vm1615, %v9679, %v9680
    %v9682 = vrot.slane %v9675, 7
    %v9683 = vsel %vm1615, %v9680, %v9682
    %v9686 = vadd.f32 %v9667, %v9681
    %v9687 = vadd.f32 %v9668, %v9683
    %v9688 = vlaneseq
    %v9689 = vshrl.u32 %v9688, 7
    %v9690 = vsub.s32 0, %v9689
    %v9691 = vrot.slane %v9566, %v9690
    %v9692 = vadd.f32 %v9686, %v9691
    %v9693 = vadd.f32 %v9687, %v9691
    %v9694 = vld [vmem:[%s55] sm:$0xff]
    %v9695 = vld [vmem:[%s55 + $0x8] sm:$0xff]
    %v9696 = vld [vmem:[%s55 + $0x10] sm:$0xff]
    %v9697 = vld [vmem:[%s55 + $0x18] sm:$0xff]
    %v9698 = vld [vmem:[%s55 + $0x20] sm:$0xff]
    %v9699 = vld [vmem:[%s55 + $0x28] sm:$0xff]
    %v9700 = vld [vmem:[%s55 + $0x30] sm:$0xff]
    %v9701 = vld [vmem:[%s55 + $0x38] sm:$0xff]
    %v9702 = vld [vmem:[%s55 + $0x40] sm:$0xff]
    %v9703 = vld [vmem:[%s55 + $0x48] sm:$0xff]
    %v9704 = vld [vmem:[%s55 + $0x50] sm:$0xff]
    %v9705 = vld [vmem:[%s55 + $0x58] sm:$0xff]
    %v9706 = vld [vmem:[%s55 + $0x60] sm:$0xff]
    %v9707 = vld [vmem:[%s55 + $0x68] sm:$0xff]
    %v9708 = vld [vmem:[%s55 + $0x70] sm:$0xff]
    %v9709 = vld [vmem:[%s55 + $0x78] sm:$0xff]
    %v9710 = vld [vmem:[%s55 + $0x80] sm:$0xff]
    %v9711 = vld [vmem:[%s55 + $0x88] sm:$0xff]
    %v9712 = vld [vmem:[%s55 + $0x90] sm:$0xff]
    %v9713 = vld [vmem:[%s55 + $0x98] sm:$0xff]
    %v9714 = vld [vmem:[%s55 + $0xa0] sm:$0xff]
    %v9715 = vld [vmem:[%s55 + $0xa8] sm:$0xff]
    %v9716 = vld [vmem:[%s55 + $0xb0] sm:$0xff]
    %v9717 = vld [vmem:[%s55 + $0xb8] sm:$0xff]
    %v9718 = vld [vmem:[%s55 + $0xc0] sm:$0xff]
    %v9719 = vld [vmem:[%s55 + $0xc8] sm:$0xff]
    %v9720 = vld [vmem:[%s55 + $0xd0] sm:$0xff]
    %v9721 = vld [vmem:[%s55 + $0xd8] sm:$0xff]
    %v9722 = vld [vmem:[%s55 + $0xe0] sm:$0xff]
    %v9723 = vld [vmem:[%s55 + $0xe8] sm:$0xff]
    %v9724 = vld [vmem:[%s55 + $0xf0] sm:$0xff]
    %v9725 = vld [vmem:[%s55 + $0xf8] sm:$0xff]
    %v9726 = vld [vmem:[%s55 + $0x100] sm:$0x1]
    %v9727 = vld [vmem:[%s55 + $0x108] sm:$0x1]
    %v9728 = vlaneseq
    %v9729 = vshrl.u32 %v9728, 7
    %v9730 = vsub.s32 0, %v9729
    %v9731 = vrot.slane %v9726, %v9730
    %v9732 = vlaneseq
    %v9733 = vshrl.u32 %v9732, 7
    %v9734 = vsub.s32 0, %v9733
    %v9735 = vrot.slane %v9727, %v9734
    %9736 = vmatprep.subr.mxu0 %v9695
    %9737 = vmatpush1.msra.mxu0 %v9694
    %9738 = vmatprep.subr.mxu0 %v9697
    %9739 = vmatpush1.msra.mxu0 %v9696
    %9740 = vmatprep.subr.mxu0 %v9699
    %9741 = vmatpush1.msra.mxu0 %v9698
    %9742 = vmatprep.subr.mxu0 %v9701
    %9743 = vmatpush1.msra.mxu0 %v9700
    %9744 = vmatprep.subr.mxu0 %v9703
    %9745 = vmatpush1.msra.mxu0 %v9702
    %9746 = vmatprep.subr.mxu0 %v9705
    %9747 = vmatpush1.msra.mxu0 %v9704
    %9748 = vmatprep.subr.mxu0 %v9707
    %9749 = vmatpush1.msra.mxu0 %v9706
    %9750 = vmatprep.subr.mxu0 %v9709
    %9751 = vmatpush1.msra.mxu0 %v9708
    %9752 = vmatprep.subr.mxu0 %v9711
    %9753 = vmatpush1.msra.mxu0 %v9710
    %9754 = vmatprep.subr.mxu0 %v9713
    %9755 = vmatpush1.msra.mxu0 %v9712
    %9756 = vmatprep.subr.mxu0 %v9715
    %9757 = vmatpush1.msra.mxu0 %v9714
    %9758 = vmatprep.subr.mxu0 %v9717
    %9759 = vmatpush1.msra.mxu0 %v9716
    %9760 = vmatprep.subr.mxu0 %v9719
    %9761 = vmatpush1.msra.mxu0 %v9718
    %9762 = vmatprep.subr.mxu0 %v9721
    %9763 = vmatpush1.msra.mxu0 %v9720
    %9764 = vmatprep.subr.mxu0 %v9723
    %9765 = vmatpush1.msra.mxu0 %v9722
    %9766 = vmatprep.subr.mxu0 %v9725
    %9767 = vmatpush1.msra.mxu0 %v9724
    %9768 = vmatprep.subr.mxu0 0.0
    %9769 = vmatpush1.msra.mxu0 0.0
    %9770 = vmatprep.subr.mxu0 0.0
    %9771 = vmatpush1.msra.mxu0 0.0
    %9772 = vmatprep.subr.mxu0 0.0
    %9773 = vmatpush1.msra.mxu0 0.0
    %9774 = vmatprep.subr.mxu0 0.0
    %9775 = vmatpush1.msra.mxu0 0.0
    %9776 = vmatprep.subr.mxu0 0.0
    %9777 = vmatpush1.msra.mxu0 0.0
    %9778 = vmatprep.subr.mxu0 0.0
    %9779 = vmatpush1.msra.mxu0 0.0
    %9780 = vmatprep.subr.mxu0 0.0
    %9781 = vmatpush1.msra.mxu0 0.0
    %9782 = vmatprep.subr.mxu0 0.0
    %9783 = vmatpush1.msra.mxu0 0.0
    %9784 = vmatprep.subr.mxu0 0.0
    %9785 = vmatpush1.msra.mxu0 0.0
    %9786 = vmatprep.subr.mxu0 0.0
    %9787 = vmatpush1.msra.mxu0 0.0
    %9788 = vmatprep.subr.mxu0 0.0
    %9789 = vmatpush1.msra.mxu0 0.0
    %9790 = vmatprep.subr.mxu0 0.0
    %9791 = vmatpush1.msra.mxu0 0.0
    %9792 = vmatprep.subr.mxu0 0.0
    %9793 = vmatpush1.msra.mxu0 0.0
    %9794 = vmatprep.subr.mxu0 0.0
    %9795 = vmatpush1.msra.mxu0 0.0
    %9796 = vmatprep.subr.mxu0 0.0
    %9797 = vmatpush1.msra.mxu0 0.0
    %9798 = vmatprep.subr.mxu0 0.0
    %9799 = vmatpush1.msra.mxu0 0.0
    %9800 = vmatprep.mubr.f32.mxu0 0.0
    %9801 = vmatmul.mubr.f32.gmra.mrb[0].mxu0 %v9692
    %v9802 = vpop.f32.mrb[0].mxu0
    %v9803 = vadd.f32 %v9731, %v9802
    %v9804 = vpop.f32.mrb[0].mxu0
    %v9805 = vadd.f32 %v9735, %v9804
    %9806 = vmatprep.mubr.f32.mxu0 0.0
    %9807 = vmatmul.mubr.f32.gmra.mrb[0].mxu0 %v9693
    %v9808 = vpop.f32.mrb[0].mxu0
    %v9809 = vadd.f32 %v9731, %v9808
    %v9810 = vpop.f32.mrb[0].mxu0
    %v9811 = vadd.f32 %v9735, %v9810
    %9812 = vdwg.mxu0
    %v9813 = vmax.f32 %v9803, 0.0
    %v9814 = vmax.f32 %v9805, 0.0
    %v9815 = vmax.f32 %v9809, 0.0
    %v9816 = vmax.f32 %v9811, 0.0
    %v9817 = vld [vmem:[%s57] sm:$0x3]
    %v9819 = vsel %vm8212, %v9817, 0
    %v9822 = vsel %vm1203, %v9815, 0
    %v9825 = vsel %vm1203, %v9816, 0
    %9827 = vmatprep.subr.mxu0 %v9814
    %9828 = vmatpush1.msra.mxu0 %v9813
    %9829 = vmatprep.subr.mxu0 %v9825
    %9830 = vmatpush1.msra.mxu0 %v9822
    %9831 = vmatprep.subr.mxu0 0.0
    %9832 = vmatpush1.msra.mxu0 0.0
    %9833 = vmatprep.subr.mxu0 0.0
    %9834 = vmatpush1.msra.mxu0 0.0
    %9835 = vmatprep.subr.mxu0 0.0
    %9836 = vmatpush1.msra.mxu0 0.0
    %9837 = vmatprep.subr.mxu0 0.0
    %9838 = vmatpush1.msra.mxu0 0.0
    %9839 = vmatprep.subr.mxu0 0.0
    %9840 = vmatpush1.msra.mxu0 0.0
    %9841 = vmatprep.subr.mxu0 0.0
    %9842 = vmatpush1.msra.mxu0 0.0
    %9843 = vmatprep.subr.mxu0 0.0
    %9844 = vmatpush1.msra.mxu0 0.0
    %9845 = vmatprep.subr.mxu0 0.0
    %9846 = vmatpush1.msra.mxu0 0.0
    %9847 = vmatprep.subr.mxu0 0.0
    %9848 = vmatpush1.msra.mxu0 0.0
    %9849 = vmatprep.subr.mxu0 0.0
    %9850 = vmatpush1.msra.mxu0 0.0
    %9851 = vmatprep.subr.mxu0 0.0
    %9852 = vmatpush1.msra.mxu0 0.0
    %9853 = vmatprep.subr.mxu0 0.0
    %9854 = vmatpush1.msra.mxu0 0.0
    %9855 = vmatprep.subr.mxu0 0.0
    %9856 = vmatpush1.msra.mxu0 0.0
    %9857 = vmatprep.subr.mxu0 0.0
    %9858 = vmatpush1.msra.mxu0 0.0
    %9859 = vmatprep.subr.mxu0 0.0
    %9860 = vmatpush1.msra.mxu0 0.0
    %9861 = vmatprep.subr.mxu0 0.0
    %9862 = vmatpush1.msra.mxu0 0.0
    %9863 = vmatprep.subr.mxu0 0.0
    %9864 = vmatpush1.msra.mxu0 0.0
    %9865 = vmatprep.subr.mxu0 0.0
    %9866 = vmatpush1.msra.mxu0 0.0
    %9867 = vmatprep.subr.mxu0 0.0
    %9868 = vmatpush1.msra.mxu0 0.0
    %9869 = vmatprep.subr.mxu0 0.0
    %9870 = vmatpush1.msra.mxu0 0.0
    %9871 = vmatprep.subr.mxu0 0.0
    %9872 = vmatpush1.msra.mxu0 0.0
    %9873 = vmatprep.subr.mxu0 0.0
    %9874 = vmatpush1.msra.mxu0 0.0
    %9875 = vmatprep.subr.mxu0 0.0
    %9876 = vmatpush1.msra.mxu0 0.0
    %9877 = vmatprep.subr.mxu0 0.0
    %9878 = vmatpush1.msra.mxu0 0.0
    %9879 = vmatprep.subr.mxu0 0.0
    %9880 = vmatpush1.msra.mxu0 0.0
    %9881 = vmatprep.subr.mxu0 0.0
    %9882 = vmatpush1.msra.mxu0 0.0
    %9883 = vmatprep.subr.mxu0 0.0
    %9884 = vmatpush1.msra.mxu0 0.0
    %9885 = vmatprep.subr.mxu0 0.0
    %9886 = vmatpush1.msra.mxu0 0.0
    %9887 = vmatprep.subr.mxu0 0.0
    %9888 = vmatpush1.msra.mxu0 0.0
    %9889 = vmatprep.subr.mxu0 0.0
    %9890 = vmatpush1.msra.mxu0 0.0
    %9891 = vmatprep.mubr.f32.mxu0 0.0
    %9892 = vmatmul.mubr.f32.gmra.mrb[0].mxu0 %v9819
    %v9893 = vpop.f32.mrb[0].mxu0
    %v9894 = vadd.f32 0.0, %v9893
    %v9895 = vpop.f32.mrb[0].mxu0
    %v9896 = vadd.f32 0.0, %v9895
    %9897 = vdwg.mxu0
    %v9898 = vld [vmem:[%s63] sm:$0xff]
    %v9899 = vld [vmem:[%s63 + $0x8] sm:$0xff]
    %v9900 = vld [vmem:[%s63 + $0x10] sm:$0xff]
    %v9901 = vld [vmem:[%s63 + $0x18] sm:$0xff]
    %v9902 = vld [vmem:[%s63 + $0x20] sm:$0xff]
    %v9903 = vld [vmem:[%s63 + $0x28] sm:$0xff]
    %v9904 = vld [vmem:[%s63 + $0x30] sm:$0xff]
    %v9905 = vld [vmem:[%s63 + $0x38] sm:$0xff]
    %v9906 = vld [vmem:[%s63 + $0x40] sm:$0xff]
    %v9907 = vld [vmem:[%s63 + $0x48] sm:$0xff]
    %v9908 = vld [vmem:[%s63 + $0x50] sm:$0xff]
    %v9909 = vld [vmem:[%s63 + $0x58] sm:$0xff]
    %v9910 = vld [vmem:[%s63 + $0x60] sm:$0xff]
    %v9911 = vld [vmem:[%s63 + $0x68] sm:$0xff]
    %v9912 = vld [vmem:[%s63 + $0x70] sm:$0xff]
    %v9913 = vld [vmem:[%s63 + $0x78] sm:$0xff]
    %v9914 = vld [vmem:[%s63 + $0x80] sm:$0xff]
    %v9915 = vld [vmem:[%s63 + $0x88] sm:$0xff]
    %v9916 = vld [vmem:[%s63 + $0x90] sm:$0xff]
    %v9917 = vld [vmem:[%s63 + $0x98] sm:$0xff]
    %v9918 = vld [vmem:[%s63 + $0xa0] sm:$0xff]
    %v9919 = vld [vmem:[%s63 + $0xa8] sm:$0xff]
    %v9920 = vld [vmem:[%s63 + $0xb0] sm:$0xff]
    %v9921 = vld [vmem:[%s63 + $0xb8] sm:$0xff]
    %v9922 = vld [vmem:[%s63 + $0xc0] sm:$0xff]
    %v9923 = vld [vmem:[%s63 + $0xc8] sm:$0xff]
    %v9924 = vld [vmem:[%s63 + $0xd0] sm:$0xff]
    %v9925 = vld [vmem:[%s63 + $0xd8] sm:$0xff]
    %v9926 = vld [vmem:[%s63 + $0xe0] sm:$0xff]
    %v9927 = vld [vmem:[%s63 + $0xe8] sm:$0xff]
    %v9928 = vld [vmem:[%s63 + $0xf0] sm:$0xff]
    %v9929 = vld [vmem:[%s63 + $0xf8] sm:$0xff]
    %v9930 = vld [vmem:[%s63 + $0x100] sm:$0x1]
    %v9931 = vlaneseq
    %v9932 = vshrl.u32 %v9931, 7
    %v9933 = vsub.s32 0, %v9932
    %v9934 = vrot.slane %v9930, %v9933
    %9935 = vmatprep.subr.mxu0 0.0
    %9936 = vmatpush1.msra.mxu0 %v9898
    %9937 = vmatprep.subr.mxu0 0.0
    %9938 = vmatpush1.msra.mxu0 %v9899
    %9939 = vmatprep.subr.mxu0 0.0
    %9940 = vmatpush1.msra.mxu0 %v9900
    %9941 = vmatprep.subr.mxu0 0.0
    %9942 = vmatpush1.msra.mxu0 %v9901
    %9943 = vmatprep.subr.mxu0 0.0
    %9944 = vmatpush1.msra.mxu0 %v9902
    %9945 = vmatprep.subr.mxu0 0.0
    %9946 = vmatpush1.msra.mxu0 %v9903
    %9947 = vmatprep.subr.mxu0 0.0
    %9948 = vmatpush1.msra.mxu0 %v9904
    %9949 = vmatprep.subr.mxu0 0.0
    %9950 = vmatpush1.msra.mxu0 %v9905
    %9951 = vmatprep.subr.mxu0 0.0
    %9952 = vmatpush1.msra.mxu0 %v9906
    %9953 = vmatprep.subr.mxu0 0.0
    %9954 = vmatpush1.msra.mxu0 %v9907
    %9955 = vmatprep.subr.mxu0 0.0
    %9956 = vmatpush1.msra.mxu0 %v9908
    %9957 = vmatprep.subr.mxu0 0.0
    %9958 = vmatpush1.msra.mxu0 %v9909
    %9959 = vmatprep.subr.mxu0 0.0
    %9960 = vmatpush1.msra.mxu0 %v9910
    %9961 = vmatprep.subr.mxu0 0.0
    %9962 = vmatpush1.msra.mxu0 %v9911
    %9963 = vmatprep.subr.mxu0 0.0
    %9964 = vmatpush1.msra.mxu0 %v9912
    %9965 = vmatprep.subr.mxu0 0.0
    %9966 = vmatpush1.msra.mxu0 %v9913
    %9967 = vmatprep.subr.mxu0 0.0
    %9968 = vmatpush1.msra.mxu0 %v9914
    %9969 = vmatprep.subr.mxu0 0.0
    %9970 = vmatpush1.msra.mxu0 %v9915
    %9971 = vmatprep.subr.mxu0 0.0
    %9972 = vmatpush1.msra.mxu0 %v9916
    %9973 = vmatprep.subr.mxu0 0.0
    %9974 = vmatpush1.msra.mxu0 %v9917
    %9975 = vmatprep.subr.mxu0 0.0
    %9976 = vmatpush1.msra.mxu0 %v9918
    %9977 = vmatprep.subr.mxu0 0.0
    %9978 = vmatpush1.msra.mxu0 %v9919
    %9979 = vmatprep.subr.mxu0 0.0
    %9980 = vmatpush1.msra.mxu0 %v9920
    %9981 = vmatprep.subr.mxu0 0.0
    %9982 = vmatpush1.msra.mxu0 %v9921
    %9983 = vmatprep.subr.mxu0 0.0
    %9984 = vmatpush1.msra.mxu0 %v9922
    %9985 = vmatprep.subr.mxu0 0.0
    %9986 = vmatpush1.msra.mxu0 %v9923
    %9987 = vmatprep.subr.mxu0 0.0
    %9988 = vmatpush1.msra.mxu0 %v9924
    %9989 = vmatprep.subr.mxu0 0.0
    %9990 = vmatpush1.msra.mxu0 %v9925
    %9991 = vmatprep.subr.mxu0 0.0
    %9992 = vmatpush1.msra.mxu0 %v9926
    %9993 = vmatprep.subr.mxu0 0.0
    %9994 = vmatpush1.msra.mxu0 %v9927
    %9995 = vmatprep.subr.mxu0 0.0
    %9996 = vmatpush1.msra.mxu0 %v9928
    %9997 = vmatprep.subr.mxu0 0.0
    %9998 = vmatpush1.msra.mxu0 %v9929
    %9999 = vmatprep.mubr.f32.mxu0 %v9896
    %10000 = vmatmul.mubr.f32.gmra.mrb[0].mxu0 %v9894
    %v10001 = vpop.f32.mrb[0].mxu0
    %v10002 = vadd.f32 %v9934, %v10001
    %v10003 = vpop.f32.mrb[0].mxu0
    %10004 = vdwg.mxu0
    %v10005 = vmax.f32 %v10002, 0.0
    %v10006 = vld [vmem:[%s65] sm:$0xff]
    %v10007 = vld [vmem:[%s65 + $0x8] sm:$0xff]
    %v10008 = vld [vmem:[%s65 + $0x10] sm:$0xff]
    %v10009 = vld [vmem:[%s65 + $0x18] sm:$0xff]
    %v10010 = vld [vmem:[%s65 + $0x20] sm:$0xff]
    %v10011 = vld [vmem:[%s65 + $0x28] sm:$0xff]
    %v10012 = vld [vmem:[%s65 + $0x30] sm:$0xff]
    %v10013 = vld [vmem:[%s65 + $0x38] sm:$0xff]
    %v10014 = vld [vmem:[%s65 + $0x40] sm:$0x1]
    %v10015 = vlaneseq
    %v10016 = vshrl.u32 %v10015, 7
    %v10017 = vsub.s32 0, %v10016
    %v10018 = vrot.slane %v10014, %v10017
    %v10020 = vsel %vm3975, %v10005, 0
    %10022 = vmatprep.subr.mxu0 0.0
    %10023 = vmatpush1.msra.mxu0 %v10006
    %10024 = vmatprep.subr.mxu0 0.0
    %10025 = vmatpush1.msra.mxu0 %v10007
    %10026 = vmatprep.subr.mxu0 0.0
    %10027 = vmatpush1.msra.mxu0 %v10008
    %10028 = vmatprep.subr.mxu0 0.0
    %10029 = vmatpush1.msra.mxu0 %v10009
    %10030 = vmatprep.subr.mxu0 0.0
    %10031 = vmatpush1.msra.mxu0 %v10010
    %10032 = vmatprep.subr.mxu0 0.0
    %10033 = vmatpush1.msra.mxu0 %v10011
    %10034 = vmatprep.subr.mxu0 0.0
    %10035 = vmatpush1.msra.mxu0 %v10012
    %10036 = vmatprep.subr.mxu0 0.0
    %10037 = vmatpush1.msra.mxu0 %v10013
    %10038 = vmatprep.subr.mxu0 0.0
    %10039 = vmatpush1.msra.mxu0 0.0
    %10040 = vmatprep.subr.mxu0 0.0
    %10041 = vmatpush1.msra.mxu0 0.0
    %10042 = vmatprep.subr.mxu0 0.0
    %10043 = vmatpush1.msra.mxu0 0.0
    %10044 = vmatprep.subr.mxu0 0.0
    %10045 = vmatpush1.msra.mxu0 0.0
    %10046 = vmatprep.subr.mxu0 0.0
    %10047 = vmatpush1.msra.mxu0 0.0
    %10048 = vmatprep.subr.mxu0 0.0
    %10049 = vmatpush1.msra.mxu0 0.0
    %10050 = vmatprep.subr.mxu0 0.0
    %10051 = vmatpush1.msra.mxu0 0.0
    %10052 = vmatprep.subr.mxu0 0.0
    %10053 = vmatpush1.msra.mxu0 0.0
    %10054 = vmatprep.subr.mxu0 0.0
    %10055 = vmatpush1.msra.mxu0 0.0
    %10056 = vmatprep.subr.mxu0 0.0
    %10057 = vmatpush1.msra.mxu0 0.0
    %10058 = vmatprep.subr.mxu0 0.0
    %10059 = vmatpush1.msra.mxu0 0.0
    %10060 = vmatprep.subr.mxu0 0.0
    %10061 = vmatpush1.msra.mxu0 0.0
    %10062 = vmatprep.subr.mxu0 0.0
    %10063 = vmatpush1.msra.mxu0 0.0
    %10064 = vmatprep.subr.mxu0 0.0
    %10065 = vmatpush1.msra.mxu0 0.0
    %10066 = vmatprep.subr.mxu0 0.0
    %10067 = vmatpush1.msra.mxu0 0.0
    %10068 = vmatprep.subr.mxu0 0.0
    %10069 = vmatpush1.msra.mxu0 0.0
    %10070 = vmatprep.subr.mxu0 0.0
    %10071 = vmatpush1.msra.mxu0 0.0
    %10072 = vmatprep.subr.mxu0 0.0
    %10073 = vmatpush1.msra.mxu0 0.0
    %10074 = vmatprep.subr.mxu0 0.0
    %10075 = vmatpush1.msra.mxu0 0.0
    %10076 = vmatprep.subr.mxu0 0.0
    %10077 = vmatpush1.msra.mxu0 0.0
    %10078 = vmatprep.subr.mxu0 0.0
    %10079 = vmatpush1.msra.mxu0 0.0
    %10080 = vmatprep.subr.mxu0 0.0
    %10081 = vmatpush1.msra.mxu0 0.0
    %10082 = vmatprep.subr.mxu0 0.0
    %10083 = vmatpush1.msra.mxu0 0.0
    %10084 = vmatprep.subr.mxu0 0.0
    %10085 = vmatpush1.msra.mxu0 0.0
    %10086 = vmatprep.mubr.f32.mxu0 0.0
    %10087 = vmatmul.mubr.f32.gmra.mrb[0].mxu0 %v10020
    %v10088 = vpop.f32.mrb[0].mxu0
    %v10089 = vadd.f32 %v10018, %v10088
    %v10090 = vpop.f32.mrb[0].mxu0
    %10091 = vdwg.mxu0
    %v10092 = vmax.f32 %v10089, 0.0
    %v10093 = vld [vmem:[%s67] sm:$0xff]
    %v10094 = vld [vmem:[%s67 + $0x8] sm:$0xff]
    %v10095 = vld [vmem:[%s67 + $0x10] sm:$0xff]
    %v10096 = vld [vmem:[%s67 + $0x18] sm:$0xff]
    %v10097 = vld [vmem:[%s67 + $0x20] sm:$0xff]
    %v10098 = vld [vmem:[%s67 + $0x28] sm:$0xff]
    %v10099 = vld [vmem:[%s67 + $0x30] sm:$0xff]
    %v10100 = vld [vmem:[%s67 + $0x38] sm:$0xff]
    %v10101 = vld [vmem:[%s67 + $0x40] sm:$0xff]
    %v10102 = vld [vmem:[%s67 + $0x48] sm:$0xff]
    %v10103 = vld [vmem:[%s67 + $0x50] sm:$0xff]
    %v10104 = vld [vmem:[%s67 + $0x58] sm:$0xff]
    %v10105 = vld [vmem:[%s67 + $0x60] sm:$0xff]
    %v10106 = vld [vmem:[%s67 + $0x68] sm:$0xff]
    %v10107 = vld [vmem:[%s67 + $0x70] sm:$0xff]
    %v10108 = vld [vmem:[%s67 + $0x78] sm:$0xff]
    %v10109 = vld [vmem:[%s67 + $0x80] sm:$0x1]
    %v10111 = vsel %vm3975, %v10092, 0
    %10113 = vmatprep.subr.mxu0 0.0
    %10114 = vmatpush1.msra.mxu0 %v10101
    %10115 = vmatprep.subr.mxu0 0.0
    %10116 = vmatpush1.msra.mxu0 %v10102
    %10117 = vmatprep.subr.mxu0 0.0
    %10118 = vmatpush1.msra.mxu0 %v10103
    %10119 = vmatprep.subr.mxu0 0.0
    %10120 = vmatpush1.msra.mxu0 %v10104
    %10121 = vmatprep.subr.mxu0 0.0
    %10122 = vmatpush1.msra.mxu0 %v10105
    %10123 = vmatprep.subr.mxu0 0.0
    %10124 = vmatpush1.msra.mxu0 %v10106
    %10125 = vmatprep.subr.mxu0 0.0
    %10126 = vmatpush1.msra.mxu0 %v10107
    %10127 = vmatprep.subr.mxu0 0.0
    %10128 = vmatpush1.msra.mxu0 %v10108
    %10129 = vmatprep.subr.mxu0 0.0
    %10130 = vmatpush1.msra.mxu0 0.0
    %10131 = vmatprep.subr.mxu0 0.0
    %10132 = vmatpush1.msra.mxu0 0.0
    %10133 = vmatprep.subr.mxu0 0.0
    %10134 = vmatpush1.msra.mxu0 0.0
    %10135 = vmatprep.subr.mxu0 0.0
    %10136 = vmatpush1.msra.mxu0 0.0
    %10137 = vmatprep.subr.mxu0 0.0
    %10138 = vmatpush1.msra.mxu0 0.0
    %10139 = vmatprep.subr.mxu0 0.0
    %10140 = vmatpush1.msra.mxu0 0.0
    %10141 = vmatprep.subr.mxu0 0.0
    %10142 = vmatpush1.msra.mxu0 0.0
    %10143 = vmatprep.subr.mxu0 0.0
    %10144 = vmatpush1.msra.mxu0 0.0
    %10145 = vmatprep.subr.mxu0 0.0
    %10146 = vmatpush1.msra.mxu0 0.0
    %10147 = vmatprep.subr.mxu0 0.0
    %10148 = vmatpush1.msra.mxu0 0.0
    %10149 = vmatprep.subr.mxu0 0.0
    %10150 = vmatpush1.msra.mxu0 0.0
    %10151 = vmatprep.subr.mxu0 0.0
    %10152 = vmatpush1.msra.mxu0 0.0
    %10153 = vmatprep.subr.mxu0 0.0
    %10154 = vmatpush1.msra.mxu0 0.0
    %10155 = vmatprep.subr.mxu0 0.0
    %10156 = vmatpush1.msra.mxu0 0.0
    %10157 = vmatprep.subr.mxu0 0.0
    %10158 = vmatpush1.msra.mxu0 0.0
    %10159 = vmatprep.subr.mxu0 0.0
    %10160 = vmatpush1.msra.mxu0 0.0
    %10161 = vmatprep.subr.mxu0 0.0
    %10162 = vmatpush1.msra.mxu0 0.0
    %10163 = vmatprep.subr.mxu0 0.0
    %10164 = vmatpush1.msra.mxu0 0.0
    %10165 = vmatprep.subr.mxu0 0.0
    %10166 = vmatpush1.msra.mxu0 0.0
    %10167 = vmatprep.subr.mxu0 0.0
    %10168 = vmatpush1.msra.mxu0 0.0
    %10169 = vmatprep.subr.mxu0 0.0
    %10170 = vmatpush1.msra.mxu0 0.0
    %10171 = vmatprep.subr.mxu0 0.0
    %10172 = vmatpush1.msra.mxu0 0.0
    %10173 = vmatprep.subr.mxu0 0.0
    %10174 = vmatpush1.msra.mxu0 0.0
    %10175 = vmatprep.subr.mxu0 0.0
    %10176 = vmatpush1.msra.mxu0 0.0
    %10177 = vmatprep.mubr.f32.mxu0 0.0
    %10178 = vmatmul.mubr.f32.gmra.mrb[0].mxu0 %v10111
    %v10179 = vpop.f32.mrb[0].mxu0
    %v10180 = vadd.f32 0.0, %v10179
    %v10181 = vpop.f32.mrb[0].mxu0
    %10182 = vdwg.mxu0
    %v10184 = vsel %vm3975, %v4693, 0
    %10186 = vmatprep.subr.mxu0 0.0
    %10187 = vmatpush1.msra.mxu0 %v10093
    %10188 = vmatprep.subr.mxu0 0.0
    %10189 = vmatpush1.msra.mxu0 %v10094
    %10190 = vmatprep.subr.mxu0 0.0
    %10191 = vmatpush1.msra.mxu0 %v10095
    %10192 = vmatprep.subr.mxu0 0.0
    %10193 = vmatpush1.msra.mxu0 %v10096
    %10194 = vmatprep.subr.mxu0 0.0
    %10195 = vmatpush1.msra.mxu0 %v10097
    %10196 = vmatprep.subr.mxu0 0.0
    %10197 = vmatpush1.msra.mxu0 %v10098
    %10198 = vmatprep.subr.mxu0 0.0
    %10199 = vmatpush1.msra.mxu0 %v10099
    %10200 = vmatprep.subr.mxu0 0.0
    %10201 = vmatpush1.msra.mxu0 %v10100
    %10202 = vmatprep.subr.mxu0 0.0
    %10203 = vmatpush1.msra.mxu0 0.0
    %10204 = vmatprep.subr.mxu0 0.0
    %10205 = vmatpush1.msra.mxu0 0.0
    %10206 = vmatprep.subr.mxu0 0.0
    %10207 = vmatpush1.msra.mxu0 0.0
    %10208 = vmatprep.subr.mxu0 0.0
    %10209 = vmatpush1.msra.mxu0 0.0
    %10210 = vmatprep.subr.mxu0 0.0
    %10211 = vmatpush1.msra.mxu0 0.0
    %10212 = vmatprep.subr.mxu0 0.0
    %10213 = vmatpush1.msra.mxu0 0.0
    %10214 = vmatprep.subr.mxu0 0.0
    %10215 = vmatpush1.msra.mxu0 0.0
    %10216 = vmatprep.subr.mxu0 0.0
    %10217 = vmatpush1.msra.mxu0 0.0
    %10218 = vmatprep.subr.mxu0 0.0
    %10219 = vmatpush1.msra.mxu0 0.0
    %10220 = vmatprep.subr.mxu0 0.0
    %10221 = vmatpush1.msra.mxu0 0.0
    %10222 = vmatprep.subr.mxu0 0.0
    %10223 = vmatpush1.msra.mxu0 0.0
    %10224 = vmatprep.subr.mxu0 0.0
    %10225 = vmatpush1.msra.mxu0 0.0
    %10226 = vmatprep.subr.mxu0 0.0
    %10227 = vmatpush1.msra.mxu0 0.0
    %10228 = vmatprep.subr.mxu0 0.0
    %10229 = vmatpush1.msra.mxu0 0.0
    %10230 = vmatprep.subr.mxu0 0.0
    %10231 = vmatpush1.msra.mxu0 0.0
    %10232 = vmatprep.subr.mxu0 0.0
    %10233 = vmatpush1.msra.mxu0 0.0
    %10234 = vmatprep.subr.mxu0 0.0
    %10235 = vmatpush1.msra.mxu0 0.0
    %10236 = vmatprep.subr.mxu0 0.0
    %10237 = vmatpush1.msra.mxu0 0.0
    %10238 = vmatprep.subr.mxu0 0.0
    %10239 = vmatpush1.msra.mxu0 0.0
    %10240 = vmatprep.subr.mxu0 0.0
    %10241 = vmatpush1.msra.mxu0 0.0
    %10242 = vmatprep.subr.mxu0 0.0
    %10243 = vmatpush1.msra.mxu0 0.0
    %10244 = vmatprep.subr.mxu0 0.0
    %10245 = vmatpush1.msra.mxu0 0.0
    %10246 = vmatprep.subr.mxu0 0.0
    %10247 = vmatpush1.msra.mxu0 0.0
    %10248 = vmatprep.subr.mxu0 0.0
    %10249 = vmatpush1.msra.mxu0 0.0
    %10250 = vmatprep.mubr.f32.mxu0 0.0
    %10251 = vmatmul.mubr.f32.gmra.mrb[0].mxu0 %v10184
    %v10252 = vpop.f32.mrb[0].mxu0
    %v10253 = vadd.f32 %v10180, %v10252
    %v10254 = vpop.f32.mrb[0].mxu0
    %10255 = vdwg.mxu0
    %v10256 = vlaneseq
    %v10257 = vshrl.u32 %v10256, 7
    %v10258 = vsub.s32 0, %v10257
    %v10259 = vrot.slane %v10109, %v10258
    %v10260 = vadd.f32 %v10253, %v10259
    %v10261 = vmax.f32 %v10260, 0.0
    %v10262 = vld [vmem:[%s69] sm:$0xff]
    %v10263 = vld [vmem:[%s69 + $0x8] sm:$0xff]
    %v10264 = vld [vmem:[%s69 + $0x10] sm:$0xff]
    %v10265 = vld [vmem:[%s69 + $0x18] sm:$0xff]
    %v10266 = vld [vmem:[%s69 + $0x20] sm:$0xff]
    %v10267 = vld [vmem:[%s69 + $0x28] sm:$0xff]
    %v10268 = vld [vmem:[%s69 + $0x30] sm:$0xff]
    %v10269 = vld [vmem:[%s69 + $0x38] sm:$0xff]
    %v10270 = vld [vmem:[%s69 + $0x40] sm:$0x1]
    %v10271 = vlaneseq
    %v10272 = vshrl.u32 %v10271, 7
    %v10273 = vsub.s32 0, %v10272
    %v10274 = vrot.slane %v10270, %v10273
    %v10276 = vsel %vm3975, %v10261, 0
    %10278 = vmatprep.subr.mxu0 0.0
    %10279 = vmatpush1.msra.mxu0 %v10262
    %10280 = vmatprep.subr.mxu0 0.0
    %10281 = vmatpush1.msra.mxu0 %v10263
    %10282 = vmatprep.subr.mxu0 0.0
    %10283 = vmatpush1.msra.mxu0 %v10264
    %10284 = vmatprep.subr.mxu0 0.0
    %10285 = vmatpush1.msra.mxu0 %v10265
    %10286 = vmatprep.subr.mxu0 0.0
    %10287 = vmatpush1.msra.mxu0 %v10266
    %10288 = vmatprep.subr.mxu0 0.0
    %10289 = vmatpush1.msra.mxu0 %v10267
    %10290 = vmatprep.subr.mxu0 0.0
    %10291 = vmatpush1.msra.mxu0 %v10268
    %10292 = vmatprep.subr.mxu0 0.0
    %10293 = vmatpush1.msra.mxu0 %v10269
    %10294 = vmatprep.subr.mxu0 0.0
    %10295 = vmatpush1.msra.mxu0 0.0
    %10296 = vmatprep.subr.mxu0 0.0
    %10297 = vmatpush1.msra.mxu0 0.0
    %10298 = vmatprep.subr.mxu0 0.0
    %10299 = vmatpush1.msra.mxu0 0.0
    %10300 = vmatprep.subr.mxu0 0.0
    %10301 = vmatpush1.msra.mxu0 0.0
    %10302 = vmatprep.subr.mxu0 0.0
    %10303 = vmatpush1.msra.mxu0 0.0
    %10304 = vmatprep.subr.mxu0 0.0
    %10305 = vmatpush1.msra.mxu0 0.0
    %10306 = vmatprep.subr.mxu0 0.0
    %10307 = vmatpush1.msra.mxu0 0.0
    %10308 = vmatprep.subr.mxu0 0.0
    %10309 = vmatpush1.msra.mxu0 0.0
    %10310 = vmatprep.subr.mxu0 0.0
    %10311 = vmatpush1.msra.mxu0 0.0
    %10312 = vmatprep.subr.mxu0 0.0
    %10313 = vmatpush1.msra.mxu0 0.0
    %10314 = vmatprep.subr.mxu0 0.0
    %10315 = vmatpush1.msra.mxu0 0.0
    %10316 = vmatprep.subr.mxu0 0.0
    %10317 = vmatpush1.msra.mxu0 0.0
    %10318 = vmatprep.subr.mxu0 0.0
    %10319 = vmatpush1.msra.mxu0 0.0
    %10320 = vmatprep.subr.mxu0 0.0
    %10321 = vmatpush1.msra.mxu0 0.0
    %10322 = vmatprep.subr.mxu0 0.0
    %10323 = vmatpush1.msra.mxu0 0.0
    %10324 = vmatprep.subr.mxu0 0.0
    %10325 = vmatpush1.msra.mxu0 0.0
    %10326 = vmatprep.subr.mxu0 0.0
    %10327 = vmatpush1.msra.mxu0 0.0
    %10328 = vmatprep.subr.mxu0 0.0
    %10329 = vmatpush1.msra.mxu0 0.0
    %10330 = vmatprep.subr.mxu0 0.0
    %10331 = vmatpush1.msra.mxu0 0.0
    %10332 = vmatprep.subr.mxu0 0.0
    %10333 = vmatpush1.msra.mxu0 0.0
    %10334 = vmatprep.subr.mxu0 0.0
    %10335 = vmatpush1.msra.mxu0 0.0
    %10336 = vmatprep.subr.mxu0 0.0
    %10337 = vmatpush1.msra.mxu0 0.0
    %10338 = vmatprep.subr.mxu0 0.0
    %10339 = vmatpush1.msra.mxu0 0.0
    %10340 = vmatprep.subr.mxu0 0.0
    %10341 = vmatpush1.msra.mxu0 0.0
    %10342 = vmatprep.mubr.f32.mxu0 0.0
    %10343 = vmatmul.mubr.f32.gmra.mrb[0].mxu0 %v10276
    %v10344 = vpop.f32.mrb[0].mxu0
    %v10345 = vadd.f32 %v10274, %v10344
    %v10346 = vpop.f32.mrb[0].mxu0
    %10347 = vdwg.mxu0
    %vm10348 = vcmask 74752
    %10349 = vst.msk [vmem:[#allocation11] sm:$0x3] %vm10348, %v10345
    // Predicated region
    $region162: #{classifier_forward.1} parent=1 // pred_check
      _
    $region163: #{classifier_forward.1} parent=1 // pred_check_branch
      %10351 = sbr.rel (0) target = $region165
    $region164: #{classifier_forward.1} parent=1 // pred_region
      %s10353 = ssub.s32 32, 32
      %10354 = vsyncadd [#allocation4], %s10353
      %s10356 = sshll.u32 [#allocation11], 4
      %s10357 = int_to_ptr.vmem [resolvable:$true] %s10356
      %10359 = dma.vmem_to_hbm [thread:$0]  %s10357, 32, %s71, [#allocation4]
    $region165: #{classifier_forward.1} parent=1 // pred_fallthru
      _
    // Predicated region
    $region166: #{classifier_forward.1} parent=1 // pred_check
      _
    $region167: #{classifier_forward.1} parent=1 // pred_check_branch
      %10361 = sbr.rel (0) target = $region169
    $region168: #{classifier_forward.1} parent=1 // pred_region
      %10362 = dma.done [#allocation4], 32
    $region169: #{classifier_forward.1} parent=1 // pred_fallthru
      _
    %10363 = vsyncpa [#allocation3], 1
    %10364 = vsyncpa [#allocation6], 1
    %10365 = vsyncpa [#allocation9], 1
    %10366 = vsyncpa [#allocation4], 1

</llo_original>
